<compile_context>
chip_gen: v7x
topology: tpu7x:2x2x1
jax: 0.10.0
libtpu: 0.0.40
codegen_flags: <defaults>
</compile_context>

<pallas_src>
import math

import jax
import jax.numpy as jnp
from jax.experimental import pallas as pl
from jax.experimental.pallas import tpu as pltpu


# ----------------------------------------------------------------------------
# Small synthetic configuration (keeps every Pallas block TPU-tile friendly).
# ----------------------------------------------------------------------------
B = 2            # batch
C = 4            # EEG channels
T = 128          # time samples
SEG = 16         # samples per segment -> S_EEG = 8 EEG tokens
S_EEG = T // SEG
D_EEG = 32       # eeg_d_model
EEG_HEADS = 2
EEG_LAYERS = 2
D_FF = 64        # eeg_d_ff

NUM_Q = 2        # num_quantizers
CODEBOOK = 64    # codebook_size
COMMIT = 0.2     # commitment_cost

VOCAB = 128      # vocab_size (lane-dense lm_head / one-hot gathers)
H_LLM = 32       # llm_hidden_size
I_LLM = 64       # llm_intermediate_size
LLM_LAYERS = 2
LLM_HEADS = 2
L_TEXT = 8       # teacher-forcing text length
S_TOT = S_EEG + L_TEXT

_VMEM = pl.BlockSpec(memory_space=pltpu.MemorySpace.VMEM)
_MXU_DT = jnp.bfloat16   # MXU operand dtype for transformer matmuls (f32 accum)

LAYER_KEYS = ("ln1_g", "ln1_b", "wq", "wk", "wv", "wo", "bo",
              "ln2_g", "ln2_b", "w1", "b1", "w2", "b2")


# ----------------------------------------------------------------------------
# In-kernel helpers (all intermediates live in VMEM / vregs)
# ----------------------------------------------------------------------------
def _mm_bf16(a, w):
    """a[..., D] @ w[D, F] with bf16 MXU operands, f32 accumulation."""
    dn = (((a.ndim - 1,), (0,)), ((), ()))
    return jax.lax.dot_general(a.astype(_MXU_DT), w.astype(_MXU_DT), dn,
                               preferred_element_type=jnp.float32)


def _mm_f32(a, w):
    dn = (((a.ndim - 1,), (0,)), ((), ()))
    return jax.lax.dot_general(a.astype(jnp.float32), w.astype(jnp.float32), dn,
                               preferred_element_type=jnp.float32)


def _ln(x, g, b):
    mu = jnp.mean(x, axis=-1, keepdims=True)
    xc = x - mu
    var = jnp.mean(xc * xc, axis=-1, keepdims=True)
    return xc * jax.lax.rsqrt(var + 1e-5) * g + b


def _transformer_layer(x, cmask, l, n_heads,
                       ln1g, ln1b, wq, wk, wv, wo, bo,
                       ln2g, ln2b, w1, b1, w2, b2):
    """Pre-LN transformer layer on x:(B, S, D); per-head weight slabs are
    indexed with static leading indices only (no lane-offset slices), Wo is
    distributed over heads (accumulation instead of lane concatenation)."""
    d = x.shape[-1]
    dh = d // n_heads
    scale = 1.0 / math.sqrt(dh)

    h = _ln(x, ln1g[l], ln1b[l])
    hb = h.astype(_MXU_DT)

    attn = None
    for hh in range(n_heads):
        wi = l * n_heads + hh
        q = jax.lax.dot_general(hb, wq[wi].astype(_MXU_DT),
                                (((2,), (0,)), ((), ())),
                                preferred_element_type=jnp.float32)   # (B,S,dh)
        k = jax.lax.dot_general(hb, wk[wi].astype(_MXU_DT),
                                (((2,), (0,)), ((), ())),
                                preferred_element_type=jnp.float32)
        v = jax.lax.dot_general(hb, wv[wi].astype(_MXU_DT),
                                (((2,), (0,)), ((), ())),
                                preferred_element_type=jnp.float32)
        # batched over B: (B,S,dh) x (B,S,dh) -> (B,S,S)
        s = jax.lax.dot_general((q * scale).astype(_MXU_DT), k.astype(_MXU_DT),
                                (((2,), (2,)), ((0,), (0,))),
                                preferred_element_type=jnp.float32)
        if cmask is not None:                      # mask applied in f32
            s = s + cmask
        m = jnp.max(s, axis=-1, keepdims=True)     # f32 max-subtraction
        p = jnp.exp(s - m)
        p = p * pl.reciprocal(jnp.sum(p, axis=-1, keepdims=True), approx=True)
        o = jax.lax.dot_general(p.astype(_MXU_DT), v.astype(_MXU_DT),
                                (((2,), (1,)), ((0,), (0,))),
                                preferred_element_type=jnp.float32)   # (B,S,dh)
        contrib = jax.lax.dot_general(o.astype(_MXU_DT), wo[wi].astype(_MXU_DT),
                                      (((2,), (0,)), ((), ())),
                                      preferred_element_type=jnp.float32)
        attn = contrib if attn is None else attn + contrib

    x = x + attn + bo[l]

    h2 = _ln(x, ln2g[l], ln2b[l])
    # TODO(synk): PyTorch nn.GELU default is exact erf GELU; tanh approx used here.
    f = jax.nn.gelu(_mm_bf16(h2, w1[l]) + b1[l], approximate=True)
    f = _mm_bf16(f, w2[l]) + b2[l]
    return x + f


# ----------------------------------------------------------------------------
# The single fused kernel: encoder -> RVQ -> LLM decoder -> losses
# ----------------------------------------------------------------------------
def _fused_kernel(xp_ref, ids_ref, nids_ref,
                  ein_w, ein_b, epos,
                  e_ln1g, e_ln1b, e_wq, e_wk, e_wv, e_wo, e_bo,
                  e_ln2g, e_ln2b, e_w1, e_b1, e_w2, e_b2,
                  e_lnfg, e_lnfb,
                  cb_ref,
                  pw_ref, pb_ref, temb_ref, lpos_ref,
                  l_ln1g, l_ln1b, l_wq, l_wk, l_wv, l_wo, l_bo,
                  l_ln2g, l_ln2b, l_w1, l_b1, l_w2, l_b2,
                  l_lnfg, l_lnfb, lmw_ref, lmb_ref,
                  logits_ref, quant_ref, idx_ref, loss_ref):
    # ---------------- EEG encoder ----------------
    x = _mm_bf16(xp_ref[...], ein_w[...]) + ein_b[...]          # (B, S_EEG, D)
    x = x + epos[...]                                           # broadcast pos add
    for l in range(EEG_LAYERS):
        x = _transformer_layer(x, None, l, EEG_HEADS,
                               e_ln1g, e_ln1b, e_wq, e_wk, e_wv, e_wo, e_bo,
                               e_ln2g, e_ln2b, e_w1, e_b1, e_w2, e_b2)
    encoded = _ln(x, e_lnfg[...], e_lnfb[...])                  # (B, S_EEG, D)

    # ---------------- Residual vector quantizer ----------------
    # Codebook norms are residual-independent -> hoisted out of the chain.
    ones_row = jnp.ones((1, D_EEG), jnp.float32)
    c2 = []
    for qi in range(NUM_Q):
        c = cb_ref[qi]                                          # (K, D)
        n = jax.lax.dot_general(ones_row, c * c, (((1,), (1,)), ((), ())),
                                preferred_element_type=jnp.float32)     # (1, K)
        c2.append(n.reshape(1, 1, CODEBOOK))

    residual = encoded
    quant_sum = jnp.zeros_like(encoded)
    vq_loss = jnp.zeros((1, 1, 1), jnp.float32)
    idx_cols = []
    for qi in range(NUM_Q):
        c = cb_ref[qi]                                          # (K, D)
        cross = jax.lax.dot_general(residual, c, (((2,), (1,)), ((), ())),
                                    preferred_element_type=jnp.float32)  # (B,S,K)
        score = c2[qi] - 2.0 * cross          # ||r||^2 constant per row -> omitted
        smin = jnp.min(score, axis=-1, keepdims=True)
        col = jax.lax.broadcasted_iota(jnp.int32, score.shape, 2)
        idx = jnp.min(jnp.where(score <= smin, col, CODEBOOK),
                      axis=-1, keepdims=True)                   # first argmin (B,S,1)
        onehot = (col == idx).astype(jnp.float32)
        quant = jax.lax.dot_general(onehot, c, (((2,), (0,)), ((), ())),
                                    preferred_element_type=jnp.float32)  # gather
        # codebook + commitment loss forward value (STE is a gradient-only trick)
        diff = quant - residual
        sq = jnp.sum(diff * diff, axis=-1, keepdims=True)       # (B,S,1)
        sq = jnp.sum(sq, axis=1, keepdims=True)                 # (B,1,1)
        sq = jnp.sum(sq, axis=0, keepdims=True)                 # (1,1,1)
        vq_loss = vq_loss + (1.0 + COMMIT) * sq / float(B * S_EEG * D_EEG)
        residual = residual - quant
        quant_sum = quant_sum + quant
        idx_cols.append(idx)

    quant_ref[...] = quant_sum
    idx_ref[...] = jnp.concatenate(idx_cols, axis=-1)

    # ---------------- LLM decoder ----------------
    eeg_h = _mm_bf16(quant_sum, pw_ref[...]) + pb_ref[...]      # (B, S_EEG, H)
    # token-embedding gather: one-hot(input_ids) @ tok_emb (lane-dense VOCAB=128)
    ids = ids_ref[...]                                          # (B, L_TEXT, 1)
    viota_txt = jax.lax.broadcasted_iota(jnp.int32, (B, L_TEXT, VOCAB), 2)
    tok_oh = (viota_txt == ids).astype(jnp.float32)
    tok_h = _mm_f32(tok_oh, temb_ref[...])                      # (B, L_TEXT, H)

    xl = jnp.concatenate([eeg_h, tok_h], axis=1) + lpos_ref[...]  # (B, S_TOT, H)

    # causal mask built ONCE, reused across all layers/heads
    rr = jax.lax.broadcasted_iota(jnp.int32, (S_TOT, S_TOT), 0)
    cc = jax.lax.broadcasted_iota(jnp.int32, (S_TOT, S_TOT), 1)
    cmask = jnp.where(cc <= rr, 0.0, -1e30).astype(jnp.float32)

    for l in range(LLM_LAYERS):
        xl = _transformer_layer(xl, cmask, l, LLM_HEADS,
                                l_ln1g, l_ln1b, l_wq, l_wk, l_wv, l_wo, l_bo,
                                l_ln2g, l_ln2b, l_w1, l_b1, l_w2, l_b2)
    xl = _ln(xl, l_lnfg[...], l_lnfb[...])
    logits = _mm_f32(xl, lmw_ref[...]) + lmb_ref[...]           # (B, S_TOT, 128)
    logits_ref[...] = logits

    # ---------------- LM cross-entropy (in-kernel) ----------------
    m = jnp.max(logits, axis=-1, keepdims=True)
    z = logits - m
    lse = jnp.log(jnp.sum(jnp.exp(z), axis=-1, keepdims=True))
    logp = z - lse                                              # (B, S_TOT, 128)
    nids = nids_ref[...]                                        # (B, S_TOT, 1), -1 = no target
    viota_tot = jax.lax.broadcasted_iota(jnp.int32, (B, S_TOT, VOCAB), 2)
    tgt_oh = (viota_tot == nids).astype(jnp.float32)
    nll = -jnp.sum(tgt_oh * logp, axis=-1, keepdims=True)       # (B, S_TOT, 1)
    nll = jnp.sum(jnp.sum(nll, axis=1, keepdims=True), axis=0, keepdims=True)
    lm_loss = nll / float(B * L_TEXT)                           # (1,1,1)

    loss_ref[...] = jnp.concatenate([vq_loss, lm_loss], axis=-1)  # (1,1,2)


# ----------------------------------------------------------------------------
# Forward: one pallas_call + tiny layout / loss-mixing glue
# ----------------------------------------------------------------------------
def brain_to_text_forward(params, eeg_signals, input_ids, labels):
    # [B, C, T] -> patchify -> [B, S_EEG, C*SEG]  (pure layout glue)
    xp = (eeg_signals.reshape(B, C, S_EEG, SEG)
          .transpose(0, 2, 1, 3)
          .reshape(B, S_EEG, C * SEG))
    ids3 = input_ids.astype(jnp.int32)[..., None]               # (B, L_TEXT, 1)
    # per-row "next token" targets aligned to the full sequence (-1 = no target)
    nids = jnp.full((B, S_TOT), -1, dtype=jnp.int32)
    nids = nids.at[:, S_EEG - 1:S_EEG + L_TEXT - 1].set(labels.astype(jnp.int32))
    nids = nids[..., None]                                      # (B, S_TOT, 1)

    enc, llm = params["encoder"], params["llm"]
    args = [xp, ids3, nids, enc["in_proj_w"], enc["in_proj_b"], enc["pos_emb"]]
    args += [enc["layers"][k] for k in LAYER_KEYS]
    args += [enc["ln_f_g"], enc["ln_f_b"], params["codebooks"],
             llm["eeg_proj_w"], llm["eeg_proj_b"], llm["tok_emb"], llm["pos_emb"]]
    args += [llm["layers"][k] for k in LAYER_KEYS]
    args += [llm["ln_f_g"], llm["ln_f_b"], llm["lm_head_w"], llm["lm_head_b"]]

    logits, quant, idx, losses = pl.pallas_call(
        _fused_kernel,
        out_shape=(
            jax.ShapeDtypeStruct((B, S_TOT, VOCAB), jnp.float32),
            jax.ShapeDtypeStruct((B, S_EEG, D_EEG), jnp.float32),
            jax.ShapeDtypeStruct((B, S_EEG, NUM_Q), jnp.int32),
            jax.ShapeDtypeStruct((1, 1, 2), jnp.float32),
        ),
        in_specs=[_VMEM] * len(args),
        out_specs=(_VMEM, _VMEM, _VMEM, _VMEM),
        cost_estimate=pl.CostEstimate(flops=4_000_000, transcendentals=20_000,
                                      bytes_accessed=500_000),
    )(*args)

    vq_loss = losses[0, 0, 0]
    lm_loss = losses[0, 0, 1]
    recon_loss = jnp.float32(0.0)   # use_reconstruction=False
    total_loss = lm_loss + 0.1 * vq_loss + 0.05 * recon_loss
    return {
        "loss": total_loss,
        "lm_loss": lm_loss,
        "vq_loss": vq_loss,
        "reconstruction_loss": recon_loss,
        "logits": logits,
        "eeg_indices": idx,
        "quantized_eeg": quant,
    }


# ----------------------------------------------------------------------------
# Deterministic parameter initialisation.  Per-head Q/K/V/O weight slabs are
# pre-split at init so the kernel only indexes static leading dimensions
# (no lane-offset slicing inside the kernel).
# ----------------------------------------------------------------------------
def _dense(key, k, n):
    return jax.random.normal(key, (k, n), jnp.float32) * 0.02


def _layer_params(key, d_model, d_ff, n_heads):
    ks = jax.random.split(key, 6)
    dh = d_model // n_heads

    def split_cols(w):                       # (D, D) -> (H, D, dh) column blocks
        return w.reshape(d_model, n_heads, dh).transpose(1, 0, 2)

    return {
        "ln1_g": jnp.ones((1, d_model), jnp.float32),
        "ln1_b": jnp.zeros((1, d_model), jnp.float32),
        "wq": split_cols(_dense(ks[0], d_model, d_model)),
        "wk": split_cols(_dense(ks[1], d_model, d_model)),
        "wv": split_cols(_dense(ks[2], d_model, d_model)),
        "wo": _dense(ks[3], d_model, d_model).reshape(n_heads, dh, d_model),
        "bo": jnp.zeros((1, d_model), jnp.float32),
        "ln2_g": jnp.ones((1, d_model), jnp.float32),
        "ln2_b": jnp.zeros((1, d_model), jnp.float32),
        "w1": _dense(ks[4], d_model, d_ff),
        "b1": jnp.zeros((1, d_ff), jnp.float32),
        "w2": _dense(ks[5], d_ff, d_model),
        "b2": jnp.zeros((1, d_model), jnp.float32),
    }


def _stack_layers(keys, d_model, d_ff, n_heads):
    layers = [_layer_params(k, d_model, d_ff, n_heads) for k in keys]
    stacked = {k: jnp.stack([lp[k] for lp in layers], axis=0) for k in LAYER_KEYS}
    # collapse (L, H, ...) -> (L*H, ...) so the kernel uses one static leading index
    for k in ("wq", "wk", "wv", "wo"):
        s = stacked[k].shape
        stacked[k] = stacked[k].reshape((s[0] * s[1],) + s[2:])
    return stacked


def init_params(key):
    k_enc, k_cb, k_llm = jax.random.split(key, 3)

    ke = jax.random.split(k_enc, EEG_LAYERS + 2)
    encoder = {
        "in_proj_w": _dense(ke[0], C * SEG, D_EEG),
        "in_proj_b": jnp.zeros((1, D_EEG), jnp.float32),
        "pos_emb": jax.random.normal(ke[1], (S_EEG, D_EEG), jnp.float32) * 0.02,
        "layers": _stack_layers(list(ke[2:2 + EEG_LAYERS]), D_EEG, D_FF, EEG_HEADS),
        "ln_f_g": jnp.ones((1, D_EEG), jnp.float32),
        "ln_f_b": jnp.zeros((1, D_EEG), jnp.float32),
    }

    codebooks = jax.random.normal(k_cb, (NUM_Q, CODEBOOK, D_EEG), jnp.float32) * 0.5

    kl = jax.random.split(k_llm, LLM_LAYERS + 4)
    llm = {
        "eeg_proj_w": _dense(kl[0], D_EEG, H_LLM),
        "eeg_proj_b": jnp.zeros((1, H_LLM), jnp.float32),
        "tok_emb": jax.random.normal(kl[1], (VOCAB, H_LLM), jnp.float32) * 0.02,
        "pos_emb": jax.random.normal(kl[2], (S_TOT, H_LLM), jnp.float32) * 0.02,
        "layers": _stack_layers(list(kl[3:3 + LLM_LAYERS]), H_LLM, I_LLM, LLM_HEADS),
        "ln_f_g": jnp.ones((1, H_LLM), jnp.float32),
        "ln_f_b": jnp.zeros((1, H_LLM), jnp.float32),
        "lm_head_w": _dense(kl[3 + LLM_LAYERS], H_LLM, VOCAB),
        "lm_head_b": jnp.zeros((1, VOCAB), jnp.float32),
    }

    return {"encoder": encoder, "codebooks": codebooks, "llm": llm}


# ----------------------------------------------------------------------------
if __name__ == "__main__":
    key = jax.random.PRNGKey(0)
    k_p, k_sig, k_ids = jax.random.split(key, 3)

    params = init_params(k_p)
    eeg_signals = jax.random.normal(k_sig, (B, C, T), jnp.float32)
    input_ids = jax.random.randint(k_ids, (B, L_TEXT), 3, VOCAB, dtype=jnp.int32)
    labels = input_ids  # teacher forcing targets

    fwd = jax.jit(brain_to_text_forward)
    out = fwd(params, eeg_signals, input_ids, labels)
    jax.block_until_ready(out)

    assert out["logits"].shape == (B, S_TOT, VOCAB)
    assert out["eeg_indices"].shape == (B, S_EEG, NUM_Q)
    assert out["quantized_eeg"].shape == (B, S_EEG, D_EEG)
    assert jnp.isfinite(out["loss"])

    print("KERNEL_OK")
</pallas_src>

<mosaic_0001>
module attributes {stable_mosaic.version = 11 : i64} {
  func.func @_fused_kernel(%arg0: memref<2x8x64xf32, #tpu.memory_space<vmem>>, %arg1: memref<2x8x1xi32, #tpu.memory_space<vmem>>, %arg2: memref<2x16x1xi32, #tpu.memory_space<vmem>>, %arg3: memref<64x32xf32, #tpu.memory_space<vmem>>, %arg4: memref<1x32xf32, #tpu.memory_space<vmem>>, %arg5: memref<8x32xf32, #tpu.memory_space<vmem>>, %arg6: memref<2x1x32xf32, #tpu.memory_space<vmem>>, %arg7: memref<2x1x32xf32, #tpu.memory_space<vmem>>, %arg8: memref<4x32x16xf32, #tpu.memory_space<vmem>>, %arg9: memref<4x32x16xf32, #tpu.memory_space<vmem>>, %arg10: memref<4x32x16xf32, #tpu.memory_space<vmem>>, %arg11: memref<4x16x32xf32, #tpu.memory_space<vmem>>, %arg12: memref<2x1x32xf32, #tpu.memory_space<vmem>>, %arg13: memref<2x1x32xf32, #tpu.memory_space<vmem>>, %arg14: memref<2x1x32xf32, #tpu.memory_space<vmem>>, %arg15: memref<2x32x64xf32, #tpu.memory_space<vmem>>, %arg16: memref<2x1x64xf32, #tpu.memory_space<vmem>>, %arg17: memref<2x64x32xf32, #tpu.memory_space<vmem>>, %arg18: memref<2x1x32xf32, #tpu.memory_space<vmem>>, %arg19: memref<1x32xf32, #tpu.memory_space<vmem>>, %arg20: memref<1x32xf32, #tpu.memory_space<vmem>>, %arg21: memref<2x64x32xf32, #tpu.memory_space<vmem>>, %arg22: memref<32x32xf32, #tpu.memory_space<vmem>>, %arg23: memref<1x32xf32, #tpu.memory_space<vmem>>, %arg24: memref<128x32xf32, #tpu.memory_space<vmem>>, %arg25: memref<16x32xf32, #tpu.memory_space<vmem>>, %arg26: memref<2x1x32xf32, #tpu.memory_space<vmem>>, %arg27: memref<2x1x32xf32, #tpu.memory_space<vmem>>, %arg28: memref<4x32x16xf32, #tpu.memory_space<vmem>>, %arg29: memref<4x32x16xf32, #tpu.memory_space<vmem>>, %arg30: memref<4x32x16xf32, #tpu.memory_space<vmem>>, %arg31: memref<4x16x32xf32, #tpu.memory_space<vmem>>, %arg32: memref<2x1x32xf32, #tpu.memory_space<vmem>>, %arg33: memref<2x1x32xf32, #tpu.memory_space<vmem>>, %arg34: memref<2x1x32xf32, #tpu.memory_space<vmem>>, %arg35: memref<2x32x64xf32, #tpu.memory_space<vmem>>, %arg36: memref<2x1x64xf32, #tpu.memory_space<vmem>>, %arg37: memref<2x64x32xf32, #tpu.memory_space<vmem>>, %arg38: memref<2x1x32xf32, #tpu.memory_space<vmem>>, %arg39: memref<1x32xf32, #tpu.memory_space<vmem>>, %arg40: memref<1x32xf32, #tpu.memory_space<vmem>>, %arg41: memref<32x128xf32, #tpu.memory_space<vmem>>, %arg42: memref<1x128xf32, #tpu.memory_space<vmem>>, %arg43: memref<2x16x128xf32, #tpu.memory_space<vmem>>, %arg44: memref<2x8x32xf32, #tpu.memory_space<vmem>>, %arg45: memref<2x8x2xi32, #tpu.memory_space<vmem>>, %arg46: memref<1x1x2xf32, #tpu.memory_space<vmem>>) attributes {dimension_semantics = [], scalar_prefetch = 0 : i64, scratch_operands = 0 : i64, tpu.core_type = #tpu.core_type<tc>} {
    %c0 = arith.constant 0 : index
    %c0_0 = arith.constant 0 : index
    %c0_1 = arith.constant 0 : index
    %0 = vector.load %arg0[%c0, %c0_0, %c0_1] : memref<2x8x64xf32, #tpu.memory_space<vmem>>, vector<2x8x64xf32>
    %c0_2 = arith.constant 0 : index
    %c0_3 = arith.constant 0 : index
    %1 = vector.load %arg3[%c0_2, %c0_3] : memref<64x32xf32, #tpu.memory_space<vmem>>, vector<64x32xf32>
    %2 = arith.truncf %0 : vector<2x8x64xf32> to vector<2x8x64xbf16>
    %3 = arith.truncf %1 : vector<64x32xf32> to vector<64x32xbf16>
    %cst = arith.constant dense<0.000000e+00> : vector<2x8x32xf32>
    %4 = tpu.matmul %2, %3, %cst {dimension_numbers = #tpu.dot_dimension_numbers<[2], [0], [0, 1], [1], [0, 0, 0, 1, 1, 1], [], []>} : vector<2x8x64xbf16>, vector<64x32xbf16>, vector<2x8x32xf32> -> vector<2x8x32xf32>
    %c0_4 = arith.constant 0 : index
    %c0_5 = arith.constant 0 : index
    %5 = vector.load %arg4[%c0_4, %c0_5] : memref<1x32xf32, #tpu.memory_space<vmem>>, vector<1x32xf32>
    %6 = vector.shape_cast %5 : vector<1x32xf32> to vector<1x1x32xf32>
    %7 = vector.broadcast %6 : vector<1x1x32xf32> to vector<2x8x32xf32>
    %8 = arith.addf %4, %7 : vector<2x8x32xf32>
    %c0_6 = arith.constant 0 : index
    %c0_7 = arith.constant 0 : index
    %9 = vector.load %arg5[%c0_6, %c0_7] : memref<8x32xf32, #tpu.memory_space<vmem>>, vector<8x32xf32>
    %10 = vector.shape_cast %9 : vector<8x32xf32> to vector<1x8x32xf32>
    %11 = vector.broadcast %10 : vector<1x8x32xf32> to vector<2x8x32xf32>
    %12 = arith.addf %8, %11 : vector<2x8x32xf32>
    %c0_8 = arith.constant 0 : index
    %c0_9 = arith.constant 0 : index
    %c0_10 = arith.constant 0 : index
    %13 = vector.load %arg6[%c0_8, %c0_9, %c0_10] : memref<2x1x32xf32, #tpu.memory_space<vmem>>, vector<1x1x32xf32>
    %14 = vector.shape_cast %13 : vector<1x1x32xf32> to vector<1x32xf32>
    %c0_11 = arith.constant 0 : index
    %c0_12 = arith.constant 0 : index
    %c0_13 = arith.constant 0 : index
    %15 = vector.load %arg7[%c0_11, %c0_12, %c0_13] : memref<2x1x32xf32, #tpu.memory_space<vmem>>, vector<1x1x32xf32>
    %16 = vector.shape_cast %15 : vector<1x1x32xf32> to vector<1x32xf32>
    %cst_14 = arith.constant dense<0.000000e+00> : vector<2x8xf32>
    %17 = vector.multi_reduction <add>, %12, %cst_14 [2] : vector<2x8x32xf32> to vector<2x8xf32>
    %18 = vector.shape_cast %17 : vector<2x8xf32> to vector<2x8x1xf32>
    %cst_15 = arith.constant 3.200000e+01 : f32
    %19 = vector.broadcast %cst_15 : f32 to vector<2x8x1xf32>
    %20 = arith.divf %18, %19 : vector<2x8x1xf32>
    %21 = vector.broadcast %20 : vector<2x8x1xf32> to vector<2x8x32xf32>
    %22 = arith.subf %12, %21 : vector<2x8x32xf32>
    %23 = arith.mulf %22, %22 : vector<2x8x32xf32>
    %cst_16 = arith.constant dense<0.000000e+00> : vector<2x8xf32>
    %24 = vector.multi_reduction <add>, %23, %cst_16 [2] : vector<2x8x32xf32> to vector<2x8xf32>
    %25 = vector.shape_cast %24 : vector<2x8xf32> to vector<2x8x1xf32>
    %cst_17 = arith.constant 3.200000e+01 : f32
    %26 = vector.broadcast %cst_17 : f32 to vector<2x8x1xf32>
    %27 = arith.divf %25, %26 : vector<2x8x1xf32>
    %cst_18 = arith.constant 9.99999974E-6 : f32
    %28 = vector.broadcast %cst_18 : f32 to vector<2x8x1xf32>
    %29 = arith.addf %27, %28 : vector<2x8x1xf32>
    %30 = math.rsqrt %29 : vector<2x8x1xf32>
    %31 = vector.broadcast %30 : vector<2x8x1xf32> to vector<2x8x32xf32>
    %32 = arith.mulf %22, %31 : vector<2x8x32xf32>
    %33 = vector.shape_cast %14 : vector<1x32xf32> to vector<1x1x32xf32>
    %34 = vector.broadcast %33 : vector<1x1x32xf32> to vector<2x8x32xf32>
    %35 = arith.mulf %32, %34 : vector<2x8x32xf32>
    %36 = vector.shape_cast %16 : vector<1x32xf32> to vector<1x1x32xf32>
    %37 = vector.broadcast %36 : vector<1x1x32xf32> to vector<2x8x32xf32>
    %38 = arith.addf %35, %37 : vector<2x8x32xf32>
    %39 = arith.truncf %38 : vector<2x8x32xf32> to vector<2x8x32xbf16>
    %c0_19 = arith.constant 0 : index
    %c0_20 = arith.constant 0 : index
    %c0_21 = arith.constant 0 : index
    %40 = vector.load %arg8[%c0_19, %c0_20, %c0_21] : memref<4x32x16xf32, #tpu.memory_space<vmem>>, vector<1x32x16xf32>
    %41 = vector.shape_cast %40 : vector<1x32x16xf32> to vector<32x16xf32>
    %42 = arith.truncf %41 : vector<32x16xf32> to vector<32x16xbf16>
    %cst_22 = arith.constant dense<0.000000e+00> : vector<2x8x16xf32>
    %43 = tpu.matmul %39, %42, %cst_22 {dimension_numbers = #tpu.dot_dimension_numbers<[2], [0], [0, 1], [1], [0, 0, 0, 1, 1, 1], [], []>} : vector<2x8x32xbf16>, vector<32x16xbf16>, vector<2x8x16xf32> -> vector<2x8x16xf32>
    %c0_23 = arith.constant 0 : index
    %c0_24 = arith.constant 0 : index
    %c0_25 = arith.constant 0 : index
    %44 = vector.load %arg9[%c0_23, %c0_24, %c0_25] : memref<4x32x16xf32, #tpu.memory_space<vmem>>, vector<1x32x16xf32>
    %45 = vector.shape_cast %44 : vector<1x32x16xf32> to vector<32x16xf32>
    %46 = arith.truncf %45 : vector<32x16xf32> to vector<32x16xbf16>
    %cst_26 = arith.constant dense<0.000000e+00> : vector<2x8x16xf32>
    %47 = tpu.matmul %39, %46, %cst_26 {dimension_numbers = #tpu.dot_dimension_numbers<[2], [0], [0, 1], [1], [0, 0, 0, 1, 1, 1], [], []>} : vector<2x8x32xbf16>, vector<32x16xbf16>, vector<2x8x16xf32> -> vector<2x8x16xf32>
    %c0_27 = arith.constant 0 : index
    %c0_28 = arith.constant 0 : index
    %c0_29 = arith.constant 0 : index
    %48 = vector.load %arg10[%c0_27, %c0_28, %c0_29] : memref<4x32x16xf32, #tpu.memory_space<vmem>>, vector<1x32x16xf32>
    %49 = vector.shape_cast %48 : vector<1x32x16xf32> to vector<32x16xf32>
    %50 = arith.truncf %49 : vector<32x16xf32> to vector<32x16xbf16>
    %cst_30 = arith.constant dense<0.000000e+00> : vector<2x8x16xf32>
    %51 = tpu.matmul %39, %50, %cst_30 {dimension_numbers = #tpu.dot_dimension_numbers<[2], [0], [0, 1], [1], [0, 0, 0, 1, 1, 1], [], []>} : vector<2x8x32xbf16>, vector<32x16xbf16>, vector<2x8x16xf32> -> vector<2x8x16xf32>
    %cst_31 = arith.constant 2.500000e-01 : f32
    %52 = vector.broadcast %cst_31 : f32 to vector<2x8x16xf32>
    %53 = arith.mulf %43, %52 : vector<2x8x16xf32>
    %54 = arith.truncf %53 : vector<2x8x16xf32> to vector<2x8x16xbf16>
    %55 = arith.truncf %47 : vector<2x8x16xf32> to vector<2x8x16xbf16>
    %cst_32 = arith.constant dense<0.000000e+00> : vector<2x8x8xf32>
    %56 = tpu.matmul %54, %55, %cst_32 {dimension_numbers = #tpu.dot_dimension_numbers<[2], [2], [1], [1], [0, 0, 0, 1, 1, 1], [0], [0]>} : vector<2x8x16xbf16>, vector<2x8x16xbf16>, vector<2x8x8xf32> -> vector<2x8x8xf32>
    %cst_33 = arith.constant dense<0xFF800000> : vector<2x8xf32>
    %57 = vector.multi_reduction <maximumf>, %56, %cst_33 [2] : vector<2x8x8xf32> to vector<2x8xf32>
    %58 = vector.shape_cast %57 : vector<2x8xf32> to vector<2x8x1xf32>
    %59 = vector.broadcast %58 : vector<2x8x1xf32> to vector<2x8x8xf32>
    %60 = arith.subf %56, %59 : vector<2x8x8xf32>
    %61 = math.exp %60 : vector<2x8x8xf32>
    %cst_34 = arith.constant dense<0.000000e+00> : vector<2x8xf32>
    %62 = vector.multi_reduction <add>, %61, %cst_34 [2] : vector<2x8x8xf32> to vector<2x8xf32>
    %63 = vector.shape_cast %62 : vector<2x8xf32> to vector<2x8x1xf32>
    %64 = tpu.reciprocal %63 {approx = true} : vector<2x8x1xf32> -> vector<2x8x1xf32>
    %65 = vector.broadcast %64 : vector<2x8x1xf32> to vector<2x8x8xf32>
    %66 = arith.mulf %61, %65 : vector<2x8x8xf32>
    %67 = arith.truncf %66 : vector<2x8x8xf32> to vector<2x8x8xbf16>
    %68 = arith.truncf %51 : vector<2x8x16xf32> to vector<2x8x16xbf16>
    %cst_35 = arith.constant dense<0.000000e+00> : vector<2x8x16xf32>
    %69 = tpu.matmul %67, %68, %cst_35 {dimension_numbers = #tpu.dot_dimension_numbers<[2], [1], [1], [2], [0, 0, 0, 1, 1, 2], [0], [0]>} : vector<2x8x8xbf16>, vector<2x8x16xbf16>, vector<2x8x16xf32> -> vector<2x8x16xf32>
    %70 = arith.truncf %69 : vector<2x8x16xf32> to vector<2x8x16xbf16>
    %c0_36 = arith.constant 0 : index
    %c0_37 = arith.constant 0 : index
    %c0_38 = arith.constant 0 : index
    %71 = vector.load %arg11[%c0_36, %c0_37, %c0_38] : memref<4x16x32xf32, #tpu.memory_space<vmem>>, vector<1x16x32xf32>
    %72 = vector.shape_cast %71 : vector<1x16x32xf32> to vector<16x32xf32>
    %73 = arith.truncf %72 : vector<16x32xf32> to vector<16x32xbf16>
    %cst_39 = arith.constant dense<0.000000e+00> : vector<2x8x32xf32>
    %74 = tpu.matmul %70, %73, %cst_39 {dimension_numbers = #tpu.dot_dimension_numbers<[2], [0], [0, 1], [1], [0, 0, 0, 1, 1, 1], [], []>} : vector<2x8x16xbf16>, vector<16x32xbf16>, vector<2x8x32xf32> -> vector<2x8x32xf32>
    %c1 = arith.constant 1 : index
    %c0_40 = arith.constant 0 : index
    %c0_41 = arith.constant 0 : index
    %75 = vector.load %arg8[%c1, %c0_40, %c0_41] : memref<4x32x16xf32, #tpu.memory_space<vmem>>, vector<1x32x16xf32>
    %76 = vector.shape_cast %75 : vector<1x32x16xf32> to vector<32x16xf32>
    %77 = arith.truncf %76 : vector<32x16xf32> to vector<32x16xbf16>
    %cst_42 = arith.constant dense<0.000000e+00> : vector<2x8x16xf32>
    %78 = tpu.matmul %39, %77, %cst_42 {dimension_numbers = #tpu.dot_dimension_numbers<[2], [0], [0, 1], [1], [0, 0, 0, 1, 1, 1], [], []>} : vector<2x8x32xbf16>, vector<32x16xbf16>, vector<2x8x16xf32> -> vector<2x8x16xf32>
    %c1_43 = arith.constant 1 : index
    %c0_44 = arith.constant 0 : index
    %c0_45 = arith.constant 0 : index
    %79 = vector.load %arg9[%c1_43, %c0_44, %c0_45] : memref<4x32x16xf32, #tpu.memory_space<vmem>>, vector<1x32x16xf32>
    %80 = vector.shape_cast %79 : vector<1x32x16xf32> to vector<32x16xf32>
    %81 = arith.truncf %80 : vector<32x16xf32> to vector<32x16xbf16>
    %cst_46 = arith.constant dense<0.000000e+00> : vector<2x8x16xf32>
    %82 = tpu.matmul %39, %81, %cst_46 {dimension_numbers = #tpu.dot_dimension_numbers<[2], [0], [0, 1], [1], [0, 0, 0, 1, 1, 1], [], []>} : vector<2x8x32xbf16>, vector<32x16xbf16>, vector<2x8x16xf32> -> vector<2x8x16xf32>
    %c1_47 = arith.constant 1 : index
    %c0_48 = arith.constant 0 : index
    %c0_49 = arith.constant 0 : index
    %83 = vector.load %arg10[%c1_47, %c0_48, %c0_49] : memref<4x32x16xf32, #tpu.memory_space<vmem>>, vector<1x32x16xf32>
    %84 = vector.shape_cast %83 : vector<1x32x16xf32> to vector<32x16xf32>
    %85 = arith.truncf %84 : vector<32x16xf32> to vector<32x16xbf16>
    %cst_50 = arith.constant dense<0.000000e+00> : vector<2x8x16xf32>
    %86 = tpu.matmul %39, %85, %cst_50 {dimension_numbers = #tpu.dot_dimension_numbers<[2], [0], [0, 1], [1], [0, 0, 0, 1, 1, 1], [], []>} : vector<2x8x32xbf16>, vector<32x16xbf16>, vector<2x8x16xf32> -> vector<2x8x16xf32>
    %cst_51 = arith.constant 2.500000e-01 : f32
    %87 = vector.broadcast %cst_51 : f32 to vector<2x8x16xf32>
    %88 = arith.mulf %78, %87 : vector<2x8x16xf32>
    %89 = arith.truncf %88 : vector<2x8x16xf32> to vector<2x8x16xbf16>
    %90 = arith.truncf %82 : vector<2x8x16xf32> to vector<2x8x16xbf16>
    %cst_52 = arith.constant dense<0.000000e+00> : vector<2x8x8xf32>
    %91 = tpu.matmul %89, %90, %cst_52 {dimension_numbers = #tpu.dot_dimension_numbers<[2], [2], [1], [1], [0, 0, 0, 1, 1, 1], [0], [0]>} : vector<2x8x16xbf16>, vector<2x8x16xbf16>, vector<2x8x8xf32> -> vector<2x8x8xf32>
    %cst_53 = arith.constant dense<0xFF800000> : vector<2x8xf32>
    %92 = vector.multi_reduction <maximumf>, %91, %cst_53 [2] : vector<2x8x8xf32> to vector<2x8xf32>
    %93 = vector.shape_cast %92 : vector<2x8xf32> to vector<2x8x1xf32>
    %94 = vector.broadcast %93 : vector<2x8x1xf32> to vector<2x8x8xf32>
    %95 = arith.subf %91, %94 : vector<2x8x8xf32>
    %96 = math.exp %95 : vector<2x8x8xf32>
    %cst_54 = arith.constant dense<0.000000e+00> : vector<2x8xf32>
    %97 = vector.multi_reduction <add>, %96, %cst_54 [2] : vector<2x8x8xf32> to vector<2x8xf32>
    %98 = vector.shape_cast %97 : vector<2x8xf32> to vector<2x8x1xf32>
    %99 = tpu.reciprocal %98 {approx = true} : vector<2x8x1xf32> -> vector<2x8x1xf32>
    %100 = vector.broadcast %99 : vector<2x8x1xf32> to vector<2x8x8xf32>
    %101 = arith.mulf %96, %100 : vector<2x8x8xf32>
    %102 = arith.truncf %101 : vector<2x8x8xf32> to vector<2x8x8xbf16>
    %103 = arith.truncf %86 : vector<2x8x16xf32> to vector<2x8x16xbf16>
    %cst_55 = arith.constant dense<0.000000e+00> : vector<2x8x16xf32>
    %104 = tpu.matmul %102, %103, %cst_55 {dimension_numbers = #tpu.dot_dimension_numbers<[2], [1], [1], [2], [0, 0, 0, 1, 1, 2], [0], [0]>} : vector<2x8x8xbf16>, vector<2x8x16xbf16>, vector<2x8x16xf32> -> vector<2x8x16xf32>
    %105 = arith.truncf %104 : vector<2x8x16xf32> to vector<2x8x16xbf16>
    %c1_56 = arith.constant 1 : index
    %c0_57 = arith.constant 0 : index
    %c0_58 = arith.constant 0 : index
    %106 = vector.load %arg11[%c1_56, %c0_57, %c0_58] : memref<4x16x32xf32, #tpu.memory_space<vmem>>, vector<1x16x32xf32>
    %107 = vector.shape_cast %106 : vector<1x16x32xf32> to vector<16x32xf32>
    %108 = arith.truncf %107 : vector<16x32xf32> to vector<16x32xbf16>
    %cst_59 = arith.constant dense<0.000000e+00> : vector<2x8x32xf32>
    %109 = tpu.matmul %105, %108, %cst_59 {dimension_numbers = #tpu.dot_dimension_numbers<[2], [0], [0, 1], [1], [0, 0, 0, 1, 1, 1], [], []>} : vector<2x8x16xbf16>, vector<16x32xbf16>, vector<2x8x32xf32> -> vector<2x8x32xf32>
    %110 = arith.addf %74, %109 : vector<2x8x32xf32>
    %111 = arith.addf %12, %110 : vector<2x8x32xf32>
    %c0_60 = arith.constant 0 : index
    %c0_61 = arith.constant 0 : index
    %c0_62 = arith.constant 0 : index
    %112 = vector.load %arg12[%c0_60, %c0_61, %c0_62] : memref<2x1x32xf32, #tpu.memory_space<vmem>>, vector<1x1x32xf32>
    %113 = vector.shape_cast %112 : vector<1x1x32xf32> to vector<1x32xf32>
    %114 = vector.shape_cast %113 : vector<1x32xf32> to vector<1x1x32xf32>
    %115 = vector.broadcast %114 : vector<1x1x32xf32> to vector<2x8x32xf32>
    %116 = arith.addf %111, %115 : vector<2x8x32xf32>
    %c0_63 = arith.constant 0 : index
    %c0_64 = arith.constant 0 : index
    %c0_65 = arith.constant 0 : index
    %117 = vector.load %arg13[%c0_63, %c0_64, %c0_65] : memref<2x1x32xf32, #tpu.memory_space<vmem>>, vector<1x1x32xf32>
    %118 = vector.shape_cast %117 : vector<1x1x32xf32> to vector<1x32xf32>
    %c0_66 = arith.constant 0 : index
    %c0_67 = arith.constant 0 : index
    %c0_68 = arith.constant 0 : index
    %119 = vector.load %arg14[%c0_66, %c0_67, %c0_68] : memref<2x1x32xf32, #tpu.memory_space<vmem>>, vector<1x1x32xf32>
    %120 = vector.shape_cast %119 : vector<1x1x32xf32> to vector<1x32xf32>
    %cst_69 = arith.constant dense<0.000000e+00> : vector<2x8xf32>
    %121 = vector.multi_reduction <add>, %116, %cst_69 [2] : vector<2x8x32xf32> to vector<2x8xf32>
    %122 = vector.shape_cast %121 : vector<2x8xf32> to vector<2x8x1xf32>
    %cst_70 = arith.constant 3.200000e+01 : f32
    %123 = vector.broadcast %cst_70 : f32 to vector<2x8x1xf32>
    %124 = arith.divf %122, %123 : vector<2x8x1xf32>
    %125 = vector.broadcast %124 : vector<2x8x1xf32> to vector<2x8x32xf32>
    %126 = arith.subf %116, %125 : vector<2x8x32xf32>
    %127 = arith.mulf %126, %126 : vector<2x8x32xf32>
    %cst_71 = arith.constant dense<0.000000e+00> : vector<2x8xf32>
    %128 = vector.multi_reduction <add>, %127, %cst_71 [2] : vector<2x8x32xf32> to vector<2x8xf32>
    %129 = vector.shape_cast %128 : vector<2x8xf32> to vector<2x8x1xf32>
    %cst_72 = arith.constant 3.200000e+01 : f32
    %130 = vector.broadcast %cst_72 : f32 to vector<2x8x1xf32>
    %131 = arith.divf %129, %130 : vector<2x8x1xf32>
    %cst_73 = arith.constant 9.99999974E-6 : f32
    %132 = vector.broadcast %cst_73 : f32 to vector<2x8x1xf32>
    %133 = arith.addf %131, %132 : vector<2x8x1xf32>
    %134 = math.rsqrt %133 : vector<2x8x1xf32>
    %135 = vector.broadcast %134 : vector<2x8x1xf32> to vector<2x8x32xf32>
    %136 = arith.mulf %126, %135 : vector<2x8x32xf32>
    %137 = vector.shape_cast %118 : vector<1x32xf32> to vector<1x1x32xf32>
    %138 = vector.broadcast %137 : vector<1x1x32xf32> to vector<2x8x32xf32>
    %139 = arith.mulf %136, %138 : vector<2x8x32xf32>
    %140 = vector.shape_cast %120 : vector<1x32xf32> to vector<1x1x32xf32>
    %141 = vector.broadcast %140 : vector<1x1x32xf32> to vector<2x8x32xf32>
    %142 = arith.addf %139, %141 : vector<2x8x32xf32>
    %c0_74 = arith.constant 0 : index
    %c0_75 = arith.constant 0 : index
    %c0_76 = arith.constant 0 : index
    %143 = vector.load %arg15[%c0_74, %c0_75, %c0_76] : memref<2x32x64xf32, #tpu.memory_space<vmem>>, vector<1x32x64xf32>
    %144 = vector.shape_cast %143 : vector<1x32x64xf32> to vector<32x64xf32>
    %145 = arith.truncf %142 : vector<2x8x32xf32> to vector<2x8x32xbf16>
    %146 = arith.truncf %144 : vector<32x64xf32> to vector<32x64xbf16>
    %cst_77 = arith.constant dense<0.000000e+00> : vector<2x8x64xf32>
    %147 = tpu.matmul %145, %146, %cst_77 {dimension_numbers = #tpu.dot_dimension_numbers<[2], [0], [0, 1], [1], [0, 0, 0, 1, 1, 1], [], []>} : vector<2x8x32xbf16>, vector<32x64xbf16>, vector<2x8x64xf32> -> vector<2x8x64xf32>
    %c0_78 = arith.constant 0 : index
    %c0_79 = arith.constant 0 : index
    %c0_80 = arith.constant 0 : index
    %148 = vector.load %arg16[%c0_78, %c0_79, %c0_80] : memref<2x1x64xf32, #tpu.memory_space<vmem>>, vector<1x1x64xf32>
    %149 = vector.shape_cast %148 : vector<1x1x64xf32> to vector<1x64xf32>
    %150 = vector.shape_cast %149 : vector<1x64xf32> to vector<1x1x64xf32>
    %151 = vector.broadcast %150 : vector<1x1x64xf32> to vector<2x8x64xf32>
    %152 = arith.addf %147, %151 : vector<2x8x64xf32>
    %153 = arith.mulf %152, %152 : vector<2x8x64xf32>
    %154 = arith.mulf %152, %153 : vector<2x8x64xf32>
    %cst_81 = arith.constant 4.471500e-02 : f32
    %155 = vector.broadcast %cst_81 : f32 to vector<2x8x64xf32>
    %156 = arith.mulf %155, %154 : vector<2x8x64xf32>
    %157 = arith.addf %152, %156 : vector<2x8x64xf32>
    %cst_82 = arith.constant 0.797884583 : f32
    %158 = vector.broadcast %cst_82 : f32 to vector<2x8x64xf32>
    %159 = arith.mulf %158, %157 : vector<2x8x64xf32>
    %160 = math.tanh %159 : vector<2x8x64xf32>
    %cst_83 = arith.constant 1.000000e+00 : f32
    %161 = vector.broadcast %cst_83 : f32 to vector<2x8x64xf32>
    %162 = arith.addf %161, %160 : vector<2x8x64xf32>
    %cst_84 = arith.constant 5.000000e-01 : f32
    %163 = vector.broadcast %cst_84 : f32 to vector<2x8x64xf32>
    %164 = arith.mulf %163, %162 : vector<2x8x64xf32>
    %165 = arith.mulf %152, %164 : vector<2x8x64xf32>
    %c0_85 = arith.constant 0 : index
    %c0_86 = arith.constant 0 : index
    %c0_87 = arith.constant 0 : index
    %166 = vector.load %arg17[%c0_85, %c0_86, %c0_87] : memref<2x64x32xf32, #tpu.memory_space<vmem>>, vector<1x64x32xf32>
    %167 = vector.shape_cast %166 : vector<1x64x32xf32> to vector<64x32xf32>
    %168 = arith.truncf %165 : vector<2x8x64xf32> to vector<2x8x64xbf16>
    %169 = arith.truncf %167 : vector<64x32xf32> to vector<64x32xbf16>
    %cst_88 = arith.constant dense<0.000000e+00> : vector<2x8x32xf32>
    %170 = tpu.matmul %168, %169, %cst_88 {dimension_numbers = #tpu.dot_dimension_numbers<[2], [0], [0, 1], [1], [0, 0, 0, 1, 1, 1], [], []>} : vector<2x8x64xbf16>, vector<64x32xbf16>, vector<2x8x32xf32> -> vector<2x8x32xf32>
    %c0_89 = arith.constant 0 : index
    %c0_90 = arith.constant 0 : index
    %c0_91 = arith.constant 0 : index
    %171 = vector.load %arg18[%c0_89, %c0_90, %c0_91] : memref<2x1x32xf32, #tpu.memory_space<vmem>>, vector<1x1x32xf32>
    %172 = vector.shape_cast %171 : vector<1x1x32xf32> to vector<1x32xf32>
    %173 = vector.shape_cast %172 : vector<1x32xf32> to vector<1x1x32xf32>
    %174 = vector.broadcast %173 : vector<1x1x32xf32> to vector<2x8x32xf32>
    %175 = arith.addf %170, %174 : vector<2x8x32xf32>
    %176 = arith.addf %116, %175 : vector<2x8x32xf32>
    %c1_92 = arith.constant 1 : index
    %c0_93 = arith.constant 0 : index
    %c0_94 = arith.constant 0 : index
    %177 = vector.load %arg6[%c1_92, %c0_93, %c0_94] : memref<2x1x32xf32, #tpu.memory_space<vmem>>, vector<1x1x32xf32>
    %178 = vector.shape_cast %177 : vector<1x1x32xf32> to vector<1x32xf32>
    %c1_95 = arith.constant 1 : index
    %c0_96 = arith.constant 0 : index
    %c0_97 = arith.constant 0 : index
    %179 = vector.load %arg7[%c1_95, %c0_96, %c0_97] : memref<2x1x32xf32, #tpu.memory_space<vmem>>, vector<1x1x32xf32>
    %180 = vector.shape_cast %179 : vector<1x1x32xf32> to vector<1x32xf32>
    %cst_98 = arith.constant dense<0.000000e+00> : vector<2x8xf32>
    %181 = vector.multi_reduction <add>, %176, %cst_98 [2] : vector<2x8x32xf32> to vector<2x8xf32>
    %182 = vector.shape_cast %181 : vector<2x8xf32> to vector<2x8x1xf32>
    %cst_99 = arith.constant 3.200000e+01 : f32
    %183 = vector.broadcast %cst_99 : f32 to vector<2x8x1xf32>
    %184 = arith.divf %182, %183 : vector<2x8x1xf32>
    %185 = vector.broadcast %184 : vector<2x8x1xf32> to vector<2x8x32xf32>
    %186 = arith.subf %176, %185 : vector<2x8x32xf32>
    %187 = arith.mulf %186, %186 : vector<2x8x32xf32>
    %cst_100 = arith.constant dense<0.000000e+00> : vector<2x8xf32>
    %188 = vector.multi_reduction <add>, %187, %cst_100 [2] : vector<2x8x32xf32> to vector<2x8xf32>
    %189 = vector.shape_cast %188 : vector<2x8xf32> to vector<2x8x1xf32>
    %cst_101 = arith.constant 3.200000e+01 : f32
    %190 = vector.broadcast %cst_101 : f32 to vector<2x8x1xf32>
    %191 = arith.divf %189, %190 : vector<2x8x1xf32>
    %cst_102 = arith.constant 9.99999974E-6 : f32
    %192 = vector.broadcast %cst_102 : f32 to vector<2x8x1xf32>
    %193 = arith.addf %191, %192 : vector<2x8x1xf32>
    %194 = math.rsqrt %193 : vector<2x8x1xf32>
    %195 = vector.broadcast %194 : vector<2x8x1xf32> to vector<2x8x32xf32>
    %196 = arith.mulf %186, %195 : vector<2x8x32xf32>
    %197 = vector.shape_cast %178 : vector<1x32xf32> to vector<1x1x32xf32>
    %198 = vector.broadcast %197 : vector<1x1x32xf32> to vector<2x8x32xf32>
    %199 = arith.mulf %196, %198 : vector<2x8x32xf32>
    %200 = vector.shape_cast %180 : vector<1x32xf32> to vector<1x1x32xf32>
    %201 = vector.broadcast %200 : vector<1x1x32xf32> to vector<2x8x32xf32>
    %202 = arith.addf %199, %201 : vector<2x8x32xf32>
    %203 = arith.truncf %202 : vector<2x8x32xf32> to vector<2x8x32xbf16>
    %c2 = arith.constant 2 : index
    %c0_103 = arith.constant 0 : index
    %c0_104 = arith.constant 0 : index
    %204 = vector.load %arg8[%c2, %c0_103, %c0_104] : memref<4x32x16xf32, #tpu.memory_space<vmem>>, vector<1x32x16xf32>
    %205 = vector.shape_cast %204 : vector<1x32x16xf32> to vector<32x16xf32>
    %206 = arith.truncf %205 : vector<32x16xf32> to vector<32x16xbf16>
    %cst_105 = arith.constant dense<0.000000e+00> : vector<2x8x16xf32>
    %207 = tpu.matmul %203, %206, %cst_105 {dimension_numbers = #tpu.dot_dimension_numbers<[2], [0], [0, 1], [1], [0, 0, 0, 1, 1, 1], [], []>} : vector<2x8x32xbf16>, vector<32x16xbf16>, vector<2x8x16xf32> -> vector<2x8x16xf32>
    %c2_106 = arith.constant 2 : index
    %c0_107 = arith.constant 0 : index
    %c0_108 = arith.constant 0 : index
    %208 = vector.load %arg9[%c2_106, %c0_107, %c0_108] : memref<4x32x16xf32, #tpu.memory_space<vmem>>, vector<1x32x16xf32>
    %209 = vector.shape_cast %208 : vector<1x32x16xf32> to vector<32x16xf32>
    %210 = arith.truncf %209 : vector<32x16xf32> to vector<32x16xbf16>
    %cst_109 = arith.constant dense<0.000000e+00> : vector<2x8x16xf32>
    %211 = tpu.matmul %203, %210, %cst_109 {dimension_numbers = #tpu.dot_dimension_numbers<[2], [0], [0, 1], [1], [0, 0, 0, 1, 1, 1], [], []>} : vector<2x8x32xbf16>, vector<32x16xbf16>, vector<2x8x16xf32> -> vector<2x8x16xf32>
    %c2_110 = arith.constant 2 : index
    %c0_111 = arith.constant 0 : index
    %c0_112 = arith.constant 0 : index
    %212 = vector.load %arg10[%c2_110, %c0_111, %c0_112] : memref<4x32x16xf32, #tpu.memory_space<vmem>>, vector<1x32x16xf32>
    %213 = vector.shape_cast %212 : vector<1x32x16xf32> to vector<32x16xf32>
    %214 = arith.truncf %213 : vector<32x16xf32> to vector<32x16xbf16>
    %cst_113 = arith.constant dense<0.000000e+00> : vector<2x8x16xf32>
    %215 = tpu.matmul %203, %214, %cst_113 {dimension_numbers = #tpu.dot_dimension_numbers<[2], [0], [0, 1], [1], [0, 0, 0, 1, 1, 1], [], []>} : vector<2x8x32xbf16>, vector<32x16xbf16>, vector<2x8x16xf32> -> vector<2x8x16xf32>
    %cst_114 = arith.constant 2.500000e-01 : f32
    %216 = vector.broadcast %cst_114 : f32 to vector<2x8x16xf32>
    %217 = arith.mulf %207, %216 : vector<2x8x16xf32>
    %218 = arith.truncf %217 : vector<2x8x16xf32> to vector<2x8x16xbf16>
    %219 = arith.truncf %211 : vector<2x8x16xf32> to vector<2x8x16xbf16>
    %cst_115 = arith.constant dense<0.000000e+00> : vector<2x8x8xf32>
    %220 = tpu.matmul %218, %219, %cst_115 {dimension_numbers = #tpu.dot_dimension_numbers<[2], [2], [1], [1], [0, 0, 0, 1, 1, 1], [0], [0]>} : vector<2x8x16xbf16>, vector<2x8x16xbf16>, vector<2x8x8xf32> -> vector<2x8x8xf32>
    %cst_116 = arith.constant dense<0xFF800000> : vector<2x8xf32>
    %221 = vector.multi_reduction <maximumf>, %220, %cst_116 [2] : vector<2x8x8xf32> to vector<2x8xf32>
    %222 = vector.shape_cast %221 : vector<2x8xf32> to vector<2x8x1xf32>
    %223 = vector.broadcast %222 : vector<2x8x1xf32> to vector<2x8x8xf32>
    %224 = arith.subf %220, %223 : vector<2x8x8xf32>
    %225 = math.exp %224 : vector<2x8x8xf32>
    %cst_117 = arith.constant dense<0.000000e+00> : vector<2x8xf32>
    %226 = vector.multi_reduction <add>, %225, %cst_117 [2] : vector<2x8x8xf32> to vector<2x8xf32>
    %227 = vector.shape_cast %226 : vector<2x8xf32> to vector<2x8x1xf32>
    %228 = tpu.reciprocal %227 {approx = true} : vector<2x8x1xf32> -> vector<2x8x1xf32>
    %229 = vector.broadcast %228 : vector<2x8x1xf32> to vector<2x8x8xf32>
    %230 = arith.mulf %225, %229 : vector<2x8x8xf32>
    %231 = arith.truncf %230 : vector<2x8x8xf32> to vector<2x8x8xbf16>
    %232 = arith.truncf %215 : vector<2x8x16xf32> to vector<2x8x16xbf16>
    %cst_118 = arith.constant dense<0.000000e+00> : vector<2x8x16xf32>
    %233 = tpu.matmul %231, %232, %cst_118 {dimension_numbers = #tpu.dot_dimension_numbers<[2], [1], [1], [2], [0, 0, 0, 1, 1, 2], [0], [0]>} : vector<2x8x8xbf16>, vector<2x8x16xbf16>, vector<2x8x16xf32> -> vector<2x8x16xf32>
    %234 = arith.truncf %233 : vector<2x8x16xf32> to vector<2x8x16xbf16>
    %c2_119 = arith.constant 2 : index
    %c0_120 = arith.constant 0 : index
    %c0_121 = arith.constant 0 : index
    %235 = vector.load %arg11[%c2_119, %c0_120, %c0_121] : memref<4x16x32xf32, #tpu.memory_space<vmem>>, vector<1x16x32xf32>
    %236 = vector.shape_cast %235 : vector<1x16x32xf32> to vector<16x32xf32>
    %237 = arith.truncf %236 : vector<16x32xf32> to vector<16x32xbf16>
    %cst_122 = arith.constant dense<0.000000e+00> : vector<2x8x32xf32>
    %238 = tpu.matmul %234, %237, %cst_122 {dimension_numbers = #tpu.dot_dimension_numbers<[2], [0], [0, 1], [1], [0, 0, 0, 1, 1, 1], [], []>} : vector<2x8x16xbf16>, vector<16x32xbf16>, vector<2x8x32xf32> -> vector<2x8x32xf32>
    %c3 = arith.constant 3 : index
    %c0_123 = arith.constant 0 : index
    %c0_124 = arith.constant 0 : index
    %239 = vector.load %arg8[%c3, %c0_123, %c0_124] : memref<4x32x16xf32, #tpu.memory_space<vmem>>, vector<1x32x16xf32>
    %240 = vector.shape_cast %239 : vector<1x32x16xf32> to vector<32x16xf32>
    %241 = arith.truncf %240 : vector<32x16xf32> to vector<32x16xbf16>
    %cst_125 = arith.constant dense<0.000000e+00> : vector<2x8x16xf32>
    %242 = tpu.matmul %203, %241, %cst_125 {dimension_numbers = #tpu.dot_dimension_numbers<[2], [0], [0, 1], [1], [0, 0, 0, 1, 1, 1], [], []>} : vector<2x8x32xbf16>, vector<32x16xbf16>, vector<2x8x16xf32> -> vector<2x8x16xf32>
    %c3_126 = arith.constant 3 : index
    %c0_127 = arith.constant 0 : index
    %c0_128 = arith.constant 0 : index
    %243 = vector.load %arg9[%c3_126, %c0_127, %c0_128] : memref<4x32x16xf32, #tpu.memory_space<vmem>>, vector<1x32x16xf32>
    %244 = vector.shape_cast %243 : vector<1x32x16xf32> to vector<32x16xf32>
    %245 = arith.truncf %244 : vector<32x16xf32> to vector<32x16xbf16>
    %cst_129 = arith.constant dense<0.000000e+00> : vector<2x8x16xf32>
    %246 = tpu.matmul %203, %245, %cst_129 {dimension_numbers = #tpu.dot_dimension_numbers<[2], [0], [0, 1], [1], [0, 0, 0, 1, 1, 1], [], []>} : vector<2x8x32xbf16>, vector<32x16xbf16>, vector<2x8x16xf32> -> vector<2x8x16xf32>
    %c3_130 = arith.constant 3 : index
    %c0_131 = arith.constant 0 : index
    %c0_132 = arith.constant 0 : index
    %247 = vector.load %arg10[%c3_130, %c0_131, %c0_132] : memref<4x32x16xf32, #tpu.memory_space<vmem>>, vector<1x32x16xf32>
    %248 = vector.shape_cast %247 : vector<1x32x16xf32> to vector<32x16xf32>
    %249 = arith.truncf %248 : vector<32x16xf32> to vector<32x16xbf16>
    %cst_133 = arith.constant dense<0.000000e+00> : vector<2x8x16xf32>
    %250 = tpu.matmul %203, %249, %cst_133 {dimension_numbers = #tpu.dot_dimension_numbers<[2], [0], [0, 1], [1], [0, 0, 0, 1, 1, 1], [], []>} : vector<2x8x32xbf16>, vector<32x16xbf16>, vector<2x8x16xf32> -> vector<2x8x16xf32>
    %cst_134 = arith.constant 2.500000e-01 : f32
    %251 = vector.broadcast %cst_134 : f32 to vector<2x8x16xf32>
    %252 = arith.mulf %242, %251 : vector<2x8x16xf32>
    %253 = arith.truncf %252 : vector<2x8x16xf32> to vector<2x8x16xbf16>
    %254 = arith.truncf %246 : vector<2x8x16xf32> to vector<2x8x16xbf16>
    %cst_135 = arith.constant dense<0.000000e+00> : vector<2x8x8xf32>
    %255 = tpu.matmul %253, %254, %cst_135 {dimension_numbers = #tpu.dot_dimension_numbers<[2], [2], [1], [1], [0, 0, 0, 1, 1, 1], [0], [0]>} : vector<2x8x16xbf16>, vector<2x8x16xbf16>, vector<2x8x8xf32> -> vector<2x8x8xf32>
    %cst_136 = arith.constant dense<0xFF800000> : vector<2x8xf32>
    %256 = vector.multi_reduction <maximumf>, %255, %cst_136 [2] : vector<2x8x8xf32> to vector<2x8xf32>
    %257 = vector.shape_cast %256 : vector<2x8xf32> to vector<2x8x1xf32>
    %258 = vector.broadcast %257 : vector<2x8x1xf32> to vector<2x8x8xf32>
    %259 = arith.subf %255, %258 : vector<2x8x8xf32>
    %260 = math.exp %259 : vector<2x8x8xf32>
    %cst_137 = arith.constant dense<0.000000e+00> : vector<2x8xf32>
    %261 = vector.multi_reduction <add>, %260, %cst_137 [2] : vector<2x8x8xf32> to vector<2x8xf32>
    %262 = vector.shape_cast %261 : vector<2x8xf32> to vector<2x8x1xf32>
    %263 = tpu.reciprocal %262 {approx = true} : vector<2x8x1xf32> -> vector<2x8x1xf32>
    %264 = vector.broadcast %263 : vector<2x8x1xf32> to vector<2x8x8xf32>
    %265 = arith.mulf %260, %264 : vector<2x8x8xf32>
    %266 = arith.truncf %265 : vector<2x8x8xf32> to vector<2x8x8xbf16>
    %267 = arith.truncf %250 : vector<2x8x16xf32> to vector<2x8x16xbf16>
    %cst_138 = arith.constant dense<0.000000e+00> : vector<2x8x16xf32>
    %268 = tpu.matmul %266, %267, %cst_138 {dimension_numbers = #tpu.dot_dimension_numbers<[2], [1], [1], [2], [0, 0, 0, 1, 1, 2], [0], [0]>} : vector<2x8x8xbf16>, vector<2x8x16xbf16>, vector<2x8x16xf32> -> vector<2x8x16xf32>
    %269 = arith.truncf %268 : vector<2x8x16xf32> to vector<2x8x16xbf16>
    %c3_139 = arith.constant 3 : index
    %c0_140 = arith.constant 0 : index
    %c0_141 = arith.constant 0 : index
    %270 = vector.load %arg11[%c3_139, %c0_140, %c0_141] : memref<4x16x32xf32, #tpu.memory_space<vmem>>, vector<1x16x32xf32>
    %271 = vector.shape_cast %270 : vector<1x16x32xf32> to vector<16x32xf32>
    %272 = arith.truncf %271 : vector<16x32xf32> to vector<16x32xbf16>
    %cst_142 = arith.constant dense<0.000000e+00> : vector<2x8x32xf32>
    %273 = tpu.matmul %269, %272, %cst_142 {dimension_numbers = #tpu.dot_dimension_numbers<[2], [0], [0, 1], [1], [0, 0, 0, 1, 1, 1], [], []>} : vector<2x8x16xbf16>, vector<16x32xbf16>, vector<2x8x32xf32> -> vector<2x8x32xf32>
    %274 = arith.addf %238, %273 : vector<2x8x32xf32>
    %275 = arith.addf %176, %274 : vector<2x8x32xf32>
    %c1_143 = arith.constant 1 : index
    %c0_144 = arith.constant 0 : index
    %c0_145 = arith.constant 0 : index
    %276 = vector.load %arg12[%c1_143, %c0_144, %c0_145] : memref<2x1x32xf32, #tpu.memory_space<vmem>>, vector<1x1x32xf32>
    %277 = vector.shape_cast %276 : vector<1x1x32xf32> to vector<1x32xf32>
    %278 = vector.shape_cast %277 : vector<1x32xf32> to vector<1x1x32xf32>
    %279 = vector.broadcast %278 : vector<1x1x32xf32> to vector<2x8x32xf32>
    %280 = arith.addf %275, %279 : vector<2x8x32xf32>
    %c1_146 = arith.constant 1 : index
    %c0_147 = arith.constant 0 : index
    %c0_148 = arith.constant 0 : index
    %281 = vector.load %arg13[%c1_146, %c0_147, %c0_148] : memref<2x1x32xf32, #tpu.memory_space<vmem>>, vector<1x1x32xf32>
    %282 = vector.shape_cast %281 : vector<1x1x32xf32> to vector<1x32xf32>
    %c1_149 = arith.constant 1 : index
    %c0_150 = arith.constant 0 : index
    %c0_151 = arith.constant 0 : index
    %283 = vector.load %arg14[%c1_149, %c0_150, %c0_151] : memref<2x1x32xf32, #tpu.memory_space<vmem>>, vector<1x1x32xf32>
    %284 = vector.shape_cast %283 : vector<1x1x32xf32> to vector<1x32xf32>
    %cst_152 = arith.constant dense<0.000000e+00> : vector<2x8xf32>
    %285 = vector.multi_reduction <add>, %280, %cst_152 [2] : vector<2x8x32xf32> to vector<2x8xf32>
    %286 = vector.shape_cast %285 : vector<2x8xf32> to vector<2x8x1xf32>
    %cst_153 = arith.constant 3.200000e+01 : f32
    %287 = vector.broadcast %cst_153 : f32 to vector<2x8x1xf32>
    %288 = arith.divf %286, %287 : vector<2x8x1xf32>
    %289 = vector.broadcast %288 : vector<2x8x1xf32> to vector<2x8x32xf32>
    %290 = arith.subf %280, %289 : vector<2x8x32xf32>
    %291 = arith.mulf %290, %290 : vector<2x8x32xf32>
    %cst_154 = arith.constant dense<0.000000e+00> : vector<2x8xf32>
    %292 = vector.multi_reduction <add>, %291, %cst_154 [2] : vector<2x8x32xf32> to vector<2x8xf32>
    %293 = vector.shape_cast %292 : vector<2x8xf32> to vector<2x8x1xf32>
    %cst_155 = arith.constant 3.200000e+01 : f32
    %294 = vector.broadcast %cst_155 : f32 to vector<2x8x1xf32>
    %295 = arith.divf %293, %294 : vector<2x8x1xf32>
    %cst_156 = arith.constant 9.99999974E-6 : f32
    %296 = vector.broadcast %cst_156 : f32 to vector<2x8x1xf32>
    %297 = arith.addf %295, %296 : vector<2x8x1xf32>
    %298 = math.rsqrt %297 : vector<2x8x1xf32>
    %299 = vector.broadcast %298 : vector<2x8x1xf32> to vector<2x8x32xf32>
    %300 = arith.mulf %290, %299 : vector<2x8x32xf32>
    %301 = vector.shape_cast %282 : vector<1x32xf32> to vector<1x1x32xf32>
    %302 = vector.broadcast %301 : vector<1x1x32xf32> to vector<2x8x32xf32>
    %303 = arith.mulf %300, %302 : vector<2x8x32xf32>
    %304 = vector.shape_cast %284 : vector<1x32xf32> to vector<1x1x32xf32>
    %305 = vector.broadcast %304 : vector<1x1x32xf32> to vector<2x8x32xf32>
    %306 = arith.addf %303, %305 : vector<2x8x32xf32>
    %c1_157 = arith.constant 1 : index
    %c0_158 = arith.constant 0 : index
    %c0_159 = arith.constant 0 : index
    %307 = vector.load %arg15[%c1_157, %c0_158, %c0_159] : memref<2x32x64xf32, #tpu.memory_space<vmem>>, vector<1x32x64xf32>
    %308 = vector.shape_cast %307 : vector<1x32x64xf32> to vector<32x64xf32>
    %309 = arith.truncf %306 : vector<2x8x32xf32> to vector<2x8x32xbf16>
    %310 = arith.truncf %308 : vector<32x64xf32> to vector<32x64xbf16>
    %cst_160 = arith.constant dense<0.000000e+00> : vector<2x8x64xf32>
    %311 = tpu.matmul %309, %310, %cst_160 {dimension_numbers = #tpu.dot_dimension_numbers<[2], [0], [0, 1], [1], [0, 0, 0, 1, 1, 1], [], []>} : vector<2x8x32xbf16>, vector<32x64xbf16>, vector<2x8x64xf32> -> vector<2x8x64xf32>
    %c1_161 = arith.constant 1 : index
    %c0_162 = arith.constant 0 : index
    %c0_163 = arith.constant 0 : index
    %312 = vector.load %arg16[%c1_161, %c0_162, %c0_163] : memref<2x1x64xf32, #tpu.memory_space<vmem>>, vector<1x1x64xf32>
    %313 = vector.shape_cast %312 : vector<1x1x64xf32> to vector<1x64xf32>
    %314 = vector.shape_cast %313 : vector<1x64xf32> to vector<1x1x64xf32>
    %315 = vector.broadcast %314 : vector<1x1x64xf32> to vector<2x8x64xf32>
    %316 = arith.addf %311, %315 : vector<2x8x64xf32>
    %317 = arith.mulf %316, %316 : vector<2x8x64xf32>
    %318 = arith.mulf %316, %317 : vector<2x8x64xf32>
    %cst_164 = arith.constant 4.471500e-02 : f32
    %319 = vector.broadcast %cst_164 : f32 to vector<2x8x64xf32>
    %320 = arith.mulf %319, %318 : vector<2x8x64xf32>
    %321 = arith.addf %316, %320 : vector<2x8x64xf32>
    %cst_165 = arith.constant 0.797884583 : f32
    %322 = vector.broadcast %cst_165 : f32 to vector<2x8x64xf32>
    %323 = arith.mulf %322, %321 : vector<2x8x64xf32>
    %324 = math.tanh %323 : vector<2x8x64xf32>
    %cst_166 = arith.constant 1.000000e+00 : f32
    %325 = vector.broadcast %cst_166 : f32 to vector<2x8x64xf32>
    %326 = arith.addf %325, %324 : vector<2x8x64xf32>
    %cst_167 = arith.constant 5.000000e-01 : f32
    %327 = vector.broadcast %cst_167 : f32 to vector<2x8x64xf32>
    %328 = arith.mulf %327, %326 : vector<2x8x64xf32>
    %329 = arith.mulf %316, %328 : vector<2x8x64xf32>
    %c1_168 = arith.constant 1 : index
    %c0_169 = arith.constant 0 : index
    %c0_170 = arith.constant 0 : index
    %330 = vector.load %arg17[%c1_168, %c0_169, %c0_170] : memref<2x64x32xf32, #tpu.memory_space<vmem>>, vector<1x64x32xf32>
    %331 = vector.shape_cast %330 : vector<1x64x32xf32> to vector<64x32xf32>
    %332 = arith.truncf %329 : vector<2x8x64xf32> to vector<2x8x64xbf16>
    %333 = arith.truncf %331 : vector<64x32xf32> to vector<64x32xbf16>
    %cst_171 = arith.constant dense<0.000000e+00> : vector<2x8x32xf32>
    %334 = tpu.matmul %332, %333, %cst_171 {dimension_numbers = #tpu.dot_dimension_numbers<[2], [0], [0, 1], [1], [0, 0, 0, 1, 1, 1], [], []>} : vector<2x8x64xbf16>, vector<64x32xbf16>, vector<2x8x32xf32> -> vector<2x8x32xf32>
    %c1_172 = arith.constant 1 : index
    %c0_173 = arith.constant 0 : index
    %c0_174 = arith.constant 0 : index
    %335 = vector.load %arg18[%c1_172, %c0_173, %c0_174] : memref<2x1x32xf32, #tpu.memory_space<vmem>>, vector<1x1x32xf32>
    %336 = vector.shape_cast %335 : vector<1x1x32xf32> to vector<1x32xf32>
    %337 = vector.shape_cast %336 : vector<1x32xf32> to vector<1x1x32xf32>
    %338 = vector.broadcast %337 : vector<1x1x32xf32> to vector<2x8x32xf32>
    %339 = arith.addf %334, %338 : vector<2x8x32xf32>
    %340 = arith.addf %280, %339 : vector<2x8x32xf32>
    %c0_175 = arith.constant 0 : index
    %c0_176 = arith.constant 0 : index
    %341 = vector.load %arg19[%c0_175, %c0_176] : memref<1x32xf32, #tpu.memory_space<vmem>>, vector<1x32xf32>
    %c0_177 = arith.constant 0 : index
    %c0_178 = arith.constant 0 : index
    %342 = vector.load %arg20[%c0_177, %c0_178] : memref<1x32xf32, #tpu.memory_space<vmem>>, vector<1x32xf32>
    %cst_179 = arith.constant dense<0.000000e+00> : vector<2x8xf32>
    %343 = vector.multi_reduction <add>, %340, %cst_179 [2] : vector<2x8x32xf32> to vector<2x8xf32>
    %344 = vector.shape_cast %343 : vector<2x8xf32> to vector<2x8x1xf32>
    %cst_180 = arith.constant 3.200000e+01 : f32
    %345 = vector.broadcast %cst_180 : f32 to vector<2x8x1xf32>
    %346 = arith.divf %344, %345 : vector<2x8x1xf32>
    %347 = vector.broadcast %346 : vector<2x8x1xf32> to vector<2x8x32xf32>
    %348 = arith.subf %340, %347 : vector<2x8x32xf32>
    %349 = arith.mulf %348, %348 : vector<2x8x32xf32>
    %cst_181 = arith.constant dense<0.000000e+00> : vector<2x8xf32>
    %350 = vector.multi_reduction <add>, %349, %cst_181 [2] : vector<2x8x32xf32> to vector<2x8xf32>
    %351 = vector.shape_cast %350 : vector<2x8xf32> to vector<2x8x1xf32>
    %cst_182 = arith.constant 3.200000e+01 : f32
    %352 = vector.broadcast %cst_182 : f32 to vector<2x8x1xf32>
    %353 = arith.divf %351, %352 : vector<2x8x1xf32>
    %cst_183 = arith.constant 9.99999974E-6 : f32
    %354 = vector.broadcast %cst_183 : f32 to vector<2x8x1xf32>
    %355 = arith.addf %353, %354 : vector<2x8x1xf32>
    %356 = math.rsqrt %355 : vector<2x8x1xf32>
    %357 = vector.broadcast %356 : vector<2x8x1xf32> to vector<2x8x32xf32>
    %358 = arith.mulf %348, %357 : vector<2x8x32xf32>
    %359 = vector.shape_cast %341 : vector<1x32xf32> to vector<1x1x32xf32>
    %360 = vector.broadcast %359 : vector<1x1x32xf32> to vector<2x8x32xf32>
    %361 = arith.mulf %358, %360 : vector<2x8x32xf32>
    %362 = vector.shape_cast %342 : vector<1x32xf32> to vector<1x1x32xf32>
    %363 = vector.broadcast %362 : vector<1x1x32xf32> to vector<2x8x32xf32>
    %364 = arith.addf %361, %363 : vector<2x8x32xf32>
    %cst_184 = arith.constant 1.000000e+00 : f32
    %365 = vector.broadcast %cst_184 : f32 to vector<1x32xf32>
    %c0_185 = arith.constant 0 : index
    %c0_186 = arith.constant 0 : index
    %c0_187 = arith.constant 0 : index
    %366 = vector.load %arg21[%c0_185, %c0_186, %c0_187] : memref<2x64x32xf32, #tpu.memory_space<vmem>>, vector<1x64x32xf32>
    %367 = vector.shape_cast %366 : vector<1x64x32xf32> to vector<64x32xf32>
    %368 = arith.mulf %367, %367 : vector<64x32xf32>
    %cst_188 = arith.constant dense<0.000000e+00> : vector<1x64xf32>
    %369 = tpu.matmul %365, %368, %cst_188 {dimension_numbers = #tpu.dot_dimension_numbers<[1], [1], [0], [0], [0, 0, 1, 0], [], []>} : vector<1x32xf32>, vector<64x32xf32>, vector<1x64xf32> -> vector<1x64xf32>
    %370 = vector.shape_cast %369 : vector<1x64xf32> to vector<1x1x64xf32>
    %c1_189 = arith.constant 1 : index
    %c0_190 = arith.constant 0 : index
    %c0_191 = arith.constant 0 : index
    %371 = vector.load %arg21[%c1_189, %c0_190, %c0_191] : memref<2x64x32xf32, #tpu.memory_space<vmem>>, vector<1x64x32xf32>
    %372 = vector.shape_cast %371 : vector<1x64x32xf32> to vector<64x32xf32>
    %373 = arith.mulf %372, %372 : vector<64x32xf32>
    %cst_192 = arith.constant dense<0.000000e+00> : vector<1x64xf32>
    %374 = tpu.matmul %365, %373, %cst_192 {dimension_numbers = #tpu.dot_dimension_numbers<[1], [1], [0], [0], [0, 0, 1, 0], [], []>} : vector<1x32xf32>, vector<64x32xf32>, vector<1x64xf32> -> vector<1x64xf32>
    %375 = vector.shape_cast %374 : vector<1x64xf32> to vector<1x1x64xf32>
    %cst_193 = arith.constant 0.000000e+00 : f32
    %376 = vector.broadcast %cst_193 : f32 to vector<2x8x32xf32>
    %cst_194 = arith.constant 0.000000e+00 : f32
    %377 = vector.broadcast %cst_194 : f32 to vector<1x1x1xf32>
    %c0_195 = arith.constant 0 : index
    %c0_196 = arith.constant 0 : index
    %c0_197 = arith.constant 0 : index
    %378 = vector.load %arg21[%c0_195, %c0_196, %c0_197] : memref<2x64x32xf32, #tpu.memory_space<vmem>>, vector<1x64x32xf32>
    %379 = vector.shape_cast %378 : vector<1x64x32xf32> to vector<64x32xf32>
    %cst_198 = arith.constant dense<0.000000e+00> : vector<2x8x64xf32>
    %380 = tpu.matmul %364, %379, %cst_198 {dimension_numbers = #tpu.dot_dimension_numbers<[2], [1], [0, 1], [0], [0, 0, 0, 1, 1, 0], [], []>} : vector<2x8x32xf32>, vector<64x32xf32>, vector<2x8x64xf32> -> vector<2x8x64xf32>
    %cst_199 = arith.constant 2.000000e+00 : f32
    %381 = vector.broadcast %cst_199 : f32 to vector<2x8x64xf32>
    %382 = arith.mulf %381, %380 : vector<2x8x64xf32>
    %383 = vector.broadcast %370 : vector<1x1x64xf32> to vector<2x8x64xf32>
    %384 = arith.subf %383, %382 : vector<2x8x64xf32>
    %cst_200 = arith.constant dense<0x7F800000> : vector<2x8xf32>
    %385 = vector.multi_reduction <minimumf>, %384, %cst_200 [2] : vector<2x8x64xf32> to vector<2x8xf32>
    %386 = vector.shape_cast %385 : vector<2x8xf32> to vector<2x8x1xf32>
    %387 = tpu.iota {dimensions = array<i32: 2>} : vector<2x8x64xi32>
    %388 = vector.broadcast %386 : vector<2x8x1xf32> to vector<2x8x64xf32>
    %389 = arith.cmpf ole, %384, %388 : vector<2x8x64xf32>
    %c64_i32 = arith.constant 64 : i32
    %390 = vector.broadcast %c64_i32 : i32 to vector<2x8x64xi32>
    %391 = arith.select %389, %387, %390 : vector<2x8x64xi1>, vector<2x8x64xi32>
    %cst_201 = arith.constant dense<2147483647> : vector<2x8xi32>
    %392 = vector.multi_reduction <minsi>, %391, %cst_201 [2] : vector<2x8x64xi32> to vector<2x8xi32>
    %393 = vector.shape_cast %392 : vector<2x8xi32> to vector<2x8x1xi32>
    %394 = vector.broadcast %393 : vector<2x8x1xi32> to vector<2x8x64xi32>
    %395 = arith.cmpi eq, %387, %394 : vector<2x8x64xi32>
    %396 = arith.extui %395 : vector<2x8x64xi1> to vector<2x8x64xi32>
    %397 = arith.sitofp %396 : vector<2x8x64xi32> to vector<2x8x64xf32>
    %cst_202 = arith.constant dense<0.000000e+00> : vector<2x8x32xf32>
    %398 = tpu.matmul %397, %379, %cst_202 {dimension_numbers = #tpu.dot_dimension_numbers<[2], [0], [0, 1], [1], [0, 0, 0, 1, 1, 1], [], []>} : vector<2x8x64xf32>, vector<64x32xf32>, vector<2x8x32xf32> -> vector<2x8x32xf32>
    %399 = arith.subf %398, %364 : vector<2x8x32xf32>
    %400 = arith.mulf %399, %399 : vector<2x8x32xf32>
    %cst_203 = arith.constant dense<0.000000e+00> : vector<2x8xf32>
    %401 = vector.multi_reduction <add>, %400, %cst_203 [2] : vector<2x8x32xf32> to vector<2x8xf32>
    %402 = vector.shape_cast %401 : vector<2x8xf32> to vector<2x8x1xf32>
    %cst_204 = arith.constant dense<0.000000e+00> : vector<2x1xf32>
    %403 = vector.multi_reduction <add>, %402, %cst_204 [1] : vector<2x8x1xf32> to vector<2x1xf32>
    %404 = vector.shape_cast %403 : vector<2x1xf32> to vector<2x1x1xf32>
    %cst_205 = arith.constant dense<0.000000e+00> : vector<1x1xf32>
    %405 = vector.multi_reduction <add>, %404, %cst_205 [0] : vector<2x1x1xf32> to vector<1x1xf32>
    %406 = vector.shape_cast %405 : vector<1x1xf32> to vector<1x1x1xf32>
    %cst_206 = arith.constant 1.200000e+00 : f32
    %407 = vector.broadcast %cst_206 : f32 to vector<1x1x1xf32>
    %408 = arith.mulf %407, %406 : vector<1x1x1xf32>
    %cst_207 = arith.constant 5.120000e+02 : f32
    %409 = vector.broadcast %cst_207 : f32 to vector<1x1x1xf32>
    %410 = arith.divf %408, %409 : vector<1x1x1xf32>
    %411 = arith.addf %377, %410 : vector<1x1x1xf32>
    %412 = arith.subf %364, %398 : vector<2x8x32xf32>
    %413 = arith.addf %376, %398 : vector<2x8x32xf32>
    %c1_208 = arith.constant 1 : index
    %c0_209 = arith.constant 0 : index
    %c0_210 = arith.constant 0 : index
    %414 = vector.load %arg21[%c1_208, %c0_209, %c0_210] : memref<2x64x32xf32, #tpu.memory_space<vmem>>, vector<1x64x32xf32>
    %415 = vector.shape_cast %414 : vector<1x64x32xf32> to vector<64x32xf32>
    %cst_211 = arith.constant dense<0.000000e+00> : vector<2x8x64xf32>
    %416 = tpu.matmul %412, %415, %cst_211 {dimension_numbers = #tpu.dot_dimension_numbers<[2], [1], [0, 1], [0], [0, 0, 0, 1, 1, 0], [], []>} : vector<2x8x32xf32>, vector<64x32xf32>, vector<2x8x64xf32> -> vector<2x8x64xf32>
    %cst_212 = arith.constant 2.000000e+00 : f32
    %417 = vector.broadcast %cst_212 : f32 to vector<2x8x64xf32>
    %418 = arith.mulf %417, %416 : vector<2x8x64xf32>
    %419 = vector.broadcast %375 : vector<1x1x64xf32> to vector<2x8x64xf32>
    %420 = arith.subf %419, %418 : vector<2x8x64xf32>
    %cst_213 = arith.constant dense<0x7F800000> : vector<2x8xf32>
    %421 = vector.multi_reduction <minimumf>, %420, %cst_213 [2] : vector<2x8x64xf32> to vector<2x8xf32>
    %422 = vector.shape_cast %421 : vector<2x8xf32> to vector<2x8x1xf32>
    %423 = tpu.iota {dimensions = array<i32: 2>} : vector<2x8x64xi32>
    %424 = vector.broadcast %422 : vector<2x8x1xf32> to vector<2x8x64xf32>
    %425 = arith.cmpf ole, %420, %424 : vector<2x8x64xf32>
    %c64_i32_214 = arith.constant 64 : i32
    %426 = vector.broadcast %c64_i32_214 : i32 to vector<2x8x64xi32>
    %427 = arith.select %425, %423, %426 : vector<2x8x64xi1>, vector<2x8x64xi32>
    %cst_215 = arith.constant dense<2147483647> : vector<2x8xi32>
    %428 = vector.multi_reduction <minsi>, %427, %cst_215 [2] : vector<2x8x64xi32> to vector<2x8xi32>
    %429 = vector.shape_cast %428 : vector<2x8xi32> to vector<2x8x1xi32>
    %430 = vector.broadcast %429 : vector<2x8x1xi32> to vector<2x8x64xi32>
    %431 = arith.cmpi eq, %423, %430 : vector<2x8x64xi32>
    %432 = arith.extui %431 : vector<2x8x64xi1> to vector<2x8x64xi32>
    %433 = arith.sitofp %432 : vector<2x8x64xi32> to vector<2x8x64xf32>
    %cst_216 = arith.constant dense<0.000000e+00> : vector<2x8x32xf32>
    %434 = tpu.matmul %433, %415, %cst_216 {dimension_numbers = #tpu.dot_dimension_numbers<[2], [0], [0, 1], [1], [0, 0, 0, 1, 1, 1], [], []>} : vector<2x8x64xf32>, vector<64x32xf32>, vector<2x8x32xf32> -> vector<2x8x32xf32>
    %435 = arith.subf %434, %412 : vector<2x8x32xf32>
    %436 = arith.mulf %435, %435 : vector<2x8x32xf32>
    %cst_217 = arith.constant dense<0.000000e+00> : vector<2x8xf32>
    %437 = vector.multi_reduction <add>, %436, %cst_217 [2] : vector<2x8x32xf32> to vector<2x8xf32>
    %438 = vector.shape_cast %437 : vector<2x8xf32> to vector<2x8x1xf32>
    %cst_218 = arith.constant dense<0.000000e+00> : vector<2x1xf32>
    %439 = vector.multi_reduction <add>, %438, %cst_218 [1] : vector<2x8x1xf32> to vector<2x1xf32>
    %440 = vector.shape_cast %439 : vector<2x1xf32> to vector<2x1x1xf32>
    %cst_219 = arith.constant dense<0.000000e+00> : vector<1x1xf32>
    %441 = vector.multi_reduction <add>, %440, %cst_219 [0] : vector<2x1x1xf32> to vector<1x1xf32>
    %442 = vector.shape_cast %441 : vector<1x1xf32> to vector<1x1x1xf32>
    %cst_220 = arith.constant 1.200000e+00 : f32
    %443 = vector.broadcast %cst_220 : f32 to vector<1x1x1xf32>
    %444 = arith.mulf %443, %442 : vector<1x1x1xf32>
    %cst_221 = arith.constant 5.120000e+02 : f32
    %445 = vector.broadcast %cst_221 : f32 to vector<1x1x1xf32>
    %446 = arith.divf %444, %445 : vector<1x1x1xf32>
    %447 = arith.addf %411, %446 : vector<1x1x1xf32>
    %448 = arith.addf %413, %434 : vector<2x8x32xf32>
    %c0_222 = arith.constant 0 : index
    %c0_223 = arith.constant 0 : index
    %c0_224 = arith.constant 0 : index
    %449 = vector.load %arg44[%c0_222, %c0_223, %c0_224] : memref<2x8x32xf32, #tpu.memory_space<vmem>>, vector<2x8x32xf32>
    tpu.vector_store %arg44[%c0_222, %c0_223, %c0_224], %448 {strides = array<i32>} : memref<2x8x32xf32, #tpu.memory_space<vmem>>, vector<2x8x32xf32>,
    %450 = tpu.concatenate %393, %429 in 2 : vector<2x8x1xi32>, vector<2x8x1xi32> -> vector<2x8x2xi32>
    %c0_225 = arith.constant 0 : index
    %c0_226 = arith.constant 0 : index
    %c0_227 = arith.constant 0 : index
    %451 = vector.load %arg45[%c0_225, %c0_226, %c0_227] : memref<2x8x2xi32, #tpu.memory_space<vmem>>, vector<2x8x2xi32>
    tpu.vector_store %arg45[%c0_225, %c0_226, %c0_227], %450 {strides = array<i32>} : memref<2x8x2xi32, #tpu.memory_space<vmem>>, vector<2x8x2xi32>,
    %c0_228 = arith.constant 0 : index
    %c0_229 = arith.constant 0 : index
    %452 = vector.load %arg22[%c0_228, %c0_229] : memref<32x32xf32, #tpu.memory_space<vmem>>, vector<32x32xf32>
    %453 = arith.truncf %448 : vector<2x8x32xf32> to vector<2x8x32xbf16>
    %454 = arith.truncf %452 : vector<32x32xf32> to vector<32x32xbf16>
    %cst_230 = arith.constant dense<0.000000e+00> : vector<2x8x32xf32>
    %455 = tpu.matmul %453, %454, %cst_230 {dimension_numbers = #tpu.dot_dimension_numbers<[2], [0], [0, 1], [1], [0, 0, 0, 1, 1, 1], [], []>} : vector<2x8x32xbf16>, vector<32x32xbf16>, vector<2x8x32xf32> -> vector<2x8x32xf32>
    %c0_231 = arith.constant 0 : index
    %c0_232 = arith.constant 0 : index
    %456 = vector.load %arg23[%c0_231, %c0_232] : memref<1x32xf32, #tpu.memory_space<vmem>>, vector<1x32xf32>
    %457 = vector.shape_cast %456 : vector<1x32xf32> to vector<1x1x32xf32>
    %458 = vector.broadcast %457 : vector<1x1x32xf32> to vector<2x8x32xf32>
    %459 = arith.addf %455, %458 : vector<2x8x32xf32>
    %c0_233 = arith.constant 0 : index
    %c0_234 = arith.constant 0 : index
    %c0_235 = arith.constant 0 : index
    %460 = vector.load %arg1[%c0_233, %c0_234, %c0_235] : memref<2x8x1xi32, #tpu.memory_space<vmem>>, vector<2x8x1xi32>
    %461 = tpu.iota {dimensions = array<i32: 2>} : vector<2x8x128xi32>
    %462 = vector.broadcast %460 : vector<2x8x1xi32> to vector<2x8x128xi32>
    %463 = arith.cmpi eq, %461, %462 : vector<2x8x128xi32>
    %464 = arith.extui %463 : vector<2x8x128xi1> to vector<2x8x128xi32>
    %465 = arith.sitofp %464 : vector<2x8x128xi32> to vector<2x8x128xf32>
    %c0_236 = arith.constant 0 : index
    %c0_237 = arith.constant 0 : index
    %466 = vector.load %arg24[%c0_236, %c0_237] : memref<128x32xf32, #tpu.memory_space<vmem>>, vector<128x32xf32>
    %cst_238 = arith.constant dense<0.000000e+00> : vector<2x8x32xf32>
    %467 = tpu.matmul %465, %466, %cst_238 {dimension_numbers = #tpu.dot_dimension_numbers<[2], [0], [0, 1], [1], [0, 0, 0, 1, 1, 1], [], []>} : vector<2x8x128xf32>, vector<128x32xf32>, vector<2x8x32xf32> -> vector<2x8x32xf32>
    %468 = tpu.concatenate %459, %467 in 1 : vector<2x8x32xf32>, vector<2x8x32xf32> -> vector<2x16x32xf32>
    %c0_239 = arith.constant 0 : index
    %c0_240 = arith.constant 0 : index
    %469 = vector.load %arg25[%c0_239, %c0_240] : memref<16x32xf32, #tpu.memory_space<vmem>>, vector<16x32xf32>
    %470 = vector.shape_cast %469 : vector<16x32xf32> to vector<1x16x32xf32>
    %471 = vector.broadcast %470 : vector<1x16x32xf32> to vector<2x16x32xf32>
    %472 = arith.addf %468, %471 : vector<2x16x32xf32>
    %473 = tpu.iota {dimensions = array<i32: 0>} : vector<16x16xi32>
    %474 = tpu.iota {dimensions = array<i32: 1>} : vector<16x16xi32>
    %475 = arith.cmpi sle, %474, %473 : vector<16x16xi32>
    %cst_241 = arith.constant 0.000000e+00 : f32
    %cst_242 = arith.constant -1.000000e+30 : f32
    %476 = vector.broadcast %cst_241 : f32 to vector<16x16xf32>
    %477 = vector.broadcast %cst_242 : f32 to vector<16x16xf32>
    %478 = arith.select %475, %476, %477 : vector<16x16xi1>, vector<16x16xf32>
    %c0_243 = arith.constant 0 : index
    %c0_244 = arith.constant 0 : index
    %c0_245 = arith.constant 0 : index
    %479 = vector.load %arg26[%c0_243, %c0_244, %c0_245] : memref<2x1x32xf32, #tpu.memory_space<vmem>>, vector<1x1x32xf32>
    %480 = vector.shape_cast %479 : vector<1x1x32xf32> to vector<1x32xf32>
    %c0_246 = arith.constant 0 : index
    %c0_247 = arith.constant 0 : index
    %c0_248 = arith.constant 0 : index
    %481 = vector.load %arg27[%c0_246, %c0_247, %c0_248] : memref<2x1x32xf32, #tpu.memory_space<vmem>>, vector<1x1x32xf32>
    %482 = vector.shape_cast %481 : vector<1x1x32xf32> to vector<1x32xf32>
    %cst_249 = arith.constant dense<0.000000e+00> : vector<2x16xf32>
    %483 = vector.multi_reduction <add>, %472, %cst_249 [2] : vector<2x16x32xf32> to vector<2x16xf32>
    %484 = vector.shape_cast %483 : vector<2x16xf32> to vector<2x16x1xf32>
    %cst_250 = arith.constant 3.200000e+01 : f32
    %485 = vector.broadcast %cst_250 : f32 to vector<2x16x1xf32>
    %486 = arith.divf %484, %485 : vector<2x16x1xf32>
    %487 = vector.broadcast %486 : vector<2x16x1xf32> to vector<2x16x32xf32>
    %488 = arith.subf %472, %487 : vector<2x16x32xf32>
    %489 = arith.mulf %488, %488 : vector<2x16x32xf32>
    %cst_251 = arith.constant dense<0.000000e+00> : vector<2x16xf32>
    %490 = vector.multi_reduction <add>, %489, %cst_251 [2] : vector<2x16x32xf32> to vector<2x16xf32>
    %491 = vector.shape_cast %490 : vector<2x16xf32> to vector<2x16x1xf32>
    %cst_252 = arith.constant 3.200000e+01 : f32
    %492 = vector.broadcast %cst_252 : f32 to vector<2x16x1xf32>
    %493 = arith.divf %491, %492 : vector<2x16x1xf32>
    %cst_253 = arith.constant 9.99999974E-6 : f32
    %494 = vector.broadcast %cst_253 : f32 to vector<2x16x1xf32>
    %495 = arith.addf %493, %494 : vector<2x16x1xf32>
    %496 = math.rsqrt %495 : vector<2x16x1xf32>
    %497 = vector.broadcast %496 : vector<2x16x1xf32> to vector<2x16x32xf32>
    %498 = arith.mulf %488, %497 : vector<2x16x32xf32>
    %499 = vector.shape_cast %480 : vector<1x32xf32> to vector<1x1x32xf32>
    %500 = vector.broadcast %499 : vector<1x1x32xf32> to vector<2x16x32xf32>
    %501 = arith.mulf %498, %500 : vector<2x16x32xf32>
    %502 = vector.shape_cast %482 : vector<1x32xf32> to vector<1x1x32xf32>
    %503 = vector.broadcast %502 : vector<1x1x32xf32> to vector<2x16x32xf32>
    %504 = arith.addf %501, %503 : vector<2x16x32xf32>
    %505 = arith.truncf %504 : vector<2x16x32xf32> to vector<2x16x32xbf16>
    %c0_254 = arith.constant 0 : index
    %c0_255 = arith.constant 0 : index
    %c0_256 = arith.constant 0 : index
    %506 = vector.load %arg28[%c0_254, %c0_255, %c0_256] : memref<4x32x16xf32, #tpu.memory_space<vmem>>, vector<1x32x16xf32>
    %507 = vector.shape_cast %506 : vector<1x32x16xf32> to vector<32x16xf32>
    %508 = arith.truncf %507 : vector<32x16xf32> to vector<32x16xbf16>
    %cst_257 = arith.constant dense<0.000000e+00> : vector<2x16x16xf32>
    %509 = tpu.matmul %505, %508, %cst_257 {dimension_numbers = #tpu.dot_dimension_numbers<[2], [0], [0, 1], [1], [0, 0, 0, 1, 1, 1], [], []>} : vector<2x16x32xbf16>, vector<32x16xbf16>, vector<2x16x16xf32> -> vector<2x16x16xf32>
    %c0_258 = arith.constant 0 : index
    %c0_259 = arith.constant 0 : index
    %c0_260 = arith.constant 0 : index
    %510 = vector.load %arg29[%c0_258, %c0_259, %c0_260] : memref<4x32x16xf32, #tpu.memory_space<vmem>>, vector<1x32x16xf32>
    %511 = vector.shape_cast %510 : vector<1x32x16xf32> to vector<32x16xf32>
    %512 = arith.truncf %511 : vector<32x16xf32> to vector<32x16xbf16>
    %cst_261 = arith.constant dense<0.000000e+00> : vector<2x16x16xf32>
    %513 = tpu.matmul %505, %512, %cst_261 {dimension_numbers = #tpu.dot_dimension_numbers<[2], [0], [0, 1], [1], [0, 0, 0, 1, 1, 1], [], []>} : vector<2x16x32xbf16>, vector<32x16xbf16>, vector<2x16x16xf32> -> vector<2x16x16xf32>
    %c0_262 = arith.constant 0 : index
    %c0_263 = arith.constant 0 : index
    %c0_264 = arith.constant 0 : index
    %514 = vector.load %arg30[%c0_262, %c0_263, %c0_264] : memref<4x32x16xf32, #tpu.memory_space<vmem>>, vector<1x32x16xf32>
    %515 = vector.shape_cast %514 : vector<1x32x16xf32> to vector<32x16xf32>
    %516 = arith.truncf %515 : vector<32x16xf32> to vector<32x16xbf16>
    %cst_265 = arith.constant dense<0.000000e+00> : vector<2x16x16xf32>
    %517 = tpu.matmul %505, %516, %cst_265 {dimension_numbers = #tpu.dot_dimension_numbers<[2], [0], [0, 1], [1], [0, 0, 0, 1, 1, 1], [], []>} : vector<2x16x32xbf16>, vector<32x16xbf16>, vector<2x16x16xf32> -> vector<2x16x16xf32>
    %cst_266 = arith.constant 2.500000e-01 : f32
    %518 = vector.broadcast %cst_266 : f32 to vector<2x16x16xf32>
    %519 = arith.mulf %509, %518 : vector<2x16x16xf32>
    %520 = arith.truncf %519 : vector<2x16x16xf32> to vector<2x16x16xbf16>
    %521 = arith.truncf %513 : vector<2x16x16xf32> to vector<2x16x16xbf16>
    %cst_267 = arith.constant dense<0.000000e+00> : vector<2x16x16xf32>
    %522 = tpu.matmul %520, %521, %cst_267 {dimension_numbers = #tpu.dot_dimension_numbers<[2], [2], [1], [1], [0, 0, 0, 1, 1, 1], [0], [0]>} : vector<2x16x16xbf16>, vector<2x16x16xbf16>, vector<2x16x16xf32> -> vector<2x16x16xf32>
    %523 = vector.shape_cast %478 : vector<16x16xf32> to vector<1x16x16xf32>
    %524 = vector.broadcast %523 : vector<1x16x16xf32> to vector<2x16x16xf32>
    %525 = arith.addf %522, %524 : vector<2x16x16xf32>
    %cst_268 = arith.constant dense<0xFF800000> : vector<2x16xf32>
    %526 = vector.multi_reduction <maximumf>, %525, %cst_268 [2] : vector<2x16x16xf32> to vector<2x16xf32>
    %527 = vector.shape_cast %526 : vector<2x16xf32> to vector<2x16x1xf32>
    %528 = vector.broadcast %527 : vector<2x16x1xf32> to vector<2x16x16xf32>
    %529 = arith.subf %525, %528 : vector<2x16x16xf32>
    %530 = math.exp %529 : vector<2x16x16xf32>
    %cst_269 = arith.constant dense<0.000000e+00> : vector<2x16xf32>
    %531 = vector.multi_reduction <add>, %530, %cst_269 [2] : vector<2x16x16xf32> to vector<2x16xf32>
    %532 = vector.shape_cast %531 : vector<2x16xf32> to vector<2x16x1xf32>
    %533 = tpu.reciprocal %532 {approx = true} : vector<2x16x1xf32> -> vector<2x16x1xf32>
    %534 = vector.broadcast %533 : vector<2x16x1xf32> to vector<2x16x16xf32>
    %535 = arith.mulf %530, %534 : vector<2x16x16xf32>
    %536 = arith.truncf %535 : vector<2x16x16xf32> to vector<2x16x16xbf16>
    %537 = arith.truncf %517 : vector<2x16x16xf32> to vector<2x16x16xbf16>
    %cst_270 = arith.constant dense<0.000000e+00> : vector<2x16x16xf32>
    %538 = tpu.matmul %536, %537, %cst_270 {dimension_numbers = #tpu.dot_dimension_numbers<[2], [1], [1], [2], [0, 0, 0, 1, 1, 2], [0], [0]>} : vector<2x16x16xbf16>, vector<2x16x16xbf16>, vector<2x16x16xf32> -> vector<2x16x16xf32>
    %539 = arith.truncf %538 : vector<2x16x16xf32> to vector<2x16x16xbf16>
    %c0_271 = arith.constant 0 : index
    %c0_272 = arith.constant 0 : index
    %c0_273 = arith.constant 0 : index
    %540 = vector.load %arg31[%c0_271, %c0_272, %c0_273] : memref<4x16x32xf32, #tpu.memory_space<vmem>>, vector<1x16x32xf32>
    %541 = vector.shape_cast %540 : vector<1x16x32xf32> to vector<16x32xf32>
    %542 = arith.truncf %541 : vector<16x32xf32> to vector<16x32xbf16>
    %cst_274 = arith.constant dense<0.000000e+00> : vector<2x16x32xf32>
    %543 = tpu.matmul %539, %542, %cst_274 {dimension_numbers = #tpu.dot_dimension_numbers<[2], [0], [0, 1], [1], [0, 0, 0, 1, 1, 1], [], []>} : vector<2x16x16xbf16>, vector<16x32xbf16>, vector<2x16x32xf32> -> vector<2x16x32xf32>
    %c1_275 = arith.constant 1 : index
    %c0_276 = arith.constant 0 : index
    %c0_277 = arith.constant 0 : index
    %544 = vector.load %arg28[%c1_275, %c0_276, %c0_277] : memref<4x32x16xf32, #tpu.memory_space<vmem>>, vector<1x32x16xf32>
    %545 = vector.shape_cast %544 : vector<1x32x16xf32> to vector<32x16xf32>
    %546 = arith.truncf %545 : vector<32x16xf32> to vector<32x16xbf16>
    %cst_278 = arith.constant dense<0.000000e+00> : vector<2x16x16xf32>
    %547 = tpu.matmul %505, %546, %cst_278 {dimension_numbers = #tpu.dot_dimension_numbers<[2], [0], [0, 1], [1], [0, 0, 0, 1, 1, 1], [], []>} : vector<2x16x32xbf16>, vector<32x16xbf16>, vector<2x16x16xf32> -> vector<2x16x16xf32>
    %c1_279 = arith.constant 1 : index
    %c0_280 = arith.constant 0 : index
    %c0_281 = arith.constant 0 : index
    %548 = vector.load %arg29[%c1_279, %c0_280, %c0_281] : memref<4x32x16xf32, #tpu.memory_space<vmem>>, vector<1x32x16xf32>
    %549 = vector.shape_cast %548 : vector<1x32x16xf32> to vector<32x16xf32>
    %550 = arith.truncf %549 : vector<32x16xf32> to vector<32x16xbf16>
    %cst_282 = arith.constant dense<0.000000e+00> : vector<2x16x16xf32>
    %551 = tpu.matmul %505, %550, %cst_282 {dimension_numbers = #tpu.dot_dimension_numbers<[2], [0], [0, 1], [1], [0, 0, 0, 1, 1, 1], [], []>} : vector<2x16x32xbf16>, vector<32x16xbf16>, vector<2x16x16xf32> -> vector<2x16x16xf32>
    %c1_283 = arith.constant 1 : index
    %c0_284 = arith.constant 0 : index
    %c0_285 = arith.constant 0 : index
    %552 = vector.load %arg30[%c1_283, %c0_284, %c0_285] : memref<4x32x16xf32, #tpu.memory_space<vmem>>, vector<1x32x16xf32>
    %553 = vector.shape_cast %552 : vector<1x32x16xf32> to vector<32x16xf32>
    %554 = arith.truncf %553 : vector<32x16xf32> to vector<32x16xbf16>
    %cst_286 = arith.constant dense<0.000000e+00> : vector<2x16x16xf32>
    %555 = tpu.matmul %505, %554, %cst_286 {dimension_numbers = #tpu.dot_dimension_numbers<[2], [0], [0, 1], [1], [0, 0, 0, 1, 1, 1], [], []>} : vector<2x16x32xbf16>, vector<32x16xbf16>, vector<2x16x16xf32> -> vector<2x16x16xf32>
    %cst_287 = arith.constant 2.500000e-01 : f32
    %556 = vector.broadcast %cst_287 : f32 to vector<2x16x16xf32>
    %557 = arith.mulf %547, %556 : vector<2x16x16xf32>
    %558 = arith.truncf %557 : vector<2x16x16xf32> to vector<2x16x16xbf16>
    %559 = arith.truncf %551 : vector<2x16x16xf32> to vector<2x16x16xbf16>
    %cst_288 = arith.constant dense<0.000000e+00> : vector<2x16x16xf32>
    %560 = tpu.matmul %558, %559, %cst_288 {dimension_numbers = #tpu.dot_dimension_numbers<[2], [2], [1], [1], [0, 0, 0, 1, 1, 1], [0], [0]>} : vector<2x16x16xbf16>, vector<2x16x16xbf16>, vector<2x16x16xf32> -> vector<2x16x16xf32>
    %561 = vector.shape_cast %478 : vector<16x16xf32> to vector<1x16x16xf32>
    %562 = vector.broadcast %561 : vector<1x16x16xf32> to vector<2x16x16xf32>
    %563 = arith.addf %560, %562 : vector<2x16x16xf32>
    %cst_289 = arith.constant dense<0xFF800000> : vector<2x16xf32>
    %564 = vector.multi_reduction <maximumf>, %563, %cst_289 [2] : vector<2x16x16xf32> to vector<2x16xf32>
    %565 = vector.shape_cast %564 : vector<2x16xf32> to vector<2x16x1xf32>
    %566 = vector.broadcast %565 : vector<2x16x1xf32> to vector<2x16x16xf32>
    %567 = arith.subf %563, %566 : vector<2x16x16xf32>
    %568 = math.exp %567 : vector<2x16x16xf32>
    %cst_290 = arith.constant dense<0.000000e+00> : vector<2x16xf32>
    %569 = vector.multi_reduction <add>, %568, %cst_290 [2] : vector<2x16x16xf32> to vector<2x16xf32>
    %570 = vector.shape_cast %569 : vector<2x16xf32> to vector<2x16x1xf32>
    %571 = tpu.reciprocal %570 {approx = true} : vector<2x16x1xf32> -> vector<2x16x1xf32>
    %572 = vector.broadcast %571 : vector<2x16x1xf32> to vector<2x16x16xf32>
    %573 = arith.mulf %568, %572 : vector<2x16x16xf32>
    %574 = arith.truncf %573 : vector<2x16x16xf32> to vector<2x16x16xbf16>
    %575 = arith.truncf %555 : vector<2x16x16xf32> to vector<2x16x16xbf16>
    %cst_291 = arith.constant dense<0.000000e+00> : vector<2x16x16xf32>
    %576 = tpu.matmul %574, %575, %cst_291 {dimension_numbers = #tpu.dot_dimension_numbers<[2], [1], [1], [2], [0, 0, 0, 1, 1, 2], [0], [0]>} : vector<2x16x16xbf16>, vector<2x16x16xbf16>, vector<2x16x16xf32> -> vector<2x16x16xf32>
    %577 = arith.truncf %576 : vector<2x16x16xf32> to vector<2x16x16xbf16>
    %c1_292 = arith.constant 1 : index
    %c0_293 = arith.constant 0 : index
    %c0_294 = arith.constant 0 : index
    %578 = vector.load %arg31[%c1_292, %c0_293, %c0_294] : memref<4x16x32xf32, #tpu.memory_space<vmem>>, vector<1x16x32xf32>
    %579 = vector.shape_cast %578 : vector<1x16x32xf32> to vector<16x32xf32>
    %580 = arith.truncf %579 : vector<16x32xf32> to vector<16x32xbf16>
    %cst_295 = arith.constant dense<0.000000e+00> : vector<2x16x32xf32>
    %581 = tpu.matmul %577, %580, %cst_295 {dimension_numbers = #tpu.dot_dimension_numbers<[2], [0], [0, 1], [1], [0, 0, 0, 1, 1, 1], [], []>} : vector<2x16x16xbf16>, vector<16x32xbf16>, vector<2x16x32xf32> -> vector<2x16x32xf32>
    %582 = arith.addf %543, %581 : vector<2x16x32xf32>
    %583 = arith.addf %472, %582 : vector<2x16x32xf32>
    %c0_296 = arith.constant 0 : index
    %c0_297 = arith.constant 0 : index
    %c0_298 = arith.constant 0 : index
    %584 = vector.load %arg32[%c0_296, %c0_297, %c0_298] : memref<2x1x32xf32, #tpu.memory_space<vmem>>, vector<1x1x32xf32>
    %585 = vector.shape_cast %584 : vector<1x1x32xf32> to vector<1x32xf32>
    %586 = vector.shape_cast %585 : vector<1x32xf32> to vector<1x1x32xf32>
    %587 = vector.broadcast %586 : vector<1x1x32xf32> to vector<2x16x32xf32>
    %588 = arith.addf %583, %587 : vector<2x16x32xf32>
    %c0_299 = arith.constant 0 : index
    %c0_300 = arith.constant 0 : index
    %c0_301 = arith.constant 0 : index
    %589 = vector.load %arg33[%c0_299, %c0_300, %c0_301] : memref<2x1x32xf32, #tpu.memory_space<vmem>>, vector<1x1x32xf32>
    %590 = vector.shape_cast %589 : vector<1x1x32xf32> to vector<1x32xf32>
    %c0_302 = arith.constant 0 : index
    %c0_303 = arith.constant 0 : index
    %c0_304 = arith.constant 0 : index
    %591 = vector.load %arg34[%c0_302, %c0_303, %c0_304] : memref<2x1x32xf32, #tpu.memory_space<vmem>>, vector<1x1x32xf32>
    %592 = vector.shape_cast %591 : vector<1x1x32xf32> to vector<1x32xf32>
    %cst_305 = arith.constant dense<0.000000e+00> : vector<2x16xf32>
    %593 = vector.multi_reduction <add>, %588, %cst_305 [2] : vector<2x16x32xf32> to vector<2x16xf32>
    %594 = vector.shape_cast %593 : vector<2x16xf32> to vector<2x16x1xf32>
    %cst_306 = arith.constant 3.200000e+01 : f32
    %595 = vector.broadcast %cst_306 : f32 to vector<2x16x1xf32>
    %596 = arith.divf %594, %595 : vector<2x16x1xf32>
    %597 = vector.broadcast %596 : vector<2x16x1xf32> to vector<2x16x32xf32>
    %598 = arith.subf %588, %597 : vector<2x16x32xf32>
    %599 = arith.mulf %598, %598 : vector<2x16x32xf32>
    %cst_307 = arith.constant dense<0.000000e+00> : vector<2x16xf32>
    %600 = vector.multi_reduction <add>, %599, %cst_307 [2] : vector<2x16x32xf32> to vector<2x16xf32>
    %601 = vector.shape_cast %600 : vector<2x16xf32> to vector<2x16x1xf32>
    %cst_308 = arith.constant 3.200000e+01 : f32
    %602 = vector.broadcast %cst_308 : f32 to vector<2x16x1xf32>
    %603 = arith.divf %601, %602 : vector<2x16x1xf32>
    %cst_309 = arith.constant 9.99999974E-6 : f32
    %604 = vector.broadcast %cst_309 : f32 to vector<2x16x1xf32>
    %605 = arith.addf %603, %604 : vector<2x16x1xf32>
    %606 = math.rsqrt %605 : vector<2x16x1xf32>
    %607 = vector.broadcast %606 : vector<2x16x1xf32> to vector<2x16x32xf32>
    %608 = arith.mulf %598, %607 : vector<2x16x32xf32>
    %609 = vector.shape_cast %590 : vector<1x32xf32> to vector<1x1x32xf32>
    %610 = vector.broadcast %609 : vector<1x1x32xf32> to vector<2x16x32xf32>
    %611 = arith.mulf %608, %610 : vector<2x16x32xf32>
    %612 = vector.shape_cast %592 : vector<1x32xf32> to vector<1x1x32xf32>
    %613 = vector.broadcast %612 : vector<1x1x32xf32> to vector<2x16x32xf32>
    %614 = arith.addf %611, %613 : vector<2x16x32xf32>
    %c0_310 = arith.constant 0 : index
    %c0_311 = arith.constant 0 : index
    %c0_312 = arith.constant 0 : index
    %615 = vector.load %arg35[%c0_310, %c0_311, %c0_312] : memref<2x32x64xf32, #tpu.memory_space<vmem>>, vector<1x32x64xf32>
    %616 = vector.shape_cast %615 : vector<1x32x64xf32> to vector<32x64xf32>
    %617 = arith.truncf %614 : vector<2x16x32xf32> to vector<2x16x32xbf16>
    %618 = arith.truncf %616 : vector<32x64xf32> to vector<32x64xbf16>
    %cst_313 = arith.constant dense<0.000000e+00> : vector<2x16x64xf32>
    %619 = tpu.matmul %617, %618, %cst_313 {dimension_numbers = #tpu.dot_dimension_numbers<[2], [0], [0, 1], [1], [0, 0, 0, 1, 1, 1], [], []>} : vector<2x16x32xbf16>, vector<32x64xbf16>, vector<2x16x64xf32> -> vector<2x16x64xf32>
    %c0_314 = arith.constant 0 : index
    %c0_315 = arith.constant 0 : index
    %c0_316 = arith.constant 0 : index
    %620 = vector.load %arg36[%c0_314, %c0_315, %c0_316] : memref<2x1x64xf32, #tpu.memory_space<vmem>>, vector<1x1x64xf32>
    %621 = vector.shape_cast %620 : vector<1x1x64xf32> to vector<1x64xf32>
    %622 = vector.shape_cast %621 : vector<1x64xf32> to vector<1x1x64xf32>
    %623 = vector.broadcast %622 : vector<1x1x64xf32> to vector<2x16x64xf32>
    %624 = arith.addf %619, %623 : vector<2x16x64xf32>
    %625 = arith.mulf %624, %624 : vector<2x16x64xf32>
    %626 = arith.mulf %624, %625 : vector<2x16x64xf32>
    %cst_317 = arith.constant 4.471500e-02 : f32
    %627 = vector.broadcast %cst_317 : f32 to vector<2x16x64xf32>
    %628 = arith.mulf %627, %626 : vector<2x16x64xf32>
    %629 = arith.addf %624, %628 : vector<2x16x64xf32>
    %cst_318 = arith.constant 0.797884583 : f32
    %630 = vector.broadcast %cst_318 : f32 to vector<2x16x64xf32>
    %631 = arith.mulf %630, %629 : vector<2x16x64xf32>
    %632 = math.tanh %631 : vector<2x16x64xf32>
    %cst_319 = arith.constant 1.000000e+00 : f32
    %633 = vector.broadcast %cst_319 : f32 to vector<2x16x64xf32>
    %634 = arith.addf %633, %632 : vector<2x16x64xf32>
    %cst_320 = arith.constant 5.000000e-01 : f32
    %635 = vector.broadcast %cst_320 : f32 to vector<2x16x64xf32>
    %636 = arith.mulf %635, %634 : vector<2x16x64xf32>
    %637 = arith.mulf %624, %636 : vector<2x16x64xf32>
    %c0_321 = arith.constant 0 : index
    %c0_322 = arith.constant 0 : index
    %c0_323 = arith.constant 0 : index
    %638 = vector.load %arg37[%c0_321, %c0_322, %c0_323] : memref<2x64x32xf32, #tpu.memory_space<vmem>>, vector<1x64x32xf32>
    %639 = vector.shape_cast %638 : vector<1x64x32xf32> to vector<64x32xf32>
    %640 = arith.truncf %637 : vector<2x16x64xf32> to vector<2x16x64xbf16>
    %641 = arith.truncf %639 : vector<64x32xf32> to vector<64x32xbf16>
    %cst_324 = arith.constant dense<0.000000e+00> : vector<2x16x32xf32>
    %642 = tpu.matmul %640, %641, %cst_324 {dimension_numbers = #tpu.dot_dimension_numbers<[2], [0], [0, 1], [1], [0, 0, 0, 1, 1, 1], [], []>} : vector<2x16x64xbf16>, vector<64x32xbf16>, vector<2x16x32xf32> -> vector<2x16x32xf32>
    %c0_325 = arith.constant 0 : index
    %c0_326 = arith.constant 0 : index
    %c0_327 = arith.constant 0 : index
    %643 = vector.load %arg38[%c0_325, %c0_326, %c0_327] : memref<2x1x32xf32, #tpu.memory_space<vmem>>, vector<1x1x32xf32>
    %644 = vector.shape_cast %643 : vector<1x1x32xf32> to vector<1x32xf32>
    %645 = vector.shape_cast %644 : vector<1x32xf32> to vector<1x1x32xf32>
    %646 = vector.broadcast %645 : vector<1x1x32xf32> to vector<2x16x32xf32>
    %647 = arith.addf %642, %646 : vector<2x16x32xf32>
    %648 = arith.addf %588, %647 : vector<2x16x32xf32>
    %c1_328 = arith.constant 1 : index
    %c0_329 = arith.constant 0 : index
    %c0_330 = arith.constant 0 : index
    %649 = vector.load %arg26[%c1_328, %c0_329, %c0_330] : memref<2x1x32xf32, #tpu.memory_space<vmem>>, vector<1x1x32xf32>
    %650 = vector.shape_cast %649 : vector<1x1x32xf32> to vector<1x32xf32>
    %c1_331 = arith.constant 1 : index
    %c0_332 = arith.constant 0 : index
    %c0_333 = arith.constant 0 : index
    %651 = vector.load %arg27[%c1_331, %c0_332, %c0_333] : memref<2x1x32xf32, #tpu.memory_space<vmem>>, vector<1x1x32xf32>
    %652 = vector.shape_cast %651 : vector<1x1x32xf32> to vector<1x32xf32>
    %cst_334 = arith.constant dense<0.000000e+00> : vector<2x16xf32>
    %653 = vector.multi_reduction <add>, %648, %cst_334 [2] : vector<2x16x32xf32> to vector<2x16xf32>
    %654 = vector.shape_cast %653 : vector<2x16xf32> to vector<2x16x1xf32>
    %cst_335 = arith.constant 3.200000e+01 : f32
    %655 = vector.broadcast %cst_335 : f32 to vector<2x16x1xf32>
    %656 = arith.divf %654, %655 : vector<2x16x1xf32>
    %657 = vector.broadcast %656 : vector<2x16x1xf32> to vector<2x16x32xf32>
    %658 = arith.subf %648, %657 : vector<2x16x32xf32>
    %659 = arith.mulf %658, %658 : vector<2x16x32xf32>
    %cst_336 = arith.constant dense<0.000000e+00> : vector<2x16xf32>
    %660 = vector.multi_reduction <add>, %659, %cst_336 [2] : vector<2x16x32xf32> to vector<2x16xf32>
    %661 = vector.shape_cast %660 : vector<2x16xf32> to vector<2x16x1xf32>
    %cst_337 = arith.constant 3.200000e+01 : f32
    %662 = vector.broadcast %cst_337 : f32 to vector<2x16x1xf32>
    %663 = arith.divf %661, %662 : vector<2x16x1xf32>
    %cst_338 = arith.constant 9.99999974E-6 : f32
    %664 = vector.broadcast %cst_338 : f32 to vector<2x16x1xf32>
    %665 = arith.addf %663, %664 : vector<2x16x1xf32>
    %666 = math.rsqrt %665 : vector<2x16x1xf32>
    %667 = vector.broadcast %666 : vector<2x16x1xf32> to vector<2x16x32xf32>
    %668 = arith.mulf %658, %667 : vector<2x16x32xf32>
    %669 = vector.shape_cast %650 : vector<1x32xf32> to vector<1x1x32xf32>
    %670 = vector.broadcast %669 : vector<1x1x32xf32> to vector<2x16x32xf32>
    %671 = arith.mulf %668, %670 : vector<2x16x32xf32>
    %672 = vector.shape_cast %652 : vector<1x32xf32> to vector<1x1x32xf32>
    %673 = vector.broadcast %672 : vector<1x1x32xf32> to vector<2x16x32xf32>
    %674 = arith.addf %671, %673 : vector<2x16x32xf32>
    %675 = arith.truncf %674 : vector<2x16x32xf32> to vector<2x16x32xbf16>
    %c2_339 = arith.constant 2 : index
    %c0_340 = arith.constant 0 : index
    %c0_341 = arith.constant 0 : index
    %676 = vector.load %arg28[%c2_339, %c0_340, %c0_341] : memref<4x32x16xf32, #tpu.memory_space<vmem>>, vector<1x32x16xf32>
    %677 = vector.shape_cast %676 : vector<1x32x16xf32> to vector<32x16xf32>
    %678 = arith.truncf %677 : vector<32x16xf32> to vector<32x16xbf16>
    %cst_342 = arith.constant dense<0.000000e+00> : vector<2x16x16xf32>
    %679 = tpu.matmul %675, %678, %cst_342 {dimension_numbers = #tpu.dot_dimension_numbers<[2], [0], [0, 1], [1], [0, 0, 0, 1, 1, 1], [], []>} : vector<2x16x32xbf16>, vector<32x16xbf16>, vector<2x16x16xf32> -> vector<2x16x16xf32>
    %c2_343 = arith.constant 2 : index
    %c0_344 = arith.constant 0 : index
    %c0_345 = arith.constant 0 : index
    %680 = vector.load %arg29[%c2_343, %c0_344, %c0_345] : memref<4x32x16xf32, #tpu.memory_space<vmem>>, vector<1x32x16xf32>
    %681 = vector.shape_cast %680 : vector<1x32x16xf32> to vector<32x16xf32>
    %682 = arith.truncf %681 : vector<32x16xf32> to vector<32x16xbf16>
    %cst_346 = arith.constant dense<0.000000e+00> : vector<2x16x16xf32>
    %683 = tpu.matmul %675, %682, %cst_346 {dimension_numbers = #tpu.dot_dimension_numbers<[2], [0], [0, 1], [1], [0, 0, 0, 1, 1, 1], [], []>} : vector<2x16x32xbf16>, vector<32x16xbf16>, vector<2x16x16xf32> -> vector<2x16x16xf32>
    %c2_347 = arith.constant 2 : index
    %c0_348 = arith.constant 0 : index
    %c0_349 = arith.constant 0 : index
    %684 = vector.load %arg30[%c2_347, %c0_348, %c0_349] : memref<4x32x16xf32, #tpu.memory_space<vmem>>, vector<1x32x16xf32>
    %685 = vector.shape_cast %684 : vector<1x32x16xf32> to vector<32x16xf32>
    %686 = arith.truncf %685 : vector<32x16xf32> to vector<32x16xbf16>
    %cst_350 = arith.constant dense<0.000000e+00> : vector<2x16x16xf32>
    %687 = tpu.matmul %675, %686, %cst_350 {dimension_numbers = #tpu.dot_dimension_numbers<[2], [0], [0, 1], [1], [0, 0, 0, 1, 1, 1], [], []>} : vector<2x16x32xbf16>, vector<32x16xbf16>, vector<2x16x16xf32> -> vector<2x16x16xf32>
    %cst_351 = arith.constant 2.500000e-01 : f32
    %688 = vector.broadcast %cst_351 : f32 to vector<2x16x16xf32>
    %689 = arith.mulf %679, %688 : vector<2x16x16xf32>
    %690 = arith.truncf %689 : vector<2x16x16xf32> to vector<2x16x16xbf16>
    %691 = arith.truncf %683 : vector<2x16x16xf32> to vector<2x16x16xbf16>
    %cst_352 = arith.constant dense<0.000000e+00> : vector<2x16x16xf32>
    %692 = tpu.matmul %690, %691, %cst_352 {dimension_numbers = #tpu.dot_dimension_numbers<[2], [2], [1], [1], [0, 0, 0, 1, 1, 1], [0], [0]>} : vector<2x16x16xbf16>, vector<2x16x16xbf16>, vector<2x16x16xf32> -> vector<2x16x16xf32>
    %693 = vector.shape_cast %478 : vector<16x16xf32> to vector<1x16x16xf32>
    %694 = vector.broadcast %693 : vector<1x16x16xf32> to vector<2x16x16xf32>
    %695 = arith.addf %692, %694 : vector<2x16x16xf32>
    %cst_353 = arith.constant dense<0xFF800000> : vector<2x16xf32>
    %696 = vector.multi_reduction <maximumf>, %695, %cst_353 [2] : vector<2x16x16xf32> to vector<2x16xf32>
    %697 = vector.shape_cast %696 : vector<2x16xf32> to vector<2x16x1xf32>
    %698 = vector.broadcast %697 : vector<2x16x1xf32> to vector<2x16x16xf32>
    %699 = arith.subf %695, %698 : vector<2x16x16xf32>
    %700 = math.exp %699 : vector<2x16x16xf32>
    %cst_354 = arith.constant dense<0.000000e+00> : vector<2x16xf32>
    %701 = vector.multi_reduction <add>, %700, %cst_354 [2] : vector<2x16x16xf32> to vector<2x16xf32>
    %702 = vector.shape_cast %701 : vector<2x16xf32> to vector<2x16x1xf32>
    %703 = tpu.reciprocal %702 {approx = true} : vector<2x16x1xf32> -> vector<2x16x1xf32>
    %704 = vector.broadcast %703 : vector<2x16x1xf32> to vector<2x16x16xf32>
    %705 = arith.mulf %700, %704 : vector<2x16x16xf32>
    %706 = arith.truncf %705 : vector<2x16x16xf32> to vector<2x16x16xbf16>
    %707 = arith.truncf %687 : vector<2x16x16xf32> to vector<2x16x16xbf16>
    %cst_355 = arith.constant dense<0.000000e+00> : vector<2x16x16xf32>
    %708 = tpu.matmul %706, %707, %cst_355 {dimension_numbers = #tpu.dot_dimension_numbers<[2], [1], [1], [2], [0, 0, 0, 1, 1, 2], [0], [0]>} : vector<2x16x16xbf16>, vector<2x16x16xbf16>, vector<2x16x16xf32> -> vector<2x16x16xf32>
    %709 = arith.truncf %708 : vector<2x16x16xf32> to vector<2x16x16xbf16>
    %c2_356 = arith.constant 2 : index
    %c0_357 = arith.constant 0 : index
    %c0_358 = arith.constant 0 : index
    %710 = vector.load %arg31[%c2_356, %c0_357, %c0_358] : memref<4x16x32xf32, #tpu.memory_space<vmem>>, vector<1x16x32xf32>
    %711 = vector.shape_cast %710 : vector<1x16x32xf32> to vector<16x32xf32>
    %712 = arith.truncf %711 : vector<16x32xf32> to vector<16x32xbf16>
    %cst_359 = arith.constant dense<0.000000e+00> : vector<2x16x32xf32>
    %713 = tpu.matmul %709, %712, %cst_359 {dimension_numbers = #tpu.dot_dimension_numbers<[2], [0], [0, 1], [1], [0, 0, 0, 1, 1, 1], [], []>} : vector<2x16x16xbf16>, vector<16x32xbf16>, vector<2x16x32xf32> -> vector<2x16x32xf32>
    %c3_360 = arith.constant 3 : index
    %c0_361 = arith.constant 0 : index
    %c0_362 = arith.constant 0 : index
    %714 = vector.load %arg28[%c3_360, %c0_361, %c0_362] : memref<4x32x16xf32, #tpu.memory_space<vmem>>, vector<1x32x16xf32>
    %715 = vector.shape_cast %714 : vector<1x32x16xf32> to vector<32x16xf32>
    %716 = arith.truncf %715 : vector<32x16xf32> to vector<32x16xbf16>
    %cst_363 = arith.constant dense<0.000000e+00> : vector<2x16x16xf32>
    %717 = tpu.matmul %675, %716, %cst_363 {dimension_numbers = #tpu.dot_dimension_numbers<[2], [0], [0, 1], [1], [0, 0, 0, 1, 1, 1], [], []>} : vector<2x16x32xbf16>, vector<32x16xbf16>, vector<2x16x16xf32> -> vector<2x16x16xf32>
    %c3_364 = arith.constant 3 : index
    %c0_365 = arith.constant 0 : index
    %c0_366 = arith.constant 0 : index
    %718 = vector.load %arg29[%c3_364, %c0_365, %c0_366] : memref<4x32x16xf32, #tpu.memory_space<vmem>>, vector<1x32x16xf32>
    %719 = vector.shape_cast %718 : vector<1x32x16xf32> to vector<32x16xf32>
    %720 = arith.truncf %719 : vector<32x16xf32> to vector<32x16xbf16>
    %cst_367 = arith.constant dense<0.000000e+00> : vector<2x16x16xf32>
    %721 = tpu.matmul %675, %720, %cst_367 {dimension_numbers = #tpu.dot_dimension_numbers<[2], [0], [0, 1], [1], [0, 0, 0, 1, 1, 1], [], []>} : vector<2x16x32xbf16>, vector<32x16xbf16>, vector<2x16x16xf32> -> vector<2x16x16xf32>
    %c3_368 = arith.constant 3 : index
    %c0_369 = arith.constant 0 : index
    %c0_370 = arith.constant 0 : index
    %722 = vector.load %arg30[%c3_368, %c0_369, %c0_370] : memref<4x32x16xf32, #tpu.memory_space<vmem>>, vector<1x32x16xf32>
    %723 = vector.shape_cast %722 : vector<1x32x16xf32> to vector<32x16xf32>
    %724 = arith.truncf %723 : vector<32x16xf32> to vector<32x16xbf16>
    %cst_371 = arith.constant dense<0.000000e+00> : vector<2x16x16xf32>
    %725 = tpu.matmul %675, %724, %cst_371 {dimension_numbers = #tpu.dot_dimension_numbers<[2], [0], [0, 1], [1], [0, 0, 0, 1, 1, 1], [], []>} : vector<2x16x32xbf16>, vector<32x16xbf16>, vector<2x16x16xf32> -> vector<2x16x16xf32>
    %cst_372 = arith.constant 2.500000e-01 : f32
    %726 = vector.broadcast %cst_372 : f32 to vector<2x16x16xf32>
    %727 = arith.mulf %717, %726 : vector<2x16x16xf32>
    %728 = arith.truncf %727 : vector<2x16x16xf32> to vector<2x16x16xbf16>
    %729 = arith.truncf %721 : vector<2x16x16xf32> to vector<2x16x16xbf16>
    %cst_373 = arith.constant dense<0.000000e+00> : vector<2x16x16xf32>
    %730 = tpu.matmul %728, %729, %cst_373 {dimension_numbers = #tpu.dot_dimension_numbers<[2], [2], [1], [1], [0, 0, 0, 1, 1, 1], [0], [0]>} : vector<2x16x16xbf16>, vector<2x16x16xbf16>, vector<2x16x16xf32> -> vector<2x16x16xf32>
    %731 = vector.shape_cast %478 : vector<16x16xf32> to vector<1x16x16xf32>
    %732 = vector.broadcast %731 : vector<1x16x16xf32> to vector<2x16x16xf32>
    %733 = arith.addf %730, %732 : vector<2x16x16xf32>
    %cst_374 = arith.constant dense<0xFF800000> : vector<2x16xf32>
    %734 = vector.multi_reduction <maximumf>, %733, %cst_374 [2] : vector<2x16x16xf32> to vector<2x16xf32>
    %735 = vector.shape_cast %734 : vector<2x16xf32> to vector<2x16x1xf32>
    %736 = vector.broadcast %735 : vector<2x16x1xf32> to vector<2x16x16xf32>
    %737 = arith.subf %733, %736 : vector<2x16x16xf32>
    %738 = math.exp %737 : vector<2x16x16xf32>
    %cst_375 = arith.constant dense<0.000000e+00> : vector<2x16xf32>
    %739 = vector.multi_reduction <add>, %738, %cst_375 [2] : vector<2x16x16xf32> to vector<2x16xf32>
    %740 = vector.shape_cast %739 : vector<2x16xf32> to vector<2x16x1xf32>
    %741 = tpu.reciprocal %740 {approx = true} : vector<2x16x1xf32> -> vector<2x16x1xf32>
    %742 = vector.broadcast %741 : vector<2x16x1xf32> to vector<2x16x16xf32>
    %743 = arith.mulf %738, %742 : vector<2x16x16xf32>
    %744 = arith.truncf %743 : vector<2x16x16xf32> to vector<2x16x16xbf16>
    %745 = arith.truncf %725 : vector<2x16x16xf32> to vector<2x16x16xbf16>
    %cst_376 = arith.constant dense<0.000000e+00> : vector<2x16x16xf32>
    %746 = tpu.matmul %744, %745, %cst_376 {dimension_numbers = #tpu.dot_dimension_numbers<[2], [1], [1], [2], [0, 0, 0, 1, 1, 2], [0], [0]>} : vector<2x16x16xbf16>, vector<2x16x16xbf16>, vector<2x16x16xf32> -> vector<2x16x16xf32>
    %747 = arith.truncf %746 : vector<2x16x16xf32> to vector<2x16x16xbf16>
    %c3_377 = arith.constant 3 : index
    %c0_378 = arith.constant 0 : index
    %c0_379 = arith.constant 0 : index
    %748 = vector.load %arg31[%c3_377, %c0_378, %c0_379] : memref<4x16x32xf32, #tpu.memory_space<vmem>>, vector<1x16x32xf32>
    %749 = vector.shape_cast %748 : vector<1x16x32xf32> to vector<16x32xf32>
    %750 = arith.truncf %749 : vector<16x32xf32> to vector<16x32xbf16>
    %cst_380 = arith.constant dense<0.000000e+00> : vector<2x16x32xf32>
    %751 = tpu.matmul %747, %750, %cst_380 {dimension_numbers = #tpu.dot_dimension_numbers<[2], [0], [0, 1], [1], [0, 0, 0, 1, 1, 1], [], []>} : vector<2x16x16xbf16>, vector<16x32xbf16>, vector<2x16x32xf32> -> vector<2x16x32xf32>
    %752 = arith.addf %713, %751 : vector<2x16x32xf32>
    %753 = arith.addf %648, %752 : vector<2x16x32xf32>
    %c1_381 = arith.constant 1 : index
    %c0_382 = arith.constant 0 : index
    %c0_383 = arith.constant 0 : index
    %754 = vector.load %arg32[%c1_381, %c0_382, %c0_383] : memref<2x1x32xf32, #tpu.memory_space<vmem>>, vector<1x1x32xf32>
    %755 = vector.shape_cast %754 : vector<1x1x32xf32> to vector<1x32xf32>
    %756 = vector.shape_cast %755 : vector<1x32xf32> to vector<1x1x32xf32>
    %757 = vector.broadcast %756 : vector<1x1x32xf32> to vector<2x16x32xf32>
    %758 = arith.addf %753, %757 : vector<2x16x32xf32>
    %c1_384 = arith.constant 1 : index
    %c0_385 = arith.constant 0 : index
    %c0_386 = arith.constant 0 : index
    %759 = vector.load %arg33[%c1_384, %c0_385, %c0_386] : memref<2x1x32xf32, #tpu.memory_space<vmem>>, vector<1x1x32xf32>
    %760 = vector.shape_cast %759 : vector<1x1x32xf32> to vector<1x32xf32>
    %c1_387 = arith.constant 1 : index
    %c0_388 = arith.constant 0 : index
    %c0_389 = arith.constant 0 : index
    %761 = vector.load %arg34[%c1_387, %c0_388, %c0_389] : memref<2x1x32xf32, #tpu.memory_space<vmem>>, vector<1x1x32xf32>
    %762 = vector.shape_cast %761 : vector<1x1x32xf32> to vector<1x32xf32>
    %cst_390 = arith.constant dense<0.000000e+00> : vector<2x16xf32>
    %763 = vector.multi_reduction <add>, %758, %cst_390 [2] : vector<2x16x32xf32> to vector<2x16xf32>
    %764 = vector.shape_cast %763 : vector<2x16xf32> to vector<2x16x1xf32>
    %cst_391 = arith.constant 3.200000e+01 : f32
    %765 = vector.broadcast %cst_391 : f32 to vector<2x16x1xf32>
    %766 = arith.divf %764, %765 : vector<2x16x1xf32>
    %767 = vector.broadcast %766 : vector<2x16x1xf32> to vector<2x16x32xf32>
    %768 = arith.subf %758, %767 : vector<2x16x32xf32>
    %769 = arith.mulf %768, %768 : vector<2x16x32xf32>
    %cst_392 = arith.constant dense<0.000000e+00> : vector<2x16xf32>
    %770 = vector.multi_reduction <add>, %769, %cst_392 [2] : vector<2x16x32xf32> to vector<2x16xf32>
    %771 = vector.shape_cast %770 : vector<2x16xf32> to vector<2x16x1xf32>
    %cst_393 = arith.constant 3.200000e+01 : f32
    %772 = vector.broadcast %cst_393 : f32 to vector<2x16x1xf32>
    %773 = arith.divf %771, %772 : vector<2x16x1xf32>
    %cst_394 = arith.constant 9.99999974E-6 : f32
    %774 = vector.broadcast %cst_394 : f32 to vector<2x16x1xf32>
    %775 = arith.addf %773, %774 : vector<2x16x1xf32>
    %776 = math.rsqrt %775 : vector<2x16x1xf32>
    %777 = vector.broadcast %776 : vector<2x16x1xf32> to vector<2x16x32xf32>
    %778 = arith.mulf %768, %777 : vector<2x16x32xf32>
    %779 = vector.shape_cast %760 : vector<1x32xf32> to vector<1x1x32xf32>
    %780 = vector.broadcast %779 : vector<1x1x32xf32> to vector<2x16x32xf32>
    %781 = arith.mulf %778, %780 : vector<2x16x32xf32>
    %782 = vector.shape_cast %762 : vector<1x32xf32> to vector<1x1x32xf32>
    %783 = vector.broadcast %782 : vector<1x1x32xf32> to vector<2x16x32xf32>
    %784 = arith.addf %781, %783 : vector<2x16x32xf32>
    %c1_395 = arith.constant 1 : index
    %c0_396 = arith.constant 0 : index
    %c0_397 = arith.constant 0 : index
    %785 = vector.load %arg35[%c1_395, %c0_396, %c0_397] : memref<2x32x64xf32, #tpu.memory_space<vmem>>, vector<1x32x64xf32>
    %786 = vector.shape_cast %785 : vector<1x32x64xf32> to vector<32x64xf32>
    %787 = arith.truncf %784 : vector<2x16x32xf32> to vector<2x16x32xbf16>
    %788 = arith.truncf %786 : vector<32x64xf32> to vector<32x64xbf16>
    %cst_398 = arith.constant dense<0.000000e+00> : vector<2x16x64xf32>
    %789 = tpu.matmul %787, %788, %cst_398 {dimension_numbers = #tpu.dot_dimension_numbers<[2], [0], [0, 1], [1], [0, 0, 0, 1, 1, 1], [], []>} : vector<2x16x32xbf16>, vector<32x64xbf16>, vector<2x16x64xf32> -> vector<2x16x64xf32>
    %c1_399 = arith.constant 1 : index
    %c0_400 = arith.constant 0 : index
    %c0_401 = arith.constant 0 : index
    %790 = vector.load %arg36[%c1_399, %c0_400, %c0_401] : memref<2x1x64xf32, #tpu.memory_space<vmem>>, vector<1x1x64xf32>
    %791 = vector.shape_cast %790 : vector<1x1x64xf32> to vector<1x64xf32>
    %792 = vector.shape_cast %791 : vector<1x64xf32> to vector<1x1x64xf32>
    %793 = vector.broadcast %792 : vector<1x1x64xf32> to vector<2x16x64xf32>
    %794 = arith.addf %789, %793 : vector<2x16x64xf32>
    %795 = arith.mulf %794, %794 : vector<2x16x64xf32>
    %796 = arith.mulf %794, %795 : vector<2x16x64xf32>
    %cst_402 = arith.constant 4.471500e-02 : f32
    %797 = vector.broadcast %cst_402 : f32 to vector<2x16x64xf32>
    %798 = arith.mulf %797, %796 : vector<2x16x64xf32>
    %799 = arith.addf %794, %798 : vector<2x16x64xf32>
    %cst_403 = arith.constant 0.797884583 : f32
    %800 = vector.broadcast %cst_403 : f32 to vector<2x16x64xf32>
    %801 = arith.mulf %800, %799 : vector<2x16x64xf32>
    %802 = math.tanh %801 : vector<2x16x64xf32>
    %cst_404 = arith.constant 1.000000e+00 : f32
    %803 = vector.broadcast %cst_404 : f32 to vector<2x16x64xf32>
    %804 = arith.addf %803, %802 : vector<2x16x64xf32>
    %cst_405 = arith.constant 5.000000e-01 : f32
    %805 = vector.broadcast %cst_405 : f32 to vector<2x16x64xf32>
    %806 = arith.mulf %805, %804 : vector<2x16x64xf32>
    %807 = arith.mulf %794, %806 : vector<2x16x64xf32>
    %c1_406 = arith.constant 1 : index
    %c0_407 = arith.constant 0 : index
    %c0_408 = arith.constant 0 : index
    %808 = vector.load %arg37[%c1_406, %c0_407, %c0_408] : memref<2x64x32xf32, #tpu.memory_space<vmem>>, vector<1x64x32xf32>
    %809 = vector.shape_cast %808 : vector<1x64x32xf32> to vector<64x32xf32>
    %810 = arith.truncf %807 : vector<2x16x64xf32> to vector<2x16x64xbf16>
    %811 = arith.truncf %809 : vector<64x32xf32> to vector<64x32xbf16>
    %cst_409 = arith.constant dense<0.000000e+00> : vector<2x16x32xf32>
    %812 = tpu.matmul %810, %811, %cst_409 {dimension_numbers = #tpu.dot_dimension_numbers<[2], [0], [0, 1], [1], [0, 0, 0, 1, 1, 1], [], []>} : vector<2x16x64xbf16>, vector<64x32xbf16>, vector<2x16x32xf32> -> vector<2x16x32xf32>
    %c1_410 = arith.constant 1 : index
    %c0_411 = arith.constant 0 : index
    %c0_412 = arith.constant 0 : index
    %813 = vector.load %arg38[%c1_410, %c0_411, %c0_412] : memref<2x1x32xf32, #tpu.memory_space<vmem>>, vector<1x1x32xf32>
    %814 = vector.shape_cast %813 : vector<1x1x32xf32> to vector<1x32xf32>
    %815 = vector.shape_cast %814 : vector<1x32xf32> to vector<1x1x32xf32>
    %816 = vector.broadcast %815 : vector<1x1x32xf32> to vector<2x16x32xf32>
    %817 = arith.addf %812, %816 : vector<2x16x32xf32>
    %818 = arith.addf %758, %817 : vector<2x16x32xf32>
    %c0_413 = arith.constant 0 : index
    %c0_414 = arith.constant 0 : index
    %819 = vector.load %arg39[%c0_413, %c0_414] : memref<1x32xf32, #tpu.memory_space<vmem>>, vector<1x32xf32>
    %c0_415 = arith.constant 0 : index
    %c0_416 = arith.constant 0 : index
    %820 = vector.load %arg40[%c0_415, %c0_416] : memref<1x32xf32, #tpu.memory_space<vmem>>, vector<1x32xf32>
    %cst_417 = arith.constant dense<0.000000e+00> : vector<2x16xf32>
    %821 = vector.multi_reduction <add>, %818, %cst_417 [2] : vector<2x16x32xf32> to vector<2x16xf32>
    %822 = vector.shape_cast %821 : vector<2x16xf32> to vector<2x16x1xf32>
    %cst_418 = arith.constant 3.200000e+01 : f32
    %823 = vector.broadcast %cst_418 : f32 to vector<2x16x1xf32>
    %824 = arith.divf %822, %823 : vector<2x16x1xf32>
    %825 = vector.broadcast %824 : vector<2x16x1xf32> to vector<2x16x32xf32>
    %826 = arith.subf %818, %825 : vector<2x16x32xf32>
    %827 = arith.mulf %826, %826 : vector<2x16x32xf32>
    %cst_419 = arith.constant dense<0.000000e+00> : vector<2x16xf32>
    %828 = vector.multi_reduction <add>, %827, %cst_419 [2] : vector<2x16x32xf32> to vector<2x16xf32>
    %829 = vector.shape_cast %828 : vector<2x16xf32> to vector<2x16x1xf32>
    %cst_420 = arith.constant 3.200000e+01 : f32
    %830 = vector.broadcast %cst_420 : f32 to vector<2x16x1xf32>
    %831 = arith.divf %829, %830 : vector<2x16x1xf32>
    %cst_421 = arith.constant 9.99999974E-6 : f32
    %832 = vector.broadcast %cst_421 : f32 to vector<2x16x1xf32>
    %833 = arith.addf %831, %832 : vector<2x16x1xf32>
    %834 = math.rsqrt %833 : vector<2x16x1xf32>
    %835 = vector.broadcast %834 : vector<2x16x1xf32> to vector<2x16x32xf32>
    %836 = arith.mulf %826, %835 : vector<2x16x32xf32>
    %837 = vector.shape_cast %819 : vector<1x32xf32> to vector<1x1x32xf32>
    %838 = vector.broadcast %837 : vector<1x1x32xf32> to vector<2x16x32xf32>
    %839 = arith.mulf %836, %838 : vector<2x16x32xf32>
    %840 = vector.shape_cast %820 : vector<1x32xf32> to vector<1x1x32xf32>
    %841 = vector.broadcast %840 : vector<1x1x32xf32> to vector<2x16x32xf32>
    %842 = arith.addf %839, %841 : vector<2x16x32xf32>
    %c0_422 = arith.constant 0 : index
    %c0_423 = arith.constant 0 : index
    %843 = vector.load %arg41[%c0_422, %c0_423] : memref<32x128xf32, #tpu.memory_space<vmem>>, vector<32x128xf32>
    %cst_424 = arith.constant dense<0.000000e+00> : vector<2x16x128xf32>
    %844 = tpu.matmul %842, %843, %cst_424 {dimension_numbers = #tpu.dot_dimension_numbers<[2], [0], [0, 1], [1], [0, 0, 0, 1, 1, 1], [], []>} : vector<2x16x32xf32>, vector<32x128xf32>, vector<2x16x128xf32> -> vector<2x16x128xf32>
    %c0_425 = arith.constant 0 : index
    %c0_426 = arith.constant 0 : index
    %845 = vector.load %arg42[%c0_425, %c0_426] : memref<1x128xf32, #tpu.memory_space<vmem>>, vector<1x128xf32>
    %846 = vector.shape_cast %845 : vector<1x128xf32> to vector<1x1x128xf32>
    %847 = vector.broadcast %846 : vector<1x1x128xf32> to vector<2x16x128xf32>
    %848 = arith.addf %844, %847 : vector<2x16x128xf32>
    %c0_427 = arith.constant 0 : index
    %c0_428 = arith.constant 0 : index
    %c0_429 = arith.constant 0 : index
    %849 = vector.load %arg43[%c0_427, %c0_428, %c0_429] : memref<2x16x128xf32, #tpu.memory_space<vmem>>, vector<2x16x128xf32>
    tpu.vector_store %arg43[%c0_427, %c0_428, %c0_429], %848 {strides = array<i32>} : memref<2x16x128xf32, #tpu.memory_space<vmem>>, vector<2x16x128xf32>,
    %cst_430 = arith.constant dense<0xFF800000> : vector<2x16xf32>
    %850 = vector.multi_reduction <maximumf>, %848, %cst_430 [2] : vector<2x16x128xf32> to vector<2x16xf32>
    %851 = vector.shape_cast %850 : vector<2x16xf32> to vector<2x16x1xf32>
    %852 = vector.broadcast %851 : vector<2x16x1xf32> to vector<2x16x128xf32>
    %853 = arith.subf %848, %852 : vector<2x16x128xf32>
    %854 = math.exp %853 : vector<2x16x128xf32>
    %cst_431 = arith.constant dense<0.000000e+00> : vector<2x16xf32>
    %855 = vector.multi_reduction <add>, %854, %cst_431 [2] : vector<2x16x128xf32> to vector<2x16xf32>
    %856 = vector.shape_cast %855 : vector<2x16xf32> to vector<2x16x1xf32>
    %857 = math.log %856 : vector<2x16x1xf32>
    %858 = vector.broadcast %857 : vector<2x16x1xf32> to vector<2x16x128xf32>
    %859 = arith.subf %853, %858 : vector<2x16x128xf32>
    %c0_432 = arith.constant 0 : index
    %c0_433 = arith.constant 0 : index
    %c0_434 = arith.constant 0 : index
    %860 = vector.load %arg2[%c0_432, %c0_433, %c0_434] : memref<2x16x1xi32, #tpu.memory_space<vmem>>, vector<2x16x1xi32>
    %861 = tpu.iota {dimensions = array<i32: 2>} : vector<2x16x128xi32>
    %862 = vector.broadcast %860 : vector<2x16x1xi32> to vector<2x16x128xi32>
    %863 = arith.cmpi eq, %861, %862 : vector<2x16x128xi32>
    %864 = arith.extui %863 : vector<2x16x128xi1> to vector<2x16x128xi32>
    %865 = arith.sitofp %864 : vector<2x16x128xi32> to vector<2x16x128xf32>
    %866 = arith.mulf %865, %859 : vector<2x16x128xf32>
    %cst_435 = arith.constant dense<0.000000e+00> : vector<2x16xf32>
    %867 = vector.multi_reduction <add>, %866, %cst_435 [2] : vector<2x16x128xf32> to vector<2x16xf32>
    %868 = vector.shape_cast %867 : vector<2x16xf32> to vector<2x16x1xf32>
    %cst_436 = arith.constant 0.000000e+00 : f32
    %869 = vector.broadcast %cst_436 : f32 to vector<2x16x1xf32>
    %870 = arith.subf %869, %868 : vector<2x16x1xf32>
    %cst_437 = arith.constant dense<0.000000e+00> : vector<2x1xf32>
    %871 = vector.multi_reduction <add>, %870, %cst_437 [1] : vector<2x16x1xf32> to vector<2x1xf32>
    %872 = vector.shape_cast %871 : vector<2x1xf32> to vector<2x1x1xf32>
    %cst_438 = arith.constant dense<0.000000e+00> : vector<1x1xf32>
    %873 = vector.multi_reduction <add>, %872, %cst_438 [0] : vector<2x1x1xf32> to vector<1x1xf32>
    %874 = vector.shape_cast %873 : vector<1x1xf32> to vector<1x1x1xf32>
    %cst_439 = arith.constant 1.600000e+01 : f32
    %875 = vector.broadcast %cst_439 : f32 to vector<1x1x1xf32>
    %876 = arith.divf %874, %875 : vector<1x1x1xf32>
    %877 = tpu.concatenate %447, %876 in 2 : vector<1x1x1xf32>, vector<1x1x1xf32> -> vector<1x1x2xf32>
    %c0_440 = arith.constant 0 : index
    %c0_441 = arith.constant 0 : index
    %c0_442 = arith.constant 0 : index
    %878 = vector.load %arg46[%c0_440, %c0_441, %c0_442] : memref<1x1x2xf32, #tpu.memory_space<vmem>>, vector<1x1x2xf32>
    tpu.vector_store %arg46[%c0_440, %c0_441, %c0_442], %877 {strides = array<i32>} : memref<1x1x2xf32, #tpu.memory_space<vmem>>, vector<1x1x2xf32>,
    return
  }
}

</mosaic_0001>

<llo_original>
// kernel: brain_to_text_forward.1
$region0: #{brain_to_text_forward.1}
  #allocation0 [shape = 'u32[]', space=smem, size = 0x4, offset = 0x4, fixed_abs, tag = 'smem constant byte address 0x4 - core index']
  #allocation1 [shape = 'u32[144,128]{1,0:T(1,128)}', space=vmem, size = 0x12000, scoped, tag = 'internal scratch']
  %s0 = inlined_call_operand.smem [shape: u32[47], index: -1, kind: input, shape index: {}]
  %s1 = sld [smem:[%s0]]
  %s2 = scalar_lea.smem %s0, 1
  %s3 = sld [smem:[%s2]]
  %s4 = scalar_lea.smem %s0, 2
  %s5 = sld [smem:[%s4]]
  %s6 = scalar_lea.smem %s0, 3
  %s7 = sld [smem:[%s6]]
  %s8 = scalar_lea.smem %s0, 4
  %s9 = sld [smem:[%s8]]
  %s10 = scalar_lea.smem %s0, 5
  %s11 = sld [smem:[%s10]]
  %s12 = scalar_lea.smem %s0, 6
  %s13 = sld [smem:[%s12]]
  %s14 = scalar_lea.smem %s0, 7
  %s15 = sld [smem:[%s14]]
  %s16 = scalar_lea.smem %s0, 8
  %s17 = sld [smem:[%s16]]
  %s18 = scalar_lea.smem %s0, 9
  %s19 = sld [smem:[%s18]]
  %s20 = scalar_lea.smem %s0, 10
  %s21 = sld [smem:[%s20]]
  %s22 = scalar_lea.smem %s0, 11
  %s23 = sld [smem:[%s22]]
  %s24 = scalar_lea.smem %s0, 12
  %s25 = sld [smem:[%s24]]
  %s26 = scalar_lea.smem %s0, 13
  %s27 = sld [smem:[%s26]]
  %s28 = scalar_lea.smem %s0, 14
  %s29 = sld [smem:[%s28]]
  %s30 = scalar_lea.smem %s0, 15
  %s31 = sld [smem:[%s30]]
  %s32 = scalar_lea.smem %s0, 16
  %s33 = sld [smem:[%s32]]
  %s34 = scalar_lea.smem %s0, 17
  %s35 = sld [smem:[%s34]]
  %s36 = scalar_lea.smem %s0, 18
  %s37 = sld [smem:[%s36]]
  %s38 = scalar_lea.smem %s0, 19
  %s39 = sld [smem:[%s38]]
  %s40 = scalar_lea.smem %s0, 20
  %s41 = sld [smem:[%s40]]
  %s42 = scalar_lea.smem %s0, 21
  %s43 = sld [smem:[%s42]]
  %s44 = scalar_lea.smem %s0, 22
  %s45 = sld [smem:[%s44]]
  %s46 = scalar_lea.smem %s0, 23
  %s47 = sld [smem:[%s46]]
  %s48 = scalar_lea.smem %s0, 24
  %s49 = sld [smem:[%s48]]
  %s50 = scalar_lea.smem %s0, 25
  %s51 = sld [smem:[%s50]]
  %s52 = scalar_lea.smem %s0, 26
  %s53 = sld [smem:[%s52]]
  %s54 = scalar_lea.smem %s0, 27
  %s55 = sld [smem:[%s54]]
  %s56 = scalar_lea.smem %s0, 28
  %s57 = sld [smem:[%s56]]
  %s58 = scalar_lea.smem %s0, 29
  %s59 = sld [smem:[%s58]]
  %s60 = scalar_lea.smem %s0, 30
  %s61 = sld [smem:[%s60]]
  %s62 = scalar_lea.smem %s0, 31
  %s63 = sld [smem:[%s62]]
  %s64 = scalar_lea.smem %s0, 32
  %s65 = sld [smem:[%s64]]
  %s66 = scalar_lea.smem %s0, 33
  %s67 = sld [smem:[%s66]]
  %s68 = scalar_lea.smem %s0, 34
  %s69 = sld [smem:[%s68]]
  %s70 = scalar_lea.smem %s0, 35
  %s71 = sld [smem:[%s70]]
  %s72 = scalar_lea.smem %s0, 36
  %s73 = sld [smem:[%s72]]
  %s74 = scalar_lea.smem %s0, 37
  %s75 = sld [smem:[%s74]]
  %s76 = scalar_lea.smem %s0, 38
  %s77 = sld [smem:[%s76]]
  %s78 = scalar_lea.smem %s0, 39
  %s79 = sld [smem:[%s78]]
  %s80 = scalar_lea.smem %s0, 40
  %s81 = sld [smem:[%s80]]
  %s82 = scalar_lea.smem %s0, 41
  %s83 = sld [smem:[%s82]]
  %s84 = scalar_lea.smem %s0, 42
  %s85 = sld [smem:[%s84]]
  %s86 = scalar_lea.smem %s0, 43
  %s87 = sld [smem:[%s86]]
  %s88 = scalar_lea.smem %s0, 44
  %s89 = sld [smem:[%s88]]
  %s90 = scalar_lea.smem %s0, 45
  %s91 = sld [smem:[%s90]]
  %s92 = scalar_lea.smem %s0, 46
  %s93 = sld [smem:[%s92]]
  %94 = xla_tuple %s87, %s89, %s91, %s93
  %s95 = sld [smem:[#allocation0]]
  $region206: #{brain_to_text_forward.1} parent=0
    _
  %s97 = ssub.s32 1, %s95
  %s98 = scalar_select 0, %s97, %s95
  $region1: #{brain_to_text_forward.1} parent=0
    #allocation2 [shape = 'u8[16384]{0}', space=vmem, size = 0x4000, scoped, tag = 'output window, operand 0, single buffered']
    #allocation3 [shape = 's32[1]{0}', space=sflag, size = 0x4, scoped, tag = 'scoped memory for brain_to_text_forward.1']
    #allocation4 [shape = 'u8[8192]{0}', space=vmem, size = 0x2000, scoped, tag = 'output window, operand 1, single buffered']
    #allocation5 [shape = 's32[1]{0}', space=sflag, size = 0x4, scoped, tag = 'scoped memory for brain_to_text_forward.1']
    %99 = vsyncpa [#allocation3], 0
    %100 = vsyncpa [#allocation5], 0
    // Predicated region
    $region2: #{brain_to_text_forward.1} parent=1 // pred_check
      _
    $region3: #{brain_to_text_forward.1} parent=1 // pred_check_branch
      %102 = sbr.rel (0) target = $region5
    $region4: #{brain_to_text_forward.1} parent=1 // pred_region
      _
    $region5: #{brain_to_text_forward.1} parent=1 // pred_fallthru
      _
    // Predicated region
    $region6: #{brain_to_text_forward.1} parent=1 // pred_check
      _
    $region7: #{brain_to_text_forward.1} parent=1 // pred_check_branch
      %104 = sbr.rel (0) target = $region9
    $region8: #{brain_to_text_forward.1} parent=1 // pred_region
      _
    $region9: #{brain_to_text_forward.1} parent=1 // pred_fallthru
      _
    // Predicated region
    $region10: #{brain_to_text_forward.1} parent=1 // pred_check
      _
    $region11: #{brain_to_text_forward.1} parent=1 // pred_check_branch
      %106 = sbr.rel (0) target = $region13
    $region12: #{brain_to_text_forward.1} parent=1 // pred_region
      _
    $region13: #{brain_to_text_forward.1} parent=1 // pred_fallthru
      _
    // Predicated region
    $region14: #{brain_to_text_forward.1} parent=1 // pred_check
      _
    $region15: #{brain_to_text_forward.1} parent=1 // pred_check_branch
      %108 = sbr.rel (0) target = $region17
    $region16: #{brain_to_text_forward.1} parent=1 // pred_region
      _
    $region17: #{brain_to_text_forward.1} parent=1 // pred_fallthru
      _
    // Predicated region
    $region18: #{brain_to_text_forward.1} parent=1 // pred_check
      _
    $region19: #{brain_to_text_forward.1} parent=1 // pred_check_branch
      %110 = sbr.rel (0) target = $region21
    $region20: #{brain_to_text_forward.1} parent=1 // pred_region
      _
    $region21: #{brain_to_text_forward.1} parent=1 // pred_fallthru
      _
    // Predicated region
    $region22: #{brain_to_text_forward.1} parent=1 // pred_check
      _
    $region23: #{brain_to_text_forward.1} parent=1 // pred_check_branch
      %112 = sbr.rel (0) target = $region25
    $region24: #{brain_to_text_forward.1} parent=1 // pred_region
      _
    $region25: #{brain_to_text_forward.1} parent=1 // pred_fallthru
      _
    // Predicated region
    $region26: #{brain_to_text_forward.1} parent=1 // pred_check
      _
    $region27: #{brain_to_text_forward.1} parent=1 // pred_check_branch
      %114 = sbr.rel (0) target = $region29
    $region28: #{brain_to_text_forward.1} parent=1 // pred_region
      _
    $region29: #{brain_to_text_forward.1} parent=1 // pred_fallthru
      _
    // Predicated region
    $region30: #{brain_to_text_forward.1} parent=1 // pred_check
      _
    $region31: #{brain_to_text_forward.1} parent=1 // pred_check_branch
      %116 = sbr.rel (0) target = $region33
    $region32: #{brain_to_text_forward.1} parent=1 // pred_region
      _
    $region33: #{brain_to_text_forward.1} parent=1 // pred_fallthru
      _
    // Predicated region
    $region34: #{brain_to_text_forward.1} parent=1 // pred_check
      _
    $region35: #{brain_to_text_forward.1} parent=1 // pred_check_branch
      %118 = sbr.rel (0) target = $region37
    $region36: #{brain_to_text_forward.1} parent=1 // pred_region
      _
    $region37: #{brain_to_text_forward.1} parent=1 // pred_fallthru
      _
    // Predicated region
    $region38: #{brain_to_text_forward.1} parent=1 // pred_check
      _
    $region39: #{brain_to_text_forward.1} parent=1 // pred_check_branch
      %120 = sbr.rel (0) target = $region41
    $region40: #{brain_to_text_forward.1} parent=1 // pred_region
      _
    $region41: #{brain_to_text_forward.1} parent=1 // pred_fallthru
      _
    // Predicated region
    $region42: #{brain_to_text_forward.1} parent=1 // pred_check
      _
    $region43: #{brain_to_text_forward.1} parent=1 // pred_check_branch
      %122 = sbr.rel (0) target = $region45
    $region44: #{brain_to_text_forward.1} parent=1 // pred_region
      _
    $region45: #{brain_to_text_forward.1} parent=1 // pred_fallthru
      _
    // Predicated region
    $region46: #{brain_to_text_forward.1} parent=1 // pred_check
      _
    $region47: #{brain_to_text_forward.1} parent=1 // pred_check_branch
      %124 = sbr.rel (0) target = $region49
    $region48: #{brain_to_text_forward.1} parent=1 // pred_region
      _
    $region49: #{brain_to_text_forward.1} parent=1 // pred_fallthru
      _
    // Predicated region
    $region50: #{brain_to_text_forward.1} parent=1 // pred_check
      _
    $region51: #{brain_to_text_forward.1} parent=1 // pred_check_branch
      %126 = sbr.rel (0) target = $region53
    $region52: #{brain_to_text_forward.1} parent=1 // pred_region
      _
    $region53: #{brain_to_text_forward.1} parent=1 // pred_fallthru
      _
    // Predicated region
    $region54: #{brain_to_text_forward.1} parent=1 // pred_check
      _
    $region55: #{brain_to_text_forward.1} parent=1 // pred_check_branch
      %128 = sbr.rel (0) target = $region57
    $region56: #{brain_to_text_forward.1} parent=1 // pred_region
      _
    $region57: #{brain_to_text_forward.1} parent=1 // pred_fallthru
      _
    // Predicated region
    $region58: #{brain_to_text_forward.1} parent=1 // pred_check
      _
    $region59: #{brain_to_text_forward.1} parent=1 // pred_check_branch
      %130 = sbr.rel (0) target = $region61
    $region60: #{brain_to_text_forward.1} parent=1 // pred_region
      _
    $region61: #{brain_to_text_forward.1} parent=1 // pred_fallthru
      _
    // Predicated region
    $region62: #{brain_to_text_forward.1} parent=1 // pred_check
      _
    $region63: #{brain_to_text_forward.1} parent=1 // pred_check_branch
      %132 = sbr.rel (0) target = $region65
    $region64: #{brain_to_text_forward.1} parent=1 // pred_region
      _
    $region65: #{brain_to_text_forward.1} parent=1 // pred_fallthru
      _
    // Predicated region
    $region66: #{brain_to_text_forward.1} parent=1 // pred_check
      _
    $region67: #{brain_to_text_forward.1} parent=1 // pred_check_branch
      %134 = sbr.rel (0) target = $region69
    $region68: #{brain_to_text_forward.1} parent=1 // pred_region
      _
    $region69: #{brain_to_text_forward.1} parent=1 // pred_fallthru
      _
    // Predicated region
    $region70: #{brain_to_text_forward.1} parent=1 // pred_check
      _
    $region71: #{brain_to_text_forward.1} parent=1 // pred_check_branch
      %136 = sbr.rel (0) target = $region73
    $region72: #{brain_to_text_forward.1} parent=1 // pred_region
      _
    $region73: #{brain_to_text_forward.1} parent=1 // pred_fallthru
      _
    // Predicated region
    $region74: #{brain_to_text_forward.1} parent=1 // pred_check
      _
    $region75: #{brain_to_text_forward.1} parent=1 // pred_check_branch
      %138 = sbr.rel (0) target = $region77
    $region76: #{brain_to_text_forward.1} parent=1 // pred_region
      _
    $region77: #{brain_to_text_forward.1} parent=1 // pred_fallthru
      _
    // Predicated region
    $region78: #{brain_to_text_forward.1} parent=1 // pred_check
      _
    $region79: #{brain_to_text_forward.1} parent=1 // pred_check_branch
      %140 = sbr.rel (0) target = $region81
    $region80: #{brain_to_text_forward.1} parent=1 // pred_region
      _
    $region81: #{brain_to_text_forward.1} parent=1 // pred_fallthru
      _
    // Predicated region
    $region82: #{brain_to_text_forward.1} parent=1 // pred_check
      _
    $region83: #{brain_to_text_forward.1} parent=1 // pred_check_branch
      %142 = sbr.rel (0) target = $region85
    $region84: #{brain_to_text_forward.1} parent=1 // pred_region
      _
    $region85: #{brain_to_text_forward.1} parent=1 // pred_fallthru
      _
    // Predicated region
    $region86: #{brain_to_text_forward.1} parent=1 // pred_check
      _
    $region87: #{brain_to_text_forward.1} parent=1 // pred_check_branch
      %144 = sbr.rel (0) target = $region89
    $region88: #{brain_to_text_forward.1} parent=1 // pred_region
      _
    $region89: #{brain_to_text_forward.1} parent=1 // pred_fallthru
      _
    // Predicated region
    $region90: #{brain_to_text_forward.1} parent=1 // pred_check
      _
    $region91: #{brain_to_text_forward.1} parent=1 // pred_check_branch
      %146 = sbr.rel (0) target = $region93
    $region92: #{brain_to_text_forward.1} parent=1 // pred_region
      _
    $region93: #{brain_to_text_forward.1} parent=1 // pred_fallthru
      _
    // Predicated region
    $region94: #{brain_to_text_forward.1} parent=1 // pred_check
      _
    $region95: #{brain_to_text_forward.1} parent=1 // pred_check_branch
      %148 = sbr.rel (0) target = $region97
    $region96: #{brain_to_text_forward.1} parent=1 // pred_region
      _
    $region97: #{brain_to_text_forward.1} parent=1 // pred_fallthru
      _
    // Predicated region
    $region98: #{brain_to_text_forward.1} parent=1 // pred_check
      _
    $region99: #{brain_to_text_forward.1} parent=1 // pred_check_branch
      %150 = sbr.rel (0) target = $region101
    $region100: #{brain_to_text_forward.1} parent=1 // pred_region
      _
    $region101: #{brain_to_text_forward.1} parent=1 // pred_fallthru
      _
    // Predicated region
    $region102: #{brain_to_text_forward.1} parent=1 // pred_check
      _
    $region103: #{brain_to_text_forward.1} parent=1 // pred_check_branch
      %152 = sbr.rel (0) target = $region105
    $region104: #{brain_to_text_forward.1} parent=1 // pred_region
      _
    $region105: #{brain_to_text_forward.1} parent=1 // pred_fallthru
      _
    // Predicated region
    $region106: #{brain_to_text_forward.1} parent=1 // pred_check
      _
    $region107: #{brain_to_text_forward.1} parent=1 // pred_check_branch
      %154 = sbr.rel (0) target = $region109
    $region108: #{brain_to_text_forward.1} parent=1 // pred_region
      _
    $region109: #{brain_to_text_forward.1} parent=1 // pred_fallthru
      _
    // Predicated region
    $region110: #{brain_to_text_forward.1} parent=1 // pred_check
      _
    $region111: #{brain_to_text_forward.1} parent=1 // pred_check_branch
      %156 = sbr.rel (0) target = $region113
    $region112: #{brain_to_text_forward.1} parent=1 // pred_region
      _
    $region113: #{brain_to_text_forward.1} parent=1 // pred_fallthru
      _
    // Predicated region
    $region114: #{brain_to_text_forward.1} parent=1 // pred_check
      _
    $region115: #{brain_to_text_forward.1} parent=1 // pred_check_branch
      %158 = sbr.rel (0) target = $region117
    $region116: #{brain_to_text_forward.1} parent=1 // pred_region
      _
    $region117: #{brain_to_text_forward.1} parent=1 // pred_fallthru
      _
    // Predicated region
    $region118: #{brain_to_text_forward.1} parent=1 // pred_check
      _
    $region119: #{brain_to_text_forward.1} parent=1 // pred_check_branch
      %160 = sbr.rel (0) target = $region121
    $region120: #{brain_to_text_forward.1} parent=1 // pred_region
      _
    $region121: #{brain_to_text_forward.1} parent=1 // pred_fallthru
      _
    // Predicated region
    $region122: #{brain_to_text_forward.1} parent=1 // pred_check
      _
    $region123: #{brain_to_text_forward.1} parent=1 // pred_check_branch
      %162 = sbr.rel (0) target = $region125
    $region124: #{brain_to_text_forward.1} parent=1 // pred_region
      _
    $region125: #{brain_to_text_forward.1} parent=1 // pred_fallthru
      _
    // Predicated region
    $region126: #{brain_to_text_forward.1} parent=1 // pred_check
      _
    $region127: #{brain_to_text_forward.1} parent=1 // pred_check_branch
      %164 = sbr.rel (0) target = $region129
    $region128: #{brain_to_text_forward.1} parent=1 // pred_region
      _
    $region129: #{brain_to_text_forward.1} parent=1 // pred_fallthru
      _
    // Predicated region
    $region130: #{brain_to_text_forward.1} parent=1 // pred_check
      _
    $region131: #{brain_to_text_forward.1} parent=1 // pred_check_branch
      %166 = sbr.rel (0) target = $region133
    $region132: #{brain_to_text_forward.1} parent=1 // pred_region
      _
    $region133: #{brain_to_text_forward.1} parent=1 // pred_fallthru
      _
    // Predicated region
    $region134: #{brain_to_text_forward.1} parent=1 // pred_check
      _
    $region135: #{brain_to_text_forward.1} parent=1 // pred_check_branch
      %168 = sbr.rel (0) target = $region137
    $region136: #{brain_to_text_forward.1} parent=1 // pred_region
      _
    $region137: #{brain_to_text_forward.1} parent=1 // pred_fallthru
      _
    // Predicated region
    $region138: #{brain_to_text_forward.1} parent=1 // pred_check
      _
    $region139: #{brain_to_text_forward.1} parent=1 // pred_check_branch
      %170 = sbr.rel (0) target = $region141
    $region140: #{brain_to_text_forward.1} parent=1 // pred_region
      _
    $region141: #{brain_to_text_forward.1} parent=1 // pred_fallthru
      _
    // Predicated region
    $region142: #{brain_to_text_forward.1} parent=1 // pred_check
      _
    $region143: #{brain_to_text_forward.1} parent=1 // pred_check_branch
      %172 = sbr.rel (0) target = $region145
    $region144: #{brain_to_text_forward.1} parent=1 // pred_region
      _
    $region145: #{brain_to_text_forward.1} parent=1 // pred_fallthru
      _
    // Predicated region
    $region146: #{brain_to_text_forward.1} parent=1 // pred_check
      _
    $region147: #{brain_to_text_forward.1} parent=1 // pred_check_branch
      %174 = sbr.rel (0) target = $region149
    $region148: #{brain_to_text_forward.1} parent=1 // pred_region
      _
    $region149: #{brain_to_text_forward.1} parent=1 // pred_fallthru
      _
    // Predicated region
    $region150: #{brain_to_text_forward.1} parent=1 // pred_check
      _
    $region151: #{brain_to_text_forward.1} parent=1 // pred_check_branch
      %176 = sbr.rel (0) target = $region153
    $region152: #{brain_to_text_forward.1} parent=1 // pred_region
      _
    $region153: #{brain_to_text_forward.1} parent=1 // pred_fallthru
      _
    // Predicated region
    $region154: #{brain_to_text_forward.1} parent=1 // pred_check
      _
    $region155: #{brain_to_text_forward.1} parent=1 // pred_check_branch
      %178 = sbr.rel (0) target = $region157
    $region156: #{brain_to_text_forward.1} parent=1 // pred_region
      _
    $region157: #{brain_to_text_forward.1} parent=1 // pred_fallthru
      _
    // Predicated region
    $region158: #{brain_to_text_forward.1} parent=1 // pred_check
      _
    $region159: #{brain_to_text_forward.1} parent=1 // pred_check_branch
      %180 = sbr.rel (0) target = $region161
    $region160: #{brain_to_text_forward.1} parent=1 // pred_region
      _
    $region161: #{brain_to_text_forward.1} parent=1 // pred_fallthru
      _
    // Predicated region
    $region162: #{brain_to_text_forward.1} parent=1 // pred_check
      _
    $region163: #{brain_to_text_forward.1} parent=1 // pred_check_branch
      %182 = sbr.rel (0) target = $region165
    $region164: #{brain_to_text_forward.1} parent=1 // pred_region
      _
    $region165: #{brain_to_text_forward.1} parent=1 // pred_fallthru
      _
    // Predicated region
    $region166: #{brain_to_text_forward.1} parent=1 // pred_check
      _
    $region167: #{brain_to_text_forward.1} parent=1 // pred_check_branch
      %184 = sbr.rel (0) target = $region169
    $region168: #{brain_to_text_forward.1} parent=1 // pred_region
      _
    $region169: #{brain_to_text_forward.1} parent=1 // pred_fallthru
      _
    // Predicated region
    $region170: #{brain_to_text_forward.1} parent=1 // pred_check
      _
    $region171: #{brain_to_text_forward.1} parent=1 // pred_check_branch
      %186 = sbr.rel (0) target = $region173
    $region172: #{brain_to_text_forward.1} parent=1 // pred_region
      _
    $region173: #{brain_to_text_forward.1} parent=1 // pred_fallthru
      _
    %v188 = vld [vmem:[%s1] sm:$0xff]
    %v189 = vld [vmem:[%s1 + $0x8] sm:$0xff]
    %v190 = vld [vmem:[%s7] sm:$0xff]
    %v191 = vld [vmem:[%s7 + $0x8] sm:$0xff]
    %v192 = vld [vmem:[%s7 + $0x10] sm:$0xff]
    %v193 = vld [vmem:[%s7 + $0x18] sm:$0xff]
    %v194 = vld [vmem:[%s7 + $0x20] sm:$0xff]
    %v195 = vld [vmem:[%s7 + $0x28] sm:$0xff]
    %v196 = vld [vmem:[%s7 + $0x30] sm:$0xff]
    %v197 = vld [vmem:[%s7 + $0x38] sm:$0xff]
    %v198 = vpack.c.bf16 %v188, %v188
    %v199 = vpack.c.bf16 %v189, %v189
    %v200 = vpack.c.bf16 %v191, %v190
    %v201 = vpack.c.bf16 %v193, %v192
    %v202 = vpack.c.bf16 %v195, %v194
    %v203 = vpack.c.bf16 %v197, %v196
    %v204 = vld [vmem:[%s9] sm:$0x1]
    %v206 = vlaneseq
    %v207 = vshrl.u32 %v206, 7
    %v208 = vsub.s32 0, %v207
    %v209 = vrot.slane %v204, %v208
    %v213 = vunpack.c.l.b16 %v198
    %v214 = vunpack.c.l.b16 %v199
    %v215 = vpack.c.b16 %v214, %v213
    %vm216 = vcmask 523264
    %v218 = vsel %vm216, %v215, 0
    %220 = vmatprep.subr.bf16.mxu0 0
    %221 = vmatpush1.bf16.msra.mxu0 %v200
    %222 = vmatprep.subr.bf16.mxu0 0
    %223 = vmatpush1.bf16.msra.mxu0 %v201
    %224 = vmatprep.subr.bf16.mxu0 0
    %225 = vmatpush1.bf16.msra.mxu0 %v202
    %226 = vmatprep.subr.bf16.mxu0 0
    %227 = vmatpush1.bf16.msra.mxu0 %v203
    %228 = vmatprep.subr.bf16.mxu0 0
    %229 = vmatpush1.bf16.msra.mxu0 0
    %230 = vmatprep.subr.bf16.mxu0 0
    %231 = vmatpush1.bf16.msra.mxu0 0
    %232 = vmatprep.subr.bf16.mxu0 0
    %233 = vmatpush1.bf16.msra.mxu0 0
    %234 = vmatprep.subr.bf16.mxu0 0
    %235 = vmatpush1.bf16.msra.mxu0 0
    %236 = vmatprep.subr.bf16.mxu0 0
    %237 = vmatpush1.bf16.msra.mxu0 0
    %238 = vmatprep.subr.bf16.mxu0 0
    %239 = vmatpush1.bf16.msra.mxu0 0
    %240 = vmatprep.subr.bf16.mxu0 0
    %241 = vmatpush1.bf16.msra.mxu0 0
    %242 = vmatprep.subr.bf16.mxu0 0
    %243 = vmatpush1.bf16.msra.mxu0 0
    %244 = vmatprep.subr.bf16.mxu0 0
    %245 = vmatpush1.bf16.msra.mxu0 0
    %246 = vmatprep.subr.bf16.mxu0 0
    %247 = vmatpush1.bf16.msra.mxu0 0
    %248 = vmatprep.subr.bf16.mxu0 0
    %249 = vmatpush1.bf16.msra.mxu0 0
    %250 = vmatprep.subr.bf16.mxu0 0
    %251 = vmatpush1.bf16.msra.mxu0 0
    %252 = vmatprep.mubr.bf16.mxu0 0
    %253 = vmatmul.mubr.bf16.gmra.mrb[0].mxu0 %v218
    %v254 = vpop.f32.mrb[0].mxu0
    %v255 = vadd.f32 %v209, %v254
    %v256 = vpop.f32.mrb[0].mxu0
    %v257 = vpop.f32.mrb[0].mxu0
    %v258 = vadd.f32 %v209, %v257
    %v259 = vpop.f32.mrb[0].mxu0
    %260 = vdwg.mxu0
    %v261 = vld [vmem:[%s11] sm:$0xff]
    %v262 = vadd.f32 %v255, %v261
    %v263 = vadd.f32 %v258, %v261
    %v264 = vld [vmem:[%s13] sm:$0x1]
    %v265 = vld [vmem:[%s15] sm:$0x1]
    %vm266 = vcmask 261120
    %v267 = vsel %vm266, %v262, 0.0
    %268 = vadd.xlane.f32.xlu0 %v267
    %v269 = vpop.xlane.xlu0 %268
    %v270 = vsel %vm266, %v263, 0.0
    %271 = vadd.xlane.f32.xlu0 %v270
    %v272 = vpop.xlane.xlu0 %271
    %v273 = vrcp.pop 32.0
    %v274 = vmul.f32 %v269, %v273
    %v275 = vmul.f32 %v272, %v273
    %v276 = vsub.f32 %v262, %v274
    %v277 = vsub.f32 %v263, %v275
    %v278 = vmul.f32 %v276, %v276
    %v279 = vmul.f32 %v277, %v277
    %v280 = vsel %vm266, %v278, 0.0
    %281 = vadd.xlane.f32.xlu0 %v280
    %v282 = vpop.xlane.xlu0 %281
    %v283 = vsel %vm266, %v279, 0.0
    %284 = vadd.xlane.f32.xlu0 %v283
    %v285 = vpop.xlane.xlu0 %284
    %v286 = vmul.f32 %v282, %v273
    %v287 = vmul.f32 %v285, %v273
    %v288 = vadd.f32 %v286, 1e-05
    %v289 = vadd.f32 %v287, 1e-05
    %v290 = vrsqrt.pop %v288
    %v291 = vrsqrt.pop %v289
    %v292 = vmul.f32 %v276, %v290
    %v293 = vmul.f32 %v277, %v291
    %v295 = vlaneseq
    %v296 = vshrl.u32 %v295, 7
    %v297 = vsub.s32 0, %v296
    %v298 = vrot.slane %v264, %v297
    %v300 = vmul.f32 %v292, %v298
    %v301 = vmul.f32 %v293, %v298
    %v303 = vlaneseq
    %v304 = vshrl.u32 %v303, 7
    %v305 = vsub.s32 0, %v304
    %v306 = vrot.slane %v265, %v305
    %v308 = vadd.f32 %v300, %v306
    %v309 = vadd.f32 %v301, %v306
    %v310 = vpack.c.bf16 %v308, %v308
    %v311 = vpack.c.bf16 %v309, %v309
    %v312 = vld [vmem:[%s17] sm:$0xff]
    %v313 = vld [vmem:[%s17 + $0x8] sm:$0xff]
    %v314 = vld [vmem:[%s17 + $0x10] sm:$0xff]
    %v315 = vld [vmem:[%s17 + $0x18] sm:$0xff]
    %v316 = vpack.c.bf16 %v313, %v312
    %v317 = vpack.c.bf16 %v315, %v314
    %v320 = vunpack.c.l.b16 %v310
    %v321 = vunpack.c.l.b16 %v311
    %v322 = vpack.c.b16 %v321, %v320
    %v324 = vsel %vm266, %v322, 0
    %326 = vmatprep.subr.bf16.mxu0 0
    %327 = vmatpush1.bf16.msra.mxu0 %v316
    %328 = vmatprep.subr.bf16.mxu0 0
    %329 = vmatpush1.bf16.msra.mxu0 %v317
    %330 = vmatprep.subr.bf16.mxu0 0
    %331 = vmatpush1.bf16.msra.mxu0 0
    %332 = vmatprep.subr.bf16.mxu0 0
    %333 = vmatpush1.bf16.msra.mxu0 0
    %334 = vmatprep.subr.bf16.mxu0 0
    %335 = vmatpush1.bf16.msra.mxu0 0
    %336 = vmatprep.subr.bf16.mxu0 0
    %337 = vmatpush1.bf16.msra.mxu0 0
    %338 = vmatprep.subr.bf16.mxu0 0
    %339 = vmatpush1.bf16.msra.mxu0 0
    %340 = vmatprep.subr.bf16.mxu0 0
    %341 = vmatpush1.bf16.msra.mxu0 0
    %342 = vmatprep.subr.bf16.mxu0 0
    %343 = vmatpush1.bf16.msra.mxu0 0
    %344 = vmatprep.subr.bf16.mxu0 0
    %345 = vmatpush1.bf16.msra.mxu0 0
    %346 = vmatprep.subr.bf16.mxu0 0
    %347 = vmatpush1.bf16.msra.mxu0 0
    %348 = vmatprep.subr.bf16.mxu0 0
    %349 = vmatpush1.bf16.msra.mxu0 0
    %350 = vmatprep.subr.bf16.mxu0 0
    %351 = vmatpush1.bf16.msra.mxu0 0
    %352 = vmatprep.subr.bf16.mxu0 0
    %353 = vmatpush1.bf16.msra.mxu0 0
    %354 = vmatprep.subr.bf16.mxu0 0
    %355 = vmatpush1.bf16.msra.mxu0 0
    %356 = vmatprep.subr.bf16.mxu0 0
    %357 = vmatpush1.bf16.msra.mxu0 0
    %358 = vmatprep.mubr.bf16.mxu0 0
    %359 = vmatmul.mubr.bf16.gmra.mrb[0].mxu0 %v324
    %v360 = vpop.f32.mrb[0].mxu0
    %v361 = vadd.f32 0.0, %v360
    %v362 = vpop.f32.mrb[0].mxu0
    %v363 = vpop.f32.mrb[0].mxu0
    %v364 = vadd.f32 0.0, %v363
    %v365 = vpop.f32.mrb[0].mxu0
    %366 = vdwg.mxu0
    %v367 = vld [vmem:[%s19] sm:$0xff]
    %v368 = vld [vmem:[%s19 + $0x8] sm:$0xff]
    %v369 = vld [vmem:[%s19 + $0x10] sm:$0xff]
    %v370 = vld [vmem:[%s19 + $0x18] sm:$0xff]
    %v371 = vpack.c.bf16 %v368, %v367
    %v372 = vpack.c.bf16 %v370, %v369
    %373 = vmatprep.subr.bf16.mxu0 0
    %374 = vmatpush1.bf16.msra.mxu0 %v371
    %375 = vmatprep.subr.bf16.mxu0 0
    %376 = vmatpush1.bf16.msra.mxu0 %v372
    %377 = vmatprep.subr.bf16.mxu0 0
    %378 = vmatpush1.bf16.msra.mxu0 0
    %379 = vmatprep.subr.bf16.mxu0 0
    %380 = vmatpush1.bf16.msra.mxu0 0
    %381 = vmatprep.subr.bf16.mxu0 0
    %382 = vmatpush1.bf16.msra.mxu0 0
    %383 = vmatprep.subr.bf16.mxu0 0
    %384 = vmatpush1.bf16.msra.mxu0 0
    %385 = vmatprep.subr.bf16.mxu0 0
    %386 = vmatpush1.bf16.msra.mxu0 0
    %387 = vmatprep.subr.bf16.mxu0 0
    %388 = vmatpush1.bf16.msra.mxu0 0
    %389 = vmatprep.subr.bf16.mxu0 0
    %390 = vmatpush1.bf16.msra.mxu0 0
    %391 = vmatprep.subr.bf16.mxu0 0
    %392 = vmatpush1.bf16.msra.mxu0 0
    %393 = vmatprep.subr.bf16.mxu0 0
    %394 = vmatpush1.bf16.msra.mxu0 0
    %395 = vmatprep.subr.bf16.mxu0 0
    %396 = vmatpush1.bf16.msra.mxu0 0
    %397 = vmatprep.subr.bf16.mxu0 0
    %398 = vmatpush1.bf16.msra.mxu0 0
    %399 = vmatprep.subr.bf16.mxu0 0
    %400 = vmatpush1.bf16.msra.mxu0 0
    %401 = vmatprep.subr.bf16.mxu0 0
    %402 = vmatpush1.bf16.msra.mxu0 0
    %403 = vmatprep.subr.bf16.mxu0 0
    %404 = vmatpush1.bf16.msra.mxu0 0
    %405 = vmatprep.mubr.bf16.mxu0 0
    %406 = vmatmul.mubr.bf16.gmra.mrb[0].mxu0 %v324
    %v407 = vpop.f32.mrb[0].mxu0
    %v408 = vadd.f32 0.0, %v407
    %v409 = vpop.f32.mrb[0].mxu0
    %v410 = vpop.f32.mrb[0].mxu0
    %v411 = vadd.f32 0.0, %v410
    %v412 = vpop.f32.mrb[0].mxu0
    %413 = vdwg.mxu0
    %v414 = vld [vmem:[%s21] sm:$0xff]
    %v415 = vld [vmem:[%s21 + $0x8] sm:$0xff]
    %v416 = vld [vmem:[%s21 + $0x10] sm:$0xff]
    %v417 = vld [vmem:[%s21 + $0x18] sm:$0xff]
    %v418 = vpack.c.bf16 %v415, %v414
    %v419 = vpack.c.bf16 %v417, %v416
    %420 = vmatprep.subr.bf16.mxu0 0
    %421 = vmatpush1.bf16.msra.mxu0 %v418
    %422 = vmatprep.subr.bf16.mxu0 0
    %423 = vmatpush1.bf16.msra.mxu0 %v419
    %424 = vmatprep.subr.bf16.mxu0 0
    %425 = vmatpush1.bf16.msra.mxu0 0
    %426 = vmatprep.subr.bf16.mxu0 0
    %427 = vmatpush1.bf16.msra.mxu0 0
    %428 = vmatprep.subr.bf16.mxu0 0
    %429 = vmatpush1.bf16.msra.mxu0 0
    %430 = vmatprep.subr.bf16.mxu0 0
    %431 = vmatpush1.bf16.msra.mxu0 0
    %432 = vmatprep.subr.bf16.mxu0 0
    %433 = vmatpush1.bf16.msra.mxu0 0
    %434 = vmatprep.subr.bf16.mxu0 0
    %435 = vmatpush1.bf16.msra.mxu0 0
    %436 = vmatprep.subr.bf16.mxu0 0
    %437 = vmatpush1.bf16.msra.mxu0 0
    %438 = vmatprep.subr.bf16.mxu0 0
    %439 = vmatpush1.bf16.msra.mxu0 0
    %440 = vmatprep.subr.bf16.mxu0 0
    %441 = vmatpush1.bf16.msra.mxu0 0
    %442 = vmatprep.subr.bf16.mxu0 0
    %443 = vmatpush1.bf16.msra.mxu0 0
    %444 = vmatprep.subr.bf16.mxu0 0
    %445 = vmatpush1.bf16.msra.mxu0 0
    %446 = vmatprep.subr.bf16.mxu0 0
    %447 = vmatpush1.bf16.msra.mxu0 0
    %448 = vmatprep.subr.bf16.mxu0 0
    %449 = vmatpush1.bf16.msra.mxu0 0
    %450 = vmatprep.subr.bf16.mxu0 0
    %451 = vmatpush1.bf16.msra.mxu0 0
    %452 = vmatprep.mubr.bf16.mxu0 0
    %453 = vmatmul.mubr.bf16.gmra.mrb[0].mxu0 %v324
    %v454 = vpop.f32.mrb[0].mxu0
    %v455 = vadd.f32 0.0, %v454
    %v456 = vpop.f32.mrb[0].mxu0
    %v457 = vpop.f32.mrb[0].mxu0
    %v458 = vadd.f32 0.0, %v457
    %v459 = vpop.f32.mrb[0].mxu0
    %460 = vdwg.mxu0
    %v461 = vmul.f32 %v361, 0.25
    %v462 = vmul.f32 %v364, 0.25
    %v463 = vpack.c.bf16 %v461, %v461
    %v464 = vpack.c.bf16 %v462, %v462
    %v465 = vpack.c.bf16 %v408, %v408
    %v466 = vpack.c.bf16 %v411, %v411
    %vm467 = vcmask 130048
    %v469 = vsel %vm467, %v463, 0
    %v472 = vsel %vm467, %v465, 0
    %474 = vmatprep.subr.bf16.mxu0 0
    %475 = vmatpush1.bf16.xpose.msra.mxu0 %v472
    %476 = vmatprep.subr.bf16.mxu0 0
    %477 = vmatpush1.bf16.xpose.msra.mxu0 0
    %478 = vmatprep.subr.bf16.mxu0 0
    %479 = vmatpush1.bf16.xpose.msra.mxu0 0
    %480 = vmatprep.subr.bf16.mxu0 0
    %481 = vmatpush1.bf16.xpose.msra.mxu0 0
    %482 = vmatprep.subr.bf16.mxu0 0
    %483 = vmatpush1.bf16.xpose.msra.mxu0 0
    %484 = vmatprep.subr.bf16.mxu0 0
    %485 = vmatpush1.bf16.xpose.msra.mxu0 0
    %486 = vmatprep.subr.bf16.mxu0 0
    %487 = vmatpush1.bf16.xpose.msra.mxu0 0
    %488 = vmatprep.subr.bf16.mxu0 0
    %489 = vmatpush1.bf16.xpose.msra.mxu0 0
    %490 = vmatprep.subr.bf16.mxu0 0
    %491 = vmatpush1.bf16.xpose.msra.mxu0 0
    %492 = vmatprep.subr.bf16.mxu0 0
    %493 = vmatpush1.bf16.xpose.msra.mxu0 0
    %494 = vmatprep.subr.bf16.mxu0 0
    %495 = vmatpush1.bf16.xpose.msra.mxu0 0
    %496 = vmatprep.subr.bf16.mxu0 0
    %497 = vmatpush1.bf16.xpose.msra.mxu0 0
    %498 = vmatprep.subr.bf16.mxu0 0
    %499 = vmatpush1.bf16.xpose.msra.mxu0 0
    %500 = vmatprep.subr.bf16.mxu0 0
    %501 = vmatpush1.bf16.xpose.msra.mxu0 0
    %502 = vmatprep.subr.bf16.mxu0 0
    %503 = vmatpush1.bf16.xpose.msra.mxu0 0
    %504 = vmatprep.subr.bf16.mxu0 0
    %505 = vmatpush1.bf16.xpose.msra.mxu0 0
    %506 = vmatprep.mubr.bf16.mxu0 0
    %507 = vmatmul.mubr.bf16.gmra.mrb[0].mxu0 %v469
    %v508 = vpop.f32.mrb[0].mxu0
    %v509 = vadd.f32 0.0, %v508
    %v510 = vpop.f32.mrb[0].mxu0
    %v511 = vpop.f32.mrb[0].mxu0
    %v512 = vpop.f32.mrb[0].mxu0
    %513 = vdwg.mxu0
    %v515 = vsel %vm467, %v464, 0
    %v518 = vsel %vm467, %v466, 0
    %520 = vmatprep.subr.bf16.mxu0 0
    %521 = vmatpush1.bf16.xpose.msra.mxu0 %v518
    %522 = vmatprep.subr.bf16.mxu0 0
    %523 = vmatpush1.bf16.xpose.msra.mxu0 0
    %524 = vmatprep.subr.bf16.mxu0 0
    %525 = vmatpush1.bf16.xpose.msra.mxu0 0
    %526 = vmatprep.subr.bf16.mxu0 0
    %527 = vmatpush1.bf16.xpose.msra.mxu0 0
    %528 = vmatprep.subr.bf16.mxu0 0
    %529 = vmatpush1.bf16.xpose.msra.mxu0 0
    %530 = vmatprep.subr.bf16.mxu0 0
    %531 = vmatpush1.bf16.xpose.msra.mxu0 0
    %532 = vmatprep.subr.bf16.mxu0 0
    %533 = vmatpush1.bf16.xpose.msra.mxu0 0
    %534 = vmatprep.subr.bf16.mxu0 0
    %535 = vmatpush1.bf16.xpose.msra.mxu0 0
    %536 = vmatprep.subr.bf16.mxu0 0
    %537 = vmatpush1.bf16.xpose.msra.mxu0 0
    %538 = vmatprep.subr.bf16.mxu0 0
    %539 = vmatpush1.bf16.xpose.msra.mxu0 0
    %540 = vmatprep.subr.bf16.mxu0 0
    %541 = vmatpush1.bf16.xpose.msra.mxu0 0
    %542 = vmatprep.subr.bf16.mxu0 0
    %543 = vmatpush1.bf16.xpose.msra.mxu0 0
    %544 = vmatprep.subr.bf16.mxu0 0
    %545 = vmatpush1.bf16.xpose.msra.mxu0 0
    %546 = vmatprep.subr.bf16.mxu0 0
    %547 = vmatpush1.bf16.xpose.msra.mxu0 0
    %548 = vmatprep.subr.bf16.mxu0 0
    %549 = vmatpush1.bf16.xpose.msra.mxu0 0
    %550 = vmatprep.subr.bf16.mxu0 0
    %551 = vmatpush1.bf16.xpose.msra.mxu0 0
    %552 = vmatprep.mubr.bf16.mxu0 0
    %553 = vmatmul.mubr.bf16.gmra.mrb[0].mxu0 %v515
    %v554 = vpop.f32.mrb[0].mxu0
    %v555 = vadd.f32 0.0, %v554
    %v556 = vpop.f32.mrb[0].mxu0
    %v557 = vpop.f32.mrb[0].mxu0
    %v558 = vpop.f32.mrb[0].mxu0
    %559 = vdwg.mxu0
    %vm560 = vcmask 64512
    %v561 = vsel %vm560, %v509, -inf
    %562 = vmax.xlane.f32.xlu0 %v561
    %v563 = vpop.xlane.xlu0 %562
    %v564 = vsel %vm560, %v555, -inf
    %565 = vmax.xlane.f32.xlu0 %v564
    %v566 = vpop.xlane.xlu0 %565
    %v567 = vsub.f32 %v509, %v563
    %v568 = vsub.f32 %v555, %v566
    %v569 = vmul.f32 %v567, 1.442695
    %v570 = vpow.pop %v569
    %v571 = vmul.f32 %v568, 1.442695
    %v572 = vpow.pop %v571
    %v573 = vsel %vm560, %v570, 0.0
    %574 = vadd.xlane.f32.xlu0 %v573
    %v575 = vpop.xlane.xlu0 %574
    %v576 = vsel %vm560, %v572, 0.0
    %577 = vadd.xlane.f32.xlu0 %v576
    %v578 = vpop.xlane.xlu0 %577
    %v579 = vrcp.pop %v575
    %v580 = vrcp.pop %v578
    %v581 = vmul.f32 %v570, %v579
    %v582 = vmul.f32 %v572, %v580
    %v583 = vpack.c.bf16 %v581, %v581
    %v584 = vpack.c.bf16 %v582, %v582
    %v585 = vpack.c.bf16 %v455, %v455
    %v586 = vpack.c.bf16 %v458, %v458
    %v588 = vsel %vm560, %v583, 0
    %vm590 = vcmask 1043456
    %v592 = vsel %vm590, %v585, 0
    %594 = vmatprep.subr.bf16.mxu0 0
    %595 = vmatpush1.bf16.msra.mxu0 %v592
    %596 = vmatprep.subr.bf16.mxu0 0
    %597 = vmatpush1.bf16.msra.mxu0 0
    %598 = vmatprep.subr.bf16.mxu0 0
    %599 = vmatpush1.bf16.msra.mxu0 0
    %600 = vmatprep.subr.bf16.mxu0 0
    %601 = vmatpush1.bf16.msra.mxu0 0
    %602 = vmatprep.subr.bf16.mxu0 0
    %603 = vmatpush1.bf16.msra.mxu0 0
    %604 = vmatprep.subr.bf16.mxu0 0
    %605 = vmatpush1.bf16.msra.mxu0 0
    %606 = vmatprep.subr.bf16.mxu0 0
    %607 = vmatpush1.bf16.msra.mxu0 0
    %608 = vmatprep.subr.bf16.mxu0 0
    %609 = vmatpush1.bf16.msra.mxu0 0
    %610 = vmatprep.subr.bf16.mxu0 0
    %611 = vmatpush1.bf16.msra.mxu0 0
    %612 = vmatprep.subr.bf16.mxu0 0
    %613 = vmatpush1.bf16.msra.mxu0 0
    %614 = vmatprep.subr.bf16.mxu0 0
    %615 = vmatpush1.bf16.msra.mxu0 0
    %616 = vmatprep.subr.bf16.mxu0 0
    %617 = vmatpush1.bf16.msra.mxu0 0
    %618 = vmatprep.subr.bf16.mxu0 0
    %619 = vmatpush1.bf16.msra.mxu0 0
    %620 = vmatprep.subr.bf16.mxu0 0
    %621 = vmatpush1.bf16.msra.mxu0 0
    %622 = vmatprep.subr.bf16.mxu0 0
    %623 = vmatpush1.bf16.msra.mxu0 0
    %624 = vmatprep.subr.bf16.mxu0 0
    %625 = vmatpush1.bf16.msra.mxu0 0
    %626 = vmatprep.mubr.bf16.mxu0 0
    %627 = vmatmul.mubr.bf16.gmra.mrb[0].mxu0 %v588
    %v628 = vpop.f32.mrb[0].mxu0
    %v629 = vadd.f32 0.0, %v628
    %v630 = vpop.f32.mrb[0].mxu0
    %v631 = vpop.f32.mrb[0].mxu0
    %v632 = vpop.f32.mrb[0].mxu0
    %633 = vdwg.mxu0
    %v635 = vsel %vm560, %v584, 0
    %v638 = vsel %vm590, %v586, 0
    %640 = vmatprep.subr.bf16.mxu0 0
    %641 = vmatpush1.bf16.msra.mxu0 %v638
    %642 = vmatprep.subr.bf16.mxu0 0
    %643 = vmatpush1.bf16.msra.mxu0 0
    %644 = vmatprep.subr.bf16.mxu0 0
    %645 = vmatpush1.bf16.msra.mxu0 0
    %646 = vmatprep.subr.bf16.mxu0 0
    %647 = vmatpush1.bf16.msra.mxu0 0
    %648 = vmatprep.subr.bf16.mxu0 0
    %649 = vmatpush1.bf16.msra.mxu0 0
    %650 = vmatprep.subr.bf16.mxu0 0
    %651 = vmatpush1.bf16.msra.mxu0 0
    %652 = vmatprep.subr.bf16.mxu0 0
    %653 = vmatpush1.bf16.msra.mxu0 0
    %654 = vmatprep.subr.bf16.mxu0 0
    %655 = vmatpush1.bf16.msra.mxu0 0
    %656 = vmatprep.subr.bf16.mxu0 0
    %657 = vmatpush1.bf16.msra.mxu0 0
    %658 = vmatprep.subr.bf16.mxu0 0
    %659 = vmatpush1.bf16.msra.mxu0 0
    %660 = vmatprep.subr.bf16.mxu0 0
    %661 = vmatpush1.bf16.msra.mxu0 0
    %662 = vmatprep.subr.bf16.mxu0 0
    %663 = vmatpush1.bf16.msra.mxu0 0
    %664 = vmatprep.subr.bf16.mxu0 0
    %665 = vmatpush1.bf16.msra.mxu0 0
    %666 = vmatprep.subr.bf16.mxu0 0
    %667 = vmatpush1.bf16.msra.mxu0 0
    %668 = vmatprep.subr.bf16.mxu0 0
    %669 = vmatpush1.bf16.msra.mxu0 0
    %670 = vmatprep.subr.bf16.mxu0 0
    %671 = vmatpush1.bf16.msra.mxu0 0
    %672 = vmatprep.mubr.bf16.mxu0 0
    %673 = vmatmul.mubr.bf16.gmra.mrb[0].mxu0 %v635
    %v674 = vpop.f32.mrb[0].mxu0
    %v675 = vadd.f32 0.0, %v674
    %v676 = vpop.f32.mrb[0].mxu0
    %v677 = vpop.f32.mrb[0].mxu0
    %v678 = vpop.f32.mrb[0].mxu0
    %679 = vdwg.mxu0
    %v680 = vpack.c.bf16 %v629, %v629
    %v681 = vpack.c.bf16 %v675, %v675
    %v682 = vld [vmem:[%s23] sm:$0xff]
    %v683 = vld [vmem:[%s23 + $0x8] sm:$0xff]
    %v684 = vpack.c.bf16 %v683, %v682
    %s685 = scalar_lea.vmem %s17, 32
    %v686 = vld [vmem:[%s685] sm:$0xff]
    %v687 = vld [vmem:[%s685 + $0x8] sm:$0xff]
    %v688 = vld [vmem:[%s685 + $0x10] sm:$0xff]
    %v689 = vld [vmem:[%s685 + $0x18] sm:$0xff]
    %v690 = vpack.c.bf16 %v687, %v686
    %v691 = vpack.c.bf16 %v689, %v688
    %692 = vmatprep.subr.bf16.mxu0 0
    %693 = vmatpush1.bf16.msra.mxu0 %v690
    %694 = vmatprep.subr.bf16.mxu0 0
    %695 = vmatpush1.bf16.msra.mxu0 %v691
    %696 = vmatprep.subr.bf16.mxu0 0
    %697 = vmatpush1.bf16.msra.mxu0 0
    %698 = vmatprep.subr.bf16.mxu0 0
    %699 = vmatpush1.bf16.msra.mxu0 0
    %700 = vmatprep.subr.bf16.mxu0 0
    %701 = vmatpush1.bf16.msra.mxu0 0
    %702 = vmatprep.subr.bf16.mxu0 0
    %703 = vmatpush1.bf16.msra.mxu0 0
    %704 = vmatprep.subr.bf16.mxu0 0
    %705 = vmatpush1.bf16.msra.mxu0 0
    %706 = vmatprep.subr.bf16.mxu0 0
    %707 = vmatpush1.bf16.msra.mxu0 0
    %708 = vmatprep.subr.bf16.mxu0 0
    %709 = vmatpush1.bf16.msra.mxu0 0
    %710 = vmatprep.subr.bf16.mxu0 0
    %711 = vmatpush1.bf16.msra.mxu0 0
    %712 = vmatprep.subr.bf16.mxu0 0
    %713 = vmatpush1.bf16.msra.mxu0 0
    %714 = vmatprep.subr.bf16.mxu0 0
    %715 = vmatpush1.bf16.msra.mxu0 0
    %716 = vmatprep.subr.bf16.mxu0 0
    %717 = vmatpush1.bf16.msra.mxu0 0
    %718 = vmatprep.subr.bf16.mxu0 0
    %719 = vmatpush1.bf16.msra.mxu0 0
    %720 = vmatprep.subr.bf16.mxu0 0
    %721 = vmatpush1.bf16.msra.mxu0 0
    %722 = vmatprep.subr.bf16.mxu0 0
    %723 = vmatpush1.bf16.msra.mxu0 0
    %724 = vmatprep.mubr.bf16.mxu0 0
    %725 = vmatmul.mubr.bf16.gmra.mrb[0].mxu0 %v324
    %v726 = vpop.f32.mrb[0].mxu0
    %v727 = vadd.f32 0.0, %v726
    %v728 = vpop.f32.mrb[0].mxu0
    %v729 = vpop.f32.mrb[0].mxu0
    %v730 = vadd.f32 0.0, %v729
    %v731 = vpop.f32.mrb[0].mxu0
    %732 = vdwg.mxu0
    %s733 = scalar_lea.vmem %s19, 32
    %v734 = vld [vmem:[%s733] sm:$0xff]
    %v735 = vld [vmem:[%s733 + $0x8] sm:$0xff]
    %v736 = vld [vmem:[%s733 + $0x10] sm:$0xff]
    %v737 = vld [vmem:[%s733 + $0x18] sm:$0xff]
    %v738 = vpack.c.bf16 %v735, %v734
    %v739 = vpack.c.bf16 %v737, %v736
    %740 = vmatprep.subr.bf16.mxu0 0
    %741 = vmatpush1.bf16.msra.mxu0 %v738
    %742 = vmatprep.subr.bf16.mxu0 0
    %743 = vmatpush1.bf16.msra.mxu0 %v739
    %744 = vmatprep.subr.bf16.mxu0 0
    %745 = vmatpush1.bf16.msra.mxu0 0
    %746 = vmatprep.subr.bf16.mxu0 0
    %747 = vmatpush1.bf16.msra.mxu0 0
    %748 = vmatprep.subr.bf16.mxu0 0
    %749 = vmatpush1.bf16.msra.mxu0 0
    %750 = vmatprep.subr.bf16.mxu0 0
    %751 = vmatpush1.bf16.msra.mxu0 0
    %752 = vmatprep.subr.bf16.mxu0 0
    %753 = vmatpush1.bf16.msra.mxu0 0
    %754 = vmatprep.subr.bf16.mxu0 0
    %755 = vmatpush1.bf16.msra.mxu0 0
    %756 = vmatprep.subr.bf16.mxu0 0
    %757 = vmatpush1.bf16.msra.mxu0 0
    %758 = vmatprep.subr.bf16.mxu0 0
    %759 = vmatpush1.bf16.msra.mxu0 0
    %760 = vmatprep.subr.bf16.mxu0 0
    %761 = vmatpush1.bf16.msra.mxu0 0
    %762 = vmatprep.subr.bf16.mxu0 0
    %763 = vmatpush1.bf16.msra.mxu0 0
    %764 = vmatprep.subr.bf16.mxu0 0
    %765 = vmatpush1.bf16.msra.mxu0 0
    %766 = vmatprep.subr.bf16.mxu0 0
    %767 = vmatpush1.bf16.msra.mxu0 0
    %768 = vmatprep.subr.bf16.mxu0 0
    %769 = vmatpush1.bf16.msra.mxu0 0
    %770 = vmatprep.subr.bf16.mxu0 0
    %771 = vmatpush1.bf16.msra.mxu0 0
    %772 = vmatprep.mubr.bf16.mxu0 0
    %773 = vmatmul.mubr.bf16.gmra.mrb[0].mxu0 %v324
    %v774 = vpop.f32.mrb[0].mxu0
    %v775 = vadd.f32 0.0, %v774
    %v776 = vpop.f32.mrb[0].mxu0
    %v777 = vpop.f32.mrb[0].mxu0
    %v778 = vadd.f32 0.0, %v777
    %v779 = vpop.f32.mrb[0].mxu0
    %780 = vdwg.mxu0
    %s781 = scalar_lea.vmem %s21, 32
    %v782 = vld [vmem:[%s781] sm:$0xff]
    %v783 = vld [vmem:[%s781 + $0x8] sm:$0xff]
    %v784 = vld [vmem:[%s781 + $0x10] sm:$0xff]
    %v785 = vld [vmem:[%s781 + $0x18] sm:$0xff]
    %v786 = vpack.c.bf16 %v783, %v782
    %v787 = vpack.c.bf16 %v785, %v784
    %788 = vmatprep.subr.bf16.mxu0 0
    %789 = vmatpush1.bf16.msra.mxu0 %v786
    %790 = vmatprep.subr.bf16.mxu0 0
    %791 = vmatpush1.bf16.msra.mxu0 %v787
    %792 = vmatprep.subr.bf16.mxu0 0
    %793 = vmatpush1.bf16.msra.mxu0 0
    %794 = vmatprep.subr.bf16.mxu0 0
    %795 = vmatpush1.bf16.msra.mxu0 0
    %796 = vmatprep.subr.bf16.mxu0 0
    %797 = vmatpush1.bf16.msra.mxu0 0
    %798 = vmatprep.subr.bf16.mxu0 0
    %799 = vmatpush1.bf16.msra.mxu0 0
    %800 = vmatprep.subr.bf16.mxu0 0
    %801 = vmatpush1.bf16.msra.mxu0 0
    %802 = vmatprep.subr.bf16.mxu0 0
    %803 = vmatpush1.bf16.msra.mxu0 0
    %804 = vmatprep.subr.bf16.mxu0 0
    %805 = vmatpush1.bf16.msra.mxu0 0
    %806 = vmatprep.subr.bf16.mxu0 0
    %807 = vmatpush1.bf16.msra.mxu0 0
    %808 = vmatprep.subr.bf16.mxu0 0
    %809 = vmatpush1.bf16.msra.mxu0 0
    %810 = vmatprep.subr.bf16.mxu0 0
    %811 = vmatpush1.bf16.msra.mxu0 0
    %812 = vmatprep.subr.bf16.mxu0 0
    %813 = vmatpush1.bf16.msra.mxu0 0
    %814 = vmatprep.subr.bf16.mxu0 0
    %815 = vmatpush1.bf16.msra.mxu0 0
    %816 = vmatprep.subr.bf16.mxu0 0
    %817 = vmatpush1.bf16.msra.mxu0 0
    %818 = vmatprep.subr.bf16.mxu0 0
    %819 = vmatpush1.bf16.msra.mxu0 0
    %820 = vmatprep.mubr.bf16.mxu0 0
    %821 = vmatmul.mubr.bf16.gmra.mrb[0].mxu0 %v324
    %v822 = vpop.f32.mrb[0].mxu0
    %v823 = vadd.f32 0.0, %v822
    %v824 = vpop.f32.mrb[0].mxu0
    %v825 = vpop.f32.mrb[0].mxu0
    %v826 = vadd.f32 0.0, %v825
    %v827 = vpop.f32.mrb[0].mxu0
    %828 = vdwg.mxu0
    %v829 = vmul.f32 %v727, 0.25
    %v830 = vmul.f32 %v730, 0.25
    %v831 = vpack.c.bf16 %v829, %v829
    %v832 = vpack.c.bf16 %v830, %v830
    %v833 = vpack.c.bf16 %v775, %v775
    %v834 = vpack.c.bf16 %v778, %v778
    %v836 = vsel %vm467, %v831, 0
    %v839 = vsel %vm467, %v833, 0
    %841 = vmatprep.subr.bf16.mxu0 0
    %842 = vmatpush1.bf16.xpose.msra.mxu0 %v839
    %843 = vmatprep.subr.bf16.mxu0 0
    %844 = vmatpush1.bf16.xpose.msra.mxu0 0
    %845 = vmatprep.subr.bf16.mxu0 0
    %846 = vmatpush1.bf16.xpose.msra.mxu0 0
    %847 = vmatprep.subr.bf16.mxu0 0
    %848 = vmatpush1.bf16.xpose.msra.mxu0 0
    %849 = vmatprep.subr.bf16.mxu0 0
    %850 = vmatpush1.bf16.xpose.msra.mxu0 0
    %851 = vmatprep.subr.bf16.mxu0 0
    %852 = vmatpush1.bf16.xpose.msra.mxu0 0
    %853 = vmatprep.subr.bf16.mxu0 0
    %854 = vmatpush1.bf16.xpose.msra.mxu0 0
    %855 = vmatprep.subr.bf16.mxu0 0
    %856 = vmatpush1.bf16.xpose.msra.mxu0 0
    %857 = vmatprep.subr.bf16.mxu0 0
    %858 = vmatpush1.bf16.xpose.msra.mxu0 0
    %859 = vmatprep.subr.bf16.mxu0 0
    %860 = vmatpush1.bf16.xpose.msra.mxu0 0
    %861 = vmatprep.subr.bf16.mxu0 0
    %862 = vmatpush1.bf16.xpose.msra.mxu0 0
    %863 = vmatprep.subr.bf16.mxu0 0
    %864 = vmatpush1.bf16.xpose.msra.mxu0 0
    %865 = vmatprep.subr.bf16.mxu0 0
    %866 = vmatpush1.bf16.xpose.msra.mxu0 0
    %867 = vmatprep.subr.bf16.mxu0 0
    %868 = vmatpush1.bf16.xpose.msra.mxu0 0
    %869 = vmatprep.subr.bf16.mxu0 0
    %870 = vmatpush1.bf16.xpose.msra.mxu0 0
    %871 = vmatprep.subr.bf16.mxu0 0
    %872 = vmatpush1.bf16.xpose.msra.mxu0 0
    %873 = vmatprep.mubr.bf16.mxu0 0
    %874 = vmatmul.mubr.bf16.gmra.mrb[0].mxu0 %v836
    %v875 = vpop.f32.mrb[0].mxu0
    %v876 = vadd.f32 0.0, %v875
    %v877 = vpop.f32.mrb[0].mxu0
    %v878 = vpop.f32.mrb[0].mxu0
    %v879 = vpop.f32.mrb[0].mxu0
    %880 = vdwg.mxu0
    %v882 = vsel %vm467, %v832, 0
    %v885 = vsel %vm467, %v834, 0
    %887 = vmatprep.subr.bf16.mxu0 0
    %888 = vmatpush1.bf16.xpose.msra.mxu0 %v885
    %889 = vmatprep.subr.bf16.mxu0 0
    %890 = vmatpush1.bf16.xpose.msra.mxu0 0
    %891 = vmatprep.subr.bf16.mxu0 0
    %892 = vmatpush1.bf16.xpose.msra.mxu0 0
    %893 = vmatprep.subr.bf16.mxu0 0
    %894 = vmatpush1.bf16.xpose.msra.mxu0 0
    %895 = vmatprep.subr.bf16.mxu0 0
    %896 = vmatpush1.bf16.xpose.msra.mxu0 0
    %897 = vmatprep.subr.bf16.mxu0 0
    %898 = vmatpush1.bf16.xpose.msra.mxu0 0
    %899 = vmatprep.subr.bf16.mxu0 0
    %900 = vmatpush1.bf16.xpose.msra.mxu0 0
    %901 = vmatprep.subr.bf16.mxu0 0
    %902 = vmatpush1.bf16.xpose.msra.mxu0 0
    %903 = vmatprep.subr.bf16.mxu0 0
    %904 = vmatpush1.bf16.xpose.msra.mxu0 0
    %905 = vmatprep.subr.bf16.mxu0 0
    %906 = vmatpush1.bf16.xpose.msra.mxu0 0
    %907 = vmatprep.subr.bf16.mxu0 0
    %908 = vmatpush1.bf16.xpose.msra.mxu0 0
    %909 = vmatprep.subr.bf16.mxu0 0
    %910 = vmatpush1.bf16.xpose.msra.mxu0 0
    %911 = vmatprep.subr.bf16.mxu0 0
    %912 = vmatpush1.bf16.xpose.msra.mxu0 0
    %913 = vmatprep.subr.bf16.mxu0 0
    %914 = vmatpush1.bf16.xpose.msra.mxu0 0
    %915 = vmatprep.subr.bf16.mxu0 0
    %916 = vmatpush1.bf16.xpose.msra.mxu0 0
    %917 = vmatprep.subr.bf16.mxu0 0
    %918 = vmatpush1.bf16.xpose.msra.mxu0 0
    %919 = vmatprep.mubr.bf16.mxu0 0
    %920 = vmatmul.mubr.bf16.gmra.mrb[0].mxu0 %v882
    %v921 = vpop.f32.mrb[0].mxu0
    %v922 = vadd.f32 0.0, %v921
    %v923 = vpop.f32.mrb[0].mxu0
    %v924 = vpop.f32.mrb[0].mxu0
    %v925 = vpop.f32.mrb[0].mxu0
    %926 = vdwg.mxu0
    %v927 = vsel %vm560, %v876, -inf
    %928 = vmax.xlane.f32.xlu0 %v927
    %v929 = vpop.xlane.xlu0 %928
    %v930 = vsel %vm560, %v922, -inf
    %931 = vmax.xlane.f32.xlu0 %v930
    %v932 = vpop.xlane.xlu0 %931
    %v933 = vsub.f32 %v876, %v929
    %v934 = vsub.f32 %v922, %v932
    %v935 = vmul.f32 %v933, 1.442695
    %v936 = vpow.pop %v935
    %v937 = vmul.f32 %v934, 1.442695
    %v938 = vpow.pop %v937
    %v939 = vsel %vm560, %v936, 0.0
    %940 = vadd.xlane.f32.xlu0 %v939
    %v941 = vpop.xlane.xlu0 %940
    %v942 = vsel %vm560, %v938, 0.0
    %943 = vadd.xlane.f32.xlu0 %v942
    %v944 = vpop.xlane.xlu0 %943
    %v945 = vrcp.pop %v941
    %v946 = vrcp.pop %v944
    %v947 = vmul.f32 %v936, %v945
    %v948 = vmul.f32 %v938, %v946
    %v949 = vpack.c.bf16 %v947, %v947
    %v950 = vpack.c.bf16 %v948, %v948
    %v951 = vpack.c.bf16 %v823, %v823
    %v952 = vpack.c.bf16 %v826, %v826
    %v954 = vsel %vm560, %v949, 0
    %v957 = vsel %vm590, %v951, 0
    %959 = vmatprep.subr.bf16.mxu0 0
    %960 = vmatpush1.bf16.msra.mxu0 %v957
    %961 = vmatprep.subr.bf16.mxu0 0
    %962 = vmatpush1.bf16.msra.mxu0 0
    %963 = vmatprep.subr.bf16.mxu0 0
    %964 = vmatpush1.bf16.msra.mxu0 0
    %965 = vmatprep.subr.bf16.mxu0 0
    %966 = vmatpush1.bf16.msra.mxu0 0
    %967 = vmatprep.subr.bf16.mxu0 0
    %968 = vmatpush1.bf16.msra.mxu0 0
    %969 = vmatprep.subr.bf16.mxu0 0
    %970 = vmatpush1.bf16.msra.mxu0 0
    %971 = vmatprep.subr.bf16.mxu0 0
    %972 = vmatpush1.bf16.msra.mxu0 0
    %973 = vmatprep.subr.bf16.mxu0 0
    %974 = vmatpush1.bf16.msra.mxu0 0
    %975 = vmatprep.subr.bf16.mxu0 0
    %976 = vmatpush1.bf16.msra.mxu0 0
    %977 = vmatprep.subr.bf16.mxu0 0
    %978 = vmatpush1.bf16.msra.mxu0 0
    %979 = vmatprep.subr.bf16.mxu0 0
    %980 = vmatpush1.bf16.msra.mxu0 0
    %981 = vmatprep.subr.bf16.mxu0 0
    %982 = vmatpush1.bf16.msra.mxu0 0
    %983 = vmatprep.subr.bf16.mxu0 0
    %984 = vmatpush1.bf16.msra.mxu0 0
    %985 = vmatprep.subr.bf16.mxu0 0
    %986 = vmatpush1.bf16.msra.mxu0 0
    %987 = vmatprep.subr.bf16.mxu0 0
    %988 = vmatpush1.bf16.msra.mxu0 0
    %989 = vmatprep.subr.bf16.mxu0 0
    %990 = vmatpush1.bf16.msra.mxu0 0
    %991 = vmatprep.mubr.bf16.mxu0 0
    %992 = vmatmul.mubr.bf16.gmra.mrb[0].mxu0 %v954
    %v993 = vpop.f32.mrb[0].mxu0
    %v994 = vadd.f32 0.0, %v993
    %v995 = vpop.f32.mrb[0].mxu0
    %v996 = vpop.f32.mrb[0].mxu0
    %v997 = vpop.f32.mrb[0].mxu0
    %998 = vdwg.mxu0
    %v1000 = vsel %vm560, %v950, 0
    %v1003 = vsel %vm590, %v952, 0
    %1005 = vmatprep.subr.bf16.mxu0 0
    %1006 = vmatpush1.bf16.msra.mxu0 %v1003
    %1007 = vmatprep.subr.bf16.mxu0 0
    %1008 = vmatpush1.bf16.msra.mxu0 0
    %1009 = vmatprep.subr.bf16.mxu0 0
    %1010 = vmatpush1.bf16.msra.mxu0 0
    %1011 = vmatprep.subr.bf16.mxu0 0
    %1012 = vmatpush1.bf16.msra.mxu0 0
    %1013 = vmatprep.subr.bf16.mxu0 0
    %1014 = vmatpush1.bf16.msra.mxu0 0
    %1015 = vmatprep.subr.bf16.mxu0 0
    %1016 = vmatpush1.bf16.msra.mxu0 0
    %1017 = vmatprep.subr.bf16.mxu0 0
    %1018 = vmatpush1.bf16.msra.mxu0 0
    %1019 = vmatprep.subr.bf16.mxu0 0
    %1020 = vmatpush1.bf16.msra.mxu0 0
    %1021 = vmatprep.subr.bf16.mxu0 0
    %1022 = vmatpush1.bf16.msra.mxu0 0
    %1023 = vmatprep.subr.bf16.mxu0 0
    %1024 = vmatpush1.bf16.msra.mxu0 0
    %1025 = vmatprep.subr.bf16.mxu0 0
    %1026 = vmatpush1.bf16.msra.mxu0 0
    %1027 = vmatprep.subr.bf16.mxu0 0
    %1028 = vmatpush1.bf16.msra.mxu0 0
    %1029 = vmatprep.subr.bf16.mxu0 0
    %1030 = vmatpush1.bf16.msra.mxu0 0
    %1031 = vmatprep.subr.bf16.mxu0 0
    %1032 = vmatpush1.bf16.msra.mxu0 0
    %1033 = vmatprep.subr.bf16.mxu0 0
    %1034 = vmatpush1.bf16.msra.mxu0 0
    %1035 = vmatprep.subr.bf16.mxu0 0
    %1036 = vmatpush1.bf16.msra.mxu0 0
    %1037 = vmatprep.mubr.bf16.mxu0 0
    %1038 = vmatmul.mubr.bf16.gmra.mrb[0].mxu0 %v1000
    %v1039 = vpop.f32.mrb[0].mxu0
    %v1040 = vadd.f32 0.0, %v1039
    %v1041 = vpop.f32.mrb[0].mxu0
    %v1042 = vpop.f32.mrb[0].mxu0
    %v1043 = vpop.f32.mrb[0].mxu0
    %1044 = vdwg.mxu0
    %v1045 = vpack.c.bf16 %v994, %v994
    %v1046 = vpack.c.bf16 %v1040, %v1040
    %s1047 = scalar_lea.vmem %s23, 16
    %v1048 = vld [vmem:[%s1047] sm:$0xff]
    %v1049 = vld [vmem:[%s1047 + $0x8] sm:$0xff]
    %v1050 = vpack.c.bf16 %v1049, %v1048
    %v1053 = vunpack.c.l.b16 %v1045
    %v1054 = vunpack.c.l.b16 %v1046
    %v1055 = vpack.c.b16 %v1054, %v1053
    %v1057 = vsel %vm467, %v1055, 0
    %1059 = vmatprep.subr.bf16.mxu0 0
    %1060 = vmatpush1.bf16.msra.mxu0 %v1050
    %1061 = vmatprep.subr.bf16.mxu0 0
    %1062 = vmatpush1.bf16.msra.mxu0 0
    %1063 = vmatprep.subr.bf16.mxu0 0
    %1064 = vmatpush1.bf16.msra.mxu0 0
    %1065 = vmatprep.subr.bf16.mxu0 0
    %1066 = vmatpush1.bf16.msra.mxu0 0
    %1067 = vmatprep.subr.bf16.mxu0 0
    %1068 = vmatpush1.bf16.msra.mxu0 0
    %1069 = vmatprep.subr.bf16.mxu0 0
    %1070 = vmatpush1.bf16.msra.mxu0 0
    %1071 = vmatprep.subr.bf16.mxu0 0
    %1072 = vmatpush1.bf16.msra.mxu0 0
    %1073 = vmatprep.subr.bf16.mxu0 0
    %1074 = vmatpush1.bf16.msra.mxu0 0
    %1075 = vmatprep.subr.bf16.mxu0 0
    %1076 = vmatpush1.bf16.msra.mxu0 0
    %1077 = vmatprep.subr.bf16.mxu0 0
    %1078 = vmatpush1.bf16.msra.mxu0 0
    %1079 = vmatprep.subr.bf16.mxu0 0
    %1080 = vmatpush1.bf16.msra.mxu0 0
    %1081 = vmatprep.subr.bf16.mxu0 0
    %1082 = vmatpush1.bf16.msra.mxu0 0
    %1083 = vmatprep.subr.bf16.mxu0 0
    %1084 = vmatpush1.bf16.msra.mxu0 0
    %1085 = vmatprep.subr.bf16.mxu0 0
    %1086 = vmatpush1.bf16.msra.mxu0 0
    %1087 = vmatprep.subr.bf16.mxu0 0
    %1088 = vmatpush1.bf16.msra.mxu0 0
    %1089 = vmatprep.subr.bf16.mxu0 0
    %1090 = vmatpush1.bf16.msra.mxu0 0
    %1091 = vmatprep.mubr.bf16.mxu0 0
    %1092 = vmatmul.mubr.bf16.gmra.mrb[0].mxu0 %v1057
    %v1093 = vpop.f32.mrb[0].mxu0
    %v1094 = vadd.f32 0.0, %v1093
    %v1095 = vpop.f32.mrb[0].mxu0
    %v1096 = vpop.f32.mrb[0].mxu0
    %v1097 = vadd.f32 0.0, %v1096
    %v1098 = vpop.f32.mrb[0].mxu0
    %1099 = vdwg.mxu0
    %v1102 = vunpack.c.l.b16 %v680
    %v1103 = vunpack.c.l.b16 %v681
    %v1104 = vpack.c.b16 %v1103, %v1102
    %v1106 = vsel %vm467, %v1104, 0
    %1108 = vmatprep.subr.bf16.mxu0 0
    %1109 = vmatpush1.bf16.msra.mxu0 %v684
    %1110 = vmatprep.subr.bf16.mxu0 0
    %1111 = vmatpush1.bf16.msra.mxu0 0
    %1112 = vmatprep.subr.bf16.mxu0 0
    %1113 = vmatpush1.bf16.msra.mxu0 0
    %1114 = vmatprep.subr.bf16.mxu0 0
    %1115 = vmatpush1.bf16.msra.mxu0 0
    %1116 = vmatprep.subr.bf16.mxu0 0
    %1117 = vmatpush1.bf16.msra.mxu0 0
    %1118 = vmatprep.subr.bf16.mxu0 0
    %1119 = vmatpush1.bf16.msra.mxu0 0
    %1120 = vmatprep.subr.bf16.mxu0 0
    %1121 = vmatpush1.bf16.msra.mxu0 0
    %1122 = vmatprep.subr.bf16.mxu0 0
    %1123 = vmatpush1.bf16.msra.mxu0 0
    %1124 = vmatprep.subr.bf16.mxu0 0
    %1125 = vmatpush1.bf16.msra.mxu0 0
    %1126 = vmatprep.subr.bf16.mxu0 0
    %1127 = vmatpush1.bf16.msra.mxu0 0
    %1128 = vmatprep.subr.bf16.mxu0 0
    %1129 = vmatpush1.bf16.msra.mxu0 0
    %1130 = vmatprep.subr.bf16.mxu0 0
    %1131 = vmatpush1.bf16.msra.mxu0 0
    %1132 = vmatprep.subr.bf16.mxu0 0
    %1133 = vmatpush1.bf16.msra.mxu0 0
    %1134 = vmatprep.subr.bf16.mxu0 0
    %1135 = vmatpush1.bf16.msra.mxu0 0
    %1136 = vmatprep.subr.bf16.mxu0 0
    %1137 = vmatpush1.bf16.msra.mxu0 0
    %1138 = vmatprep.subr.bf16.mxu0 0
    %1139 = vmatpush1.bf16.msra.mxu0 0
    %1140 = vmatprep.mubr.bf16.mxu0 0
    %1141 = vmatmul.mubr.bf16.gmra.mrb[0].mxu0 %v1106
    %v1142 = vpop.f32.mrb[0].mxu0
    %v1143 = vadd.f32 %v1094, %v1142
    %v1144 = vpop.f32.mrb[0].mxu0
    %v1145 = vpop.f32.mrb[0].mxu0
    %v1146 = vadd.f32 %v1097, %v1145
    %v1147 = vpop.f32.mrb[0].mxu0
    %1148 = vdwg.mxu0
    %v1149 = vadd.f32 %v262, %v1143
    %v1150 = vadd.f32 %v263, %v1146
    %v1151 = vld [vmem:[%s25] sm:$0x1]
    %v1153 = vlaneseq
    %v1154 = vshrl.u32 %v1153, 7
    %v1155 = vsub.s32 0, %v1154
    %v1156 = vrot.slane %v1151, %v1155
    %v1158 = vadd.f32 %v1149, %v1156
    %v1159 = vadd.f32 %v1150, %v1156
    %v1160 = vld [vmem:[%s27] sm:$0x1]
    %v1161 = vld [vmem:[%s29] sm:$0x1]
    %v1162 = vsel %vm266, %v1158, 0.0
    %1163 = vadd.xlane.f32.xlu0 %v1162
    %v1164 = vpop.xlane.xlu0 %1163
    %v1165 = vsel %vm266, %v1159, 0.0
    %1166 = vadd.xlane.f32.xlu0 %v1165
    %v1167 = vpop.xlane.xlu0 %1166
    %v1168 = vmul.f32 %v1164, %v273
    %v1169 = vmul.f32 %v1167, %v273
    %v1170 = vsub.f32 %v1158, %v1168
    %v1171 = vsub.f32 %v1159, %v1169
    %v1172 = vmul.f32 %v1170, %v1170
    %v1173 = vmul.f32 %v1171, %v1171
    %v1174 = vsel %vm266, %v1172, 0.0
    %1175 = vadd.xlane.f32.xlu0 %v1174
    %v1176 = vpop.xlane.xlu0 %1175
    %v1177 = vsel %vm266, %v1173, 0.0
    %1178 = vadd.xlane.f32.xlu0 %v1177
    %v1179 = vpop.xlane.xlu0 %1178
    %v1180 = vmul.f32 %v1176, %v273
    %v1181 = vmul.f32 %v1179, %v273
    %v1182 = vadd.f32 %v1180, 1e-05
    %v1183 = vadd.f32 %v1181, 1e-05
    %v1184 = vrsqrt.pop %v1182
    %v1185 = vrsqrt.pop %v1183
    %v1186 = vmul.f32 %v1170, %v1184
    %v1187 = vmul.f32 %v1171, %v1185
    %v1189 = vlaneseq
    %v1190 = vshrl.u32 %v1189, 7
    %v1191 = vsub.s32 0, %v1190
    %v1192 = vrot.slane %v1160, %v1191
    %v1194 = vmul.f32 %v1186, %v1192
    %v1195 = vmul.f32 %v1187, %v1192
    %v1197 = vlaneseq
    %v1198 = vshrl.u32 %v1197, 7
    %v1199 = vsub.s32 0, %v1198
    %v1200 = vrot.slane %v1161, %v1199
    %v1202 = vadd.f32 %v1194, %v1200
    %v1203 = vadd.f32 %v1195, %v1200
    %v1204 = vld [vmem:[%s31] sm:$0xff]
    %v1205 = vld [vmem:[%s31 + $0x8] sm:$0xff]
    %v1206 = vld [vmem:[%s31 + $0x10] sm:$0xff]
    %v1207 = vld [vmem:[%s31 + $0x18] sm:$0xff]
    %v1208 = vpack.c.bf16 %v1202, %v1202
    %v1209 = vpack.c.bf16 %v1203, %v1203
    %v1210 = vpack.c.bf16 %v1205, %v1204
    %v1211 = vpack.c.bf16 %v1207, %v1206
    %v1212 = vld [vmem:[%s33] sm:$0x1]
    %v1214 = vlaneseq
    %v1215 = vshrl.u32 %v1214, 7
    %v1216 = vsub.s32 0, %v1215
    %v1217 = vrot.slane %v1212, %v1216
    %v1221 = vunpack.c.l.b16 %v1208
    %v1222 = vunpack.c.l.b16 %v1209
    %v1223 = vpack.c.b16 %v1222, %v1221
    %v1225 = vsel %vm266, %v1223, 0
    %1227 = vmatprep.subr.bf16.mxu0 0
    %1228 = vmatpush1.bf16.msra.mxu0 %v1210
    %1229 = vmatprep.subr.bf16.mxu0 0
    %1230 = vmatpush1.bf16.msra.mxu0 %v1211
    %1231 = vmatprep.subr.bf16.mxu0 0
    %1232 = vmatpush1.bf16.msra.mxu0 0
    %1233 = vmatprep.subr.bf16.mxu0 0
    %1234 = vmatpush1.bf16.msra.mxu0 0
    %1235 = vmatprep.subr.bf16.mxu0 0
    %1236 = vmatpush1.bf16.msra.mxu0 0
    %1237 = vmatprep.subr.bf16.mxu0 0
    %1238 = vmatpush1.bf16.msra.mxu0 0
    %1239 = vmatprep.subr.bf16.mxu0 0
    %1240 = vmatpush1.bf16.msra.mxu0 0
    %1241 = vmatprep.subr.bf16.mxu0 0
    %1242 = vmatpush1.bf16.msra.mxu0 0
    %1243 = vmatprep.subr.bf16.mxu0 0
    %1244 = vmatpush1.bf16.msra.mxu0 0
    %1245 = vmatprep.subr.bf16.mxu0 0
    %1246 = vmatpush1.bf16.msra.mxu0 0
    %1247 = vmatprep.subr.bf16.mxu0 0
    %1248 = vmatpush1.bf16.msra.mxu0 0
    %1249 = vmatprep.subr.bf16.mxu0 0
    %1250 = vmatpush1.bf16.msra.mxu0 0
    %1251 = vmatprep.subr.bf16.mxu0 0
    %1252 = vmatpush1.bf16.msra.mxu0 0
    %1253 = vmatprep.subr.bf16.mxu0 0
    %1254 = vmatpush1.bf16.msra.mxu0 0
    %1255 = vmatprep.subr.bf16.mxu0 0
    %1256 = vmatpush1.bf16.msra.mxu0 0
    %1257 = vmatprep.subr.bf16.mxu0 0
    %1258 = vmatpush1.bf16.msra.mxu0 0
    %1259 = vmatprep.mubr.bf16.mxu0 0
    %1260 = vmatmul.mubr.bf16.gmra.mrb[0].mxu0 %v1225
    %v1261 = vpop.f32.mrb[0].mxu0
    %v1262 = vadd.f32 %v1217, %v1261
    %v1263 = vpop.f32.mrb[0].mxu0
    %v1264 = vpop.f32.mrb[0].mxu0
    %v1265 = vadd.f32 %v1217, %v1264
    %v1266 = vpop.f32.mrb[0].mxu0
    %1267 = vdwg.mxu0
    %v1268 = vmul.f32 %v1262, %v1262
    %v1269 = vmul.f32 %v1265, %v1265
    %v1270 = vmul.f32 %v1262, %v1268
    %v1271 = vmul.f32 %v1265, %v1269
    %v1272 = vmul.f32 %v1270, 0.044715
    %v1273 = vmul.f32 %v1271, 0.044715
    %v1274 = vadd.f32 %v1262, %v1272
    %v1275 = vadd.f32 %v1265, %v1273
    %v1276 = vmul.f32 %v1274, 0.7978846
    %v1277 = vmul.f32 %v1275, 0.7978846
    %v1278 = vtanh.pop %v1276
    %v1279 = vtanh.pop %v1277
    %v1280 = vadd.f32 %v1278, 1.0
    %v1281 = vadd.f32 %v1279, 1.0
    %v1282 = vmul.f32 %v1280, 0.5
    %v1283 = vmul.f32 %v1281, 0.5
    %v1284 = vmul.f32 %v1262, %v1282
    %v1285 = vmul.f32 %v1265, %v1283
    %v1286 = vld [vmem:[%s35] sm:$0xff]
    %v1287 = vld [vmem:[%s35 + $0x8] sm:$0xff]
    %v1288 = vld [vmem:[%s35 + $0x10] sm:$0xff]
    %v1289 = vld [vmem:[%s35 + $0x18] sm:$0xff]
    %v1290 = vld [vmem:[%s35 + $0x20] sm:$0xff]
    %v1291 = vld [vmem:[%s35 + $0x28] sm:$0xff]
    %v1292 = vld [vmem:[%s35 + $0x30] sm:$0xff]
    %v1293 = vld [vmem:[%s35 + $0x38] sm:$0xff]
    %v1294 = vpack.c.bf16 %v1284, %v1284
    %v1295 = vpack.c.bf16 %v1285, %v1285
    %v1296 = vpack.c.bf16 %v1287, %v1286
    %v1297 = vpack.c.bf16 %v1289, %v1288
    %v1298 = vpack.c.bf16 %v1291, %v1290
    %v1299 = vpack.c.bf16 %v1293, %v1292
    %v1300 = vld [vmem:[%s37] sm:$0x1]
    %v1302 = vlaneseq
    %v1303 = vshrl.u32 %v1302, 7
    %v1304 = vsub.s32 0, %v1303
    %v1305 = vrot.slane %v1300, %v1304
    %v1309 = vunpack.c.l.b16 %v1294
    %v1310 = vunpack.c.l.b16 %v1295
    %v1311 = vpack.c.b16 %v1310, %v1309
    %v1313 = vsel %vm216, %v1311, 0
    %1315 = vmatprep.subr.bf16.mxu0 0
    %1316 = vmatpush1.bf16.msra.mxu0 %v1296
    %1317 = vmatprep.subr.bf16.mxu0 0
    %1318 = vmatpush1.bf16.msra.mxu0 %v1297
    %1319 = vmatprep.subr.bf16.mxu0 0
    %1320 = vmatpush1.bf16.msra.mxu0 %v1298
    %1321 = vmatprep.subr.bf16.mxu0 0
    %1322 = vmatpush1.bf16.msra.mxu0 %v1299
    %1323 = vmatprep.subr.bf16.mxu0 0
    %1324 = vmatpush1.bf16.msra.mxu0 0
    %1325 = vmatprep.subr.bf16.mxu0 0
    %1326 = vmatpush1.bf16.msra.mxu0 0
    %1327 = vmatprep.subr.bf16.mxu0 0
    %1328 = vmatpush1.bf16.msra.mxu0 0
    %1329 = vmatprep.subr.bf16.mxu0 0
    %1330 = vmatpush1.bf16.msra.mxu0 0
    %1331 = vmatprep.subr.bf16.mxu0 0
    %1332 = vmatpush1.bf16.msra.mxu0 0
    %1333 = vmatprep.subr.bf16.mxu0 0
    %1334 = vmatpush1.bf16.msra.mxu0 0
    %1335 = vmatprep.subr.bf16.mxu0 0
    %1336 = vmatpush1.bf16.msra.mxu0 0
    %1337 = vmatprep.subr.bf16.mxu0 0
    %1338 = vmatpush1.bf16.msra.mxu0 0
    %1339 = vmatprep.subr.bf16.mxu0 0
    %1340 = vmatpush1.bf16.msra.mxu0 0
    %1341 = vmatprep.subr.bf16.mxu0 0
    %1342 = vmatpush1.bf16.msra.mxu0 0
    %1343 = vmatprep.subr.bf16.mxu0 0
    %1344 = vmatpush1.bf16.msra.mxu0 0
    %1345 = vmatprep.subr.bf16.mxu0 0
    %1346 = vmatpush1.bf16.msra.mxu0 0
    %1347 = vmatprep.mubr.bf16.mxu0 0
    %1348 = vmatmul.mubr.bf16.gmra.mrb[0].mxu0 %v1313
    %v1349 = vpop.f32.mrb[0].mxu0
    %v1350 = vadd.f32 %v1305, %v1349
    %v1351 = vpop.f32.mrb[0].mxu0
    %v1352 = vpop.f32.mrb[0].mxu0
    %v1353 = vadd.f32 %v1305, %v1352
    %v1354 = vpop.f32.mrb[0].mxu0
    %1355 = vdwg.mxu0
    %v1356 = vadd.f32 %v1158, %v1350
    %v1357 = vadd.f32 %v1159, %v1353
    %s1358 = scalar_lea.vmem %s13, 1
    %v1359 = vld [vmem:[%s1358] sm:$0x1]
    %s1360 = scalar_lea.vmem %s15, 1
    %v1361 = vld [vmem:[%s1360] sm:$0x1]
    %v1362 = vsel %vm266, %v1356, 0.0
    %1363 = vadd.xlane.f32.xlu0 %v1362
    %v1364 = vpop.xlane.xlu0 %1363
    %v1365 = vsel %vm266, %v1357, 0.0
    %1366 = vadd.xlane.f32.xlu0 %v1365
    %v1367 = vpop.xlane.xlu0 %1366
    %v1368 = vmul.f32 %v1364, %v273
    %v1369 = vmul.f32 %v1367, %v273
    %v1370 = vsub.f32 %v1356, %v1368
    %v1371 = vsub.f32 %v1357, %v1369
    %v1372 = vmul.f32 %v1370, %v1370
    %v1373 = vmul.f32 %v1371, %v1371
    %v1374 = vsel %vm266, %v1372, 0.0
    %1375 = vadd.xlane.f32.xlu0 %v1374
    %v1376 = vpop.xlane.xlu0 %1375
    %v1377 = vsel %vm266, %v1373, 0.0
    %1378 = vadd.xlane.f32.xlu0 %v1377
    %v1379 = vpop.xlane.xlu0 %1378
    %v1380 = vmul.f32 %v1376, %v273
    %v1381 = vmul.f32 %v1379, %v273
    %v1382 = vadd.f32 %v1380, 1e-05
    %v1383 = vadd.f32 %v1381, 1e-05
    %v1384 = vrsqrt.pop %v1382
    %v1385 = vrsqrt.pop %v1383
    %v1386 = vmul.f32 %v1370, %v1384
    %v1387 = vmul.f32 %v1371, %v1385
    %v1389 = vlaneseq
    %v1390 = vshrl.u32 %v1389, 7
    %v1391 = vsub.s32 0, %v1390
    %v1392 = vrot.slane %v1359, %v1391
    %v1394 = vmul.f32 %v1386, %v1392
    %v1395 = vmul.f32 %v1387, %v1392
    %v1397 = vlaneseq
    %v1398 = vshrl.u32 %v1397, 7
    %v1399 = vsub.s32 0, %v1398
    %v1400 = vrot.slane %v1361, %v1399
    %v1402 = vadd.f32 %v1394, %v1400
    %v1403 = vadd.f32 %v1395, %v1400
    %v1404 = vpack.c.bf16 %v1402, %v1402
    %v1405 = vpack.c.bf16 %v1403, %v1403
    %s1406 = scalar_lea.vmem %s17, 64
    %v1407 = vld [vmem:[%s1406] sm:$0xff]
    %v1408 = vld [vmem:[%s1406 + $0x8] sm:$0xff]
    %v1409 = vld [vmem:[%s1406 + $0x10] sm:$0xff]
    %v1410 = vld [vmem:[%s1406 + $0x18] sm:$0xff]
    %v1411 = vpack.c.bf16 %v1408, %v1407
    %v1412 = vpack.c.bf16 %v1410, %v1409
    %v1415 = vunpack.c.l.b16 %v1404
    %v1416 = vunpack.c.l.b16 %v1405
    %v1417 = vpack.c.b16 %v1416, %v1415
    %v1419 = vsel %vm266, %v1417, 0
    %1421 = vmatprep.subr.bf16.mxu0 0
    %1422 = vmatpush1.bf16.msra.mxu0 %v1411
    %1423 = vmatprep.subr.bf16.mxu0 0
    %1424 = vmatpush1.bf16.msra.mxu0 %v1412
    %1425 = vmatprep.subr.bf16.mxu0 0
    %1426 = vmatpush1.bf16.msra.mxu0 0
    %1427 = vmatprep.subr.bf16.mxu0 0
    %1428 = vmatpush1.bf16.msra.mxu0 0
    %1429 = vmatprep.subr.bf16.mxu0 0
    %1430 = vmatpush1.bf16.msra.mxu0 0
    %1431 = vmatprep.subr.bf16.mxu0 0
    %1432 = vmatpush1.bf16.msra.mxu0 0
    %1433 = vmatprep.subr.bf16.mxu0 0
    %1434 = vmatpush1.bf16.msra.mxu0 0
    %1435 = vmatprep.subr.bf16.mxu0 0
    %1436 = vmatpush1.bf16.msra.mxu0 0
    %1437 = vmatprep.subr.bf16.mxu0 0
    %1438 = vmatpush1.bf16.msra.mxu0 0
    %1439 = vmatprep.subr.bf16.mxu0 0
    %1440 = vmatpush1.bf16.msra.mxu0 0
    %1441 = vmatprep.subr.bf16.mxu0 0
    %1442 = vmatpush1.bf16.msra.mxu0 0
    %1443 = vmatprep.subr.bf16.mxu0 0
    %1444 = vmatpush1.bf16.msra.mxu0 0
    %1445 = vmatprep.subr.bf16.mxu0 0
    %1446 = vmatpush1.bf16.msra.mxu0 0
    %1447 = vmatprep.subr.bf16.mxu0 0
    %1448 = vmatpush1.bf16.msra.mxu0 0
    %1449 = vmatprep.subr.bf16.mxu0 0
    %1450 = vmatpush1.bf16.msra.mxu0 0
    %1451 = vmatprep.subr.bf16.mxu0 0
    %1452 = vmatpush1.bf16.msra.mxu0 0
    %1453 = vmatprep.mubr.bf16.mxu0 0
    %1454 = vmatmul.mubr.bf16.gmra.mrb[0].mxu0 %v1419
    %v1455 = vpop.f32.mrb[0].mxu0
    %v1456 = vadd.f32 0.0, %v1455
    %v1457 = vpop.f32.mrb[0].mxu0
    %v1458 = vpop.f32.mrb[0].mxu0
    %v1459 = vadd.f32 0.0, %v1458
    %v1460 = vpop.f32.mrb[0].mxu0
    %1461 = vdwg.mxu0
    %s1462 = scalar_lea.vmem %s19, 64
    %v1463 = vld [vmem:[%s1462] sm:$0xff]
    %v1464 = vld [vmem:[%s1462 + $0x8] sm:$0xff]
    %v1465 = vld [vmem:[%s1462 + $0x10] sm:$0xff]
    %v1466 = vld [vmem:[%s1462 + $0x18] sm:$0xff]
    %v1467 = vpack.c.bf16 %v1464, %v1463
    %v1468 = vpack.c.bf16 %v1466, %v1465
    %1469 = vmatprep.subr.bf16.mxu0 0
    %1470 = vmatpush1.bf16.msra.mxu0 %v1467
    %1471 = vmatprep.subr.bf16.mxu0 0
    %1472 = vmatpush1.bf16.msra.mxu0 %v1468
    %1473 = vmatprep.subr.bf16.mxu0 0
    %1474 = vmatpush1.bf16.msra.mxu0 0
    %1475 = vmatprep.subr.bf16.mxu0 0
    %1476 = vmatpush1.bf16.msra.mxu0 0
    %1477 = vmatprep.subr.bf16.mxu0 0
    %1478 = vmatpush1.bf16.msra.mxu0 0
    %1479 = vmatprep.subr.bf16.mxu0 0
    %1480 = vmatpush1.bf16.msra.mxu0 0
    %1481 = vmatprep.subr.bf16.mxu0 0
    %1482 = vmatpush1.bf16.msra.mxu0 0
    %1483 = vmatprep.subr.bf16.mxu0 0
    %1484 = vmatpush1.bf16.msra.mxu0 0
    %1485 = vmatprep.subr.bf16.mxu0 0
    %1486 = vmatpush1.bf16.msra.mxu0 0
    %1487 = vmatprep.subr.bf16.mxu0 0
    %1488 = vmatpush1.bf16.msra.mxu0 0
    %1489 = vmatprep.subr.bf16.mxu0 0
    %1490 = vmatpush1.bf16.msra.mxu0 0
    %1491 = vmatprep.subr.bf16.mxu0 0
    %1492 = vmatpush1.bf16.msra.mxu0 0
    %1493 = vmatprep.subr.bf16.mxu0 0
    %1494 = vmatpush1.bf16.msra.mxu0 0
    %1495 = vmatprep.subr.bf16.mxu0 0
    %1496 = vmatpush1.bf16.msra.mxu0 0
    %1497 = vmatprep.subr.bf16.mxu0 0
    %1498 = vmatpush1.bf16.msra.mxu0 0
    %1499 = vmatprep.subr.bf16.mxu0 0
    %1500 = vmatpush1.bf16.msra.mxu0 0
    %1501 = vmatprep.mubr.bf16.mxu0 0
    %1502 = vmatmul.mubr.bf16.gmra.mrb[0].mxu0 %v1419
    %v1503 = vpop.f32.mrb[0].mxu0
    %v1504 = vadd.f32 0.0, %v1503
    %v1505 = vpop.f32.mrb[0].mxu0
    %v1506 = vpop.f32.mrb[0].mxu0
    %v1507 = vadd.f32 0.0, %v1506
    %v1508 = vpop.f32.mrb[0].mxu0
    %1509 = vdwg.mxu0
    %s1510 = scalar_lea.vmem %s21, 64
    %v1511 = vld [vmem:[%s1510] sm:$0xff]
    %v1512 = vld [vmem:[%s1510 + $0x8] sm:$0xff]
    %v1513 = vld [vmem:[%s1510 + $0x10] sm:$0xff]
    %v1514 = vld [vmem:[%s1510 + $0x18] sm:$0xff]
    %v1515 = vpack.c.bf16 %v1512, %v1511
    %v1516 = vpack.c.bf16 %v1514, %v1513
    %1517 = vmatprep.subr.bf16.mxu0 0
    %1518 = vmatpush1.bf16.msra.mxu0 %v1515
    %1519 = vmatprep.subr.bf16.mxu0 0
    %1520 = vmatpush1.bf16.msra.mxu0 %v1516
    %1521 = vmatprep.subr.bf16.mxu0 0
    %1522 = vmatpush1.bf16.msra.mxu0 0
    %1523 = vmatprep.subr.bf16.mxu0 0
    %1524 = vmatpush1.bf16.msra.mxu0 0
    %1525 = vmatprep.subr.bf16.mxu0 0
    %1526 = vmatpush1.bf16.msra.mxu0 0
    %1527 = vmatprep.subr.bf16.mxu0 0
    %1528 = vmatpush1.bf16.msra.mxu0 0
    %1529 = vmatprep.subr.bf16.mxu0 0
    %1530 = vmatpush1.bf16.msra.mxu0 0
    %1531 = vmatprep.subr.bf16.mxu0 0
    %1532 = vmatpush1.bf16.msra.mxu0 0
    %1533 = vmatprep.subr.bf16.mxu0 0
    %1534 = vmatpush1.bf16.msra.mxu0 0
    %1535 = vmatprep.subr.bf16.mxu0 0
    %1536 = vmatpush1.bf16.msra.mxu0 0
    %1537 = vmatprep.subr.bf16.mxu0 0
    %1538 = vmatpush1.bf16.msra.mxu0 0
    %1539 = vmatprep.subr.bf16.mxu0 0
    %1540 = vmatpush1.bf16.msra.mxu0 0
    %1541 = vmatprep.subr.bf16.mxu0 0
    %1542 = vmatpush1.bf16.msra.mxu0 0
    %1543 = vmatprep.subr.bf16.mxu0 0
    %1544 = vmatpush1.bf16.msra.mxu0 0
    %1545 = vmatprep.subr.bf16.mxu0 0
    %1546 = vmatpush1.bf16.msra.mxu0 0
    %1547 = vmatprep.subr.bf16.mxu0 0
    %1548 = vmatpush1.bf16.msra.mxu0 0
    %1549 = vmatprep.mubr.bf16.mxu0 0
    %1550 = vmatmul.mubr.bf16.gmra.mrb[0].mxu0 %v1419
    %v1551 = vpop.f32.mrb[0].mxu0
    %v1552 = vadd.f32 0.0, %v1551
    %v1553 = vpop.f32.mrb[0].mxu0
    %v1554 = vpop.f32.mrb[0].mxu0
    %v1555 = vadd.f32 0.0, %v1554
    %v1556 = vpop.f32.mrb[0].mxu0
    %1557 = vdwg.mxu0
    %v1558 = vmul.f32 %v1456, 0.25
    %v1559 = vmul.f32 %v1459, 0.25
    %v1560 = vpack.c.bf16 %v1558, %v1558
    %v1561 = vpack.c.bf16 %v1559, %v1559
    %v1562 = vpack.c.bf16 %v1504, %v1504
    %v1563 = vpack.c.bf16 %v1507, %v1507
    %v1565 = vsel %vm467, %v1560, 0
    %v1568 = vsel %vm467, %v1562, 0
    %1570 = vmatprep.subr.bf16.mxu0 0
    %1571 = vmatpush1.bf16.xpose.msra.mxu0 %v1568
    %1572 = vmatprep.subr.bf16.mxu0 0
    %1573 = vmatpush1.bf16.xpose.msra.mxu0 0
    %1574 = vmatprep.subr.bf16.mxu0 0
    %1575 = vmatpush1.bf16.xpose.msra.mxu0 0
    %1576 = vmatprep.subr.bf16.mxu0 0
    %1577 = vmatpush1.bf16.xpose.msra.mxu0 0
    %1578 = vmatprep.subr.bf16.mxu0 0
    %1579 = vmatpush1.bf16.xpose.msra.mxu0 0
    %1580 = vmatprep.subr.bf16.mxu0 0
    %1581 = vmatpush1.bf16.xpose.msra.mxu0 0
    %1582 = vmatprep.subr.bf16.mxu0 0
    %1583 = vmatpush1.bf16.xpose.msra.mxu0 0
    %1584 = vmatprep.subr.bf16.mxu0 0
    %1585 = vmatpush1.bf16.xpose.msra.mxu0 0
    %1586 = vmatprep.subr.bf16.mxu0 0
    %1587 = vmatpush1.bf16.xpose.msra.mxu0 0
    %1588 = vmatprep.subr.bf16.mxu0 0
    %1589 = vmatpush1.bf16.xpose.msra.mxu0 0
    %1590 = vmatprep.subr.bf16.mxu0 0
    %1591 = vmatpush1.bf16.xpose.msra.mxu0 0
    %1592 = vmatprep.subr.bf16.mxu0 0
    %1593 = vmatpush1.bf16.xpose.msra.mxu0 0
    %1594 = vmatprep.subr.bf16.mxu0 0
    %1595 = vmatpush1.bf16.xpose.msra.mxu0 0
    %1596 = vmatprep.subr.bf16.mxu0 0
    %1597 = vmatpush1.bf16.xpose.msra.mxu0 0
    %1598 = vmatprep.subr.bf16.mxu0 0
    %1599 = vmatpush1.bf16.xpose.msra.mxu0 0
    %1600 = vmatprep.subr.bf16.mxu0 0
    %1601 = vmatpush1.bf16.xpose.msra.mxu0 0
    %1602 = vmatprep.mubr.bf16.mxu0 0
    %1603 = vmatmul.mubr.bf16.gmra.mrb[0].mxu0 %v1565
    %v1604 = vpop.f32.mrb[0].mxu0
    %v1605 = vadd.f32 0.0, %v1604
    %v1606 = vpop.f32.mrb[0].mxu0
    %v1607 = vpop.f32.mrb[0].mxu0
    %v1608 = vpop.f32.mrb[0].mxu0
    %1609 = vdwg.mxu0
    %v1611 = vsel %vm467, %v1561, 0
    %v1614 = vsel %vm467, %v1563, 0
    %1616 = vmatprep.subr.bf16.mxu0 0
    %1617 = vmatpush1.bf16.xpose.msra.mxu0 %v1614
    %1618 = vmatprep.subr.bf16.mxu0 0
    %1619 = vmatpush1.bf16.xpose.msra.mxu0 0
    %1620 = vmatprep.subr.bf16.mxu0 0
    %1621 = vmatpush1.bf16.xpose.msra.mxu0 0
    %1622 = vmatprep.subr.bf16.mxu0 0
    %1623 = vmatpush1.bf16.xpose.msra.mxu0 0
    %1624 = vmatprep.subr.bf16.mxu0 0
    %1625 = vmatpush1.bf16.xpose.msra.mxu0 0
    %1626 = vmatprep.subr.bf16.mxu0 0
    %1627 = vmatpush1.bf16.xpose.msra.mxu0 0
    %1628 = vmatprep.subr.bf16.mxu0 0
    %1629 = vmatpush1.bf16.xpose.msra.mxu0 0
    %1630 = vmatprep.subr.bf16.mxu0 0
    %1631 = vmatpush1.bf16.xpose.msra.mxu0 0
    %1632 = vmatprep.subr.bf16.mxu0 0
    %1633 = vmatpush1.bf16.xpose.msra.mxu0 0
    %1634 = vmatprep.subr.bf16.mxu0 0
    %1635 = vmatpush1.bf16.xpose.msra.mxu0 0
    %1636 = vmatprep.subr.bf16.mxu0 0
    %1637 = vmatpush1.bf16.xpose.msra.mxu0 0
    %1638 = vmatprep.subr.bf16.mxu0 0
    %1639 = vmatpush1.bf16.xpose.msra.mxu0 0
    %1640 = vmatprep.subr.bf16.mxu0 0
    %1641 = vmatpush1.bf16.xpose.msra.mxu0 0
    %1642 = vmatprep.subr.bf16.mxu0 0
    %1643 = vmatpush1.bf16.xpose.msra.mxu0 0
    %1644 = vmatprep.subr.bf16.mxu0 0
    %1645 = vmatpush1.bf16.xpose.msra.mxu0 0
    %1646 = vmatprep.subr.bf16.mxu0 0
    %1647 = vmatpush1.bf16.xpose.msra.mxu0 0
    %1648 = vmatprep.mubr.bf16.mxu0 0
    %1649 = vmatmul.mubr.bf16.gmra.mrb[0].mxu0 %v1611
    %v1650 = vpop.f32.mrb[0].mxu0
    %v1651 = vadd.f32 0.0, %v1650
    %v1652 = vpop.f32.mrb[0].mxu0
    %v1653 = vpop.f32.mrb[0].mxu0
    %v1654 = vpop.f32.mrb[0].mxu0
    %1655 = vdwg.mxu0
    %v1656 = vsel %vm560, %v1605, -inf
    %1657 = vmax.xlane.f32.xlu0 %v1656
    %v1658 = vpop.xlane.xlu0 %1657
    %v1659 = vsel %vm560, %v1651, -inf
    %1660 = vmax.xlane.f32.xlu0 %v1659
    %v1661 = vpop.xlane.xlu0 %1660
    %v1662 = vsub.f32 %v1605, %v1658
    %v1663 = vsub.f32 %v1651, %v1661
    %v1664 = vmul.f32 %v1662, 1.442695
    %v1665 = vpow.pop %v1664
    %v1666 = vmul.f32 %v1663, 1.442695
    %v1667 = vpow.pop %v1666
    %v1668 = vsel %vm560, %v1665, 0.0
    %1669 = vadd.xlane.f32.xlu0 %v1668
    %v1670 = vpop.xlane.xlu0 %1669
    %v1671 = vsel %vm560, %v1667, 0.0
    %1672 = vadd.xlane.f32.xlu0 %v1671
    %v1673 = vpop.xlane.xlu0 %1672
    %v1674 = vrcp.pop %v1670
    %v1675 = vrcp.pop %v1673
    %v1676 = vmul.f32 %v1665, %v1674
    %v1677 = vmul.f32 %v1667, %v1675
    %v1678 = vpack.c.bf16 %v1676, %v1676
    %v1679 = vpack.c.bf16 %v1677, %v1677
    %v1680 = vpack.c.bf16 %v1552, %v1552
    %v1681 = vpack.c.bf16 %v1555, %v1555
    %v1683 = vsel %vm560, %v1678, 0
    %v1686 = vsel %vm590, %v1680, 0
    %1688 = vmatprep.subr.bf16.mxu0 0
    %1689 = vmatpush1.bf16.msra.mxu0 %v1686
    %1690 = vmatprep.subr.bf16.mxu0 0
    %1691 = vmatpush1.bf16.msra.mxu0 0
    %1692 = vmatprep.subr.bf16.mxu0 0
    %1693 = vmatpush1.bf16.msra.mxu0 0
    %1694 = vmatprep.subr.bf16.mxu0 0
    %1695 = vmatpush1.bf16.msra.mxu0 0
    %1696 = vmatprep.subr.bf16.mxu0 0
    %1697 = vmatpush1.bf16.msra.mxu0 0
    %1698 = vmatprep.subr.bf16.mxu0 0
    %1699 = vmatpush1.bf16.msra.mxu0 0
    %1700 = vmatprep.subr.bf16.mxu0 0
    %1701 = vmatpush1.bf16.msra.mxu0 0
    %1702 = vmatprep.subr.bf16.mxu0 0
    %1703 = vmatpush1.bf16.msra.mxu0 0
    %1704 = vmatprep.subr.bf16.mxu0 0
    %1705 = vmatpush1.bf16.msra.mxu0 0
    %1706 = vmatprep.subr.bf16.mxu0 0
    %1707 = vmatpush1.bf16.msra.mxu0 0
    %1708 = vmatprep.subr.bf16.mxu0 0
    %1709 = vmatpush1.bf16.msra.mxu0 0
    %1710 = vmatprep.subr.bf16.mxu0 0
    %1711 = vmatpush1.bf16.msra.mxu0 0
    %1712 = vmatprep.subr.bf16.mxu0 0
    %1713 = vmatpush1.bf16.msra.mxu0 0
    %1714 = vmatprep.subr.bf16.mxu0 0
    %1715 = vmatpush1.bf16.msra.mxu0 0
    %1716 = vmatprep.subr.bf16.mxu0 0
    %1717 = vmatpush1.bf16.msra.mxu0 0
    %1718 = vmatprep.subr.bf16.mxu0 0
    %1719 = vmatpush1.bf16.msra.mxu0 0
    %1720 = vmatprep.mubr.bf16.mxu0 0
    %1721 = vmatmul.mubr.bf16.gmra.mrb[0].mxu0 %v1683
    %v1722 = vpop.f32.mrb[0].mxu0
    %v1723 = vadd.f32 0.0, %v1722
    %v1724 = vpop.f32.mrb[0].mxu0
    %v1725 = vpop.f32.mrb[0].mxu0
    %v1726 = vpop.f32.mrb[0].mxu0
    %1727 = vdwg.mxu0
    %v1729 = vsel %vm560, %v1679, 0
    %v1732 = vsel %vm590, %v1681, 0
    %1734 = vmatprep.subr.bf16.mxu0 0
    %1735 = vmatpush1.bf16.msra.mxu0 %v1732
    %1736 = vmatprep.subr.bf16.mxu0 0
    %1737 = vmatpush1.bf16.msra.mxu0 0
    %1738 = vmatprep.subr.bf16.mxu0 0
    %1739 = vmatpush1.bf16.msra.mxu0 0
    %1740 = vmatprep.subr.bf16.mxu0 0
    %1741 = vmatpush1.bf16.msra.mxu0 0
    %1742 = vmatprep.subr.bf16.mxu0 0
    %1743 = vmatpush1.bf16.msra.mxu0 0
    %1744 = vmatprep.subr.bf16.mxu0 0
    %1745 = vmatpush1.bf16.msra.mxu0 0
    %1746 = vmatprep.subr.bf16.mxu0 0
    %1747 = vmatpush1.bf16.msra.mxu0 0
    %1748 = vmatprep.subr.bf16.mxu0 0
    %1749 = vmatpush1.bf16.msra.mxu0 0
    %1750 = vmatprep.subr.bf16.mxu0 0
    %1751 = vmatpush1.bf16.msra.mxu0 0
    %1752 = vmatprep.subr.bf16.mxu0 0
    %1753 = vmatpush1.bf16.msra.mxu0 0
    %1754 = vmatprep.subr.bf16.mxu0 0
    %1755 = vmatpush1.bf16.msra.mxu0 0
    %1756 = vmatprep.subr.bf16.mxu0 0
    %1757 = vmatpush1.bf16.msra.mxu0 0
    %1758 = vmatprep.subr.bf16.mxu0 0
    %1759 = vmatpush1.bf16.msra.mxu0 0
    %1760 = vmatprep.subr.bf16.mxu0 0
    %1761 = vmatpush1.bf16.msra.mxu0 0
    %1762 = vmatprep.subr.bf16.mxu0 0
    %1763 = vmatpush1.bf16.msra.mxu0 0
    %1764 = vmatprep.subr.bf16.mxu0 0
    %1765 = vmatpush1.bf16.msra.mxu0 0
    %1766 = vmatprep.mubr.bf16.mxu0 0
    %1767 = vmatmul.mubr.bf16.gmra.mrb[0].mxu0 %v1729
    %v1768 = vpop.f32.mrb[0].mxu0
    %v1769 = vadd.f32 0.0, %v1768
    %v1770 = vpop.f32.mrb[0].mxu0
    %v1771 = vpop.f32.mrb[0].mxu0
    %v1772 = vpop.f32.mrb[0].mxu0
    %1773 = vdwg.mxu0
    %v1774 = vpack.c.bf16 %v1723, %v1723
    %v1775 = vpack.c.bf16 %v1769, %v1769
    %s1776 = scalar_lea.vmem %s23, 32
    %v1777 = vld [vmem:[%s1776] sm:$0xff]
    %v1778 = vld [vmem:[%s1776 + $0x8] sm:$0xff]
    %v1779 = vpack.c.bf16 %v1778, %v1777
    %s1780 = scalar_lea.vmem %s17, 96
    %v1781 = vld [vmem:[%s1780] sm:$0xff]
    %v1782 = vld [vmem:[%s1780 + $0x8] sm:$0xff]
    %v1783 = vld [vmem:[%s1780 + $0x10] sm:$0xff]
    %v1784 = vld [vmem:[%s1780 + $0x18] sm:$0xff]
    %v1785 = vpack.c.bf16 %v1782, %v1781
    %v1786 = vpack.c.bf16 %v1784, %v1783
    %1787 = vmatprep.subr.bf16.mxu0 0
    %1788 = vmatpush1.bf16.msra.mxu0 %v1785
    %1789 = vmatprep.subr.bf16.mxu0 0
    %1790 = vmatpush1.bf16.msra.mxu0 %v1786
    %1791 = vmatprep.subr.bf16.mxu0 0
    %1792 = vmatpush1.bf16.msra.mxu0 0
    %1793 = vmatprep.subr.bf16.mxu0 0
    %1794 = vmatpush1.bf16.msra.mxu0 0
    %1795 = vmatprep.subr.bf16.mxu0 0
    %1796 = vmatpush1.bf16.msra.mxu0 0
    %1797 = vmatprep.subr.bf16.mxu0 0
    %1798 = vmatpush1.bf16.msra.mxu0 0
    %1799 = vmatprep.subr.bf16.mxu0 0
    %1800 = vmatpush1.bf16.msra.mxu0 0
    %1801 = vmatprep.subr.bf16.mxu0 0
    %1802 = vmatpush1.bf16.msra.mxu0 0
    %1803 = vmatprep.subr.bf16.mxu0 0
    %1804 = vmatpush1.bf16.msra.mxu0 0
    %1805 = vmatprep.subr.bf16.mxu0 0
    %1806 = vmatpush1.bf16.msra.mxu0 0
    %1807 = vmatprep.subr.bf16.mxu0 0
    %1808 = vmatpush1.bf16.msra.mxu0 0
    %1809 = vmatprep.subr.bf16.mxu0 0
    %1810 = vmatpush1.bf16.msra.mxu0 0
    %1811 = vmatprep.subr.bf16.mxu0 0
    %1812 = vmatpush1.bf16.msra.mxu0 0
    %1813 = vmatprep.subr.bf16.mxu0 0
    %1814 = vmatpush1.bf16.msra.mxu0 0
    %1815 = vmatprep.subr.bf16.mxu0 0
    %1816 = vmatpush1.bf16.msra.mxu0 0
    %1817 = vmatprep.subr.bf16.mxu0 0
    %1818 = vmatpush1.bf16.msra.mxu0 0
    %1819 = vmatprep.mubr.bf16.mxu0 0
    %1820 = vmatmul.mubr.bf16.gmra.mrb[0].mxu0 %v1419
    %v1821 = vpop.f32.mrb[0].mxu0
    %v1822 = vadd.f32 0.0, %v1821
    %v1823 = vpop.f32.mrb[0].mxu0
    %v1824 = vpop.f32.mrb[0].mxu0
    %v1825 = vadd.f32 0.0, %v1824
    %v1826 = vpop.f32.mrb[0].mxu0
    %1827 = vdwg.mxu0
    %s1828 = scalar_lea.vmem %s19, 96
    %v1829 = vld [vmem:[%s1828] sm:$0xff]
    %v1830 = vld [vmem:[%s1828 + $0x8] sm:$0xff]
    %v1831 = vld [vmem:[%s1828 + $0x10] sm:$0xff]
    %v1832 = vld [vmem:[%s1828 + $0x18] sm:$0xff]
    %v1833 = vpack.c.bf16 %v1830, %v1829
    %v1834 = vpack.c.bf16 %v1832, %v1831
    %1835 = vmatprep.subr.bf16.mxu0 0
    %1836 = vmatpush1.bf16.msra.mxu0 %v1833
    %1837 = vmatprep.subr.bf16.mxu0 0
    %1838 = vmatpush1.bf16.msra.mxu0 %v1834
    %1839 = vmatprep.subr.bf16.mxu0 0
    %1840 = vmatpush1.bf16.msra.mxu0 0
    %1841 = vmatprep.subr.bf16.mxu0 0
    %1842 = vmatpush1.bf16.msra.mxu0 0
    %1843 = vmatprep.subr.bf16.mxu0 0
    %1844 = vmatpush1.bf16.msra.mxu0 0
    %1845 = vmatprep.subr.bf16.mxu0 0
    %1846 = vmatpush1.bf16.msra.mxu0 0
    %1847 = vmatprep.subr.bf16.mxu0 0
    %1848 = vmatpush1.bf16.msra.mxu0 0
    %1849 = vmatprep.subr.bf16.mxu0 0
    %1850 = vmatpush1.bf16.msra.mxu0 0
    %1851 = vmatprep.subr.bf16.mxu0 0
    %1852 = vmatpush1.bf16.msra.mxu0 0
    %1853 = vmatprep.subr.bf16.mxu0 0
    %1854 = vmatpush1.bf16.msra.mxu0 0
    %1855 = vmatprep.subr.bf16.mxu0 0
    %1856 = vmatpush1.bf16.msra.mxu0 0
    %1857 = vmatprep.subr.bf16.mxu0 0
    %1858 = vmatpush1.bf16.msra.mxu0 0
    %1859 = vmatprep.subr.bf16.mxu0 0
    %1860 = vmatpush1.bf16.msra.mxu0 0
    %1861 = vmatprep.subr.bf16.mxu0 0
    %1862 = vmatpush1.bf16.msra.mxu0 0
    %1863 = vmatprep.subr.bf16.mxu0 0
    %1864 = vmatpush1.bf16.msra.mxu0 0
    %1865 = vmatprep.subr.bf16.mxu0 0
    %1866 = vmatpush1.bf16.msra.mxu0 0
    %1867 = vmatprep.mubr.bf16.mxu0 0
    %1868 = vmatmul.mubr.bf16.gmra.mrb[0].mxu0 %v1419
    %v1869 = vpop.f32.mrb[0].mxu0
    %v1870 = vadd.f32 0.0, %v1869
    %v1871 = vpop.f32.mrb[0].mxu0
    %v1872 = vpop.f32.mrb[0].mxu0
    %v1873 = vadd.f32 0.0, %v1872
    %v1874 = vpop.f32.mrb[0].mxu0
    %1875 = vdwg.mxu0
    %s1876 = scalar_lea.vmem %s21, 96
    %v1877 = vld [vmem:[%s1876] sm:$0xff]
    %v1878 = vld [vmem:[%s1876 + $0x8] sm:$0xff]
    %v1879 = vld [vmem:[%s1876 + $0x10] sm:$0xff]
    %v1880 = vld [vmem:[%s1876 + $0x18] sm:$0xff]
    %v1881 = vpack.c.bf16 %v1878, %v1877
    %v1882 = vpack.c.bf16 %v1880, %v1879
    %1883 = vmatprep.subr.bf16.mxu0 0
    %1884 = vmatpush1.bf16.msra.mxu0 %v1881
    %1885 = vmatprep.subr.bf16.mxu0 0
    %1886 = vmatpush1.bf16.msra.mxu0 %v1882
    %1887 = vmatprep.subr.bf16.mxu0 0
    %1888 = vmatpush1.bf16.msra.mxu0 0
    %1889 = vmatprep.subr.bf16.mxu0 0
    %1890 = vmatpush1.bf16.msra.mxu0 0
    %1891 = vmatprep.subr.bf16.mxu0 0
    %1892 = vmatpush1.bf16.msra.mxu0 0
    %1893 = vmatprep.subr.bf16.mxu0 0
    %1894 = vmatpush1.bf16.msra.mxu0 0
    %1895 = vmatprep.subr.bf16.mxu0 0
    %1896 = vmatpush1.bf16.msra.mxu0 0
    %1897 = vmatprep.subr.bf16.mxu0 0
    %1898 = vmatpush1.bf16.msra.mxu0 0
    %1899 = vmatprep.subr.bf16.mxu0 0
    %1900 = vmatpush1.bf16.msra.mxu0 0
    %1901 = vmatprep.subr.bf16.mxu0 0
    %1902 = vmatpush1.bf16.msra.mxu0 0
    %1903 = vmatprep.subr.bf16.mxu0 0
    %1904 = vmatpush1.bf16.msra.mxu0 0
    %1905 = vmatprep.subr.bf16.mxu0 0
    %1906 = vmatpush1.bf16.msra.mxu0 0
    %1907 = vmatprep.subr.bf16.mxu0 0
    %1908 = vmatpush1.bf16.msra.mxu0 0
    %1909 = vmatprep.subr.bf16.mxu0 0
    %1910 = vmatpush1.bf16.msra.mxu0 0
    %1911 = vmatprep.subr.bf16.mxu0 0
    %1912 = vmatpush1.bf16.msra.mxu0 0
    %1913 = vmatprep.subr.bf16.mxu0 0
    %1914 = vmatpush1.bf16.msra.mxu0 0
    %1915 = vmatprep.mubr.bf16.mxu0 0
    %1916 = vmatmul.mubr.bf16.gmra.mrb[0].mxu0 %v1419
    %v1917 = vpop.f32.mrb[0].mxu0
    %v1918 = vadd.f32 0.0, %v1917
    %v1919 = vpop.f32.mrb[0].mxu0
    %v1920 = vpop.f32.mrb[0].mxu0
    %v1921 = vadd.f32 0.0, %v1920
    %v1922 = vpop.f32.mrb[0].mxu0
    %1923 = vdwg.mxu0
    %v1924 = vmul.f32 %v1822, 0.25
    %v1925 = vmul.f32 %v1825, 0.25
    %v1926 = vpack.c.bf16 %v1924, %v1924
    %v1927 = vpack.c.bf16 %v1925, %v1925
    %v1928 = vpack.c.bf16 %v1870, %v1870
    %v1929 = vpack.c.bf16 %v1873, %v1873
    %v1931 = vsel %vm467, %v1926, 0
    %v1934 = vsel %vm467, %v1928, 0
    %1936 = vmatprep.subr.bf16.mxu0 0
    %1937 = vmatpush1.bf16.xpose.msra.mxu0 %v1934
    %1938 = vmatprep.subr.bf16.mxu0 0
    %1939 = vmatpush1.bf16.xpose.msra.mxu0 0
    %1940 = vmatprep.subr.bf16.mxu0 0
    %1941 = vmatpush1.bf16.xpose.msra.mxu0 0
    %1942 = vmatprep.subr.bf16.mxu0 0
    %1943 = vmatpush1.bf16.xpose.msra.mxu0 0
    %1944 = vmatprep.subr.bf16.mxu0 0
    %1945 = vmatpush1.bf16.xpose.msra.mxu0 0
    %1946 = vmatprep.subr.bf16.mxu0 0
    %1947 = vmatpush1.bf16.xpose.msra.mxu0 0
    %1948 = vmatprep.subr.bf16.mxu0 0
    %1949 = vmatpush1.bf16.xpose.msra.mxu0 0
    %1950 = vmatprep.subr.bf16.mxu0 0
    %1951 = vmatpush1.bf16.xpose.msra.mxu0 0
    %1952 = vmatprep.subr.bf16.mxu0 0
    %1953 = vmatpush1.bf16.xpose.msra.mxu0 0
    %1954 = vmatprep.subr.bf16.mxu0 0
    %1955 = vmatpush1.bf16.xpose.msra.mxu0 0
    %1956 = vmatprep.subr.bf16.mxu0 0
    %1957 = vmatpush1.bf16.xpose.msra.mxu0 0
    %1958 = vmatprep.subr.bf16.mxu0 0
    %1959 = vmatpush1.bf16.xpose.msra.mxu0 0
    %1960 = vmatprep.subr.bf16.mxu0 0
    %1961 = vmatpush1.bf16.xpose.msra.mxu0 0
    %1962 = vmatprep.subr.bf16.mxu0 0
    %1963 = vmatpush1.bf16.xpose.msra.mxu0 0
    %1964 = vmatprep.subr.bf16.mxu0 0
    %1965 = vmatpush1.bf16.xpose.msra.mxu0 0
    %1966 = vmatprep.subr.bf16.mxu0 0
    %1967 = vmatpush1.bf16.xpose.msra.mxu0 0
    %1968 = vmatprep.mubr.bf16.mxu0 0
    %1969 = vmatmul.mubr.bf16.gmra.mrb[0].mxu0 %v1931
    %v1970 = vpop.f32.mrb[0].mxu0
    %v1971 = vadd.f32 0.0, %v1970
    %v1972 = vpop.f32.mrb[0].mxu0
    %v1973 = vpop.f32.mrb[0].mxu0
    %v1974 = vpop.f32.mrb[0].mxu0
    %1975 = vdwg.mxu0
    %v1977 = vsel %vm467, %v1927, 0
    %v1980 = vsel %vm467, %v1929, 0
    %1982 = vmatprep.subr.bf16.mxu0 0
    %1983 = vmatpush1.bf16.xpose.msra.mxu0 %v1980
    %1984 = vmatprep.subr.bf16.mxu0 0
    %1985 = vmatpush1.bf16.xpose.msra.mxu0 0
    %1986 = vmatprep.subr.bf16.mxu0 0
    %1987 = vmatpush1.bf16.xpose.msra.mxu0 0
    %1988 = vmatprep.subr.bf16.mxu0 0
    %1989 = vmatpush1.bf16.xpose.msra.mxu0 0
    %1990 = vmatprep.subr.bf16.mxu0 0
    %1991 = vmatpush1.bf16.xpose.msra.mxu0 0
    %1992 = vmatprep.subr.bf16.mxu0 0
    %1993 = vmatpush1.bf16.xpose.msra.mxu0 0
    %1994 = vmatprep.subr.bf16.mxu0 0
    %1995 = vmatpush1.bf16.xpose.msra.mxu0 0
    %1996 = vmatprep.subr.bf16.mxu0 0
    %1997 = vmatpush1.bf16.xpose.msra.mxu0 0
    %1998 = vmatprep.subr.bf16.mxu0 0
    %1999 = vmatpush1.bf16.xpose.msra.mxu0 0
    %2000 = vmatprep.subr.bf16.mxu0 0
    %2001 = vmatpush1.bf16.xpose.msra.mxu0 0
    %2002 = vmatprep.subr.bf16.mxu0 0
    %2003 = vmatpush1.bf16.xpose.msra.mxu0 0
    %2004 = vmatprep.subr.bf16.mxu0 0
    %2005 = vmatpush1.bf16.xpose.msra.mxu0 0
    %2006 = vmatprep.subr.bf16.mxu0 0
    %2007 = vmatpush1.bf16.xpose.msra.mxu0 0
    %2008 = vmatprep.subr.bf16.mxu0 0
    %2009 = vmatpush1.bf16.xpose.msra.mxu0 0
    %2010 = vmatprep.subr.bf16.mxu0 0
    %2011 = vmatpush1.bf16.xpose.msra.mxu0 0
    %2012 = vmatprep.subr.bf16.mxu0 0
    %2013 = vmatpush1.bf16.xpose.msra.mxu0 0
    %2014 = vmatprep.mubr.bf16.mxu0 0
    %2015 = vmatmul.mubr.bf16.gmra.mrb[0].mxu0 %v1977
    %v2016 = vpop.f32.mrb[0].mxu0
    %v2017 = vadd.f32 0.0, %v2016
    %v2018 = vpop.f32.mrb[0].mxu0
    %v2019 = vpop.f32.mrb[0].mxu0
    %v2020 = vpop.f32.mrb[0].mxu0
    %2021 = vdwg.mxu0
    %v2022 = vsel %vm560, %v1971, -inf
    %2023 = vmax.xlane.f32.xlu0 %v2022
    %v2024 = vpop.xlane.xlu0 %2023
    %v2025 = vsel %vm560, %v2017, -inf
    %2026 = vmax.xlane.f32.xlu0 %v2025
    %v2027 = vpop.xlane.xlu0 %2026
    %v2028 = vsub.f32 %v1971, %v2024
    %v2029 = vsub.f32 %v2017, %v2027
    %v2030 = vmul.f32 %v2028, 1.442695
    %v2031 = vpow.pop %v2030
    %v2032 = vmul.f32 %v2029, 1.442695
    %v2033 = vpow.pop %v2032
    %v2034 = vsel %vm560, %v2031, 0.0
    %2035 = vadd.xlane.f32.xlu0 %v2034
    %v2036 = vpop.xlane.xlu0 %2035
    %v2037 = vsel %vm560, %v2033, 0.0
    %2038 = vadd.xlane.f32.xlu0 %v2037
    %v2039 = vpop.xlane.xlu0 %2038
    %v2040 = vrcp.pop %v2036
    %v2041 = vrcp.pop %v2039
    %v2042 = vmul.f32 %v2031, %v2040
    %v2043 = vmul.f32 %v2033, %v2041
    %v2044 = vpack.c.bf16 %v2042, %v2042
    %v2045 = vpack.c.bf16 %v2043, %v2043
    %v2046 = vpack.c.bf16 %v1918, %v1918
    %v2047 = vpack.c.bf16 %v1921, %v1921
    %v2049 = vsel %vm560, %v2044, 0
    %v2052 = vsel %vm590, %v2046, 0
    %2054 = vmatprep.subr.bf16.mxu0 0
    %2055 = vmatpush1.bf16.msra.mxu0 %v2052
    %2056 = vmatprep.subr.bf16.mxu0 0
    %2057 = vmatpush1.bf16.msra.mxu0 0
    %2058 = vmatprep.subr.bf16.mxu0 0
    %2059 = vmatpush1.bf16.msra.mxu0 0
    %2060 = vmatprep.subr.bf16.mxu0 0
    %2061 = vmatpush1.bf16.msra.mxu0 0
    %2062 = vmatprep.subr.bf16.mxu0 0
    %2063 = vmatpush1.bf16.msra.mxu0 0
    %2064 = vmatprep.subr.bf16.mxu0 0
    %2065 = vmatpush1.bf16.msra.mxu0 0
    %2066 = vmatprep.subr.bf16.mxu0 0
    %2067 = vmatpush1.bf16.msra.mxu0 0
    %2068 = vmatprep.subr.bf16.mxu0 0
    %2069 = vmatpush1.bf16.msra.mxu0 0
    %2070 = vmatprep.subr.bf16.mxu0 0
    %2071 = vmatpush1.bf16.msra.mxu0 0
    %2072 = vmatprep.subr.bf16.mxu0 0
    %2073 = vmatpush1.bf16.msra.mxu0 0
    %2074 = vmatprep.subr.bf16.mxu0 0
    %2075 = vmatpush1.bf16.msra.mxu0 0
    %2076 = vmatprep.subr.bf16.mxu0 0
    %2077 = vmatpush1.bf16.msra.mxu0 0
    %2078 = vmatprep.subr.bf16.mxu0 0
    %2079 = vmatpush1.bf16.msra.mxu0 0
    %2080 = vmatprep.subr.bf16.mxu0 0
    %2081 = vmatpush1.bf16.msra.mxu0 0
    %2082 = vmatprep.subr.bf16.mxu0 0
    %2083 = vmatpush1.bf16.msra.mxu0 0
    %2084 = vmatprep.subr.bf16.mxu0 0
    %2085 = vmatpush1.bf16.msra.mxu0 0
    %2086 = vmatprep.mubr.bf16.mxu0 0
    %2087 = vmatmul.mubr.bf16.gmra.mrb[0].mxu0 %v2049
    %v2088 = vpop.f32.mrb[0].mxu0
    %v2089 = vadd.f32 0.0, %v2088
    %v2090 = vpop.f32.mrb[0].mxu0
    %v2091 = vpop.f32.mrb[0].mxu0
    %v2092 = vpop.f32.mrb[0].mxu0
    %2093 = vdwg.mxu0
    %v2095 = vsel %vm560, %v2045, 0
    %v2098 = vsel %vm590, %v2047, 0
    %2100 = vmatprep.subr.bf16.mxu0 0
    %2101 = vmatpush1.bf16.msra.mxu0 %v2098
    %2102 = vmatprep.subr.bf16.mxu0 0
    %2103 = vmatpush1.bf16.msra.mxu0 0
    %2104 = vmatprep.subr.bf16.mxu0 0
    %2105 = vmatpush1.bf16.msra.mxu0 0
    %2106 = vmatprep.subr.bf16.mxu0 0
    %2107 = vmatpush1.bf16.msra.mxu0 0
    %2108 = vmatprep.subr.bf16.mxu0 0
    %2109 = vmatpush1.bf16.msra.mxu0 0
    %2110 = vmatprep.subr.bf16.mxu0 0
    %2111 = vmatpush1.bf16.msra.mxu0 0
    %2112 = vmatprep.subr.bf16.mxu0 0
    %2113 = vmatpush1.bf16.msra.mxu0 0
    %2114 = vmatprep.subr.bf16.mxu0 0
    %2115 = vmatpush1.bf16.msra.mxu0 0
    %2116 = vmatprep.subr.bf16.mxu0 0
    %2117 = vmatpush1.bf16.msra.mxu0 0
    %2118 = vmatprep.subr.bf16.mxu0 0
    %2119 = vmatpush1.bf16.msra.mxu0 0
    %2120 = vmatprep.subr.bf16.mxu0 0
    %2121 = vmatpush1.bf16.msra.mxu0 0
    %2122 = vmatprep.subr.bf16.mxu0 0
    %2123 = vmatpush1.bf16.msra.mxu0 0
    %2124 = vmatprep.subr.bf16.mxu0 0
    %2125 = vmatpush1.bf16.msra.mxu0 0
    %2126 = vmatprep.subr.bf16.mxu0 0
    %2127 = vmatpush1.bf16.msra.mxu0 0
    %2128 = vmatprep.subr.bf16.mxu0 0
    %2129 = vmatpush1.bf16.msra.mxu0 0
    %2130 = vmatprep.subr.bf16.mxu0 0
    %2131 = vmatpush1.bf16.msra.mxu0 0
    %2132 = vmatprep.mubr.bf16.mxu0 0
    %2133 = vmatmul.mubr.bf16.gmra.mrb[0].mxu0 %v2095
    %v2134 = vpop.f32.mrb[0].mxu0
    %v2135 = vadd.f32 0.0, %v2134
    %v2136 = vpop.f32.mrb[0].mxu0
    %v2137 = vpop.f32.mrb[0].mxu0
    %v2138 = vpop.f32.mrb[0].mxu0
    %2139 = vdwg.mxu0
    %v2140 = vpack.c.bf16 %v2089, %v2089
    %v2141 = vpack.c.bf16 %v2135, %v2135
    %s2142 = scalar_lea.vmem %s23, 48
    %v2143 = vld [vmem:[%s2142] sm:$0xff]
    %v2144 = vld [vmem:[%s2142 + $0x8] sm:$0xff]
    %v2145 = vpack.c.bf16 %v2144, %v2143
    %v2148 = vunpack.c.l.b16 %v2140
    %v2149 = vunpack.c.l.b16 %v2141
    %v2150 = vpack.c.b16 %v2149, %v2148
    %v2152 = vsel %vm467, %v2150, 0
    %2154 = vmatprep.subr.bf16.mxu0 0
    %2155 = vmatpush1.bf16.msra.mxu0 %v2145
    %2156 = vmatprep.subr.bf16.mxu0 0
    %2157 = vmatpush1.bf16.msra.mxu0 0
    %2158 = vmatprep.subr.bf16.mxu0 0
    %2159 = vmatpush1.bf16.msra.mxu0 0
    %2160 = vmatprep.subr.bf16.mxu0 0
    %2161 = vmatpush1.bf16.msra.mxu0 0
    %2162 = vmatprep.subr.bf16.mxu0 0
    %2163 = vmatpush1.bf16.msra.mxu0 0
    %2164 = vmatprep.subr.bf16.mxu0 0
    %2165 = vmatpush1.bf16.msra.mxu0 0
    %2166 = vmatprep.subr.bf16.mxu0 0
    %2167 = vmatpush1.bf16.msra.mxu0 0
    %2168 = vmatprep.subr.bf16.mxu0 0
    %2169 = vmatpush1.bf16.msra.mxu0 0
    %2170 = vmatprep.subr.bf16.mxu0 0
    %2171 = vmatpush1.bf16.msra.mxu0 0
    %2172 = vmatprep.subr.bf16.mxu0 0
    %2173 = vmatpush1.bf16.msra.mxu0 0
    %2174 = vmatprep.subr.bf16.mxu0 0
    %2175 = vmatpush1.bf16.msra.mxu0 0
    %2176 = vmatprep.subr.bf16.mxu0 0
    %2177 = vmatpush1.bf16.msra.mxu0 0
    %2178 = vmatprep.subr.bf16.mxu0 0
    %2179 = vmatpush1.bf16.msra.mxu0 0
    %2180 = vmatprep.subr.bf16.mxu0 0
    %2181 = vmatpush1.bf16.msra.mxu0 0
    %2182 = vmatprep.subr.bf16.mxu0 0
    %2183 = vmatpush1.bf16.msra.mxu0 0
    %2184 = vmatprep.subr.bf16.mxu0 0
    %2185 = vmatpush1.bf16.msra.mxu0 0
    %2186 = vmatprep.mubr.bf16.mxu0 0
    %2187 = vmatmul.mubr.bf16.gmra.mrb[0].mxu0 %v2152
    %v2188 = vpop.f32.mrb[0].mxu0
    %v2189 = vadd.f32 0.0, %v2188
    %v2190 = vpop.f32.mrb[0].mxu0
    %v2191 = vpop.f32.mrb[0].mxu0
    %v2192 = vadd.f32 0.0, %v2191
    %v2193 = vpop.f32.mrb[0].mxu0
    %2194 = vdwg.mxu0
    %v2197 = vunpack.c.l.b16 %v1774
    %v2198 = vunpack.c.l.b16 %v1775
    %v2199 = vpack.c.b16 %v2198, %v2197
    %v2201 = vsel %vm467, %v2199, 0
    %2203 = vmatprep.subr.bf16.mxu0 0
    %2204 = vmatpush1.bf16.msra.mxu0 %v1779
    %2205 = vmatprep.subr.bf16.mxu0 0
    %2206 = vmatpush1.bf16.msra.mxu0 0
    %2207 = vmatprep.subr.bf16.mxu0 0
    %2208 = vmatpush1.bf16.msra.mxu0 0
    %2209 = vmatprep.subr.bf16.mxu0 0
    %2210 = vmatpush1.bf16.msra.mxu0 0
    %2211 = vmatprep.subr.bf16.mxu0 0
    %2212 = vmatpush1.bf16.msra.mxu0 0
    %2213 = vmatprep.subr.bf16.mxu0 0
    %2214 = vmatpush1.bf16.msra.mxu0 0
    %2215 = vmatprep.subr.bf16.mxu0 0
    %2216 = vmatpush1.bf16.msra.mxu0 0
    %2217 = vmatprep.subr.bf16.mxu0 0
    %2218 = vmatpush1.bf16.msra.mxu0 0
    %2219 = vmatprep.subr.bf16.mxu0 0
    %2220 = vmatpush1.bf16.msra.mxu0 0
    %2221 = vmatprep.subr.bf16.mxu0 0
    %2222 = vmatpush1.bf16.msra.mxu0 0
    %2223 = vmatprep.subr.bf16.mxu0 0
    %2224 = vmatpush1.bf16.msra.mxu0 0
    %2225 = vmatprep.subr.bf16.mxu0 0
    %2226 = vmatpush1.bf16.msra.mxu0 0
    %2227 = vmatprep.subr.bf16.mxu0 0
    %2228 = vmatpush1.bf16.msra.mxu0 0
    %2229 = vmatprep.subr.bf16.mxu0 0
    %2230 = vmatpush1.bf16.msra.mxu0 0
    %2231 = vmatprep.subr.bf16.mxu0 0
    %2232 = vmatpush1.bf16.msra.mxu0 0
    %2233 = vmatprep.subr.bf16.mxu0 0
    %2234 = vmatpush1.bf16.msra.mxu0 0
    %2235 = vmatprep.mubr.bf16.mxu0 0
    %2236 = vmatmul.mubr.bf16.gmra.mrb[0].mxu0 %v2201
    %v2237 = vpop.f32.mrb[0].mxu0
    %v2238 = vadd.f32 %v2189, %v2237
    %v2239 = vpop.f32.mrb[0].mxu0
    %v2240 = vpop.f32.mrb[0].mxu0
    %v2241 = vadd.f32 %v2192, %v2240
    %v2242 = vpop.f32.mrb[0].mxu0
    %2243 = vdwg.mxu0
    %v2244 = vadd.f32 %v1356, %v2238
    %v2245 = vadd.f32 %v1357, %v2241
    %s2246 = scalar_lea.vmem %s25, 1
    %v2247 = vld [vmem:[%s2246] sm:$0x1]
    %v2249 = vlaneseq
    %v2250 = vshrl.u32 %v2249, 7
    %v2251 = vsub.s32 0, %v2250
    %v2252 = vrot.slane %v2247, %v2251
    %v2254 = vadd.f32 %v2244, %v2252
    %v2255 = vadd.f32 %v2245, %v2252
    %s2256 = scalar_lea.vmem %s27, 1
    %v2257 = vld [vmem:[%s2256] sm:$0x1]
    %s2258 = scalar_lea.vmem %s29, 1
    %v2259 = vld [vmem:[%s2258] sm:$0x1]
    %v2260 = vsel %vm266, %v2254, 0.0
    %2261 = vadd.xlane.f32.xlu0 %v2260
    %v2262 = vpop.xlane.xlu0 %2261
    %v2263 = vsel %vm266, %v2255, 0.0
    %2264 = vadd.xlane.f32.xlu0 %v2263
    %v2265 = vpop.xlane.xlu0 %2264
    %v2266 = vmul.f32 %v2262, %v273
    %v2267 = vmul.f32 %v2265, %v273
    %v2268 = vsub.f32 %v2254, %v2266
    %v2269 = vsub.f32 %v2255, %v2267
    %v2270 = vmul.f32 %v2268, %v2268
    %v2271 = vmul.f32 %v2269, %v2269
    %v2272 = vsel %vm266, %v2270, 0.0
    %2273 = vadd.xlane.f32.xlu0 %v2272
    %v2274 = vpop.xlane.xlu0 %2273
    %v2275 = vsel %vm266, %v2271, 0.0
    %2276 = vadd.xlane.f32.xlu0 %v2275
    %v2277 = vpop.xlane.xlu0 %2276
    %v2278 = vmul.f32 %v2274, %v273
    %v2279 = vmul.f32 %v2277, %v273
    %v2280 = vadd.f32 %v2278, 1e-05
    %v2281 = vadd.f32 %v2279, 1e-05
    %v2282 = vrsqrt.pop %v2280
    %v2283 = vrsqrt.pop %v2281
    %v2284 = vmul.f32 %v2268, %v2282
    %v2285 = vmul.f32 %v2269, %v2283
    %v2287 = vlaneseq
    %v2288 = vshrl.u32 %v2287, 7
    %v2289 = vsub.s32 0, %v2288
    %v2290 = vrot.slane %v2257, %v2289
    %v2292 = vmul.f32 %v2284, %v2290
    %v2293 = vmul.f32 %v2285, %v2290
    %v2295 = vlaneseq
    %v2296 = vshrl.u32 %v2295, 7
    %v2297 = vsub.s32 0, %v2296
    %v2298 = vrot.slane %v2259, %v2297
    %v2300 = vadd.f32 %v2292, %v2298
    %v2301 = vadd.f32 %v2293, %v2298
    %s2302 = scalar_lea.vmem %s31, 32
    %v2303 = vld [vmem:[%s2302] sm:$0xff]
    %v2304 = vld [vmem:[%s2302 + $0x8] sm:$0xff]
    %v2305 = vld [vmem:[%s2302 + $0x10] sm:$0xff]
    %v2306 = vld [vmem:[%s2302 + $0x18] sm:$0xff]
    %v2307 = vpack.c.bf16 %v2300, %v2300
    %v2308 = vpack.c.bf16 %v2301, %v2301
    %v2309 = vpack.c.bf16 %v2304, %v2303
    %v2310 = vpack.c.bf16 %v2306, %v2305
    %s2311 = scalar_lea.vmem %s33, 1
    %v2312 = vld [vmem:[%s2311] sm:$0x1]
    %v2314 = vlaneseq
    %v2315 = vshrl.u32 %v2314, 7
    %v2316 = vsub.s32 0, %v2315
    %v2317 = vrot.slane %v2312, %v2316
    %v2321 = vunpack.c.l.b16 %v2307
    %v2322 = vunpack.c.l.b16 %v2308
    %v2323 = vpack.c.b16 %v2322, %v2321
    %v2325 = vsel %vm266, %v2323, 0
    %2327 = vmatprep.subr.bf16.mxu0 0
    %2328 = vmatpush1.bf16.msra.mxu0 %v2309
    %2329 = vmatprep.subr.bf16.mxu0 0
    %2330 = vmatpush1.bf16.msra.mxu0 %v2310
    %2331 = vmatprep.subr.bf16.mxu0 0
    %2332 = vmatpush1.bf16.msra.mxu0 0
    %2333 = vmatprep.subr.bf16.mxu0 0
    %2334 = vmatpush1.bf16.msra.mxu0 0
    %2335 = vmatprep.subr.bf16.mxu0 0
    %2336 = vmatpush1.bf16.msra.mxu0 0
    %2337 = vmatprep.subr.bf16.mxu0 0
    %2338 = vmatpush1.bf16.msra.mxu0 0
    %2339 = vmatprep.subr.bf16.mxu0 0
    %2340 = vmatpush1.bf16.msra.mxu0 0
    %2341 = vmatprep.subr.bf16.mxu0 0
    %2342 = vmatpush1.bf16.msra.mxu0 0
    %2343 = vmatprep.subr.bf16.mxu0 0
    %2344 = vmatpush1.bf16.msra.mxu0 0
    %2345 = vmatprep.subr.bf16.mxu0 0
    %2346 = vmatpush1.bf16.msra.mxu0 0
    %2347 = vmatprep.subr.bf16.mxu0 0
    %2348 = vmatpush1.bf16.msra.mxu0 0
    %2349 = vmatprep.subr.bf16.mxu0 0
    %2350 = vmatpush1.bf16.msra.mxu0 0
    %2351 = vmatprep.subr.bf16.mxu0 0
    %2352 = vmatpush1.bf16.msra.mxu0 0
    %2353 = vmatprep.subr.bf16.mxu0 0
    %2354 = vmatpush1.bf16.msra.mxu0 0
    %2355 = vmatprep.subr.bf16.mxu0 0
    %2356 = vmatpush1.bf16.msra.mxu0 0
    %2357 = vmatprep.subr.bf16.mxu0 0
    %2358 = vmatpush1.bf16.msra.mxu0 0
    %2359 = vmatprep.mubr.bf16.mxu0 0
    %2360 = vmatmul.mubr.bf16.gmra.mrb[0].mxu0 %v2325
    %v2361 = vpop.f32.mrb[0].mxu0
    %v2362 = vadd.f32 %v2317, %v2361
    %v2363 = vpop.f32.mrb[0].mxu0
    %v2364 = vpop.f32.mrb[0].mxu0
    %v2365 = vadd.f32 %v2317, %v2364
    %v2366 = vpop.f32.mrb[0].mxu0
    %2367 = vdwg.mxu0
    %v2368 = vmul.f32 %v2362, %v2362
    %v2369 = vmul.f32 %v2365, %v2365
    %v2370 = vmul.f32 %v2362, %v2368
    %v2371 = vmul.f32 %v2365, %v2369
    %v2372 = vmul.f32 %v2370, 0.044715
    %v2373 = vmul.f32 %v2371, 0.044715
    %v2374 = vadd.f32 %v2362, %v2372
    %v2375 = vadd.f32 %v2365, %v2373
    %v2376 = vmul.f32 %v2374, 0.7978846
    %v2377 = vmul.f32 %v2375, 0.7978846
    %v2378 = vtanh.pop %v2376
    %v2379 = vtanh.pop %v2377
    %v2380 = vadd.f32 %v2378, 1.0
    %v2381 = vadd.f32 %v2379, 1.0
    %v2382 = vmul.f32 %v2380, 0.5
    %v2383 = vmul.f32 %v2381, 0.5
    %v2384 = vmul.f32 %v2362, %v2382
    %v2385 = vmul.f32 %v2365, %v2383
    %s2386 = scalar_lea.vmem %s35, 64
    %v2387 = vld [vmem:[%s2386] sm:$0xff]
    %v2388 = vld [vmem:[%s2386 + $0x8] sm:$0xff]
    %v2389 = vld [vmem:[%s2386 + $0x10] sm:$0xff]
    %v2390 = vld [vmem:[%s2386 + $0x18] sm:$0xff]
    %v2391 = vld [vmem:[%s2386 + $0x20] sm:$0xff]
    %v2392 = vld [vmem:[%s2386 + $0x28] sm:$0xff]
    %v2393 = vld [vmem:[%s2386 + $0x30] sm:$0xff]
    %v2394 = vld [vmem:[%s2386 + $0x38] sm:$0xff]
    %v2395 = vpack.c.bf16 %v2384, %v2384
    %v2396 = vpack.c.bf16 %v2385, %v2385
    %v2397 = vpack.c.bf16 %v2388, %v2387
    %v2398 = vpack.c.bf16 %v2390, %v2389
    %v2399 = vpack.c.bf16 %v2392, %v2391
    %v2400 = vpack.c.bf16 %v2394, %v2393
    %s2401 = scalar_lea.vmem %s37, 1
    %v2402 = vld [vmem:[%s2401] sm:$0x1]
    %v2404 = vlaneseq
    %v2405 = vshrl.u32 %v2404, 7
    %v2406 = vsub.s32 0, %v2405
    %v2407 = vrot.slane %v2402, %v2406
    %v2411 = vunpack.c.l.b16 %v2395
    %v2412 = vunpack.c.l.b16 %v2396
    %v2413 = vpack.c.b16 %v2412, %v2411
    %v2415 = vsel %vm216, %v2413, 0
    %2417 = vmatprep.subr.bf16.mxu0 0
    %2418 = vmatpush1.bf16.msra.mxu0 %v2397
    %2419 = vmatprep.subr.bf16.mxu0 0
    %2420 = vmatpush1.bf16.msra.mxu0 %v2398
    %2421 = vmatprep.subr.bf16.mxu0 0
    %2422 = vmatpush1.bf16.msra.mxu0 %v2399
    %2423 = vmatprep.subr.bf16.mxu0 0
    %2424 = vmatpush1.bf16.msra.mxu0 %v2400
    %2425 = vmatprep.subr.bf16.mxu0 0
    %2426 = vmatpush1.bf16.msra.mxu0 0
    %2427 = vmatprep.subr.bf16.mxu0 0
    %2428 = vmatpush1.bf16.msra.mxu0 0
    %2429 = vmatprep.subr.bf16.mxu0 0
    %2430 = vmatpush1.bf16.msra.mxu0 0
    %2431 = vmatprep.subr.bf16.mxu0 0
    %2432 = vmatpush1.bf16.msra.mxu0 0
    %2433 = vmatprep.subr.bf16.mxu0 0
    %2434 = vmatpush1.bf16.msra.mxu0 0
    %2435 = vmatprep.subr.bf16.mxu0 0
    %2436 = vmatpush1.bf16.msra.mxu0 0
    %2437 = vmatprep.subr.bf16.mxu0 0
    %2438 = vmatpush1.bf16.msra.mxu0 0
    %2439 = vmatprep.subr.bf16.mxu0 0
    %2440 = vmatpush1.bf16.msra.mxu0 0
    %2441 = vmatprep.subr.bf16.mxu0 0
    %2442 = vmatpush1.bf16.msra.mxu0 0
    %2443 = vmatprep.subr.bf16.mxu0 0
    %2444 = vmatpush1.bf16.msra.mxu0 0
    %2445 = vmatprep.subr.bf16.mxu0 0
    %2446 = vmatpush1.bf16.msra.mxu0 0
    %2447 = vmatprep.subr.bf16.mxu0 0
    %2448 = vmatpush1.bf16.msra.mxu0 0
    %2449 = vmatprep.mubr.bf16.mxu0 0
    %2450 = vmatmul.mubr.bf16.gmra.mrb[0].mxu0 %v2415
    %v2451 = vpop.f32.mrb[0].mxu0
    %v2452 = vadd.f32 %v2407, %v2451
    %v2453 = vpop.f32.mrb[0].mxu0
    %v2454 = vpop.f32.mrb[0].mxu0
    %v2455 = vadd.f32 %v2407, %v2454
    %v2456 = vpop.f32.mrb[0].mxu0
    %2457 = vdwg.mxu0
    %v2458 = vadd.f32 %v2254, %v2452
    %v2459 = vadd.f32 %v2255, %v2455
    %v2460 = vld [vmem:[%s39] sm:$0x1]
    %v2461 = vld [vmem:[%s41] sm:$0x1]
    %v2462 = vsel %vm266, %v2458, 0.0
    %2463 = vadd.xlane.f32.xlu0 %v2462
    %v2464 = vpop.xlane.xlu0 %2463
    %v2465 = vsel %vm266, %v2459, 0.0
    %2466 = vadd.xlane.f32.xlu0 %v2465
    %v2467 = vpop.xlane.xlu0 %2466
    %v2468 = vmul.f32 %v2464, %v273
    %v2469 = vmul.f32 %v2467, %v273
    %v2470 = vsub.f32 %v2458, %v2468
    %v2471 = vsub.f32 %v2459, %v2469
    %v2472 = vmul.f32 %v2470, %v2470
    %v2473 = vmul.f32 %v2471, %v2471
    %v2474 = vsel %vm266, %v2472, 0.0
    %2475 = vadd.xlane.f32.xlu0 %v2474
    %v2476 = vpop.xlane.xlu0 %2475
    %v2477 = vsel %vm266, %v2473, 0.0
    %2478 = vadd.xlane.f32.xlu0 %v2477
    %v2479 = vpop.xlane.xlu0 %2478
    %v2480 = vmul.f32 %v2476, %v273
    %v2481 = vmul.f32 %v2479, %v273
    %v2482 = vadd.f32 %v2480, 1e-05
    %v2483 = vadd.f32 %v2481, 1e-05
    %v2484 = vrsqrt.pop %v2482
    %v2485 = vrsqrt.pop %v2483
    %v2486 = vmul.f32 %v2470, %v2484
    %v2487 = vmul.f32 %v2471, %v2485
    %v2489 = vlaneseq
    %v2490 = vshrl.u32 %v2489, 7
    %v2491 = vsub.s32 0, %v2490
    %v2492 = vrot.slane %v2460, %v2491
    %v2494 = vmul.f32 %v2486, %v2492
    %v2495 = vmul.f32 %v2487, %v2492
    %v2497 = vlaneseq
    %v2498 = vshrl.u32 %v2497, 7
    %v2499 = vsub.s32 0, %v2498
    %v2500 = vrot.slane %v2461, %v2499
    %v2502 = vadd.f32 %v2494, %v2500
    %v2503 = vadd.f32 %v2495, %v2500
    %v2504 = vld [vmem:[%s43] sm:$0xff]
    %v2505 = vld [vmem:[%s43 + $0x8] sm:$0xff]
    %v2506 = vld [vmem:[%s43 + $0x10] sm:$0xff]
    %v2507 = vld [vmem:[%s43 + $0x18] sm:$0xff]
    %v2508 = vld [vmem:[%s43 + $0x20] sm:$0xff]
    %v2509 = vld [vmem:[%s43 + $0x28] sm:$0xff]
    %v2510 = vld [vmem:[%s43 + $0x30] sm:$0xff]
    %v2511 = vld [vmem:[%s43 + $0x38] sm:$0xff]
    %v2512 = vmul.f32 %v2504, %v2504
    %v2513 = vmul.f32 %v2505, %v2505
    %v2514 = vmul.f32 %v2506, %v2506
    %v2515 = vmul.f32 %v2507, %v2507
    %v2516 = vmul.f32 %v2508, %v2508
    %v2517 = vmul.f32 %v2509, %v2509
    %v2518 = vmul.f32 %v2510, %v2510
    %v2519 = vmul.f32 %v2511, %v2511
    %v2521 = vsel %vm266, 1.0, 0
    %v2524 = vsel %vm266, %v2512, 0
    %v2527 = vsel %vm266, %v2513, 0
    %v2530 = vsel %vm266, %v2514, 0
    %v2533 = vsel %vm266, %v2515, 0
    %v2536 = vsel %vm266, %v2516, 0
    %v2539 = vsel %vm266, %v2517, 0
    %v2542 = vsel %vm266, %v2518, 0
    %v2545 = vsel %vm266, %v2519, 0
    %2547 = vmatprep.subr.mxu0 0.0
    %2548 = vmatpush1.xpose.msra.mxu0 %v2524
    %2549 = vmatprep.subr.mxu0 0.0
    %2550 = vmatpush1.xpose.msra.mxu0 %v2527
    %2551 = vmatprep.subr.mxu0 0.0
    %2552 = vmatpush1.xpose.msra.mxu0 %v2530
    %2553 = vmatprep.subr.mxu0 0.0
    %2554 = vmatpush1.xpose.msra.mxu0 %v2533
    %2555 = vmatprep.subr.mxu0 0.0
    %2556 = vmatpush1.xpose.msra.mxu0 %v2536
    %2557 = vmatprep.subr.mxu0 0.0
    %2558 = vmatpush1.xpose.msra.mxu0 %v2539
    %2559 = vmatprep.subr.mxu0 0.0
    %2560 = vmatpush1.xpose.msra.mxu0 %v2542
    %2561 = vmatprep.subr.mxu0 0.0
    %2562 = vmatpush1.xpose.msra.mxu0 %v2545
    %2563 = vmatprep.subr.mxu0 0.0
    %2564 = vmatpush1.xpose.msra.mxu0 0.0
    %2565 = vmatprep.subr.mxu0 0.0
    %2566 = vmatpush1.xpose.msra.mxu0 0.0
    %2567 = vmatprep.subr.mxu0 0.0
    %2568 = vmatpush1.xpose.msra.mxu0 0.0
    %2569 = vmatprep.subr.mxu0 0.0
    %2570 = vmatpush1.xpose.msra.mxu0 0.0
    %2571 = vmatprep.subr.mxu0 0.0
    %2572 = vmatpush1.xpose.msra.mxu0 0.0
    %2573 = vmatprep.subr.mxu0 0.0
    %2574 = vmatpush1.xpose.msra.mxu0 0.0
    %2575 = vmatprep.subr.mxu0 0.0
    %2576 = vmatpush1.xpose.msra.mxu0 0.0
    %2577 = vmatprep.subr.mxu0 0.0
    %2578 = vmatpush1.xpose.msra.mxu0 0.0
    %2579 = vmatprep.subr.mxu0 0.0
    %2580 = vmatpush1.xpose.msra.mxu0 0.0
    %2581 = vmatprep.subr.mxu0 0.0
    %2582 = vmatpush1.xpose.msra.mxu0 0.0
    %2583 = vmatprep.subr.mxu0 0.0
    %2584 = vmatpush1.xpose.msra.mxu0 0.0
    %2585 = vmatprep.subr.mxu0 0.0
    %2586 = vmatpush1.xpose.msra.mxu0 0.0
    %2587 = vmatprep.subr.mxu0 0.0
    %2588 = vmatpush1.xpose.msra.mxu0 0.0
    %2589 = vmatprep.subr.mxu0 0.0
    %2590 = vmatpush1.xpose.msra.mxu0 0.0
    %2591 = vmatprep.subr.mxu0 0.0
    %2592 = vmatpush1.xpose.msra.mxu0 0.0
    %2593 = vmatprep.subr.mxu0 0.0
    %2594 = vmatpush1.xpose.msra.mxu0 0.0
    %2595 = vmatprep.subr.mxu0 0.0
    %2596 = vmatpush1.xpose.msra.mxu0 0.0
    %2597 = vmatprep.subr.mxu0 0.0
    %2598 = vmatpush1.xpose.msra.mxu0 0.0
    %2599 = vmatprep.subr.mxu0 0.0
    %2600 = vmatpush1.xpose.msra.mxu0 0.0
    %2601 = vmatprep.subr.mxu0 0.0
    %2602 = vmatpush1.xpose.msra.mxu0 0.0
    %2603 = vmatprep.subr.mxu0 0.0
    %2604 = vmatpush1.xpose.msra.mxu0 0.0
    %2605 = vmatprep.subr.mxu0 0.0
    %2606 = vmatpush1.xpose.msra.mxu0 0.0
    %2607 = vmatprep.subr.mxu0 0.0
    %2608 = vmatpush1.xpose.msra.mxu0 0.0
    %2609 = vmatprep.subr.mxu0 0.0
    %2610 = vmatpush1.xpose.msra.mxu0 0.0
    %2611 = vmatprep.mubr.f32.mxu0 0.0
    %2612 = vmatmul.mubr.f32.gmra.mrb[0].mxu0 %v2521
    %v2613 = vpop.f32.mrb[0].mxu0
    %v2614 = vadd.f32 0.0, %v2613
    %v2615 = vpop.f32.mrb[0].mxu0
    %2616 = vdwg.mxu0
    %s2617 = scalar_lea.vmem %s43, 64
    %v2618 = vld [vmem:[%s2617] sm:$0xff]
    %v2619 = vld [vmem:[%s2617 + $0x8] sm:$0xff]
    %v2620 = vld [vmem:[%s2617 + $0x10] sm:$0xff]
    %v2621 = vld [vmem:[%s2617 + $0x18] sm:$0xff]
    %v2622 = vld [vmem:[%s2617 + $0x20] sm:$0xff]
    %v2623 = vld [vmem:[%s2617 + $0x28] sm:$0xff]
    %v2624 = vld [vmem:[%s2617 + $0x30] sm:$0xff]
    %v2625 = vld [vmem:[%s2617 + $0x38] sm:$0xff]
    %v2626 = vmul.f32 %v2618, %v2618
    %v2627 = vmul.f32 %v2619, %v2619
    %v2628 = vmul.f32 %v2620, %v2620
    %v2629 = vmul.f32 %v2621, %v2621
    %v2630 = vmul.f32 %v2622, %v2622
    %v2631 = vmul.f32 %v2623, %v2623
    %v2632 = vmul.f32 %v2624, %v2624
    %v2633 = vmul.f32 %v2625, %v2625
    %v2635 = vsel %vm266, %v2626, 0
    %v2638 = vsel %vm266, %v2627, 0
    %v2641 = vsel %vm266, %v2628, 0
    %v2644 = vsel %vm266, %v2629, 0
    %v2647 = vsel %vm266, %v2630, 0
    %v2650 = vsel %vm266, %v2631, 0
    %v2653 = vsel %vm266, %v2632, 0
    %v2656 = vsel %vm266, %v2633, 0
    %2658 = vmatprep.subr.mxu0 0.0
    %2659 = vmatpush1.xpose.msra.mxu0 %v2635
    %2660 = vmatprep.subr.mxu0 0.0
    %2661 = vmatpush1.xpose.msra.mxu0 %v2638
    %2662 = vmatprep.subr.mxu0 0.0
    %2663 = vmatpush1.xpose.msra.mxu0 %v2641
    %2664 = vmatprep.subr.mxu0 0.0
    %2665 = vmatpush1.xpose.msra.mxu0 %v2644
    %2666 = vmatprep.subr.mxu0 0.0
    %2667 = vmatpush1.xpose.msra.mxu0 %v2647
    %2668 = vmatprep.subr.mxu0 0.0
    %2669 = vmatpush1.xpose.msra.mxu0 %v2650
    %2670 = vmatprep.subr.mxu0 0.0
    %2671 = vmatpush1.xpose.msra.mxu0 %v2653
    %2672 = vmatprep.subr.mxu0 0.0
    %2673 = vmatpush1.xpose.msra.mxu0 %v2656
    %2674 = vmatprep.subr.mxu0 0.0
    %2675 = vmatpush1.xpose.msra.mxu0 0.0
    %2676 = vmatprep.subr.mxu0 0.0
    %2677 = vmatpush1.xpose.msra.mxu0 0.0
    %2678 = vmatprep.subr.mxu0 0.0
    %2679 = vmatpush1.xpose.msra.mxu0 0.0
    %2680 = vmatprep.subr.mxu0 0.0
    %2681 = vmatpush1.xpose.msra.mxu0 0.0
    %2682 = vmatprep.subr.mxu0 0.0
    %2683 = vmatpush1.xpose.msra.mxu0 0.0
    %2684 = vmatprep.subr.mxu0 0.0
    %2685 = vmatpush1.xpose.msra.mxu0 0.0
    %2686 = vmatprep.subr.mxu0 0.0
    %2687 = vmatpush1.xpose.msra.mxu0 0.0
    %2688 = vmatprep.subr.mxu0 0.0
    %2689 = vmatpush1.xpose.msra.mxu0 0.0
    %2690 = vmatprep.subr.mxu0 0.0
    %2691 = vmatpush1.xpose.msra.mxu0 0.0
    %2692 = vmatprep.subr.mxu0 0.0
    %2693 = vmatpush1.xpose.msra.mxu0 0.0
    %2694 = vmatprep.subr.mxu0 0.0
    %2695 = vmatpush1.xpose.msra.mxu0 0.0
    %2696 = vmatprep.subr.mxu0 0.0
    %2697 = vmatpush1.xpose.msra.mxu0 0.0
    %2698 = vmatprep.subr.mxu0 0.0
    %2699 = vmatpush1.xpose.msra.mxu0 0.0
    %2700 = vmatprep.subr.mxu0 0.0
    %2701 = vmatpush1.xpose.msra.mxu0 0.0
    %2702 = vmatprep.subr.mxu0 0.0
    %2703 = vmatpush1.xpose.msra.mxu0 0.0
    %2704 = vmatprep.subr.mxu0 0.0
    %2705 = vmatpush1.xpose.msra.mxu0 0.0
    %2706 = vmatprep.subr.mxu0 0.0
    %2707 = vmatpush1.xpose.msra.mxu0 0.0
    %2708 = vmatprep.subr.mxu0 0.0
    %2709 = vmatpush1.xpose.msra.mxu0 0.0
    %2710 = vmatprep.subr.mxu0 0.0
    %2711 = vmatpush1.xpose.msra.mxu0 0.0
    %2712 = vmatprep.subr.mxu0 0.0
    %2713 = vmatpush1.xpose.msra.mxu0 0.0
    %2714 = vmatprep.subr.mxu0 0.0
    %2715 = vmatpush1.xpose.msra.mxu0 0.0
    %2716 = vmatprep.subr.mxu0 0.0
    %2717 = vmatpush1.xpose.msra.mxu0 0.0
    %2718 = vmatprep.subr.mxu0 0.0
    %2719 = vmatpush1.xpose.msra.mxu0 0.0
    %2720 = vmatprep.subr.mxu0 0.0
    %2721 = vmatpush1.xpose.msra.mxu0 0.0
    %2722 = vmatprep.mubr.f32.mxu0 0.0
    %2723 = vmatmul.mubr.f32.gmra.mrb[0].mxu0 %v2521
    %v2724 = vpop.f32.mrb[0].mxu0
    %v2725 = vadd.f32 0.0, %v2724
    %v2726 = vpop.f32.mrb[0].mxu0
    %2727 = vdwg.mxu0
    %v2729 = vsel %vm266, %v2502, 0
    %v2732 = vsel %vm266, %v2503, 0
    %v2735 = vsel %vm266, %v2504, 0
    %v2738 = vsel %vm266, %v2505, 0
    %v2741 = vsel %vm266, %v2506, 0
    %v2744 = vsel %vm266, %v2507, 0
    %v2747 = vsel %vm266, %v2508, 0
    %v2750 = vsel %vm266, %v2509, 0
    %v2753 = vsel %vm266, %v2510, 0
    %v2756 = vsel %vm266, %v2511, 0
    %2758 = vmatprep.subr.mxu0 0.0
    %2759 = vmatpush1.xpose.msra.mxu0 %v2735
    %2760 = vmatprep.subr.mxu0 0.0
    %2761 = vmatpush1.xpose.msra.mxu0 %v2738
    %2762 = vmatprep.subr.mxu0 0.0
    %2763 = vmatpush1.xpose.msra.mxu0 %v2741
    %2764 = vmatprep.subr.mxu0 0.0
    %2765 = vmatpush1.xpose.msra.mxu0 %v2744
    %2766 = vmatprep.subr.mxu0 0.0
    %2767 = vmatpush1.xpose.msra.mxu0 %v2747
    %2768 = vmatprep.subr.mxu0 0.0
    %2769 = vmatpush1.xpose.msra.mxu0 %v2750
    %2770 = vmatprep.subr.mxu0 0.0
    %2771 = vmatpush1.xpose.msra.mxu0 %v2753
    %2772 = vmatprep.subr.mxu0 0.0
    %2773 = vmatpush1.xpose.msra.mxu0 %v2756
    %2774 = vmatprep.subr.mxu0 0.0
    %2775 = vmatpush1.xpose.msra.mxu0 0.0
    %2776 = vmatprep.subr.mxu0 0.0
    %2777 = vmatpush1.xpose.msra.mxu0 0.0
    %2778 = vmatprep.subr.mxu0 0.0
    %2779 = vmatpush1.xpose.msra.mxu0 0.0
    %2780 = vmatprep.subr.mxu0 0.0
    %2781 = vmatpush1.xpose.msra.mxu0 0.0
    %2782 = vmatprep.subr.mxu0 0.0
    %2783 = vmatpush1.xpose.msra.mxu0 0.0
    %2784 = vmatprep.subr.mxu0 0.0
    %2785 = vmatpush1.xpose.msra.mxu0 0.0
    %2786 = vmatprep.subr.mxu0 0.0
    %2787 = vmatpush1.xpose.msra.mxu0 0.0
    %2788 = vmatprep.subr.mxu0 0.0
    %2789 = vmatpush1.xpose.msra.mxu0 0.0
    %2790 = vmatprep.subr.mxu0 0.0
    %2791 = vmatpush1.xpose.msra.mxu0 0.0
    %2792 = vmatprep.subr.mxu0 0.0
    %2793 = vmatpush1.xpose.msra.mxu0 0.0
    %2794 = vmatprep.subr.mxu0 0.0
    %2795 = vmatpush1.xpose.msra.mxu0 0.0
    %2796 = vmatprep.subr.mxu0 0.0
    %2797 = vmatpush1.xpose.msra.mxu0 0.0
    %2798 = vmatprep.subr.mxu0 0.0
    %2799 = vmatpush1.xpose.msra.mxu0 0.0
    %2800 = vmatprep.subr.mxu0 0.0
    %2801 = vmatpush1.xpose.msra.mxu0 0.0
    %2802 = vmatprep.subr.mxu0 0.0
    %2803 = vmatpush1.xpose.msra.mxu0 0.0
    %2804 = vmatprep.subr.mxu0 0.0
    %2805 = vmatpush1.xpose.msra.mxu0 0.0
    %2806 = vmatprep.subr.mxu0 0.0
    %2807 = vmatpush1.xpose.msra.mxu0 0.0
    %2808 = vmatprep.subr.mxu0 0.0
    %2809 = vmatpush1.xpose.msra.mxu0 0.0
    %2810 = vmatprep.subr.mxu0 0.0
    %2811 = vmatpush1.xpose.msra.mxu0 0.0
    %2812 = vmatprep.subr.mxu0 0.0
    %2813 = vmatpush1.xpose.msra.mxu0 0.0
    %2814 = vmatprep.subr.mxu0 0.0
    %2815 = vmatpush1.xpose.msra.mxu0 0.0
    %2816 = vmatprep.subr.mxu0 0.0
    %2817 = vmatpush1.xpose.msra.mxu0 0.0
    %2818 = vmatprep.subr.mxu0 0.0
    %2819 = vmatpush1.xpose.msra.mxu0 0.0
    %2820 = vmatprep.subr.mxu0 0.0
    %2821 = vmatpush1.xpose.msra.mxu0 0.0
    %2822 = vmatprep.mubr.f32.mxu0 0.0
    %2823 = vmatmul.mubr.f32.gmra.mrb[0].mxu0 %v2729
    %v2824 = vpop.f32.mrb[0].mxu0
    %v2825 = vadd.f32 0.0, %v2824
    %v2826 = vpop.f32.mrb[0].mxu0
    %2827 = vmatprep.mubr.f32.mxu0 0.0
    %2828 = vmatmul.mubr.f32.gmra.mrb[0].mxu0 %v2732
    %v2829 = vpop.f32.mrb[0].mxu0
    %v2830 = vadd.f32 0.0, %v2829
    %v2831 = vpop.f32.mrb[0].mxu0
    %2832 = vdwg.mxu0
    %v2833 = vmul.f32 %v2825, 2.0
    %v2834 = vmul.f32 %v2830, 2.0
    %v2835 = vlaneseq
    %v2836 = vshrl.u32 %v2835, 7
    %v2837 = vsub.s32 0, %v2836
    %v2838 = vrot.slane %v2614, %v2837
    %v2839 = vsub.f32 %v2838, %v2833
    %v2840 = vsub.f32 %v2838, %v2834
    %v2841 = vsel %vm216, %v2839, inf
    %2842 = vmin.xlane.f32.xlu0 %v2841
    %v2843 = vpop.xlane.xlu0 %2842
    %v2844 = vsel %vm216, %v2840, inf
    %2845 = vmin.xlane.f32.xlu0 %v2844
    %v2846 = vpop.xlane.xlu0 %2845
    %v2847 = vlaneseq
    %v2848 = vand.u32 %v2847, 127
    %vm2849 = vcmp.le.f32.partialorder %v2839, %v2843
    %vm2850 = vcmp.le.f32.partialorder %v2840, %v2846
    %v2851 = vsel %vm2849, %v2848, 64
    %v2852 = vsel %vm2850, %v2848, 64
    %v2853 = vsel %vm216, %v2851, 2147483647
    %v2854 = vand.u32 %v2853, 65535
    %v2855 = vshra.s32 %v2853, 16
    %v2856 = vcvt.s32.f32 %v2854
    %v2857 = vcvt.s32.f32 %v2855
    %2858 = vmin.xlane.f32.xlu0 %v2857
    %v2859 = vpop.xlane.xlu0 %2858
    %vm2860 = vcmp.eq.f32.partialorder %v2857, %v2859
    %v2861 = vsel %vm2860, %v2856, inf
    %2862 = vmin.xlane.f32.xlu0 %v2861
    %v2863 = vpop.xlane.xlu0 %2862
    %v2864 = vcvt.f32.s32 %v2863
    %v2865 = vcvt.f32.s32 %v2859
    %v2866 = vshll.u32 %v2865, 16
    %v2867 = vadd.s32 %v2866, %v2864
    %v2868 = vsel %vm216, %v2852, 2147483647
    %v2869 = vand.u32 %v2868, 65535
    %v2870 = vshra.s32 %v2868, 16
    %v2871 = vcvt.s32.f32 %v2869
    %v2872 = vcvt.s32.f32 %v2870
    %2873 = vmin.xlane.f32.xlu0 %v2872
    %v2874 = vpop.xlane.xlu0 %2873
    %vm2875 = vcmp.eq.f32.partialorder %v2872, %v2874
    %v2876 = vsel %vm2875, %v2871, inf
    %2877 = vmin.xlane.f32.xlu0 %v2876
    %v2878 = vpop.xlane.xlu0 %2877
    %v2879 = vcvt.f32.s32 %v2878
    %v2880 = vcvt.f32.s32 %v2874
    %v2881 = vshll.u32 %v2880, 16
    %v2882 = vadd.s32 %v2881, %v2879
    %vm2883 = vcmp.eq.s32.totalorder %v2848, %v2867
    %vm2884 = vcmp.eq.s32.totalorder %v2848, %v2882
    %v2885 = vsel %vm2883, 1, 0
    %v2886 = vsel %vm2884, 1, 0
    %v2887 = vcvt.s32.f32 %v2885
    %v2888 = vcvt.s32.f32 %v2886
    %v2890 = vsel %vm216, %v2887, 0
    %v2893 = vsel %vm216, %v2888, 0
    %2895 = vmatprep.subr.mxu0 0.0
    %2896 = vmatpush1.msra.mxu0 %v2504
    %2897 = vmatprep.subr.mxu0 0.0
    %2898 = vmatpush1.msra.mxu0 %v2505
    %2899 = vmatprep.subr.mxu0 0.0
    %2900 = vmatpush1.msra.mxu0 %v2506
    %2901 = vmatprep.subr.mxu0 0.0
    %2902 = vmatpush1.msra.mxu0 %v2507
    %2903 = vmatprep.subr.mxu0 0.0
    %2904 = vmatpush1.msra.mxu0 %v2508
    %2905 = vmatprep.subr.mxu0 0.0
    %2906 = vmatpush1.msra.mxu0 %v2509
    %2907 = vmatprep.subr.mxu0 0.0
    %2908 = vmatpush1.msra.mxu0 %v2510
    %2909 = vmatprep.subr.mxu0 0.0
    %2910 = vmatpush1.msra.mxu0 %v2511
    %2911 = vmatprep.subr.mxu0 0.0
    %2912 = vmatpush1.msra.mxu0 0.0
    %2913 = vmatprep.subr.mxu0 0.0
    %2914 = vmatpush1.msra.mxu0 0.0
    %2915 = vmatprep.subr.mxu0 0.0
    %2916 = vmatpush1.msra.mxu0 0.0
    %2917 = vmatprep.subr.mxu0 0.0
    %2918 = vmatpush1.msra.mxu0 0.0
    %2919 = vmatprep.subr.mxu0 0.0
    %2920 = vmatpush1.msra.mxu0 0.0
    %2921 = vmatprep.subr.mxu0 0.0
    %2922 = vmatpush1.msra.mxu0 0.0
    %2923 = vmatprep.subr.mxu0 0.0
    %2924 = vmatpush1.msra.mxu0 0.0
    %2925 = vmatprep.subr.mxu0 0.0
    %2926 = vmatpush1.msra.mxu0 0.0
    %2927 = vmatprep.subr.mxu0 0.0
    %2928 = vmatpush1.msra.mxu0 0.0
    %2929 = vmatprep.subr.mxu0 0.0
    %2930 = vmatpush1.msra.mxu0 0.0
    %2931 = vmatprep.subr.mxu0 0.0
    %2932 = vmatpush1.msra.mxu0 0.0
    %2933 = vmatprep.subr.mxu0 0.0
    %2934 = vmatpush1.msra.mxu0 0.0
    %2935 = vmatprep.subr.mxu0 0.0
    %2936 = vmatpush1.msra.mxu0 0.0
    %2937 = vmatprep.subr.mxu0 0.0
    %2938 = vmatpush1.msra.mxu0 0.0
    %2939 = vmatprep.subr.mxu0 0.0
    %2940 = vmatpush1.msra.mxu0 0.0
    %2941 = vmatprep.subr.mxu0 0.0
    %2942 = vmatpush1.msra.mxu0 0.0
    %2943 = vmatprep.subr.mxu0 0.0
    %2944 = vmatpush1.msra.mxu0 0.0
    %2945 = vmatprep.subr.mxu0 0.0
    %2946 = vmatpush1.msra.mxu0 0.0
    %2947 = vmatprep.subr.mxu0 0.0
    %2948 = vmatpush1.msra.mxu0 0.0
    %2949 = vmatprep.subr.mxu0 0.0
    %2950 = vmatpush1.msra.mxu0 0.0
    %2951 = vmatprep.subr.mxu0 0.0
    %2952 = vmatpush1.msra.mxu0 0.0
    %2953 = vmatprep.subr.mxu0 0.0
    %2954 = vmatpush1.msra.mxu0 0.0
    %2955 = vmatprep.subr.mxu0 0.0
    %2956 = vmatpush1.msra.mxu0 0.0
    %2957 = vmatprep.subr.mxu0 0.0
    %2958 = vmatpush1.msra.mxu0 0.0
    %2959 = vmatprep.mubr.f32.mxu0 0.0
    %2960 = vmatmul.mubr.f32.gmra.mrb[0].mxu0 %v2890
    %v2961 = vpop.f32.mrb[0].mxu0
    %v2962 = vadd.f32 0.0, %v2961
    %v2963 = vpop.f32.mrb[0].mxu0
    %2964 = vmatprep.mubr.f32.mxu0 0.0
    %2965 = vmatmul.mubr.f32.gmra.mrb[0].mxu0 %v2893
    %v2966 = vpop.f32.mrb[0].mxu0
    %v2967 = vadd.f32 0.0, %v2966
    %v2968 = vpop.f32.mrb[0].mxu0
    %2969 = vdwg.mxu0
    %v2970 = vsub.f32 %v2962, %v2502
    %v2971 = vsub.f32 %v2967, %v2503
    %v2972 = vmul.f32 %v2970, %v2970
    %v2973 = vmul.f32 %v2971, %v2971
    %v2974 = vsel %vm266, %v2972, 0.0
    %2975 = vadd.xlane.f32.xlu0 %v2974
    %v2976 = vpop.xlane.xlu0 %2975
    %v2977 = vsel %vm266, %v2973, 0.0
    %2978 = vadd.xlane.f32.xlu0 %v2977
    %v2979 = vpop.xlane.xlu0 %2978
    %v2980 = vrot.slane %v2976, 4
    %v2981 = vadd.f32 %v2976, %v2980
    %v2982 = vrot.slane %v2981, 2
    %v2983 = vadd.f32 %v2981, %v2982
    %v2984 = vrot.slane %v2983, 1
    %v2985 = vadd.f32 %v2983, %v2984
    %v2986 = vrot.slane %v2979, 4
    %v2987 = vadd.f32 %v2979, %v2986
    %v2988 = vrot.slane %v2987, 2
    %v2989 = vadd.f32 %v2987, %v2988
    %v2990 = vrot.slane %v2989, 1
    %v2991 = vadd.f32 %v2989, %v2990
    %v2992 = vadd.f32 %v2985, %v2991
    %v2993 = vmul.f32 %v2992, 1.2
    %v2994 = vrcp.pop 512.0
    %v2995 = vmul.f32 %v2993, %v2994
    %v2996 = vadd.f32 %v2995, 0.0
    %v2997 = vsub.f32 %v2502, %v2962
    %v2998 = vsub.f32 %v2503, %v2967
    %v2999 = vadd.f32 %v2962, 0.0
    %v3000 = vadd.f32 %v2967, 0.0
    %v3002 = vsel %vm266, %v2997, 0
    %v3005 = vsel %vm266, %v2998, 0
    %v3008 = vsel %vm266, %v2618, 0
    %v3011 = vsel %vm266, %v2619, 0
    %v3014 = vsel %vm266, %v2620, 0
    %v3017 = vsel %vm266, %v2621, 0
    %v3020 = vsel %vm266, %v2622, 0
    %v3023 = vsel %vm266, %v2623, 0
    %v3026 = vsel %vm266, %v2624, 0
    %v3029 = vsel %vm266, %v2625, 0
    %3031 = vmatprep.subr.mxu0 0.0
    %3032 = vmatpush1.xpose.msra.mxu0 %v3008
    %3033 = vmatprep.subr.mxu0 0.0
    %3034 = vmatpush1.xpose.msra.mxu0 %v3011
    %3035 = vmatprep.subr.mxu0 0.0
    %3036 = vmatpush1.xpose.msra.mxu0 %v3014
    %3037 = vmatprep.subr.mxu0 0.0
    %3038 = vmatpush1.xpose.msra.mxu0 %v3017
    %3039 = vmatprep.subr.mxu0 0.0
    %3040 = vmatpush1.xpose.msra.mxu0 %v3020
    %3041 = vmatprep.subr.mxu0 0.0
    %3042 = vmatpush1.xpose.msra.mxu0 %v3023
    %3043 = vmatprep.subr.mxu0 0.0
    %3044 = vmatpush1.xpose.msra.mxu0 %v3026
    %3045 = vmatprep.subr.mxu0 0.0
    %3046 = vmatpush1.xpose.msra.mxu0 %v3029
    %3047 = vmatprep.subr.mxu0 0.0
    %3048 = vmatpush1.xpose.msra.mxu0 0.0
    %3049 = vmatprep.subr.mxu0 0.0
    %3050 = vmatpush1.xpose.msra.mxu0 0.0
    %3051 = vmatprep.subr.mxu0 0.0
    %3052 = vmatpush1.xpose.msra.mxu0 0.0
    %3053 = vmatprep.subr.mxu0 0.0
    %3054 = vmatpush1.xpose.msra.mxu0 0.0
    %3055 = vmatprep.subr.mxu0 0.0
    %3056 = vmatpush1.xpose.msra.mxu0 0.0
    %3057 = vmatprep.subr.mxu0 0.0
    %3058 = vmatpush1.xpose.msra.mxu0 0.0
    %3059 = vmatprep.subr.mxu0 0.0
    %3060 = vmatpush1.xpose.msra.mxu0 0.0
    %3061 = vmatprep.subr.mxu0 0.0
    %3062 = vmatpush1.xpose.msra.mxu0 0.0
    %3063 = vmatprep.subr.mxu0 0.0
    %3064 = vmatpush1.xpose.msra.mxu0 0.0
    %3065 = vmatprep.subr.mxu0 0.0
    %3066 = vmatpush1.xpose.msra.mxu0 0.0
    %3067 = vmatprep.subr.mxu0 0.0
    %3068 = vmatpush1.xpose.msra.mxu0 0.0
    %3069 = vmatprep.subr.mxu0 0.0
    %3070 = vmatpush1.xpose.msra.mxu0 0.0
    %3071 = vmatprep.subr.mxu0 0.0
    %3072 = vmatpush1.xpose.msra.mxu0 0.0
    %3073 = vmatprep.subr.mxu0 0.0
    %3074 = vmatpush1.xpose.msra.mxu0 0.0
    %3075 = vmatprep.subr.mxu0 0.0
    %3076 = vmatpush1.xpose.msra.mxu0 0.0
    %3077 = vmatprep.subr.mxu0 0.0
    %3078 = vmatpush1.xpose.msra.mxu0 0.0
    %3079 = vmatprep.subr.mxu0 0.0
    %3080 = vmatpush1.xpose.msra.mxu0 0.0
    %3081 = vmatprep.subr.mxu0 0.0
    %3082 = vmatpush1.xpose.msra.mxu0 0.0
    %3083 = vmatprep.subr.mxu0 0.0
    %3084 = vmatpush1.xpose.msra.mxu0 0.0
    %3085 = vmatprep.subr.mxu0 0.0
    %3086 = vmatpush1.xpose.msra.mxu0 0.0
    %3087 = vmatprep.subr.mxu0 0.0
    %3088 = vmatpush1.xpose.msra.mxu0 0.0
    %3089 = vmatprep.subr.mxu0 0.0
    %3090 = vmatpush1.xpose.msra.mxu0 0.0
    %3091 = vmatprep.subr.mxu0 0.0
    %3092 = vmatpush1.xpose.msra.mxu0 0.0
    %3093 = vmatprep.subr.mxu0 0.0
    %3094 = vmatpush1.xpose.msra.mxu0 0.0
    %3095 = vmatprep.mubr.f32.mxu0 0.0
    %3096 = vmatmul.mubr.f32.gmra.mrb[0].mxu0 %v3002
    %v3097 = vpop.f32.mrb[0].mxu0
    %v3098 = vadd.f32 0.0, %v3097
    %v3099 = vpop.f32.mrb[0].mxu0
    %3100 = vmatprep.mubr.f32.mxu0 0.0
    %3101 = vmatmul.mubr.f32.gmra.mrb[0].mxu0 %v3005
    %v3102 = vpop.f32.mrb[0].mxu0
    %v3103 = vadd.f32 0.0, %v3102
    %v3104 = vpop.f32.mrb[0].mxu0
    %3105 = vdwg.mxu0
    %v3106 = vmul.f32 %v3098, 2.0
    %v3107 = vmul.f32 %v3103, 2.0
    %v3108 = vlaneseq
    %v3109 = vshrl.u32 %v3108, 7
    %v3110 = vsub.s32 0, %v3109
    %v3111 = vrot.slane %v2725, %v3110
    %v3112 = vsub.f32 %v3111, %v3106
    %v3113 = vsub.f32 %v3111, %v3107
    %v3114 = vsel %vm216, %v3112, inf
    %3115 = vmin.xlane.f32.xlu0 %v3114
    %v3116 = vpop.xlane.xlu0 %3115
    %v3117 = vsel %vm216, %v3113, inf
    %3118 = vmin.xlane.f32.xlu0 %v3117
    %v3119 = vpop.xlane.xlu0 %3118
    %vm3120 = vcmp.le.f32.partialorder %v3112, %v3116
    %vm3121 = vcmp.le.f32.partialorder %v3113, %v3119
    %v3122 = vsel %vm3120, %v2848, 64
    %v3123 = vsel %vm3121, %v2848, 64
    %v3124 = vsel %vm216, %v3122, 2147483647
    %v3125 = vand.u32 %v3124, 65535
    %v3126 = vshra.s32 %v3124, 16
    %v3127 = vcvt.s32.f32 %v3125
    %v3128 = vcvt.s32.f32 %v3126
    %3129 = vmin.xlane.f32.xlu0 %v3128
    %v3130 = vpop.xlane.xlu0 %3129
    %vm3131 = vcmp.eq.f32.partialorder %v3128, %v3130
    %v3132 = vsel %vm3131, %v3127, inf
    %3133 = vmin.xlane.f32.xlu0 %v3132
    %v3134 = vpop.xlane.xlu0 %3133
    %v3135 = vcvt.f32.s32 %v3134
    %v3136 = vcvt.f32.s32 %v3130
    %v3137 = vshll.u32 %v3136, 16
    %v3138 = vadd.s32 %v3137, %v3135
    %v3139 = vsel %vm216, %v3123, 2147483647
    %v3140 = vand.u32 %v3139, 65535
    %v3141 = vshra.s32 %v3139, 16
    %v3142 = vcvt.s32.f32 %v3140
    %v3143 = vcvt.s32.f32 %v3141
    %3144 = vmin.xlane.f32.xlu0 %v3143
    %v3145 = vpop.xlane.xlu0 %3144
    %vm3146 = vcmp.eq.f32.partialorder %v3143, %v3145
    %v3147 = vsel %vm3146, %v3142, inf
    %3148 = vmin.xlane.f32.xlu0 %v3147
    %v3149 = vpop.xlane.xlu0 %3148
    %v3150 = vcvt.f32.s32 %v3149
    %v3151 = vcvt.f32.s32 %v3145
    %v3152 = vshll.u32 %v3151, 16
    %v3153 = vadd.s32 %v3152, %v3150
    %vm3154 = vcmp.eq.s32.totalorder %v2848, %v3138
    %vm3155 = vcmp.eq.s32.totalorder %v2848, %v3153
    %v3156 = vsel %vm3154, 1, 0
    %v3157 = vsel %vm3155, 1, 0
    %v3158 = vcvt.s32.f32 %v3156
    %v3159 = vcvt.s32.f32 %v3157
    %v3161 = vsel %vm216, %v3158, 0
    %v3164 = vsel %vm216, %v3159, 0
    %3166 = vmatprep.subr.mxu0 0.0
    %3167 = vmatpush1.msra.mxu0 %v2618
    %3168 = vmatprep.subr.mxu0 0.0
    %3169 = vmatpush1.msra.mxu0 %v2619
    %3170 = vmatprep.subr.mxu0 0.0
    %3171 = vmatpush1.msra.mxu0 %v2620
    %3172 = vmatprep.subr.mxu0 0.0
    %3173 = vmatpush1.msra.mxu0 %v2621
    %3174 = vmatprep.subr.mxu0 0.0
    %3175 = vmatpush1.msra.mxu0 %v2622
    %3176 = vmatprep.subr.mxu0 0.0
    %3177 = vmatpush1.msra.mxu0 %v2623
    %3178 = vmatprep.subr.mxu0 0.0
    %3179 = vmatpush1.msra.mxu0 %v2624
    %3180 = vmatprep.subr.mxu0 0.0
    %3181 = vmatpush1.msra.mxu0 %v2625
    %3182 = vmatprep.subr.mxu0 0.0
    %3183 = vmatpush1.msra.mxu0 0.0
    %3184 = vmatprep.subr.mxu0 0.0
    %3185 = vmatpush1.msra.mxu0 0.0
    %3186 = vmatprep.subr.mxu0 0.0
    %3187 = vmatpush1.msra.mxu0 0.0
    %3188 = vmatprep.subr.mxu0 0.0
    %3189 = vmatpush1.msra.mxu0 0.0
    %3190 = vmatprep.subr.mxu0 0.0
    %3191 = vmatpush1.msra.mxu0 0.0
    %3192 = vmatprep.subr.mxu0 0.0
    %3193 = vmatpush1.msra.mxu0 0.0
    %3194 = vmatprep.subr.mxu0 0.0
    %3195 = vmatpush1.msra.mxu0 0.0
    %3196 = vmatprep.subr.mxu0 0.0
    %3197 = vmatpush1.msra.mxu0 0.0
    %3198 = vmatprep.subr.mxu0 0.0
    %3199 = vmatpush1.msra.mxu0 0.0
    %3200 = vmatprep.subr.mxu0 0.0
    %3201 = vmatpush1.msra.mxu0 0.0
    %3202 = vmatprep.subr.mxu0 0.0
    %3203 = vmatpush1.msra.mxu0 0.0
    %3204 = vmatprep.subr.mxu0 0.0
    %3205 = vmatpush1.msra.mxu0 0.0
    %3206 = vmatprep.subr.mxu0 0.0
    %3207 = vmatpush1.msra.mxu0 0.0
    %3208 = vmatprep.subr.mxu0 0.0
    %3209 = vmatpush1.msra.mxu0 0.0
    %3210 = vmatprep.subr.mxu0 0.0
    %3211 = vmatpush1.msra.mxu0 0.0
    %3212 = vmatprep.subr.mxu0 0.0
    %3213 = vmatpush1.msra.mxu0 0.0
    %3214 = vmatprep.subr.mxu0 0.0
    %3215 = vmatpush1.msra.mxu0 0.0
    %3216 = vmatprep.subr.mxu0 0.0
    %3217 = vmatpush1.msra.mxu0 0.0
    %3218 = vmatprep.subr.mxu0 0.0
    %3219 = vmatpush1.msra.mxu0 0.0
    %3220 = vmatprep.subr.mxu0 0.0
    %3221 = vmatpush1.msra.mxu0 0.0
    %3222 = vmatprep.subr.mxu0 0.0
    %3223 = vmatpush1.msra.mxu0 0.0
    %3224 = vmatprep.subr.mxu0 0.0
    %3225 = vmatpush1.msra.mxu0 0.0
    %3226 = vmatprep.subr.mxu0 0.0
    %3227 = vmatpush1.msra.mxu0 0.0
    %3228 = vmatprep.subr.mxu0 0.0
    %3229 = vmatpush1.msra.mxu0 0.0
    %3230 = vmatprep.mubr.f32.mxu0 0.0
    %3231 = vmatmul.mubr.f32.gmra.mrb[0].mxu0 %v3161
    %v3232 = vpop.f32.mrb[0].mxu0
    %v3233 = vadd.f32 0.0, %v3232
    %v3234 = vpop.f32.mrb[0].mxu0
    %3235 = vmatprep.mubr.f32.mxu0 0.0
    %3236 = vmatmul.mubr.f32.gmra.mrb[0].mxu0 %v3164
    %v3237 = vpop.f32.mrb[0].mxu0
    %v3238 = vadd.f32 0.0, %v3237
    %v3239 = vpop.f32.mrb[0].mxu0
    %3240 = vdwg.mxu0
    %v3241 = vsub.f32 %v3233, %v2997
    %v3242 = vsub.f32 %v3238, %v2998
    %v3243 = vmul.f32 %v3241, %v3241
    %v3244 = vmul.f32 %v3242, %v3242
    %v3245 = vsel %vm266, %v3243, 0.0
    %3246 = vadd.xlane.f32.xlu0 %v3245
    %v3247 = vpop.xlane.xlu0 %3246
    %v3248 = vsel %vm266, %v3244, 0.0
    %3249 = vadd.xlane.f32.xlu0 %v3248
    %v3250 = vpop.xlane.xlu0 %3249
    %v3251 = vrot.slane %v3247, 4
    %v3252 = vadd.f32 %v3247, %v3251
    %v3253 = vrot.slane %v3252, 2
    %v3254 = vadd.f32 %v3252, %v3253
    %v3255 = vrot.slane %v3254, 1
    %v3256 = vadd.f32 %v3254, %v3255
    %v3257 = vrot.slane %v3250, 4
    %v3258 = vadd.f32 %v3250, %v3257
    %v3259 = vrot.slane %v3258, 2
    %v3260 = vadd.f32 %v3258, %v3259
    %v3261 = vrot.slane %v3260, 1
    %v3262 = vadd.f32 %v3260, %v3261
    %v3263 = vadd.f32 %v3256, %v3262
    %v3264 = vmul.f32 %v3263, 1.2
    %v3265 = vmul.f32 %v3264, %v2994
    %v3266 = vadd.f32 %v2996, %v3265
    %v3267 = vadd.f32 %v2999, %v3233
    %v3268 = vadd.f32 %v3000, %v3238
    %3269 = vst.msk [vmem:[#allocation4] sm:$0xff] %vm266, %v3267
    %3270 = vst.msk [vmem:[#allocation4 + $0x8] sm:$0xff] %vm266, %v3268
    %vm3271 = vcmask 7168
    %v3272 = vsel %vm3271, %v2867, %v3138
    %v3273 = vsel %vm3271, %v2882, %v3153
    %vm3274 = vcmask 15360
    %3275 = vst.msk [vmem:[%s91] sm:$0xff] %vm3274, %v3272
    %3276 = vst.msk [vmem:[%s91 + $0x8] sm:$0xff] %vm3274, %v3273
    %v3277 = vld [vmem:[%s45] sm:$0xff]
    %v3278 = vld [vmem:[%s45 + $0x8] sm:$0xff]
    %v3279 = vld [vmem:[%s45 + $0x10] sm:$0xff]
    %v3280 = vld [vmem:[%s45 + $0x18] sm:$0xff]
    %v3281 = vpack.c.bf16 %v3267, %v3267
    %v3282 = vpack.c.bf16 %v3268, %v3268
    %v3283 = vpack.c.bf16 %v3278, %v3277
    %v3284 = vpack.c.bf16 %v3280, %v3279
    %v3285 = vld [vmem:[%s47] sm:$0x1]
    %v3287 = vlaneseq
    %v3288 = vshrl.u32 %v3287, 7
    %v3289 = vsub.s32 0, %v3288
    %v3290 = vrot.slane %v3285, %v3289
    %v3294 = vunpack.c.l.b16 %v3281
    %v3295 = vunpack.c.l.b16 %v3282
    %v3296 = vpack.c.b16 %v3295, %v3294
    %v3298 = vsel %vm266, %v3296, 0
    %3300 = vmatprep.subr.bf16.mxu0 0
    %3301 = vmatpush1.bf16.msra.mxu0 %v3283
    %3302 = vmatprep.subr.bf16.mxu0 0
    %3303 = vmatpush1.bf16.msra.mxu0 %v3284
    %3304 = vmatprep.subr.bf16.mxu0 0
    %3305 = vmatpush1.bf16.msra.mxu0 0
    %3306 = vmatprep.subr.bf16.mxu0 0
    %3307 = vmatpush1.bf16.msra.mxu0 0
    %3308 = vmatprep.subr.bf16.mxu0 0
    %3309 = vmatpush1.bf16.msra.mxu0 0
    %3310 = vmatprep.subr.bf16.mxu0 0
    %3311 = vmatpush1.bf16.msra.mxu0 0
    %3312 = vmatprep.subr.bf16.mxu0 0
    %3313 = vmatpush1.bf16.msra.mxu0 0
    %3314 = vmatprep.subr.bf16.mxu0 0
    %3315 = vmatpush1.bf16.msra.mxu0 0
    %3316 = vmatprep.subr.bf16.mxu0 0
    %3317 = vmatpush1.bf16.msra.mxu0 0
    %3318 = vmatprep.subr.bf16.mxu0 0
    %3319 = vmatpush1.bf16.msra.mxu0 0
    %3320 = vmatprep.subr.bf16.mxu0 0
    %3321 = vmatpush1.bf16.msra.mxu0 0
    %3322 = vmatprep.subr.bf16.mxu0 0
    %3323 = vmatpush1.bf16.msra.mxu0 0
    %3324 = vmatprep.subr.bf16.mxu0 0
    %3325 = vmatpush1.bf16.msra.mxu0 0
    %3326 = vmatprep.subr.bf16.mxu0 0
    %3327 = vmatpush1.bf16.msra.mxu0 0
    %3328 = vmatprep.subr.bf16.mxu0 0
    %3329 = vmatpush1.bf16.msra.mxu0 0
    %3330 = vmatprep.subr.bf16.mxu0 0
    %3331 = vmatpush1.bf16.msra.mxu0 0
    %3332 = vmatprep.mubr.bf16.mxu0 0
    %3333 = vmatmul.mubr.bf16.gmra.mrb[0].mxu0 %v3298
    %v3334 = vpop.f32.mrb[0].mxu0
    %v3335 = vadd.f32 %v3290, %v3334
    %v3336 = vpop.f32.mrb[0].mxu0
    %v3337 = vpop.f32.mrb[0].mxu0
    %v3338 = vadd.f32 %v3290, %v3337
    %v3339 = vpop.f32.mrb[0].mxu0
    %3340 = vdwg.mxu0
    %v3341 = vld [vmem:[%s3] sm:$0xff]
    %v3342 = vld [vmem:[%s3 + $0x8] sm:$0xff]
    %3343 = vset.pattern.permute.xlu0 0
    %3344 = vperm.xlu0 %3343, %v3341
    %v3345 = vpop.permute.xlu0 %3344
    %3346 = vset.pattern.permute.xlu0 0
    %3347 = vperm.xlu0 %3346, %v3342
    %v3348 = vpop.permute.xlu0 %3347
    %vm3349 = vcmp.eq.s32.totalorder %v2848, %v3345
    %vm3350 = vcmp.eq.s32.totalorder %v2848, %v3348
    %v3351 = vsel %vm3349, 1, 0
    %v3352 = vsel %vm3350, 1, 0
    %v3353 = vcvt.s32.f32 %v3351
    %v3354 = vcvt.s32.f32 %v3352
    %v3355 = vld [vmem:[%s49] sm:$0xff]
    %v3356 = vld [vmem:[%s49 + $0x8] sm:$0xff]
    %v3357 = vld [vmem:[%s49 + $0x10] sm:$0xff]
    %v3358 = vld [vmem:[%s49 + $0x18] sm:$0xff]
    %v3359 = vld [vmem:[%s49 + $0x20] sm:$0xff]
    %v3360 = vld [vmem:[%s49 + $0x28] sm:$0xff]
    %v3361 = vld [vmem:[%s49 + $0x30] sm:$0xff]
    %v3362 = vld [vmem:[%s49 + $0x38] sm:$0xff]
    %v3363 = vld [vmem:[%s49 + $0x40] sm:$0xff]
    %v3364 = vld [vmem:[%s49 + $0x48] sm:$0xff]
    %v3365 = vld [vmem:[%s49 + $0x50] sm:$0xff]
    %v3366 = vld [vmem:[%s49 + $0x58] sm:$0xff]
    %v3367 = vld [vmem:[%s49 + $0x60] sm:$0xff]
    %v3368 = vld [vmem:[%s49 + $0x68] sm:$0xff]
    %v3369 = vld [vmem:[%s49 + $0x70] sm:$0xff]
    %v3370 = vld [vmem:[%s49 + $0x78] sm:$0xff]
    %3371 = vmatprep.subr.mxu0 0.0
    %3372 = vmatpush1.msra.mxu0 %v3355
    %3373 = vmatprep.subr.mxu0 0.0
    %3374 = vmatpush1.msra.mxu0 %v3356
    %3375 = vmatprep.subr.mxu0 0.0
    %3376 = vmatpush1.msra.mxu0 %v3357
    %3377 = vmatprep.subr.mxu0 0.0
    %3378 = vmatpush1.msra.mxu0 %v3358
    %3379 = vmatprep.subr.mxu0 0.0
    %3380 = vmatpush1.msra.mxu0 %v3359
    %3381 = vmatprep.subr.mxu0 0.0
    %3382 = vmatpush1.msra.mxu0 %v3360
    %3383 = vmatprep.subr.mxu0 0.0
    %3384 = vmatpush1.msra.mxu0 %v3361
    %3385 = vmatprep.subr.mxu0 0.0
    %3386 = vmatpush1.msra.mxu0 %v3362
    %3387 = vmatprep.subr.mxu0 0.0
    %3388 = vmatpush1.msra.mxu0 %v3363
    %3389 = vmatprep.subr.mxu0 0.0
    %3390 = vmatpush1.msra.mxu0 %v3364
    %3391 = vmatprep.subr.mxu0 0.0
    %3392 = vmatpush1.msra.mxu0 %v3365
    %3393 = vmatprep.subr.mxu0 0.0
    %3394 = vmatpush1.msra.mxu0 %v3366
    %3395 = vmatprep.subr.mxu0 0.0
    %3396 = vmatpush1.msra.mxu0 %v3367
    %3397 = vmatprep.subr.mxu0 0.0
    %3398 = vmatpush1.msra.mxu0 %v3368
    %3399 = vmatprep.subr.mxu0 0.0
    %3400 = vmatpush1.msra.mxu0 %v3369
    %3401 = vmatprep.subr.mxu0 0.0
    %3402 = vmatpush1.msra.mxu0 %v3370
    %3403 = vmatprep.subr.mxu0 0.0
    %3404 = vmatpush1.msra.mxu0 0.0
    %3405 = vmatprep.subr.mxu0 0.0
    %3406 = vmatpush1.msra.mxu0 0.0
    %3407 = vmatprep.subr.mxu0 0.0
    %3408 = vmatpush1.msra.mxu0 0.0
    %3409 = vmatprep.subr.mxu0 0.0
    %3410 = vmatpush1.msra.mxu0 0.0
    %3411 = vmatprep.subr.mxu0 0.0
    %3412 = vmatpush1.msra.mxu0 0.0
    %3413 = vmatprep.subr.mxu0 0.0
    %3414 = vmatpush1.msra.mxu0 0.0
    %3415 = vmatprep.subr.mxu0 0.0
    %3416 = vmatpush1.msra.mxu0 0.0
    %3417 = vmatprep.subr.mxu0 0.0
    %3418 = vmatpush1.msra.mxu0 0.0
    %3419 = vmatprep.subr.mxu0 0.0
    %3420 = vmatpush1.msra.mxu0 0.0
    %3421 = vmatprep.subr.mxu0 0.0
    %3422 = vmatpush1.msra.mxu0 0.0
    %3423 = vmatprep.subr.mxu0 0.0
    %3424 = vmatpush1.msra.mxu0 0.0
    %3425 = vmatprep.subr.mxu0 0.0
    %3426 = vmatpush1.msra.mxu0 0.0
    %3427 = vmatprep.subr.mxu0 0.0
    %3428 = vmatpush1.msra.mxu0 0.0
    %3429 = vmatprep.subr.mxu0 0.0
    %3430 = vmatpush1.msra.mxu0 0.0
    %3431 = vmatprep.subr.mxu0 0.0
    %3432 = vmatpush1.msra.mxu0 0.0
    %3433 = vmatprep.subr.mxu0 0.0
    %3434 = vmatpush1.msra.mxu0 0.0
    %3435 = vmatprep.mubr.f32.mxu0 0.0
    %3436 = vmatmul.mubr.f32.gmra.mrb[0].mxu0 %v3353
    %v3437 = vpop.f32.mrb[0].mxu0
    %v3438 = vadd.f32 0.0, %v3437
    %v3439 = vpop.f32.mrb[0].mxu0
    %3440 = vmatprep.mubr.f32.mxu0 0.0
    %3441 = vmatmul.mubr.f32.gmra.mrb[0].mxu0 %v3354
    %v3442 = vpop.f32.mrb[0].mxu0
    %v3443 = vadd.f32 0.0, %v3442
    %v3444 = vpop.f32.mrb[0].mxu0
    %3445 = vdwg.mxu0
    %v3446 = vld [vmem:[%s51] sm:$0xff]
    %v3447 = vld [vmem:[%s51 + $0x8] sm:$0xff]
    %v3448 = vadd.f32 %v3335, %v3446
    %v3449 = vadd.f32 %v3438, %v3447
    %v3450 = vadd.f32 %v3338, %v3446
    %v3451 = vadd.f32 %v3443, %v3447
    %v3452 = vlaneseq
    %v3453 = vshrl.u32 %v3452, 7
    %v3454 = vadd.s32 %v3453, 8
    %vm3455 = vcmp.le.s32.totalorder %v2848, %v3453
    %vm3456 = vcmp.le.s32.totalorder %v2848, %v3454
    %v3457 = vsel %vm3455, 0.0, -1e+30
    %v3458 = vsel %vm3456, 0.0, -1e+30
    %v3459 = vld [vmem:[%s53] sm:$0x1]
    %v3460 = vld [vmem:[%s55] sm:$0x1]
    %v3461 = vsel %vm266, %v3448, 0.0
    %3462 = vadd.xlane.f32.xlu0 %v3461
    %v3463 = vpop.xlane.xlu0 %3462
    %v3464 = vsel %vm266, %v3449, 0.0
    %3465 = vadd.xlane.f32.xlu0 %v3464
    %v3466 = vpop.xlane.xlu0 %3465
    %v3467 = vsel %vm266, %v3450, 0.0
    %3468 = vadd.xlane.f32.xlu0 %v3467
    %v3469 = vpop.xlane.xlu0 %3468
    %v3470 = vsel %vm266, %v3451, 0.0
    %3471 = vadd.xlane.f32.xlu0 %v3470
    %v3472 = vpop.xlane.xlu0 %3471
    %v3473 = vmul.f32 %v3463, %v273
    %v3474 = vmul.f32 %v3466, %v273
    %v3475 = vmul.f32 %v3469, %v273
    %v3476 = vmul.f32 %v3472, %v273
    %v3477 = vsub.f32 %v3448, %v3473
    %v3478 = vsub.f32 %v3449, %v3474
    %v3479 = vsub.f32 %v3450, %v3475
    %v3480 = vsub.f32 %v3451, %v3476
    %v3481 = vmul.f32 %v3477, %v3477
    %v3482 = vmul.f32 %v3478, %v3478
    %v3483 = vmul.f32 %v3479, %v3479
    %v3484 = vmul.f32 %v3480, %v3480
    %v3485 = vsel %vm266, %v3481, 0.0
    %3486 = vadd.xlane.f32.xlu0 %v3485
    %v3487 = vpop.xlane.xlu0 %3486
    %v3488 = vsel %vm266, %v3482, 0.0
    %3489 = vadd.xlane.f32.xlu0 %v3488
    %v3490 = vpop.xlane.xlu0 %3489
    %v3491 = vsel %vm266, %v3483, 0.0
    %3492 = vadd.xlane.f32.xlu0 %v3491
    %v3493 = vpop.xlane.xlu0 %3492
    %v3494 = vsel %vm266, %v3484, 0.0
    %3495 = vadd.xlane.f32.xlu0 %v3494
    %v3496 = vpop.xlane.xlu0 %3495
    %v3497 = vmul.f32 %v3487, %v273
    %v3498 = vmul.f32 %v3490, %v273
    %v3499 = vmul.f32 %v3493, %v273
    %v3500 = vmul.f32 %v3496, %v273
    %v3501 = vadd.f32 %v3497, 1e-05
    %v3502 = vadd.f32 %v3498, 1e-05
    %v3503 = vadd.f32 %v3499, 1e-05
    %v3504 = vadd.f32 %v3500, 1e-05
    %v3505 = vrsqrt.pop %v3501
    %v3506 = vrsqrt.pop %v3502
    %v3507 = vrsqrt.pop %v3503
    %v3508 = vrsqrt.pop %v3504
    %v3509 = vmul.f32 %v3477, %v3505
    %v3510 = vmul.f32 %v3478, %v3506
    %v3511 = vmul.f32 %v3479, %v3507
    %v3512 = vmul.f32 %v3480, %v3508
    %v3514 = vlaneseq
    %v3515 = vshrl.u32 %v3514, 7
    %v3516 = vsub.s32 0, %v3515
    %v3517 = vrot.slane %v3459, %v3516
    %v3519 = vmul.f32 %v3509, %v3517
    %v3520 = vmul.f32 %v3510, %v3517
    %v3521 = vmul.f32 %v3511, %v3517
    %v3522 = vmul.f32 %v3512, %v3517
    %v3524 = vlaneseq
    %v3525 = vshrl.u32 %v3524, 7
    %v3526 = vsub.s32 0, %v3525
    %v3527 = vrot.slane %v3460, %v3526
    %v3529 = vadd.f32 %v3519, %v3527
    %v3530 = vadd.f32 %v3520, %v3527
    %v3531 = vadd.f32 %v3521, %v3527
    %v3532 = vadd.f32 %v3522, %v3527
    %v3533 = vpack.c.bf16 %v3530, %v3529
    %v3534 = vpack.c.bf16 %v3532, %v3531
    %v3535 = vld [vmem:[%s57] sm:$0xff]
    %v3536 = vld [vmem:[%s57 + $0x8] sm:$0xff]
    %v3537 = vld [vmem:[%s57 + $0x10] sm:$0xff]
    %v3538 = vld [vmem:[%s57 + $0x18] sm:$0xff]
    %v3539 = vpack.c.bf16 %v3536, %v3535
    %v3540 = vpack.c.bf16 %v3538, %v3537
    %v3542 = vsel %vm266, %v3533, 0
    %v3545 = vsel %vm266, %v3534, 0
    %3547 = vmatprep.subr.bf16.mxu0 0
    %3548 = vmatpush1.bf16.msra.mxu0 %v3539
    %3549 = vmatprep.subr.bf16.mxu0 0
    %3550 = vmatpush1.bf16.msra.mxu0 %v3540
    %3551 = vmatprep.subr.bf16.mxu0 0
    %3552 = vmatpush1.bf16.msra.mxu0 0
    %3553 = vmatprep.subr.bf16.mxu0 0
    %3554 = vmatpush1.bf16.msra.mxu0 0
    %3555 = vmatprep.subr.bf16.mxu0 0
    %3556 = vmatpush1.bf16.msra.mxu0 0
    %3557 = vmatprep.subr.bf16.mxu0 0
    %3558 = vmatpush1.bf16.msra.mxu0 0
    %3559 = vmatprep.subr.bf16.mxu0 0
    %3560 = vmatpush1.bf16.msra.mxu0 0
    %3561 = vmatprep.subr.bf16.mxu0 0
    %3562 = vmatpush1.bf16.msra.mxu0 0
    %3563 = vmatprep.subr.bf16.mxu0 0
    %3564 = vmatpush1.bf16.msra.mxu0 0
    %3565 = vmatprep.subr.bf16.mxu0 0
    %3566 = vmatpush1.bf16.msra.mxu0 0
    %3567 = vmatprep.subr.bf16.mxu0 0
    %3568 = vmatpush1.bf16.msra.mxu0 0
    %3569 = vmatprep.subr.bf16.mxu0 0
    %3570 = vmatpush1.bf16.msra.mxu0 0
    %3571 = vmatprep.subr.bf16.mxu0 0
    %3572 = vmatpush1.bf16.msra.mxu0 0
    %3573 = vmatprep.subr.bf16.mxu0 0
    %3574 = vmatpush1.bf16.msra.mxu0 0
    %3575 = vmatprep.subr.bf16.mxu0 0
    %3576 = vmatpush1.bf16.msra.mxu0 0
    %3577 = vmatprep.subr.bf16.mxu0 0
    %3578 = vmatpush1.bf16.msra.mxu0 0
    %3579 = vmatprep.mubr.bf16.mxu0 0
    %3580 = vmatmul.mubr.bf16.gmra.mrb[0].mxu0 %v3542
    %v3581 = vpop.f32.mrb[0].mxu0
    %v3582 = vadd.f32 0.0, %v3581
    %v3583 = vpop.f32.mrb[0].mxu0
    %v3584 = vpop.f32.mrb[0].mxu0
    %v3585 = vadd.f32 0.0, %v3584
    %v3586 = vpop.f32.mrb[0].mxu0
    %3587 = vmatprep.mubr.bf16.mxu0 0
    %3588 = vmatmul.mubr.bf16.gmra.mrb[0].mxu0 %v3545
    %v3589 = vpop.f32.mrb[0].mxu0
    %v3590 = vadd.f32 0.0, %v3589
    %v3591 = vpop.f32.mrb[0].mxu0
    %v3592 = vpop.f32.mrb[0].mxu0
    %v3593 = vadd.f32 0.0, %v3592
    %v3594 = vpop.f32.mrb[0].mxu0
    %3595 = vdwg.mxu0
    %v3596 = vld [vmem:[%s59] sm:$0xff]
    %v3597 = vld [vmem:[%s59 + $0x8] sm:$0xff]
    %v3598 = vld [vmem:[%s59 + $0x10] sm:$0xff]
    %v3599 = vld [vmem:[%s59 + $0x18] sm:$0xff]
    %v3600 = vpack.c.bf16 %v3597, %v3596
    %v3601 = vpack.c.bf16 %v3599, %v3598
    %3602 = vmatprep.subr.bf16.mxu0 0
    %3603 = vmatpush1.bf16.msra.mxu0 %v3600
    %3604 = vmatprep.subr.bf16.mxu0 0
    %3605 = vmatpush1.bf16.msra.mxu0 %v3601
    %3606 = vmatprep.subr.bf16.mxu0 0
    %3607 = vmatpush1.bf16.msra.mxu0 0
    %3608 = vmatprep.subr.bf16.mxu0 0
    %3609 = vmatpush1.bf16.msra.mxu0 0
    %3610 = vmatprep.subr.bf16.mxu0 0
    %3611 = vmatpush1.bf16.msra.mxu0 0
    %3612 = vmatprep.subr.bf16.mxu0 0
    %3613 = vmatpush1.bf16.msra.mxu0 0
    %3614 = vmatprep.subr.bf16.mxu0 0
    %3615 = vmatpush1.bf16.msra.mxu0 0
    %3616 = vmatprep.subr.bf16.mxu0 0
    %3617 = vmatpush1.bf16.msra.mxu0 0
    %3618 = vmatprep.subr.bf16.mxu0 0
    %3619 = vmatpush1.bf16.msra.mxu0 0
    %3620 = vmatprep.subr.bf16.mxu0 0
    %3621 = vmatpush1.bf16.msra.mxu0 0
    %3622 = vmatprep.subr.bf16.mxu0 0
    %3623 = vmatpush1.bf16.msra.mxu0 0
    %3624 = vmatprep.subr.bf16.mxu0 0
    %3625 = vmatpush1.bf16.msra.mxu0 0
    %3626 = vmatprep.subr.bf16.mxu0 0
    %3627 = vmatpush1.bf16.msra.mxu0 0
    %3628 = vmatprep.subr.bf16.mxu0 0
    %3629 = vmatpush1.bf16.msra.mxu0 0
    %3630 = vmatprep.subr.bf16.mxu0 0
    %3631 = vmatpush1.bf16.msra.mxu0 0
    %3632 = vmatprep.subr.bf16.mxu0 0
    %3633 = vmatpush1.bf16.msra.mxu0 0
    %3634 = vmatprep.mubr.bf16.mxu0 0
    %3635 = vmatmul.mubr.bf16.gmra.mrb[0].mxu0 %v3542
    %v3636 = vpop.f32.mrb[0].mxu0
    %v3637 = vadd.f32 0.0, %v3636
    %v3638 = vpop.f32.mrb[0].mxu0
    %v3639 = vpop.f32.mrb[0].mxu0
    %v3640 = vadd.f32 0.0, %v3639
    %v3641 = vpop.f32.mrb[0].mxu0
    %3642 = vmatprep.mubr.bf16.mxu0 0
    %3643 = vmatmul.mubr.bf16.gmra.mrb[0].mxu0 %v3545
    %v3644 = vpop.f32.mrb[0].mxu0
    %v3645 = vadd.f32 0.0, %v3644
    %v3646 = vpop.f32.mrb[0].mxu0
    %v3647 = vpop.f32.mrb[0].mxu0
    %v3648 = vadd.f32 0.0, %v3647
    %v3649 = vpop.f32.mrb[0].mxu0
    %3650 = vdwg.mxu0
    %v3651 = vld [vmem:[%s61] sm:$0xff]
    %v3652 = vld [vmem:[%s61 + $0x8] sm:$0xff]
    %v3653 = vld [vmem:[%s61 + $0x10] sm:$0xff]
    %v3654 = vld [vmem:[%s61 + $0x18] sm:$0xff]
    %v3655 = vpack.c.bf16 %v3652, %v3651
    %v3656 = vpack.c.bf16 %v3654, %v3653
    %3657 = vmatprep.subr.bf16.mxu0 0
    %3658 = vmatpush1.bf16.msra.mxu0 %v3655
    %3659 = vmatprep.subr.bf16.mxu0 0
    %3660 = vmatpush1.bf16.msra.mxu0 %v3656
    %3661 = vmatprep.subr.bf16.mxu0 0
    %3662 = vmatpush1.bf16.msra.mxu0 0
    %3663 = vmatprep.subr.bf16.mxu0 0
    %3664 = vmatpush1.bf16.msra.mxu0 0
    %3665 = vmatprep.subr.bf16.mxu0 0
    %3666 = vmatpush1.bf16.msra.mxu0 0
    %3667 = vmatprep.subr.bf16.mxu0 0
    %3668 = vmatpush1.bf16.msra.mxu0 0
    %3669 = vmatprep.subr.bf16.mxu0 0
    %3670 = vmatpush1.bf16.msra.mxu0 0
    %3671 = vmatprep.subr.bf16.mxu0 0
    %3672 = vmatpush1.bf16.msra.mxu0 0
    %3673 = vmatprep.subr.bf16.mxu0 0
    %3674 = vmatpush1.bf16.msra.mxu0 0
    %3675 = vmatprep.subr.bf16.mxu0 0
    %3676 = vmatpush1.bf16.msra.mxu0 0
    %3677 = vmatprep.subr.bf16.mxu0 0
    %3678 = vmatpush1.bf16.msra.mxu0 0
    %3679 = vmatprep.subr.bf16.mxu0 0
    %3680 = vmatpush1.bf16.msra.mxu0 0
    %3681 = vmatprep.subr.bf16.mxu0 0
    %3682 = vmatpush1.bf16.msra.mxu0 0
    %3683 = vmatprep.subr.bf16.mxu0 0
    %3684 = vmatpush1.bf16.msra.mxu0 0
    %3685 = vmatprep.subr.bf16.mxu0 0
    %3686 = vmatpush1.bf16.msra.mxu0 0
    %3687 = vmatprep.subr.bf16.mxu0 0
    %3688 = vmatpush1.bf16.msra.mxu0 0
    %3689 = vmatprep.mubr.bf16.mxu0 0
    %3690 = vmatmul.mubr.bf16.gmra.mrb[0].mxu0 %v3542
    %v3691 = vpop.f32.mrb[0].mxu0
    %v3692 = vadd.f32 0.0, %v3691
    %v3693 = vpop.f32.mrb[0].mxu0
    %v3694 = vpop.f32.mrb[0].mxu0
    %v3695 = vadd.f32 0.0, %v3694
    %v3696 = vpop.f32.mrb[0].mxu0
    %3697 = vmatprep.mubr.bf16.mxu0 0
    %3698 = vmatmul.mubr.bf16.gmra.mrb[0].mxu0 %v3545
    %v3699 = vpop.f32.mrb[0].mxu0
    %v3700 = vadd.f32 0.0, %v3699
    %v3701 = vpop.f32.mrb[0].mxu0
    %v3702 = vpop.f32.mrb[0].mxu0
    %v3703 = vadd.f32 0.0, %v3702
    %v3704 = vpop.f32.mrb[0].mxu0
    %3705 = vdwg.mxu0
    %v3706 = vmul.f32 %v3582, 0.25
    %v3707 = vmul.f32 %v3585, 0.25
    %v3708 = vmul.f32 %v3590, 0.25
    %v3709 = vmul.f32 %v3593, 0.25
    %v3710 = vpack.c.bf16 %v3707, %v3706
    %v3711 = vpack.c.bf16 %v3709, %v3708
    %v3712 = vpack.c.bf16 %v3640, %v3637
    %v3713 = vpack.c.bf16 %v3648, %v3645
    %v3715 = vsel %vm467, %v3710, 0
    %v3718 = vsel %vm467, %v3712, 0
    %3720 = vmatprep.subr.bf16.mxu0 0
    %3721 = vmatpush1.bf16.xpose.msra.mxu0 %v3718
    %3722 = vmatprep.subr.bf16.mxu0 0
    %3723 = vmatpush1.bf16.xpose.msra.mxu0 0
    %3724 = vmatprep.subr.bf16.mxu0 0
    %3725 = vmatpush1.bf16.xpose.msra.mxu0 0
    %3726 = vmatprep.subr.bf16.mxu0 0
    %3727 = vmatpush1.bf16.xpose.msra.mxu0 0
    %3728 = vmatprep.subr.bf16.mxu0 0
    %3729 = vmatpush1.bf16.xpose.msra.mxu0 0
    %3730 = vmatprep.subr.bf16.mxu0 0
    %3731 = vmatpush1.bf16.xpose.msra.mxu0 0
    %3732 = vmatprep.subr.bf16.mxu0 0
    %3733 = vmatpush1.bf16.xpose.msra.mxu0 0
    %3734 = vmatprep.subr.bf16.mxu0 0
    %3735 = vmatpush1.bf16.xpose.msra.mxu0 0
    %3736 = vmatprep.subr.bf16.mxu0 0
    %3737 = vmatpush1.bf16.xpose.msra.mxu0 0
    %3738 = vmatprep.subr.bf16.mxu0 0
    %3739 = vmatpush1.bf16.xpose.msra.mxu0 0
    %3740 = vmatprep.subr.bf16.mxu0 0
    %3741 = vmatpush1.bf16.xpose.msra.mxu0 0
    %3742 = vmatprep.subr.bf16.mxu0 0
    %3743 = vmatpush1.bf16.xpose.msra.mxu0 0
    %3744 = vmatprep.subr.bf16.mxu0 0
    %3745 = vmatpush1.bf16.xpose.msra.mxu0 0
    %3746 = vmatprep.subr.bf16.mxu0 0
    %3747 = vmatpush1.bf16.xpose.msra.mxu0 0
    %3748 = vmatprep.subr.bf16.mxu0 0
    %3749 = vmatpush1.bf16.xpose.msra.mxu0 0
    %3750 = vmatprep.subr.bf16.mxu0 0
    %3751 = vmatpush1.bf16.xpose.msra.mxu0 0
    %3752 = vmatprep.mubr.bf16.mxu0 0
    %3753 = vmatmul.mubr.bf16.gmra.mrb[0].mxu0 %v3715
    %v3754 = vpop.f32.mrb[0].mxu0
    %v3755 = vadd.f32 %v3457, %v3754
    %v3756 = vpop.f32.mrb[0].mxu0
    %v3757 = vpop.f32.mrb[0].mxu0
    %v3758 = vadd.f32 %v3458, %v3757
    %v3759 = vpop.f32.mrb[0].mxu0
    %3760 = vdwg.mxu0
    %v3762 = vsel %vm467, %v3711, 0
    %v3765 = vsel %vm467, %v3713, 0
    %3767 = vmatprep.subr.bf16.mxu0 0
    %3768 = vmatpush1.bf16.xpose.msra.mxu0 %v3765
    %3769 = vmatprep.subr.bf16.mxu0 0
    %3770 = vmatpush1.bf16.xpose.msra.mxu0 0
    %3771 = vmatprep.subr.bf16.mxu0 0
    %3772 = vmatpush1.bf16.xpose.msra.mxu0 0
    %3773 = vmatprep.subr.bf16.mxu0 0
    %3774 = vmatpush1.bf16.xpose.msra.mxu0 0
    %3775 = vmatprep.subr.bf16.mxu0 0
    %3776 = vmatpush1.bf16.xpose.msra.mxu0 0
    %3777 = vmatprep.subr.bf16.mxu0 0
    %3778 = vmatpush1.bf16.xpose.msra.mxu0 0
    %3779 = vmatprep.subr.bf16.mxu0 0
    %3780 = vmatpush1.bf16.xpose.msra.mxu0 0
    %3781 = vmatprep.subr.bf16.mxu0 0
    %3782 = vmatpush1.bf16.xpose.msra.mxu0 0
    %3783 = vmatprep.subr.bf16.mxu0 0
    %3784 = vmatpush1.bf16.xpose.msra.mxu0 0
    %3785 = vmatprep.subr.bf16.mxu0 0
    %3786 = vmatpush1.bf16.xpose.msra.mxu0 0
    %3787 = vmatprep.subr.bf16.mxu0 0
    %3788 = vmatpush1.bf16.xpose.msra.mxu0 0
    %3789 = vmatprep.subr.bf16.mxu0 0
    %3790 = vmatpush1.bf16.xpose.msra.mxu0 0
    %3791 = vmatprep.subr.bf16.mxu0 0
    %3792 = vmatpush1.bf16.xpose.msra.mxu0 0
    %3793 = vmatprep.subr.bf16.mxu0 0
    %3794 = vmatpush1.bf16.xpose.msra.mxu0 0
    %3795 = vmatprep.subr.bf16.mxu0 0
    %3796 = vmatpush1.bf16.xpose.msra.mxu0 0
    %3797 = vmatprep.subr.bf16.mxu0 0
    %3798 = vmatpush1.bf16.xpose.msra.mxu0 0
    %3799 = vmatprep.mubr.bf16.mxu0 0
    %3800 = vmatmul.mubr.bf16.gmra.mrb[0].mxu0 %v3762
    %v3801 = vpop.f32.mrb[0].mxu0
    %v3802 = vadd.f32 %v3457, %v3801
    %v3803 = vpop.f32.mrb[0].mxu0
    %v3804 = vpop.f32.mrb[0].mxu0
    %v3805 = vadd.f32 %v3458, %v3804
    %v3806 = vpop.f32.mrb[0].mxu0
    %3807 = vdwg.mxu0
    %v3808 = vsel %vm467, %v3755, -inf
    %3809 = vmax.xlane.f32.xlu0 %v3808
    %v3810 = vpop.xlane.xlu0 %3809
    %v3811 = vsel %vm467, %v3758, -inf
    %3812 = vmax.xlane.f32.xlu0 %v3811
    %v3813 = vpop.xlane.xlu0 %3812
    %v3814 = vsel %vm467, %v3802, -inf
    %3815 = vmax.xlane.f32.xlu0 %v3814
    %v3816 = vpop.xlane.xlu0 %3815
    %v3817 = vsel %vm467, %v3805, -inf
    %3818 = vmax.xlane.f32.xlu0 %v3817
    %v3819 = vpop.xlane.xlu0 %3818
    %v3820 = vsub.f32 %v3755, %v3810
    %v3821 = vsub.f32 %v3758, %v3813
    %v3822 = vsub.f32 %v3802, %v3816
    %v3823 = vsub.f32 %v3805, %v3819
    %v3824 = vmul.f32 %v3820, 1.442695
    %v3825 = vpow.pop %v3824
    %v3826 = vmul.f32 %v3821, 1.442695
    %v3827 = vpow.pop %v3826
    %v3828 = vmul.f32 %v3822, 1.442695
    %v3829 = vpow.pop %v3828
    %v3830 = vmul.f32 %v3823, 1.442695
    %v3831 = vpow.pop %v3830
    %v3832 = vsel %vm467, %v3825, 0.0
    %3833 = vadd.xlane.f32.xlu0 %v3832
    %v3834 = vpop.xlane.xlu0 %3833
    %v3835 = vsel %vm467, %v3827, 0.0
    %3836 = vadd.xlane.f32.xlu0 %v3835
    %v3837 = vpop.xlane.xlu0 %3836
    %v3838 = vsel %vm467, %v3829, 0.0
    %3839 = vadd.xlane.f32.xlu0 %v3838
    %v3840 = vpop.xlane.xlu0 %3839
    %v3841 = vsel %vm467, %v3831, 0.0
    %3842 = vadd.xlane.f32.xlu0 %v3841
    %v3843 = vpop.xlane.xlu0 %3842
    %v3844 = vrcp.pop %v3834
    %v3845 = vrcp.pop %v3837
    %v3846 = vrcp.pop %v3840
    %v3847 = vrcp.pop %v3843
    %v3848 = vmul.f32 %v3825, %v3844
    %v3849 = vmul.f32 %v3827, %v3845
    %v3850 = vmul.f32 %v3829, %v3846
    %v3851 = vmul.f32 %v3831, %v3847
    %v3852 = vpack.c.bf16 %v3849, %v3848
    %v3853 = vpack.c.bf16 %v3851, %v3850
    %v3854 = vpack.c.bf16 %v3695, %v3692
    %v3855 = vpack.c.bf16 %v3703, %v3700
    %v3857 = vsel %vm467, %v3852, 0
    %3859 = vmatprep.subr.bf16.mxu0 0
    %3860 = vmatpush1.bf16.msra.mxu0 %v3854
    %3861 = vmatprep.subr.bf16.mxu0 0
    %3862 = vmatpush1.bf16.msra.mxu0 0
    %3863 = vmatprep.subr.bf16.mxu0 0
    %3864 = vmatpush1.bf16.msra.mxu0 0
    %3865 = vmatprep.subr.bf16.mxu0 0
    %3866 = vmatpush1.bf16.msra.mxu0 0
    %3867 = vmatprep.subr.bf16.mxu0 0
    %3868 = vmatpush1.bf16.msra.mxu0 0
    %3869 = vmatprep.subr.bf16.mxu0 0
    %3870 = vmatpush1.bf16.msra.mxu0 0
    %3871 = vmatprep.subr.bf16.mxu0 0
    %3872 = vmatpush1.bf16.msra.mxu0 0
    %3873 = vmatprep.subr.bf16.mxu0 0
    %3874 = vmatpush1.bf16.msra.mxu0 0
    %3875 = vmatprep.subr.bf16.mxu0 0
    %3876 = vmatpush1.bf16.msra.mxu0 0
    %3877 = vmatprep.subr.bf16.mxu0 0
    %3878 = vmatpush1.bf16.msra.mxu0 0
    %3879 = vmatprep.subr.bf16.mxu0 0
    %3880 = vmatpush1.bf16.msra.mxu0 0
    %3881 = vmatprep.subr.bf16.mxu0 0
    %3882 = vmatpush1.bf16.msra.mxu0 0
    %3883 = vmatprep.subr.bf16.mxu0 0
    %3884 = vmatpush1.bf16.msra.mxu0 0
    %3885 = vmatprep.subr.bf16.mxu0 0
    %3886 = vmatpush1.bf16.msra.mxu0 0
    %3887 = vmatprep.subr.bf16.mxu0 0
    %3888 = vmatpush1.bf16.msra.mxu0 0
    %3889 = vmatprep.subr.bf16.mxu0 0
    %3890 = vmatpush1.bf16.msra.mxu0 0
    %3891 = vmatprep.mubr.bf16.mxu0 0
    %3892 = vmatmul.mubr.bf16.gmra.mrb[0].mxu0 %v3857
    %v3893 = vpop.f32.mrb[0].mxu0
    %v3894 = vadd.f32 0.0, %v3893
    %v3895 = vpop.f32.mrb[0].mxu0
    %v3896 = vpop.f32.mrb[0].mxu0
    %v3897 = vadd.f32 0.0, %v3896
    %v3898 = vpop.f32.mrb[0].mxu0
    %3899 = vdwg.mxu0
    %v3901 = vsel %vm467, %v3853, 0
    %3903 = vmatprep.subr.bf16.mxu0 0
    %3904 = vmatpush1.bf16.msra.mxu0 %v3855
    %3905 = vmatprep.subr.bf16.mxu0 0
    %3906 = vmatpush1.bf16.msra.mxu0 0
    %3907 = vmatprep.subr.bf16.mxu0 0
    %3908 = vmatpush1.bf16.msra.mxu0 0
    %3909 = vmatprep.subr.bf16.mxu0 0
    %3910 = vmatpush1.bf16.msra.mxu0 0
    %3911 = vmatprep.subr.bf16.mxu0 0
    %3912 = vmatpush1.bf16.msra.mxu0 0
    %3913 = vmatprep.subr.bf16.mxu0 0
    %3914 = vmatpush1.bf16.msra.mxu0 0
    %3915 = vmatprep.subr.bf16.mxu0 0
    %3916 = vmatpush1.bf16.msra.mxu0 0
    %3917 = vmatprep.subr.bf16.mxu0 0
    %3918 = vmatpush1.bf16.msra.mxu0 0
    %3919 = vmatprep.subr.bf16.mxu0 0
    %3920 = vmatpush1.bf16.msra.mxu0 0
    %3921 = vmatprep.subr.bf16.mxu0 0
    %3922 = vmatpush1.bf16.msra.mxu0 0
    %3923 = vmatprep.subr.bf16.mxu0 0
    %3924 = vmatpush1.bf16.msra.mxu0 0
    %3925 = vmatprep.subr.bf16.mxu0 0
    %3926 = vmatpush1.bf16.msra.mxu0 0
    %3927 = vmatprep.subr.bf16.mxu0 0
    %3928 = vmatpush1.bf16.msra.mxu0 0
    %3929 = vmatprep.subr.bf16.mxu0 0
    %3930 = vmatpush1.bf16.msra.mxu0 0
    %3931 = vmatprep.subr.bf16.mxu0 0
    %3932 = vmatpush1.bf16.msra.mxu0 0
    %3933 = vmatprep.subr.bf16.mxu0 0
    %3934 = vmatpush1.bf16.msra.mxu0 0
    %3935 = vmatprep.mubr.bf16.mxu0 0
    %3936 = vmatmul.mubr.bf16.gmra.mrb[0].mxu0 %v3901
    %v3937 = vpop.f32.mrb[0].mxu0
    %v3938 = vadd.f32 0.0, %v3937
    %v3939 = vpop.f32.mrb[0].mxu0
    %v3940 = vpop.f32.mrb[0].mxu0
    %v3941 = vadd.f32 0.0, %v3940
    %v3942 = vpop.f32.mrb[0].mxu0
    %3943 = vdwg.mxu0
    %v3944 = vpack.c.bf16 %v3897, %v3894
    %v3945 = vpack.c.bf16 %v3941, %v3938
    %v3946 = vld [vmem:[%s63] sm:$0xff]
    %v3947 = vld [vmem:[%s63 + $0x8] sm:$0xff]
    %v3948 = vpack.c.bf16 %v3947, %v3946
    %s3949 = scalar_lea.vmem %s57, 32
    %v3950 = vld [vmem:[%s3949] sm:$0xff]
    %v3951 = vld [vmem:[%s3949 + $0x8] sm:$0xff]
    %v3952 = vld [vmem:[%s3949 + $0x10] sm:$0xff]
    %v3953 = vld [vmem:[%s3949 + $0x18] sm:$0xff]
    %v3954 = vpack.c.bf16 %v3951, %v3950
    %v3955 = vpack.c.bf16 %v3953, %v3952
    %3956 = vmatprep.subr.bf16.mxu0 0
    %3957 = vmatpush1.bf16.msra.mxu0 %v3954
    %3958 = vmatprep.subr.bf16.mxu0 0
    %3959 = vmatpush1.bf16.msra.mxu0 %v3955
    %3960 = vmatprep.subr.bf16.mxu0 0
    %3961 = vmatpush1.bf16.msra.mxu0 0
    %3962 = vmatprep.subr.bf16.mxu0 0
    %3963 = vmatpush1.bf16.msra.mxu0 0
    %3964 = vmatprep.subr.bf16.mxu0 0
    %3965 = vmatpush1.bf16.msra.mxu0 0
    %3966 = vmatprep.subr.bf16.mxu0 0
    %3967 = vmatpush1.bf16.msra.mxu0 0
    %3968 = vmatprep.subr.bf16.mxu0 0
    %3969 = vmatpush1.bf16.msra.mxu0 0
    %3970 = vmatprep.subr.bf16.mxu0 0
    %3971 = vmatpush1.bf16.msra.mxu0 0
    %3972 = vmatprep.subr.bf16.mxu0 0
    %3973 = vmatpush1.bf16.msra.mxu0 0
    %3974 = vmatprep.subr.bf16.mxu0 0
    %3975 = vmatpush1.bf16.msra.mxu0 0
    %3976 = vmatprep.subr.bf16.mxu0 0
    %3977 = vmatpush1.bf16.msra.mxu0 0
    %3978 = vmatprep.subr.bf16.mxu0 0
    %3979 = vmatpush1.bf16.msra.mxu0 0
    %3980 = vmatprep.subr.bf16.mxu0 0
    %3981 = vmatpush1.bf16.msra.mxu0 0
    %3982 = vmatprep.subr.bf16.mxu0 0
    %3983 = vmatpush1.bf16.msra.mxu0 0
    %3984 = vmatprep.subr.bf16.mxu0 0
    %3985 = vmatpush1.bf16.msra.mxu0 0
    %3986 = vmatprep.subr.bf16.mxu0 0
    %3987 = vmatpush1.bf16.msra.mxu0 0
    %3988 = vmatprep.mubr.bf16.mxu0 0
    %3989 = vmatmul.mubr.bf16.gmra.mrb[0].mxu0 %v3542
    %v3990 = vpop.f32.mrb[0].mxu0
    %v3991 = vadd.f32 0.0, %v3990
    %v3992 = vpop.f32.mrb[0].mxu0
    %v3993 = vpop.f32.mrb[0].mxu0
    %v3994 = vadd.f32 0.0, %v3993
    %v3995 = vpop.f32.mrb[0].mxu0
    %3996 = vmatprep.mubr.bf16.mxu0 0
    %3997 = vmatmul.mubr.bf16.gmra.mrb[0].mxu0 %v3545
    %v3998 = vpop.f32.mrb[0].mxu0
    %v3999 = vadd.f32 0.0, %v3998
    %v4000 = vpop.f32.mrb[0].mxu0
    %v4001 = vpop.f32.mrb[0].mxu0
    %v4002 = vadd.f32 0.0, %v4001
    %v4003 = vpop.f32.mrb[0].mxu0
    %4004 = vdwg.mxu0
    %s4005 = scalar_lea.vmem %s59, 32
    %v4006 = vld [vmem:[%s4005] sm:$0xff]
    %v4007 = vld [vmem:[%s4005 + $0x8] sm:$0xff]
    %v4008 = vld [vmem:[%s4005 + $0x10] sm:$0xff]
    %v4009 = vld [vmem:[%s4005 + $0x18] sm:$0xff]
    %v4010 = vpack.c.bf16 %v4007, %v4006
    %v4011 = vpack.c.bf16 %v4009, %v4008
    %4012 = vmatprep.subr.bf16.mxu0 0
    %4013 = vmatpush1.bf16.msra.mxu0 %v4010
    %4014 = vmatprep.subr.bf16.mxu0 0
    %4015 = vmatpush1.bf16.msra.mxu0 %v4011
    %4016 = vmatprep.subr.bf16.mxu0 0
    %4017 = vmatpush1.bf16.msra.mxu0 0
    %4018 = vmatprep.subr.bf16.mxu0 0
    %4019 = vmatpush1.bf16.msra.mxu0 0
    %4020 = vmatprep.subr.bf16.mxu0 0
    %4021 = vmatpush1.bf16.msra.mxu0 0
    %4022 = vmatprep.subr.bf16.mxu0 0
    %4023 = vmatpush1.bf16.msra.mxu0 0
    %4024 = vmatprep.subr.bf16.mxu0 0
    %4025 = vmatpush1.bf16.msra.mxu0 0
    %4026 = vmatprep.subr.bf16.mxu0 0
    %4027 = vmatpush1.bf16.msra.mxu0 0
    %4028 = vmatprep.subr.bf16.mxu0 0
    %4029 = vmatpush1.bf16.msra.mxu0 0
    %4030 = vmatprep.subr.bf16.mxu0 0
    %4031 = vmatpush1.bf16.msra.mxu0 0
    %4032 = vmatprep.subr.bf16.mxu0 0
    %4033 = vmatpush1.bf16.msra.mxu0 0
    %4034 = vmatprep.subr.bf16.mxu0 0
    %4035 = vmatpush1.bf16.msra.mxu0 0
    %4036 = vmatprep.subr.bf16.mxu0 0
    %4037 = vmatpush1.bf16.msra.mxu0 0
    %4038 = vmatprep.subr.bf16.mxu0 0
    %4039 = vmatpush1.bf16.msra.mxu0 0
    %4040 = vmatprep.subr.bf16.mxu0 0
    %4041 = vmatpush1.bf16.msra.mxu0 0
    %4042 = vmatprep.subr.bf16.mxu0 0
    %4043 = vmatpush1.bf16.msra.mxu0 0
    %4044 = vmatprep.mubr.bf16.mxu0 0
    %4045 = vmatmul.mubr.bf16.gmra.mrb[0].mxu0 %v3542
    %v4046 = vpop.f32.mrb[0].mxu0
    %v4047 = vadd.f32 0.0, %v4046
    %v4048 = vpop.f32.mrb[0].mxu0
    %v4049 = vpop.f32.mrb[0].mxu0
    %v4050 = vadd.f32 0.0, %v4049
    %v4051 = vpop.f32.mrb[0].mxu0
    %4052 = vmatprep.mubr.bf16.mxu0 0
    %4053 = vmatmul.mubr.bf16.gmra.mrb[0].mxu0 %v3545
    %v4054 = vpop.f32.mrb[0].mxu0
    %v4055 = vadd.f32 0.0, %v4054
    %v4056 = vpop.f32.mrb[0].mxu0
    %v4057 = vpop.f32.mrb[0].mxu0
    %v4058 = vadd.f32 0.0, %v4057
    %v4059 = vpop.f32.mrb[0].mxu0
    %4060 = vdwg.mxu0
    %s4061 = scalar_lea.vmem %s61, 32
    %v4062 = vld [vmem:[%s4061] sm:$0xff]
    %v4063 = vld [vmem:[%s4061 + $0x8] sm:$0xff]
    %v4064 = vld [vmem:[%s4061 + $0x10] sm:$0xff]
    %v4065 = vld [vmem:[%s4061 + $0x18] sm:$0xff]
    %v4066 = vpack.c.bf16 %v4063, %v4062
    %v4067 = vpack.c.bf16 %v4065, %v4064
    %4068 = vmatprep.subr.bf16.mxu0 0
    %4069 = vmatpush1.bf16.msra.mxu0 %v4066
    %4070 = vmatprep.subr.bf16.mxu0 0
    %4071 = vmatpush1.bf16.msra.mxu0 %v4067
    %4072 = vmatprep.subr.bf16.mxu0 0
    %4073 = vmatpush1.bf16.msra.mxu0 0
    %4074 = vmatprep.subr.bf16.mxu0 0
    %4075 = vmatpush1.bf16.msra.mxu0 0
    %4076 = vmatprep.subr.bf16.mxu0 0
    %4077 = vmatpush1.bf16.msra.mxu0 0
    %4078 = vmatprep.subr.bf16.mxu0 0
    %4079 = vmatpush1.bf16.msra.mxu0 0
    %4080 = vmatprep.subr.bf16.mxu0 0
    %4081 = vmatpush1.bf16.msra.mxu0 0
    %4082 = vmatprep.subr.bf16.mxu0 0
    %4083 = vmatpush1.bf16.msra.mxu0 0
    %4084 = vmatprep.subr.bf16.mxu0 0
    %4085 = vmatpush1.bf16.msra.mxu0 0
    %4086 = vmatprep.subr.bf16.mxu0 0
    %4087 = vmatpush1.bf16.msra.mxu0 0
    %4088 = vmatprep.subr.bf16.mxu0 0
    %4089 = vmatpush1.bf16.msra.mxu0 0
    %4090 = vmatprep.subr.bf16.mxu0 0
    %4091 = vmatpush1.bf16.msra.mxu0 0
    %4092 = vmatprep.subr.bf16.mxu0 0
    %4093 = vmatpush1.bf16.msra.mxu0 0
    %4094 = vmatprep.subr.bf16.mxu0 0
    %4095 = vmatpush1.bf16.msra.mxu0 0
    %4096 = vmatprep.subr.bf16.mxu0 0
    %4097 = vmatpush1.bf16.msra.mxu0 0
    %4098 = vmatprep.subr.bf16.mxu0 0
    %4099 = vmatpush1.bf16.msra.mxu0 0
    %4100 = vmatprep.mubr.bf16.mxu0 0
    %4101 = vmatmul.mubr.bf16.gmra.mrb[0].mxu0 %v3542
    %v4102 = vpop.f32.mrb[0].mxu0
    %v4103 = vadd.f32 0.0, %v4102
    %v4104 = vpop.f32.mrb[0].mxu0
    %v4105 = vpop.f32.mrb[0].mxu0
    %v4106 = vadd.f32 0.0, %v4105
    %v4107 = vpop.f32.mrb[0].mxu0
    %4108 = vmatprep.mubr.bf16.mxu0 0
    %4109 = vmatmul.mubr.bf16.gmra.mrb[0].mxu0 %v3545
    %v4110 = vpop.f32.mrb[0].mxu0
    %v4111 = vadd.f32 0.0, %v4110
    %v4112 = vpop.f32.mrb[0].mxu0
    %v4113 = vpop.f32.mrb[0].mxu0
    %v4114 = vadd.f32 0.0, %v4113
    %v4115 = vpop.f32.mrb[0].mxu0
    %4116 = vdwg.mxu0
    %v4117 = vmul.f32 %v3991, 0.25
    %v4118 = vmul.f32 %v3994, 0.25
    %v4119 = vmul.f32 %v3999, 0.25
    %v4120 = vmul.f32 %v4002, 0.25
    %v4121 = vpack.c.bf16 %v4118, %v4117
    %v4122 = vpack.c.bf16 %v4120, %v4119
    %v4123 = vpack.c.bf16 %v4050, %v4047
    %v4124 = vpack.c.bf16 %v4058, %v4055
    %v4126 = vsel %vm467, %v4121, 0
    %v4129 = vsel %vm467, %v4123, 0
    %4131 = vmatprep.subr.bf16.mxu0 0
    %4132 = vmatpush1.bf16.xpose.msra.mxu0 %v4129
    %4133 = vmatprep.subr.bf16.mxu0 0
    %4134 = vmatpush1.bf16.xpose.msra.mxu0 0
    %4135 = vmatprep.subr.bf16.mxu0 0
    %4136 = vmatpush1.bf16.xpose.msra.mxu0 0
    %4137 = vmatprep.subr.bf16.mxu0 0
    %4138 = vmatpush1.bf16.xpose.msra.mxu0 0
    %4139 = vmatprep.subr.bf16.mxu0 0
    %4140 = vmatpush1.bf16.xpose.msra.mxu0 0
    %4141 = vmatprep.subr.bf16.mxu0 0
    %4142 = vmatpush1.bf16.xpose.msra.mxu0 0
    %4143 = vmatprep.subr.bf16.mxu0 0
    %4144 = vmatpush1.bf16.xpose.msra.mxu0 0
    %4145 = vmatprep.subr.bf16.mxu0 0
    %4146 = vmatpush1.bf16.xpose.msra.mxu0 0
    %4147 = vmatprep.subr.bf16.mxu0 0
    %4148 = vmatpush1.bf16.xpose.msra.mxu0 0
    %4149 = vmatprep.subr.bf16.mxu0 0
    %4150 = vmatpush1.bf16.xpose.msra.mxu0 0
    %4151 = vmatprep.subr.bf16.mxu0 0
    %4152 = vmatpush1.bf16.xpose.msra.mxu0 0
    %4153 = vmatprep.subr.bf16.mxu0 0
    %4154 = vmatpush1.bf16.xpose.msra.mxu0 0
    %4155 = vmatprep.subr.bf16.mxu0 0
    %4156 = vmatpush1.bf16.xpose.msra.mxu0 0
    %4157 = vmatprep.subr.bf16.mxu0 0
    %4158 = vmatpush1.bf16.xpose.msra.mxu0 0
    %4159 = vmatprep.subr.bf16.mxu0 0
    %4160 = vmatpush1.bf16.xpose.msra.mxu0 0
    %4161 = vmatprep.subr.bf16.mxu0 0
    %4162 = vmatpush1.bf16.xpose.msra.mxu0 0
    %4163 = vmatprep.mubr.bf16.mxu0 0
    %4164 = vmatmul.mubr.bf16.gmra.mrb[0].mxu0 %v4126
    %v4165 = vpop.f32.mrb[0].mxu0
    %v4166 = vadd.f32 %v3457, %v4165
    %v4167 = vpop.f32.mrb[0].mxu0
    %v4168 = vpop.f32.mrb[0].mxu0
    %v4169 = vadd.f32 %v3458, %v4168
    %v4170 = vpop.f32.mrb[0].mxu0
    %4171 = vdwg.mxu0
    %v4173 = vsel %vm467, %v4122, 0
    %v4176 = vsel %vm467, %v4124, 0
    %4178 = vmatprep.subr.bf16.mxu0 0
    %4179 = vmatpush1.bf16.xpose.msra.mxu0 %v4176
    %4180 = vmatprep.subr.bf16.mxu0 0
    %4181 = vmatpush1.bf16.xpose.msra.mxu0 0
    %4182 = vmatprep.subr.bf16.mxu0 0
    %4183 = vmatpush1.bf16.xpose.msra.mxu0 0
    %4184 = vmatprep.subr.bf16.mxu0 0
    %4185 = vmatpush1.bf16.xpose.msra.mxu0 0
    %4186 = vmatprep.subr.bf16.mxu0 0
    %4187 = vmatpush1.bf16.xpose.msra.mxu0 0
    %4188 = vmatprep.subr.bf16.mxu0 0
    %4189 = vmatpush1.bf16.xpose.msra.mxu0 0
    %4190 = vmatprep.subr.bf16.mxu0 0
    %4191 = vmatpush1.bf16.xpose.msra.mxu0 0
    %4192 = vmatprep.subr.bf16.mxu0 0
    %4193 = vmatpush1.bf16.xpose.msra.mxu0 0
    %4194 = vmatprep.subr.bf16.mxu0 0
    %4195 = vmatpush1.bf16.xpose.msra.mxu0 0
    %4196 = vmatprep.subr.bf16.mxu0 0
    %4197 = vmatpush1.bf16.xpose.msra.mxu0 0
    %4198 = vmatprep.subr.bf16.mxu0 0
    %4199 = vmatpush1.bf16.xpose.msra.mxu0 0
    %4200 = vmatprep.subr.bf16.mxu0 0
    %4201 = vmatpush1.bf16.xpose.msra.mxu0 0
    %4202 = vmatprep.subr.bf16.mxu0 0
    %4203 = vmatpush1.bf16.xpose.msra.mxu0 0
    %4204 = vmatprep.subr.bf16.mxu0 0
    %4205 = vmatpush1.bf16.xpose.msra.mxu0 0
    %4206 = vmatprep.subr.bf16.mxu0 0
    %4207 = vmatpush1.bf16.xpose.msra.mxu0 0
    %4208 = vmatprep.subr.bf16.mxu0 0
    %4209 = vmatpush1.bf16.xpose.msra.mxu0 0
    %4210 = vmatprep.mubr.bf16.mxu0 0
    %4211 = vmatmul.mubr.bf16.gmra.mrb[0].mxu0 %v4173
    %v4212 = vpop.f32.mrb[0].mxu0
    %v4213 = vadd.f32 %v3457, %v4212
    %v4214 = vpop.f32.mrb[0].mxu0
    %v4215 = vpop.f32.mrb[0].mxu0
    %v4216 = vadd.f32 %v3458, %v4215
    %v4217 = vpop.f32.mrb[0].mxu0
    %4218 = vdwg.mxu0
    %v4219 = vsel %vm467, %v4166, -inf
    %4220 = vmax.xlane.f32.xlu0 %v4219
    %v4221 = vpop.xlane.xlu0 %4220
    %v4222 = vsel %vm467, %v4169, -inf
    %4223 = vmax.xlane.f32.xlu0 %v4222
    %v4224 = vpop.xlane.xlu0 %4223
    %v4225 = vsel %vm467, %v4213, -inf
    %4226 = vmax.xlane.f32.xlu0 %v4225
    %v4227 = vpop.xlane.xlu0 %4226
    %v4228 = vsel %vm467, %v4216, -inf
    %4229 = vmax.xlane.f32.xlu0 %v4228
    %v4230 = vpop.xlane.xlu0 %4229
    %v4231 = vsub.f32 %v4166, %v4221
    %v4232 = vsub.f32 %v4169, %v4224
    %v4233 = vsub.f32 %v4213, %v4227
    %v4234 = vsub.f32 %v4216, %v4230
    %v4235 = vmul.f32 %v4231, 1.442695
    %v4236 = vpow.pop %v4235
    %v4237 = vmul.f32 %v4232, 1.442695
    %v4238 = vpow.pop %v4237
    %v4239 = vmul.f32 %v4233, 1.442695
    %v4240 = vpow.pop %v4239
    %v4241 = vmul.f32 %v4234, 1.442695
    %v4242 = vpow.pop %v4241
    %v4243 = vsel %vm467, %v4236, 0.0
    %4244 = vadd.xlane.f32.xlu0 %v4243
    %v4245 = vpop.xlane.xlu0 %4244
    %v4246 = vsel %vm467, %v4238, 0.0
    %4247 = vadd.xlane.f32.xlu0 %v4246
    %v4248 = vpop.xlane.xlu0 %4247
    %v4249 = vsel %vm467, %v4240, 0.0
    %4250 = vadd.xlane.f32.xlu0 %v4249
    %v4251 = vpop.xlane.xlu0 %4250
    %v4252 = vsel %vm467, %v4242, 0.0
    %4253 = vadd.xlane.f32.xlu0 %v4252
    %v4254 = vpop.xlane.xlu0 %4253
    %v4255 = vrcp.pop %v4245
    %v4256 = vrcp.pop %v4248
    %v4257 = vrcp.pop %v4251
    %v4258 = vrcp.pop %v4254
    %v4259 = vmul.f32 %v4236, %v4255
    %v4260 = vmul.f32 %v4238, %v4256
    %v4261 = vmul.f32 %v4240, %v4257
    %v4262 = vmul.f32 %v4242, %v4258
    %v4263 = vpack.c.bf16 %v4260, %v4259
    %v4264 = vpack.c.bf16 %v4262, %v4261
    %v4265 = vpack.c.bf16 %v4106, %v4103
    %v4266 = vpack.c.bf16 %v4114, %v4111
    %v4268 = vsel %vm467, %v4263, 0
    %4270 = vmatprep.subr.bf16.mxu0 0
    %4271 = vmatpush1.bf16.msra.mxu0 %v4265
    %4272 = vmatprep.subr.bf16.mxu0 0
    %4273 = vmatpush1.bf16.msra.mxu0 0
    %4274 = vmatprep.subr.bf16.mxu0 0
    %4275 = vmatpush1.bf16.msra.mxu0 0
    %4276 = vmatprep.subr.bf16.mxu0 0
    %4277 = vmatpush1.bf16.msra.mxu0 0
    %4278 = vmatprep.subr.bf16.mxu0 0
    %4279 = vmatpush1.bf16.msra.mxu0 0
    %4280 = vmatprep.subr.bf16.mxu0 0
    %4281 = vmatpush1.bf16.msra.mxu0 0
    %4282 = vmatprep.subr.bf16.mxu0 0
    %4283 = vmatpush1.bf16.msra.mxu0 0
    %4284 = vmatprep.subr.bf16.mxu0 0
    %4285 = vmatpush1.bf16.msra.mxu0 0
    %4286 = vmatprep.subr.bf16.mxu0 0
    %4287 = vmatpush1.bf16.msra.mxu0 0
    %4288 = vmatprep.subr.bf16.mxu0 0
    %4289 = vmatpush1.bf16.msra.mxu0 0
    %4290 = vmatprep.subr.bf16.mxu0 0
    %4291 = vmatpush1.bf16.msra.mxu0 0
    %4292 = vmatprep.subr.bf16.mxu0 0
    %4293 = vmatpush1.bf16.msra.mxu0 0
    %4294 = vmatprep.subr.bf16.mxu0 0
    %4295 = vmatpush1.bf16.msra.mxu0 0
    %4296 = vmatprep.subr.bf16.mxu0 0
    %4297 = vmatpush1.bf16.msra.mxu0 0
    %4298 = vmatprep.subr.bf16.mxu0 0
    %4299 = vmatpush1.bf16.msra.mxu0 0
    %4300 = vmatprep.subr.bf16.mxu0 0
    %4301 = vmatpush1.bf16.msra.mxu0 0
    %4302 = vmatprep.mubr.bf16.mxu0 0
    %4303 = vmatmul.mubr.bf16.gmra.mrb[0].mxu0 %v4268
    %v4304 = vpop.f32.mrb[0].mxu0
    %v4305 = vadd.f32 0.0, %v4304
    %v4306 = vpop.f32.mrb[0].mxu0
    %v4307 = vpop.f32.mrb[0].mxu0
    %v4308 = vadd.f32 0.0, %v4307
    %v4309 = vpop.f32.mrb[0].mxu0
    %4310 = vdwg.mxu0
    %v4312 = vsel %vm467, %v4264, 0
    %4314 = vmatprep.subr.bf16.mxu0 0
    %4315 = vmatpush1.bf16.msra.mxu0 %v4266
    %4316 = vmatprep.subr.bf16.mxu0 0
    %4317 = vmatpush1.bf16.msra.mxu0 0
    %4318 = vmatprep.subr.bf16.mxu0 0
    %4319 = vmatpush1.bf16.msra.mxu0 0
    %4320 = vmatprep.subr.bf16.mxu0 0
    %4321 = vmatpush1.bf16.msra.mxu0 0
    %4322 = vmatprep.subr.bf16.mxu0 0
    %4323 = vmatpush1.bf16.msra.mxu0 0
    %4324 = vmatprep.subr.bf16.mxu0 0
    %4325 = vmatpush1.bf16.msra.mxu0 0
    %4326 = vmatprep.subr.bf16.mxu0 0
    %4327 = vmatpush1.bf16.msra.mxu0 0
    %4328 = vmatprep.subr.bf16.mxu0 0
    %4329 = vmatpush1.bf16.msra.mxu0 0
    %4330 = vmatprep.subr.bf16.mxu0 0
    %4331 = vmatpush1.bf16.msra.mxu0 0
    %4332 = vmatprep.subr.bf16.mxu0 0
    %4333 = vmatpush1.bf16.msra.mxu0 0
    %4334 = vmatprep.subr.bf16.mxu0 0
    %4335 = vmatpush1.bf16.msra.mxu0 0
    %4336 = vmatprep.subr.bf16.mxu0 0
    %4337 = vmatpush1.bf16.msra.mxu0 0
    %4338 = vmatprep.subr.bf16.mxu0 0
    %4339 = vmatpush1.bf16.msra.mxu0 0
    %4340 = vmatprep.subr.bf16.mxu0 0
    %4341 = vmatpush1.bf16.msra.mxu0 0
    %4342 = vmatprep.subr.bf16.mxu0 0
    %4343 = vmatpush1.bf16.msra.mxu0 0
    %4344 = vmatprep.subr.bf16.mxu0 0
    %4345 = vmatpush1.bf16.msra.mxu0 0
    %4346 = vmatprep.mubr.bf16.mxu0 0
    %4347 = vmatmul.mubr.bf16.gmra.mrb[0].mxu0 %v4312
    %v4348 = vpop.f32.mrb[0].mxu0
    %v4349 = vadd.f32 0.0, %v4348
    %v4350 = vpop.f32.mrb[0].mxu0
    %v4351 = vpop.f32.mrb[0].mxu0
    %v4352 = vadd.f32 0.0, %v4351
    %v4353 = vpop.f32.mrb[0].mxu0
    %4354 = vdwg.mxu0
    %v4355 = vpack.c.bf16 %v4308, %v4305
    %v4356 = vpack.c.bf16 %v4352, %v4349
    %s4357 = scalar_lea.vmem %s63, 16
    %v4358 = vld [vmem:[%s4357] sm:$0xff]
    %v4359 = vld [vmem:[%s4357 + $0x8] sm:$0xff]
    %v4360 = vpack.c.bf16 %v4359, %v4358
    %v4362 = vsel %vm467, %v4355, 0
    %v4365 = vsel %vm467, %v4356, 0
    %4367 = vmatprep.subr.bf16.mxu0 0
    %4368 = vmatpush1.bf16.msra.mxu0 %v4360
    %4369 = vmatprep.subr.bf16.mxu0 0
    %4370 = vmatpush1.bf16.msra.mxu0 0
    %4371 = vmatprep.subr.bf16.mxu0 0
    %4372 = vmatpush1.bf16.msra.mxu0 0
    %4373 = vmatprep.subr.bf16.mxu0 0
    %4374 = vmatpush1.bf16.msra.mxu0 0
    %4375 = vmatprep.subr.bf16.mxu0 0
    %4376 = vmatpush1.bf16.msra.mxu0 0
    %4377 = vmatprep.subr.bf16.mxu0 0
    %4378 = vmatpush1.bf16.msra.mxu0 0
    %4379 = vmatprep.subr.bf16.mxu0 0
    %4380 = vmatpush1.bf16.msra.mxu0 0
    %4381 = vmatprep.subr.bf16.mxu0 0
    %4382 = vmatpush1.bf16.msra.mxu0 0
    %4383 = vmatprep.subr.bf16.mxu0 0
    %4384 = vmatpush1.bf16.msra.mxu0 0
    %4385 = vmatprep.subr.bf16.mxu0 0
    %4386 = vmatpush1.bf16.msra.mxu0 0
    %4387 = vmatprep.subr.bf16.mxu0 0
    %4388 = vmatpush1.bf16.msra.mxu0 0
    %4389 = vmatprep.subr.bf16.mxu0 0
    %4390 = vmatpush1.bf16.msra.mxu0 0
    %4391 = vmatprep.subr.bf16.mxu0 0
    %4392 = vmatpush1.bf16.msra.mxu0 0
    %4393 = vmatprep.subr.bf16.mxu0 0
    %4394 = vmatpush1.bf16.msra.mxu0 0
    %4395 = vmatprep.subr.bf16.mxu0 0
    %4396 = vmatpush1.bf16.msra.mxu0 0
    %4397 = vmatprep.subr.bf16.mxu0 0
    %4398 = vmatpush1.bf16.msra.mxu0 0
    %4399 = vmatprep.mubr.bf16.mxu0 0
    %4400 = vmatmul.mubr.bf16.gmra.mrb[0].mxu0 %v4362
    %v4401 = vpop.f32.mrb[0].mxu0
    %v4402 = vadd.f32 0.0, %v4401
    %v4403 = vpop.f32.mrb[0].mxu0
    %v4404 = vpop.f32.mrb[0].mxu0
    %v4405 = vadd.f32 0.0, %v4404
    %v4406 = vpop.f32.mrb[0].mxu0
    %4407 = vmatprep.mubr.bf16.mxu0 0
    %4408 = vmatmul.mubr.bf16.gmra.mrb[0].mxu0 %v4365
    %v4409 = vpop.f32.mrb[0].mxu0
    %v4410 = vadd.f32 0.0, %v4409
    %v4411 = vpop.f32.mrb[0].mxu0
    %v4412 = vpop.f32.mrb[0].mxu0
    %v4413 = vadd.f32 0.0, %v4412
    %v4414 = vpop.f32.mrb[0].mxu0
    %4415 = vdwg.mxu0
    %v4417 = vsel %vm467, %v3944, 0
    %v4420 = vsel %vm467, %v3945, 0
    %4422 = vmatprep.subr.bf16.mxu0 0
    %4423 = vmatpush1.bf16.msra.mxu0 %v3948
    %4424 = vmatprep.subr.bf16.mxu0 0
    %4425 = vmatpush1.bf16.msra.mxu0 0
    %4426 = vmatprep.subr.bf16.mxu0 0
    %4427 = vmatpush1.bf16.msra.mxu0 0
    %4428 = vmatprep.subr.bf16.mxu0 0
    %4429 = vmatpush1.bf16.msra.mxu0 0
    %4430 = vmatprep.subr.bf16.mxu0 0
    %4431 = vmatpush1.bf16.msra.mxu0 0
    %4432 = vmatprep.subr.bf16.mxu0 0
    %4433 = vmatpush1.bf16.msra.mxu0 0
    %4434 = vmatprep.subr.bf16.mxu0 0
    %4435 = vmatpush1.bf16.msra.mxu0 0
    %4436 = vmatprep.subr.bf16.mxu0 0
    %4437 = vmatpush1.bf16.msra.mxu0 0
    %4438 = vmatprep.subr.bf16.mxu0 0
    %4439 = vmatpush1.bf16.msra.mxu0 0
    %4440 = vmatprep.subr.bf16.mxu0 0
    %4441 = vmatpush1.bf16.msra.mxu0 0
    %4442 = vmatprep.subr.bf16.mxu0 0
    %4443 = vmatpush1.bf16.msra.mxu0 0
    %4444 = vmatprep.subr.bf16.mxu0 0
    %4445 = vmatpush1.bf16.msra.mxu0 0
    %4446 = vmatprep.subr.bf16.mxu0 0
    %4447 = vmatpush1.bf16.msra.mxu0 0
    %4448 = vmatprep.subr.bf16.mxu0 0
    %4449 = vmatpush1.bf16.msra.mxu0 0
    %4450 = vmatprep.subr.bf16.mxu0 0
    %4451 = vmatpush1.bf16.msra.mxu0 0
    %4452 = vmatprep.subr.bf16.mxu0 0
    %4453 = vmatpush1.bf16.msra.mxu0 0
    %4454 = vmatprep.mubr.bf16.mxu0 0
    %4455 = vmatmul.mubr.bf16.gmra.mrb[0].mxu0 %v4417
    %v4456 = vpop.f32.mrb[0].mxu0
    %v4457 = vadd.f32 %v4402, %v4456
    %v4458 = vpop.f32.mrb[0].mxu0
    %v4459 = vpop.f32.mrb[0].mxu0
    %v4460 = vadd.f32 %v4405, %v4459
    %v4461 = vpop.f32.mrb[0].mxu0
    %4462 = vmatprep.mubr.bf16.mxu0 0
    %4463 = vmatmul.mubr.bf16.gmra.mrb[0].mxu0 %v4420
    %v4464 = vpop.f32.mrb[0].mxu0
    %v4465 = vadd.f32 %v4410, %v4464
    %v4466 = vpop.f32.mrb[0].mxu0
    %v4467 = vpop.f32.mrb[0].mxu0
    %v4468 = vadd.f32 %v4413, %v4467
    %v4469 = vpop.f32.mrb[0].mxu0
    %4470 = vdwg.mxu0
    %v4471 = vadd.f32 %v3448, %v4457
    %v4472 = vadd.f32 %v3449, %v4460
    %v4473 = vadd.f32 %v3450, %v4465
    %v4474 = vadd.f32 %v3451, %v4468
    %v4475 = vld [vmem:[%s65] sm:$0x1]
    %v4477 = vlaneseq
    %v4478 = vshrl.u32 %v4477, 7
    %v4479 = vsub.s32 0, %v4478
    %v4480 = vrot.slane %v4475, %v4479
    %v4482 = vadd.f32 %v4471, %v4480
    %v4483 = vadd.f32 %v4472, %v4480
    %v4484 = vadd.f32 %v4473, %v4480
    %v4485 = vadd.f32 %v4474, %v4480
    %v4486 = vld [vmem:[%s67] sm:$0x1]
    %v4487 = vld [vmem:[%s69] sm:$0x1]
    %v4488 = vsel %vm266, %v4482, 0.0
    %4489 = vadd.xlane.f32.xlu0 %v4488
    %v4490 = vpop.xlane.xlu0 %4489
    %v4491 = vsel %vm266, %v4483, 0.0
    %4492 = vadd.xlane.f32.xlu0 %v4491
    %v4493 = vpop.xlane.xlu0 %4492
    %v4494 = vsel %vm266, %v4484, 0.0
    %4495 = vadd.xlane.f32.xlu0 %v4494
    %v4496 = vpop.xlane.xlu0 %4495
    %v4497 = vsel %vm266, %v4485, 0.0
    %4498 = vadd.xlane.f32.xlu0 %v4497
    %v4499 = vpop.xlane.xlu0 %4498
    %v4500 = vmul.f32 %v4490, %v273
    %v4501 = vmul.f32 %v4493, %v273
    %v4502 = vmul.f32 %v4496, %v273
    %v4503 = vmul.f32 %v4499, %v273
    %v4504 = vsub.f32 %v4482, %v4500
    %v4505 = vsub.f32 %v4483, %v4501
    %v4506 = vsub.f32 %v4484, %v4502
    %v4507 = vsub.f32 %v4485, %v4503
    %v4508 = vmul.f32 %v4504, %v4504
    %v4509 = vmul.f32 %v4505, %v4505
    %v4510 = vmul.f32 %v4506, %v4506
    %v4511 = vmul.f32 %v4507, %v4507
    %v4512 = vsel %vm266, %v4508, 0.0
    %4513 = vadd.xlane.f32.xlu0 %v4512
    %v4514 = vpop.xlane.xlu0 %4513
    %v4515 = vsel %vm266, %v4509, 0.0
    %4516 = vadd.xlane.f32.xlu0 %v4515
    %v4517 = vpop.xlane.xlu0 %4516
    %v4518 = vsel %vm266, %v4510, 0.0
    %4519 = vadd.xlane.f32.xlu0 %v4518
    %v4520 = vpop.xlane.xlu0 %4519
    %v4521 = vsel %vm266, %v4511, 0.0
    %4522 = vadd.xlane.f32.xlu0 %v4521
    %v4523 = vpop.xlane.xlu0 %4522
    %v4524 = vmul.f32 %v4514, %v273
    %v4525 = vmul.f32 %v4517, %v273
    %v4526 = vmul.f32 %v4520, %v273
    %v4527 = vmul.f32 %v4523, %v273
    %v4528 = vadd.f32 %v4524, 1e-05
    %v4529 = vadd.f32 %v4525, 1e-05
    %v4530 = vadd.f32 %v4526, 1e-05
    %v4531 = vadd.f32 %v4527, 1e-05
    %v4532 = vrsqrt.pop %v4528
    %v4533 = vrsqrt.pop %v4529
    %v4534 = vrsqrt.pop %v4530
    %v4535 = vrsqrt.pop %v4531
    %v4536 = vmul.f32 %v4504, %v4532
    %v4537 = vmul.f32 %v4505, %v4533
    %v4538 = vmul.f32 %v4506, %v4534
    %v4539 = vmul.f32 %v4507, %v4535
    %v4541 = vlaneseq
    %v4542 = vshrl.u32 %v4541, 7
    %v4543 = vsub.s32 0, %v4542
    %v4544 = vrot.slane %v4486, %v4543
    %v4546 = vmul.f32 %v4536, %v4544
    %v4547 = vmul.f32 %v4537, %v4544
    %v4548 = vmul.f32 %v4538, %v4544
    %v4549 = vmul.f32 %v4539, %v4544
    %v4551 = vlaneseq
    %v4552 = vshrl.u32 %v4551, 7
    %v4553 = vsub.s32 0, %v4552
    %v4554 = vrot.slane %v4487, %v4553
    %v4556 = vadd.f32 %v4546, %v4554
    %v4557 = vadd.f32 %v4547, %v4554
    %v4558 = vadd.f32 %v4548, %v4554
    %v4559 = vadd.f32 %v4549, %v4554
    %v4560 = vld [vmem:[%s71] sm:$0xff]
    %v4561 = vld [vmem:[%s71 + $0x8] sm:$0xff]
    %v4562 = vld [vmem:[%s71 + $0x10] sm:$0xff]
    %v4563 = vld [vmem:[%s71 + $0x18] sm:$0xff]
    %v4564 = vpack.c.bf16 %v4557, %v4556
    %v4565 = vpack.c.bf16 %v4559, %v4558
    %v4566 = vpack.c.bf16 %v4561, %v4560
    %v4567 = vpack.c.bf16 %v4563, %v4562
    %v4568 = vld [vmem:[%s73] sm:$0x1]
    %v4570 = vlaneseq
    %v4571 = vshrl.u32 %v4570, 7
    %v4572 = vsub.s32 0, %v4571
    %v4573 = vrot.slane %v4568, %v4572
    %v4576 = vsel %vm266, %v4564, 0
    %v4579 = vsel %vm266, %v4565, 0
    %4581 = vmatprep.subr.bf16.mxu0 0
    %4582 = vmatpush1.bf16.msra.mxu0 %v4566
    %4583 = vmatprep.subr.bf16.mxu0 0
    %4584 = vmatpush1.bf16.msra.mxu0 %v4567
    %4585 = vmatprep.subr.bf16.mxu0 0
    %4586 = vmatpush1.bf16.msra.mxu0 0
    %4587 = vmatprep.subr.bf16.mxu0 0
    %4588 = vmatpush1.bf16.msra.mxu0 0
    %4589 = vmatprep.subr.bf16.mxu0 0
    %4590 = vmatpush1.bf16.msra.mxu0 0
    %4591 = vmatprep.subr.bf16.mxu0 0
    %4592 = vmatpush1.bf16.msra.mxu0 0
    %4593 = vmatprep.subr.bf16.mxu0 0
    %4594 = vmatpush1.bf16.msra.mxu0 0
    %4595 = vmatprep.subr.bf16.mxu0 0
    %4596 = vmatpush1.bf16.msra.mxu0 0
    %4597 = vmatprep.subr.bf16.mxu0 0
    %4598 = vmatpush1.bf16.msra.mxu0 0
    %4599 = vmatprep.subr.bf16.mxu0 0
    %4600 = vmatpush1.bf16.msra.mxu0 0
    %4601 = vmatprep.subr.bf16.mxu0 0
    %4602 = vmatpush1.bf16.msra.mxu0 0
    %4603 = vmatprep.subr.bf16.mxu0 0
    %4604 = vmatpush1.bf16.msra.mxu0 0
    %4605 = vmatprep.subr.bf16.mxu0 0
    %4606 = vmatpush1.bf16.msra.mxu0 0
    %4607 = vmatprep.subr.bf16.mxu0 0
    %4608 = vmatpush1.bf16.msra.mxu0 0
    %4609 = vmatprep.subr.bf16.mxu0 0
    %4610 = vmatpush1.bf16.msra.mxu0 0
    %4611 = vmatprep.subr.bf16.mxu0 0
    %4612 = vmatpush1.bf16.msra.mxu0 0
    %4613 = vmatprep.mubr.bf16.mxu0 0
    %4614 = vmatmul.mubr.bf16.gmra.mrb[0].mxu0 %v4576
    %v4615 = vpop.f32.mrb[0].mxu0
    %v4616 = vadd.f32 %v4573, %v4615
    %v4617 = vpop.f32.mrb[0].mxu0
    %v4618 = vpop.f32.mrb[0].mxu0
    %v4619 = vadd.f32 %v4573, %v4618
    %v4620 = vpop.f32.mrb[0].mxu0
    %4621 = vmatprep.mubr.bf16.mxu0 0
    %4622 = vmatmul.mubr.bf16.gmra.mrb[0].mxu0 %v4579
    %v4623 = vpop.f32.mrb[0].mxu0
    %v4624 = vadd.f32 %v4573, %v4623
    %v4625 = vpop.f32.mrb[0].mxu0
    %v4626 = vpop.f32.mrb[0].mxu0
    %v4627 = vadd.f32 %v4573, %v4626
    %v4628 = vpop.f32.mrb[0].mxu0
    %4629 = vdwg.mxu0
    %v4630 = vmul.f32 %v4616, %v4616
    %v4631 = vmul.f32 %v4619, %v4619
    %v4632 = vmul.f32 %v4624, %v4624
    %v4633 = vmul.f32 %v4627, %v4627
    %v4634 = vmul.f32 %v4616, %v4630
    %v4635 = vmul.f32 %v4619, %v4631
    %v4636 = vmul.f32 %v4624, %v4632
    %v4637 = vmul.f32 %v4627, %v4633
    %v4638 = vmul.f32 %v4634, 0.044715
    %v4639 = vmul.f32 %v4635, 0.044715
    %v4640 = vmul.f32 %v4636, 0.044715
    %v4641 = vmul.f32 %v4637, 0.044715
    %v4642 = vadd.f32 %v4616, %v4638
    %v4643 = vadd.f32 %v4619, %v4639
    %v4644 = vadd.f32 %v4624, %v4640
    %v4645 = vadd.f32 %v4627, %v4641
    %v4646 = vmul.f32 %v4642, 0.7978846
    %v4647 = vmul.f32 %v4643, 0.7978846
    %v4648 = vmul.f32 %v4644, 0.7978846
    %v4649 = vmul.f32 %v4645, 0.7978846
    %v4650 = vtanh.pop %v4646
    %v4651 = vtanh.pop %v4647
    %v4652 = vtanh.pop %v4648
    %v4653 = vtanh.pop %v4649
    %v4654 = vadd.f32 %v4650, 1.0
    %v4655 = vadd.f32 %v4651, 1.0
    %v4656 = vadd.f32 %v4652, 1.0
    %v4657 = vadd.f32 %v4653, 1.0
    %v4658 = vmul.f32 %v4654, 0.5
    %v4659 = vmul.f32 %v4655, 0.5
    %v4660 = vmul.f32 %v4656, 0.5
    %v4661 = vmul.f32 %v4657, 0.5
    %v4662 = vmul.f32 %v4616, %v4658
    %v4663 = vmul.f32 %v4619, %v4659
    %v4664 = vmul.f32 %v4624, %v4660
    %v4665 = vmul.f32 %v4627, %v4661
    %v4666 = vld [vmem:[%s75] sm:$0xff]
    %v4667 = vld [vmem:[%s75 + $0x8] sm:$0xff]
    %v4668 = vld [vmem:[%s75 + $0x10] sm:$0xff]
    %v4669 = vld [vmem:[%s75 + $0x18] sm:$0xff]
    %v4670 = vld [vmem:[%s75 + $0x20] sm:$0xff]
    %v4671 = vld [vmem:[%s75 + $0x28] sm:$0xff]
    %v4672 = vld [vmem:[%s75 + $0x30] sm:$0xff]
    %v4673 = vld [vmem:[%s75 + $0x38] sm:$0xff]
    %v4674 = vpack.c.bf16 %v4663, %v4662
    %v4675 = vpack.c.bf16 %v4665, %v4664
    %v4676 = vpack.c.bf16 %v4667, %v4666
    %v4677 = vpack.c.bf16 %v4669, %v4668
    %v4678 = vpack.c.bf16 %v4671, %v4670
    %v4679 = vpack.c.bf16 %v4673, %v4672
    %v4680 = vld [vmem:[%s77] sm:$0x1]
    %v4682 = vlaneseq
    %v4683 = vshrl.u32 %v4682, 7
    %v4684 = vsub.s32 0, %v4683
    %v4685 = vrot.slane %v4680, %v4684
    %v4688 = vsel %vm216, %v4674, 0
    %v4691 = vsel %vm216, %v4675, 0
    %4693 = vmatprep.subr.bf16.mxu0 0
    %4694 = vmatpush1.bf16.msra.mxu0 %v4676
    %4695 = vmatprep.subr.bf16.mxu0 0
    %4696 = vmatpush1.bf16.msra.mxu0 %v4677
    %4697 = vmatprep.subr.bf16.mxu0 0
    %4698 = vmatpush1.bf16.msra.mxu0 %v4678
    %4699 = vmatprep.subr.bf16.mxu0 0
    %4700 = vmatpush1.bf16.msra.mxu0 %v4679
    %4701 = vmatprep.subr.bf16.mxu0 0
    %4702 = vmatpush1.bf16.msra.mxu0 0
    %4703 = vmatprep.subr.bf16.mxu0 0
    %4704 = vmatpush1.bf16.msra.mxu0 0
    %4705 = vmatprep.subr.bf16.mxu0 0
    %4706 = vmatpush1.bf16.msra.mxu0 0
    %4707 = vmatprep.subr.bf16.mxu0 0
    %4708 = vmatpush1.bf16.msra.mxu0 0
    %4709 = vmatprep.subr.bf16.mxu0 0
    %4710 = vmatpush1.bf16.msra.mxu0 0
    %4711 = vmatprep.subr.bf16.mxu0 0
    %4712 = vmatpush1.bf16.msra.mxu0 0
    %4713 = vmatprep.subr.bf16.mxu0 0
    %4714 = vmatpush1.bf16.msra.mxu0 0
    %4715 = vmatprep.subr.bf16.mxu0 0
    %4716 = vmatpush1.bf16.msra.mxu0 0
    %4717 = vmatprep.subr.bf16.mxu0 0
    %4718 = vmatpush1.bf16.msra.mxu0 0
    %4719 = vmatprep.subr.bf16.mxu0 0
    %4720 = vmatpush1.bf16.msra.mxu0 0
    %4721 = vmatprep.subr.bf16.mxu0 0
    %4722 = vmatpush1.bf16.msra.mxu0 0
    %4723 = vmatprep.subr.bf16.mxu0 0
    %4724 = vmatpush1.bf16.msra.mxu0 0
    %4725 = vmatprep.mubr.bf16.mxu0 0
    %4726 = vmatmul.mubr.bf16.gmra.mrb[0].mxu0 %v4688
    %v4727 = vpop.f32.mrb[0].mxu0
    %v4728 = vadd.f32 %v4685, %v4727
    %v4729 = vpop.f32.mrb[0].mxu0
    %v4730 = vpop.f32.mrb[0].mxu0
    %v4731 = vadd.f32 %v4685, %v4730
    %v4732 = vpop.f32.mrb[0].mxu0
    %4733 = vmatprep.mubr.bf16.mxu0 0
    %4734 = vmatmul.mubr.bf16.gmra.mrb[0].mxu0 %v4691
    %v4735 = vpop.f32.mrb[0].mxu0
    %v4736 = vadd.f32 %v4685, %v4735
    %v4737 = vpop.f32.mrb[0].mxu0
    %v4738 = vpop.f32.mrb[0].mxu0
    %v4739 = vadd.f32 %v4685, %v4738
    %v4740 = vpop.f32.mrb[0].mxu0
    %4741 = vdwg.mxu0
    %v4742 = vadd.f32 %v4482, %v4728
    %v4743 = vadd.f32 %v4483, %v4731
    %v4744 = vadd.f32 %v4484, %v4736
    %v4745 = vadd.f32 %v4485, %v4739
    %s4746 = scalar_lea.vmem %s53, 1
    %v4747 = vld [vmem:[%s4746] sm:$0x1]
    %s4748 = scalar_lea.vmem %s55, 1
    %v4749 = vld [vmem:[%s4748] sm:$0x1]
    %v4750 = vsel %vm266, %v4742, 0.0
    %4751 = vadd.xlane.f32.xlu0 %v4750
    %v4752 = vpop.xlane.xlu0 %4751
    %v4753 = vsel %vm266, %v4743, 0.0
    %4754 = vadd.xlane.f32.xlu0 %v4753
    %v4755 = vpop.xlane.xlu0 %4754
    %v4756 = vsel %vm266, %v4744, 0.0
    %4757 = vadd.xlane.f32.xlu0 %v4756
    %v4758 = vpop.xlane.xlu0 %4757
    %v4759 = vsel %vm266, %v4745, 0.0
    %4760 = vadd.xlane.f32.xlu0 %v4759
    %v4761 = vpop.xlane.xlu0 %4760
    %v4762 = vmul.f32 %v4752, %v273
    %v4763 = vmul.f32 %v4755, %v273
    %v4764 = vmul.f32 %v4758, %v273
    %v4765 = vmul.f32 %v4761, %v273
    %v4766 = vsub.f32 %v4742, %v4762
    %v4767 = vsub.f32 %v4743, %v4763
    %v4768 = vsub.f32 %v4744, %v4764
    %v4769 = vsub.f32 %v4745, %v4765
    %v4770 = vmul.f32 %v4766, %v4766
    %v4771 = vmul.f32 %v4767, %v4767
    %v4772 = vmul.f32 %v4768, %v4768
    %v4773 = vmul.f32 %v4769, %v4769
    %v4774 = vsel %vm266, %v4770, 0.0
    %4775 = vadd.xlane.f32.xlu0 %v4774
    %v4776 = vpop.xlane.xlu0 %4775
    %v4777 = vsel %vm266, %v4771, 0.0
    %4778 = vadd.xlane.f32.xlu0 %v4777
    %v4779 = vpop.xlane.xlu0 %4778
    %v4780 = vsel %vm266, %v4772, 0.0
    %4781 = vadd.xlane.f32.xlu0 %v4780
    %v4782 = vpop.xlane.xlu0 %4781
    %v4783 = vsel %vm266, %v4773, 0.0
    %4784 = vadd.xlane.f32.xlu0 %v4783
    %v4785 = vpop.xlane.xlu0 %4784
    %v4786 = vmul.f32 %v4776, %v273
    %v4787 = vmul.f32 %v4779, %v273
    %v4788 = vmul.f32 %v4782, %v273
    %v4789 = vmul.f32 %v4785, %v273
    %v4790 = vadd.f32 %v4786, 1e-05
    %v4791 = vadd.f32 %v4787, 1e-05
    %v4792 = vadd.f32 %v4788, 1e-05
    %v4793 = vadd.f32 %v4789, 1e-05
    %v4794 = vrsqrt.pop %v4790
    %v4795 = vrsqrt.pop %v4791
    %v4796 = vrsqrt.pop %v4792
    %v4797 = vrsqrt.pop %v4793
    %v4798 = vmul.f32 %v4766, %v4794
    %v4799 = vmul.f32 %v4767, %v4795
    %v4800 = vmul.f32 %v4768, %v4796
    %v4801 = vmul.f32 %v4769, %v4797
    %v4803 = vlaneseq
    %v4804 = vshrl.u32 %v4803, 7
    %v4805 = vsub.s32 0, %v4804
    %v4806 = vrot.slane %v4747, %v4805
    %v4808 = vmul.f32 %v4798, %v4806
    %v4809 = vmul.f32 %v4799, %v4806
    %v4810 = vmul.f32 %v4800, %v4806
    %v4811 = vmul.f32 %v4801, %v4806
    %v4813 = vlaneseq
    %v4814 = vshrl.u32 %v4813, 7
    %v4815 = vsub.s32 0, %v4814
    %v4816 = vrot.slane %v4749, %v4815
    %v4818 = vadd.f32 %v4808, %v4816
    %v4819 = vadd.f32 %v4809, %v4816
    %v4820 = vadd.f32 %v4810, %v4816
    %v4821 = vadd.f32 %v4811, %v4816
    %v4822 = vpack.c.bf16 %v4819, %v4818
    %v4823 = vpack.c.bf16 %v4821, %v4820
    %s4824 = scalar_lea.vmem %s57, 64
    %v4825 = vld [vmem:[%s4824] sm:$0xff]
    %v4826 = vld [vmem:[%s4824 + $0x8] sm:$0xff]
    %v4827 = vld [vmem:[%s4824 + $0x10] sm:$0xff]
    %v4828 = vld [vmem:[%s4824 + $0x18] sm:$0xff]
    %v4829 = vpack.c.bf16 %v4826, %v4825
    %v4830 = vpack.c.bf16 %v4828, %v4827
    %v4832 = vsel %vm266, %v4822, 0
    %v4835 = vsel %vm266, %v4823, 0
    %4837 = vmatprep.subr.bf16.mxu0 0
    %4838 = vmatpush1.bf16.msra.mxu0 %v4829
    %4839 = vmatprep.subr.bf16.mxu0 0
    %4840 = vmatpush1.bf16.msra.mxu0 %v4830
    %4841 = vmatprep.subr.bf16.mxu0 0
    %4842 = vmatpush1.bf16.msra.mxu0 0
    %4843 = vmatprep.subr.bf16.mxu0 0
    %4844 = vmatpush1.bf16.msra.mxu0 0
    %4845 = vmatprep.subr.bf16.mxu0 0
    %4846 = vmatpush1.bf16.msra.mxu0 0
    %4847 = vmatprep.subr.bf16.mxu0 0
    %4848 = vmatpush1.bf16.msra.mxu0 0
    %4849 = vmatprep.subr.bf16.mxu0 0
    %4850 = vmatpush1.bf16.msra.mxu0 0
    %4851 = vmatprep.subr.bf16.mxu0 0
    %4852 = vmatpush1.bf16.msra.mxu0 0
    %4853 = vmatprep.subr.bf16.mxu0 0
    %4854 = vmatpush1.bf16.msra.mxu0 0
    %4855 = vmatprep.subr.bf16.mxu0 0
    %4856 = vmatpush1.bf16.msra.mxu0 0
    %4857 = vmatprep.subr.bf16.mxu0 0
    %4858 = vmatpush1.bf16.msra.mxu0 0
    %4859 = vmatprep.subr.bf16.mxu0 0
    %4860 = vmatpush1.bf16.msra.mxu0 0
    %4861 = vmatprep.subr.bf16.mxu0 0
    %4862 = vmatpush1.bf16.msra.mxu0 0
    %4863 = vmatprep.subr.bf16.mxu0 0
    %4864 = vmatpush1.bf16.msra.mxu0 0
    %4865 = vmatprep.subr.bf16.mxu0 0
    %4866 = vmatpush1.bf16.msra.mxu0 0
    %4867 = vmatprep.subr.bf16.mxu0 0
    %4868 = vmatpush1.bf16.msra.mxu0 0
    %4869 = vmatprep.mubr.bf16.mxu0 0
    %4870 = vmatmul.mubr.bf16.gmra.mrb[0].mxu0 %v4832
    %v4871 = vpop.f32.mrb[0].mxu0
    %v4872 = vadd.f32 0.0, %v4871
    %v4873 = vpop.f32.mrb[0].mxu0
    %v4874 = vpop.f32.mrb[0].mxu0
    %v4875 = vadd.f32 0.0, %v4874
    %v4876 = vpop.f32.mrb[0].mxu0
    %4877 = vmatprep.mubr.bf16.mxu0 0
    %4878 = vmatmul.mubr.bf16.gmra.mrb[0].mxu0 %v4835
    %v4879 = vpop.f32.mrb[0].mxu0
    %v4880 = vadd.f32 0.0, %v4879
    %v4881 = vpop.f32.mrb[0].mxu0
    %v4882 = vpop.f32.mrb[0].mxu0
    %v4883 = vadd.f32 0.0, %v4882
    %v4884 = vpop.f32.mrb[0].mxu0
    %4885 = vdwg.mxu0
    %s4886 = scalar_lea.vmem %s59, 64
    %v4887 = vld [vmem:[%s4886] sm:$0xff]
    %v4888 = vld [vmem:[%s4886 + $0x8] sm:$0xff]
    %v4889 = vld [vmem:[%s4886 + $0x10] sm:$0xff]
    %v4890 = vld [vmem:[%s4886 + $0x18] sm:$0xff]
    %v4891 = vpack.c.bf16 %v4888, %v4887
    %v4892 = vpack.c.bf16 %v4890, %v4889
    %4893 = vmatprep.subr.bf16.mxu0 0
    %4894 = vmatpush1.bf16.msra.mxu0 %v4891
    %4895 = vmatprep.subr.bf16.mxu0 0
    %4896 = vmatpush1.bf16.msra.mxu0 %v4892
    %4897 = vmatprep.subr.bf16.mxu0 0
    %4898 = vmatpush1.bf16.msra.mxu0 0
    %4899 = vmatprep.subr.bf16.mxu0 0
    %4900 = vmatpush1.bf16.msra.mxu0 0
    %4901 = vmatprep.subr.bf16.mxu0 0
    %4902 = vmatpush1.bf16.msra.mxu0 0
    %4903 = vmatprep.subr.bf16.mxu0 0
    %4904 = vmatpush1.bf16.msra.mxu0 0
    %4905 = vmatprep.subr.bf16.mxu0 0
    %4906 = vmatpush1.bf16.msra.mxu0 0
    %4907 = vmatprep.subr.bf16.mxu0 0
    %4908 = vmatpush1.bf16.msra.mxu0 0
    %4909 = vmatprep.subr.bf16.mxu0 0
    %4910 = vmatpush1.bf16.msra.mxu0 0
    %4911 = vmatprep.subr.bf16.mxu0 0
    %4912 = vmatpush1.bf16.msra.mxu0 0
    %4913 = vmatprep.subr.bf16.mxu0 0
    %4914 = vmatpush1.bf16.msra.mxu0 0
    %4915 = vmatprep.subr.bf16.mxu0 0
    %4916 = vmatpush1.bf16.msra.mxu0 0
    %4917 = vmatprep.subr.bf16.mxu0 0
    %4918 = vmatpush1.bf16.msra.mxu0 0
    %4919 = vmatprep.subr.bf16.mxu0 0
    %4920 = vmatpush1.bf16.msra.mxu0 0
    %4921 = vmatprep.subr.bf16.mxu0 0
    %4922 = vmatpush1.bf16.msra.mxu0 0
    %4923 = vmatprep.subr.bf16.mxu0 0
    %4924 = vmatpush1.bf16.msra.mxu0 0
    %4925 = vmatprep.mubr.bf16.mxu0 0
    %4926 = vmatmul.mubr.bf16.gmra.mrb[0].mxu0 %v4832
    %v4927 = vpop.f32.mrb[0].mxu0
    %v4928 = vadd.f32 0.0, %v4927
    %v4929 = vpop.f32.mrb[0].mxu0
    %v4930 = vpop.f32.mrb[0].mxu0
    %v4931 = vadd.f32 0.0, %v4930
    %v4932 = vpop.f32.mrb[0].mxu0
    %4933 = vmatprep.mubr.bf16.mxu0 0
    %4934 = vmatmul.mubr.bf16.gmra.mrb[0].mxu0 %v4835
    %v4935 = vpop.f32.mrb[0].mxu0
    %v4936 = vadd.f32 0.0, %v4935
    %v4937 = vpop.f32.mrb[0].mxu0
    %v4938 = vpop.f32.mrb[0].mxu0
    %v4939 = vadd.f32 0.0, %v4938
    %v4940 = vpop.f32.mrb[0].mxu0
    %4941 = vdwg.mxu0
    %s4942 = scalar_lea.vmem %s61, 64
    %v4943 = vld [vmem:[%s4942] sm:$0xff]
    %v4944 = vld [vmem:[%s4942 + $0x8] sm:$0xff]
    %v4945 = vld [vmem:[%s4942 + $0x10] sm:$0xff]
    %v4946 = vld [vmem:[%s4942 + $0x18] sm:$0xff]
    %v4947 = vpack.c.bf16 %v4944, %v4943
    %v4948 = vpack.c.bf16 %v4946, %v4945
    %4949 = vmatprep.subr.bf16.mxu0 0
    %4950 = vmatpush1.bf16.msra.mxu0 %v4947
    %4951 = vmatprep.subr.bf16.mxu0 0
    %4952 = vmatpush1.bf16.msra.mxu0 %v4948
    %4953 = vmatprep.subr.bf16.mxu0 0
    %4954 = vmatpush1.bf16.msra.mxu0 0
    %4955 = vmatprep.subr.bf16.mxu0 0
    %4956 = vmatpush1.bf16.msra.mxu0 0
    %4957 = vmatprep.subr.bf16.mxu0 0
    %4958 = vmatpush1.bf16.msra.mxu0 0
    %4959 = vmatprep.subr.bf16.mxu0 0
    %4960 = vmatpush1.bf16.msra.mxu0 0
    %4961 = vmatprep.subr.bf16.mxu0 0
    %4962 = vmatpush1.bf16.msra.mxu0 0
    %4963 = vmatprep.subr.bf16.mxu0 0
    %4964 = vmatpush1.bf16.msra.mxu0 0
    %4965 = vmatprep.subr.bf16.mxu0 0
    %4966 = vmatpush1.bf16.msra.mxu0 0
    %4967 = vmatprep.subr.bf16.mxu0 0
    %4968 = vmatpush1.bf16.msra.mxu0 0
    %4969 = vmatprep.subr.bf16.mxu0 0
    %4970 = vmatpush1.bf16.msra.mxu0 0
    %4971 = vmatprep.subr.bf16.mxu0 0
    %4972 = vmatpush1.bf16.msra.mxu0 0
    %4973 = vmatprep.subr.bf16.mxu0 0
    %4974 = vmatpush1.bf16.msra.mxu0 0
    %4975 = vmatprep.subr.bf16.mxu0 0
    %4976 = vmatpush1.bf16.msra.mxu0 0
    %4977 = vmatprep.subr.bf16.mxu0 0
    %4978 = vmatpush1.bf16.msra.mxu0 0
    %4979 = vmatprep.subr.bf16.mxu0 0
    %4980 = vmatpush1.bf16.msra.mxu0 0
    %4981 = vmatprep.mubr.bf16.mxu0 0
    %4982 = vmatmul.mubr.bf16.gmra.mrb[0].mxu0 %v4832
    %v4983 = vpop.f32.mrb[0].mxu0
    %v4984 = vadd.f32 0.0, %v4983
    %v4985 = vpop.f32.mrb[0].mxu0
    %v4986 = vpop.f32.mrb[0].mxu0
    %v4987 = vadd.f32 0.0, %v4986
    %v4988 = vpop.f32.mrb[0].mxu0
    %4989 = vmatprep.mubr.bf16.mxu0 0
    %4990 = vmatmul.mubr.bf16.gmra.mrb[0].mxu0 %v4835
    %v4991 = vpop.f32.mrb[0].mxu0
    %v4992 = vadd.f32 0.0, %v4991
    %v4993 = vpop.f32.mrb[0].mxu0
    %v4994 = vpop.f32.mrb[0].mxu0
    %v4995 = vadd.f32 0.0, %v4994
    %v4996 = vpop.f32.mrb[0].mxu0
    %4997 = vdwg.mxu0
    %v4998 = vmul.f32 %v4872, 0.25
    %v4999 = vmul.f32 %v4875, 0.25
    %v5000 = vmul.f32 %v4880, 0.25
    %v5001 = vmul.f32 %v4883, 0.25
    %v5002 = vpack.c.bf16 %v4999, %v4998
    %v5003 = vpack.c.bf16 %v5001, %v5000
    %v5004 = vpack.c.bf16 %v4931, %v4928
    %v5005 = vpack.c.bf16 %v4939, %v4936
    %v5007 = vsel %vm467, %v5002, 0
    %v5010 = vsel %vm467, %v5004, 0
    %5012 = vmatprep.subr.bf16.mxu0 0
    %5013 = vmatpush1.bf16.xpose.msra.mxu0 %v5010
    %5014 = vmatprep.subr.bf16.mxu0 0
    %5015 = vmatpush1.bf16.xpose.msra.mxu0 0
    %5016 = vmatprep.subr.bf16.mxu0 0
    %5017 = vmatpush1.bf16.xpose.msra.mxu0 0
    %5018 = vmatprep.subr.bf16.mxu0 0
    %5019 = vmatpush1.bf16.xpose.msra.mxu0 0
    %5020 = vmatprep.subr.bf16.mxu0 0
    %5021 = vmatpush1.bf16.xpose.msra.mxu0 0
    %5022 = vmatprep.subr.bf16.mxu0 0
    %5023 = vmatpush1.bf16.xpose.msra.mxu0 0
    %5024 = vmatprep.subr.bf16.mxu0 0
    %5025 = vmatpush1.bf16.xpose.msra.mxu0 0
    %5026 = vmatprep.subr.bf16.mxu0 0
    %5027 = vmatpush1.bf16.xpose.msra.mxu0 0
    %5028 = vmatprep.subr.bf16.mxu0 0
    %5029 = vmatpush1.bf16.xpose.msra.mxu0 0
    %5030 = vmatprep.subr.bf16.mxu0 0
    %5031 = vmatpush1.bf16.xpose.msra.mxu0 0
    %5032 = vmatprep.subr.bf16.mxu0 0
    %5033 = vmatpush1.bf16.xpose.msra.mxu0 0
    %5034 = vmatprep.subr.bf16.mxu0 0
    %5035 = vmatpush1.bf16.xpose.msra.mxu0 0
    %5036 = vmatprep.subr.bf16.mxu0 0
    %5037 = vmatpush1.bf16.xpose.msra.mxu0 0
    %5038 = vmatprep.subr.bf16.mxu0 0
    %5039 = vmatpush1.bf16.xpose.msra.mxu0 0
    %5040 = vmatprep.subr.bf16.mxu0 0
    %5041 = vmatpush1.bf16.xpose.msra.mxu0 0
    %5042 = vmatprep.subr.bf16.mxu0 0
    %5043 = vmatpush1.bf16.xpose.msra.mxu0 0
    %5044 = vmatprep.mubr.bf16.mxu0 0
    %5045 = vmatmul.mubr.bf16.gmra.mrb[0].mxu0 %v5007
    %v5046 = vpop.f32.mrb[0].mxu0
    %v5047 = vadd.f32 %v3457, %v5046
    %v5048 = vpop.f32.mrb[0].mxu0
    %v5049 = vpop.f32.mrb[0].mxu0
    %v5050 = vadd.f32 %v3458, %v5049
    %v5051 = vpop.f32.mrb[0].mxu0
    %5052 = vdwg.mxu0
    %v5054 = vsel %vm467, %v5003, 0
    %v5057 = vsel %vm467, %v5005, 0
    %5059 = vmatprep.subr.bf16.mxu0 0
    %5060 = vmatpush1.bf16.xpose.msra.mxu0 %v5057
    %5061 = vmatprep.subr.bf16.mxu0 0
    %5062 = vmatpush1.bf16.xpose.msra.mxu0 0
    %5063 = vmatprep.subr.bf16.mxu0 0
    %5064 = vmatpush1.bf16.xpose.msra.mxu0 0
    %5065 = vmatprep.subr.bf16.mxu0 0
    %5066 = vmatpush1.bf16.xpose.msra.mxu0 0
    %5067 = vmatprep.subr.bf16.mxu0 0
    %5068 = vmatpush1.bf16.xpose.msra.mxu0 0
    %5069 = vmatprep.subr.bf16.mxu0 0
    %5070 = vmatpush1.bf16.xpose.msra.mxu0 0
    %5071 = vmatprep.subr.bf16.mxu0 0
    %5072 = vmatpush1.bf16.xpose.msra.mxu0 0
    %5073 = vmatprep.subr.bf16.mxu0 0
    %5074 = vmatpush1.bf16.xpose.msra.mxu0 0
    %5075 = vmatprep.subr.bf16.mxu0 0
    %5076 = vmatpush1.bf16.xpose.msra.mxu0 0
    %5077 = vmatprep.subr.bf16.mxu0 0
    %5078 = vmatpush1.bf16.xpose.msra.mxu0 0
    %5079 = vmatprep.subr.bf16.mxu0 0
    %5080 = vmatpush1.bf16.xpose.msra.mxu0 0
    %5081 = vmatprep.subr.bf16.mxu0 0
    %5082 = vmatpush1.bf16.xpose.msra.mxu0 0
    %5083 = vmatprep.subr.bf16.mxu0 0
    %5084 = vmatpush1.bf16.xpose.msra.mxu0 0
    %5085 = vmatprep.subr.bf16.mxu0 0
    %5086 = vmatpush1.bf16.xpose.msra.mxu0 0
    %5087 = vmatprep.subr.bf16.mxu0 0
    %5088 = vmatpush1.bf16.xpose.msra.mxu0 0
    %5089 = vmatprep.subr.bf16.mxu0 0
    %5090 = vmatpush1.bf16.xpose.msra.mxu0 0
    %5091 = vmatprep.mubr.bf16.mxu0 0
    %5092 = vmatmul.mubr.bf16.gmra.mrb[0].mxu0 %v5054
    %v5093 = vpop.f32.mrb[0].mxu0
    %v5094 = vadd.f32 %v3457, %v5093
    %v5095 = vpop.f32.mrb[0].mxu0
    %v5096 = vpop.f32.mrb[0].mxu0
    %v5097 = vadd.f32 %v3458, %v5096
    %v5098 = vpop.f32.mrb[0].mxu0
    %5099 = vdwg.mxu0
    %v5100 = vsel %vm467, %v5047, -inf
    %5101 = vmax.xlane.f32.xlu0 %v5100
    %v5102 = vpop.xlane.xlu0 %5101
    %v5103 = vsel %vm467, %v5050, -inf
    %5104 = vmax.xlane.f32.xlu0 %v5103
    %v5105 = vpop.xlane.xlu0 %5104
    %v5106 = vsel %vm467, %v5094, -inf
    %5107 = vmax.xlane.f32.xlu0 %v5106
    %v5108 = vpop.xlane.xlu0 %5107
    %v5109 = vsel %vm467, %v5097, -inf
    %5110 = vmax.xlane.f32.xlu0 %v5109
    %v5111 = vpop.xlane.xlu0 %5110
    %v5112 = vsub.f32 %v5047, %v5102
    %v5113 = vsub.f32 %v5050, %v5105
    %v5114 = vsub.f32 %v5094, %v5108
    %v5115 = vsub.f32 %v5097, %v5111
    %v5116 = vmul.f32 %v5112, 1.442695
    %v5117 = vpow.pop %v5116
    %v5118 = vmul.f32 %v5113, 1.442695
    %v5119 = vpow.pop %v5118
    %v5120 = vmul.f32 %v5114, 1.442695
    %v5121 = vpow.pop %v5120
    %v5122 = vmul.f32 %v5115, 1.442695
    %v5123 = vpow.pop %v5122
    %v5124 = vsel %vm467, %v5117, 0.0
    %5125 = vadd.xlane.f32.xlu0 %v5124
    %v5126 = vpop.xlane.xlu0 %5125
    %v5127 = vsel %vm467, %v5119, 0.0
    %5128 = vadd.xlane.f32.xlu0 %v5127
    %v5129 = vpop.xlane.xlu0 %5128
    %v5130 = vsel %vm467, %v5121, 0.0
    %5131 = vadd.xlane.f32.xlu0 %v5130
    %v5132 = vpop.xlane.xlu0 %5131
    %v5133 = vsel %vm467, %v5123, 0.0
    %5134 = vadd.xlane.f32.xlu0 %v5133
    %v5135 = vpop.xlane.xlu0 %5134
    %v5136 = vrcp.pop %v5126
    %v5137 = vrcp.pop %v5129
    %v5138 = vrcp.pop %v5132
    %v5139 = vrcp.pop %v5135
    %v5140 = vmul.f32 %v5117, %v5136
    %v5141 = vmul.f32 %v5119, %v5137
    %v5142 = vmul.f32 %v5121, %v5138
    %v5143 = vmul.f32 %v5123, %v5139
    %v5144 = vpack.c.bf16 %v5141, %v5140
    %v5145 = vpack.c.bf16 %v5143, %v5142
    %v5146 = vpack.c.bf16 %v4987, %v4984
    %v5147 = vpack.c.bf16 %v4995, %v4992
    %v5149 = vsel %vm467, %v5144, 0
    %5151 = vmatprep.subr.bf16.mxu0 0
    %5152 = vmatpush1.bf16.msra.mxu0 %v5146
    %5153 = vmatprep.subr.bf16.mxu0 0
    %5154 = vmatpush1.bf16.msra.mxu0 0
    %5155 = vmatprep.subr.bf16.mxu0 0
    %5156 = vmatpush1.bf16.msra.mxu0 0
    %5157 = vmatprep.subr.bf16.mxu0 0
    %5158 = vmatpush1.bf16.msra.mxu0 0
    %5159 = vmatprep.subr.bf16.mxu0 0
    %5160 = vmatpush1.bf16.msra.mxu0 0
    %5161 = vmatprep.subr.bf16.mxu0 0
    %5162 = vmatpush1.bf16.msra.mxu0 0
    %5163 = vmatprep.subr.bf16.mxu0 0
    %5164 = vmatpush1.bf16.msra.mxu0 0
    %5165 = vmatprep.subr.bf16.mxu0 0
    %5166 = vmatpush1.bf16.msra.mxu0 0
    %5167 = vmatprep.subr.bf16.mxu0 0
    %5168 = vmatpush1.bf16.msra.mxu0 0
    %5169 = vmatprep.subr.bf16.mxu0 0
    %5170 = vmatpush1.bf16.msra.mxu0 0
    %5171 = vmatprep.subr.bf16.mxu0 0
    %5172 = vmatpush1.bf16.msra.mxu0 0
    %5173 = vmatprep.subr.bf16.mxu0 0
    %5174 = vmatpush1.bf16.msra.mxu0 0
    %5175 = vmatprep.subr.bf16.mxu0 0
    %5176 = vmatpush1.bf16.msra.mxu0 0
    %5177 = vmatprep.subr.bf16.mxu0 0
    %5178 = vmatpush1.bf16.msra.mxu0 0
    %5179 = vmatprep.subr.bf16.mxu0 0
    %5180 = vmatpush1.bf16.msra.mxu0 0
    %5181 = vmatprep.subr.bf16.mxu0 0
    %5182 = vmatpush1.bf16.msra.mxu0 0
    %5183 = vmatprep.mubr.bf16.mxu0 0
    %5184 = vmatmul.mubr.bf16.gmra.mrb[0].mxu0 %v5149
    %v5185 = vpop.f32.mrb[0].mxu0
    %v5186 = vadd.f32 0.0, %v5185
    %v5187 = vpop.f32.mrb[0].mxu0
    %v5188 = vpop.f32.mrb[0].mxu0
    %v5189 = vadd.f32 0.0, %v5188
    %v5190 = vpop.f32.mrb[0].mxu0
    %5191 = vdwg.mxu0
    %v5193 = vsel %vm467, %v5145, 0
    %5195 = vmatprep.subr.bf16.mxu0 0
    %5196 = vmatpush1.bf16.msra.mxu0 %v5147
    %5197 = vmatprep.subr.bf16.mxu0 0
    %5198 = vmatpush1.bf16.msra.mxu0 0
    %5199 = vmatprep.subr.bf16.mxu0 0
    %5200 = vmatpush1.bf16.msra.mxu0 0
    %5201 = vmatprep.subr.bf16.mxu0 0
    %5202 = vmatpush1.bf16.msra.mxu0 0
    %5203 = vmatprep.subr.bf16.mxu0 0
    %5204 = vmatpush1.bf16.msra.mxu0 0
    %5205 = vmatprep.subr.bf16.mxu0 0
    %5206 = vmatpush1.bf16.msra.mxu0 0
    %5207 = vmatprep.subr.bf16.mxu0 0
    %5208 = vmatpush1.bf16.msra.mxu0 0
    %5209 = vmatprep.subr.bf16.mxu0 0
    %5210 = vmatpush1.bf16.msra.mxu0 0
    %5211 = vmatprep.subr.bf16.mxu0 0
    %5212 = vmatpush1.bf16.msra.mxu0 0
    %5213 = vmatprep.subr.bf16.mxu0 0
    %5214 = vmatpush1.bf16.msra.mxu0 0
    %5215 = vmatprep.subr.bf16.mxu0 0
    %5216 = vmatpush1.bf16.msra.mxu0 0
    %5217 = vmatprep.subr.bf16.mxu0 0
    %5218 = vmatpush1.bf16.msra.mxu0 0
    %5219 = vmatprep.subr.bf16.mxu0 0
    %5220 = vmatpush1.bf16.msra.mxu0 0
    %5221 = vmatprep.subr.bf16.mxu0 0
    %5222 = vmatpush1.bf16.msra.mxu0 0
    %5223 = vmatprep.subr.bf16.mxu0 0
    %5224 = vmatpush1.bf16.msra.mxu0 0
    %5225 = vmatprep.subr.bf16.mxu0 0
    %5226 = vmatpush1.bf16.msra.mxu0 0
    %5227 = vmatprep.mubr.bf16.mxu0 0
    %5228 = vmatmul.mubr.bf16.gmra.mrb[0].mxu0 %v5193
    %v5229 = vpop.f32.mrb[0].mxu0
    %v5230 = vadd.f32 0.0, %v5229
    %v5231 = vpop.f32.mrb[0].mxu0
    %v5232 = vpop.f32.mrb[0].mxu0
    %v5233 = vadd.f32 0.0, %v5232
    %v5234 = vpop.f32.mrb[0].mxu0
    %5235 = vdwg.mxu0
    %v5236 = vpack.c.bf16 %v5189, %v5186
    %v5237 = vpack.c.bf16 %v5233, %v5230
    %s5238 = scalar_lea.vmem %s63, 32
    %v5239 = vld [vmem:[%s5238] sm:$0xff]
    %v5240 = vld [vmem:[%s5238 + $0x8] sm:$0xff]
    %v5241 = vpack.c.bf16 %v5240, %v5239
    %s5242 = scalar_lea.vmem %s57, 96
    %v5243 = vld [vmem:[%s5242] sm:$0xff]
    %v5244 = vld [vmem:[%s5242 + $0x8] sm:$0xff]
    %v5245 = vld [vmem:[%s5242 + $0x10] sm:$0xff]
    %v5246 = vld [vmem:[%s5242 + $0x18] sm:$0xff]
    %v5247 = vpack.c.bf16 %v5244, %v5243
    %v5248 = vpack.c.bf16 %v5246, %v5245
    %5249 = vmatprep.subr.bf16.mxu0 0
    %5250 = vmatpush1.bf16.msra.mxu0 %v5247
    %5251 = vmatprep.subr.bf16.mxu0 0
    %5252 = vmatpush1.bf16.msra.mxu0 %v5248
    %5253 = vmatprep.subr.bf16.mxu0 0
    %5254 = vmatpush1.bf16.msra.mxu0 0
    %5255 = vmatprep.subr.bf16.mxu0 0
    %5256 = vmatpush1.bf16.msra.mxu0 0
    %5257 = vmatprep.subr.bf16.mxu0 0
    %5258 = vmatpush1.bf16.msra.mxu0 0
    %5259 = vmatprep.subr.bf16.mxu0 0
    %5260 = vmatpush1.bf16.msra.mxu0 0
    %5261 = vmatprep.subr.bf16.mxu0 0
    %5262 = vmatpush1.bf16.msra.mxu0 0
    %5263 = vmatprep.subr.bf16.mxu0 0
    %5264 = vmatpush1.bf16.msra.mxu0 0
    %5265 = vmatprep.subr.bf16.mxu0 0
    %5266 = vmatpush1.bf16.msra.mxu0 0
    %5267 = vmatprep.subr.bf16.mxu0 0
    %5268 = vmatpush1.bf16.msra.mxu0 0
    %5269 = vmatprep.subr.bf16.mxu0 0
    %5270 = vmatpush1.bf16.msra.mxu0 0
    %5271 = vmatprep.subr.bf16.mxu0 0
    %5272 = vmatpush1.bf16.msra.mxu0 0
    %5273 = vmatprep.subr.bf16.mxu0 0
    %5274 = vmatpush1.bf16.msra.mxu0 0
    %5275 = vmatprep.subr.bf16.mxu0 0
    %5276 = vmatpush1.bf16.msra.mxu0 0
    %5277 = vmatprep.subr.bf16.mxu0 0
    %5278 = vmatpush1.bf16.msra.mxu0 0
    %5279 = vmatprep.subr.bf16.mxu0 0
    %5280 = vmatpush1.bf16.msra.mxu0 0
    %5281 = vmatprep.mubr.bf16.mxu0 0
    %5282 = vmatmul.mubr.bf16.gmra.mrb[0].mxu0 %v4832
    %v5283 = vpop.f32.mrb[0].mxu0
    %v5284 = vadd.f32 0.0, %v5283
    %v5285 = vpop.f32.mrb[0].mxu0
    %v5286 = vpop.f32.mrb[0].mxu0
    %v5287 = vadd.f32 0.0, %v5286
    %v5288 = vpop.f32.mrb[0].mxu0
    %5289 = vmatprep.mubr.bf16.mxu0 0
    %5290 = vmatmul.mubr.bf16.gmra.mrb[0].mxu0 %v4835
    %v5291 = vpop.f32.mrb[0].mxu0
    %v5292 = vadd.f32 0.0, %v5291
    %v5293 = vpop.f32.mrb[0].mxu0
    %v5294 = vpop.f32.mrb[0].mxu0
    %v5295 = vadd.f32 0.0, %v5294
    %v5296 = vpop.f32.mrb[0].mxu0
    %5297 = vdwg.mxu0
    %s5298 = scalar_lea.vmem %s59, 96
    %v5299 = vld [vmem:[%s5298] sm:$0xff]
    %v5300 = vld [vmem:[%s5298 + $0x8] sm:$0xff]
    %v5301 = vld [vmem:[%s5298 + $0x10] sm:$0xff]
    %v5302 = vld [vmem:[%s5298 + $0x18] sm:$0xff]
    %v5303 = vpack.c.bf16 %v5300, %v5299
    %v5304 = vpack.c.bf16 %v5302, %v5301
    %5305 = vmatprep.subr.bf16.mxu0 0
    %5306 = vmatpush1.bf16.msra.mxu0 %v5303
    %5307 = vmatprep.subr.bf16.mxu0 0
    %5308 = vmatpush1.bf16.msra.mxu0 %v5304
    %5309 = vmatprep.subr.bf16.mxu0 0
    %5310 = vmatpush1.bf16.msra.mxu0 0
    %5311 = vmatprep.subr.bf16.mxu0 0
    %5312 = vmatpush1.bf16.msra.mxu0 0
    %5313 = vmatprep.subr.bf16.mxu0 0
    %5314 = vmatpush1.bf16.msra.mxu0 0
    %5315 = vmatprep.subr.bf16.mxu0 0
    %5316 = vmatpush1.bf16.msra.mxu0 0
    %5317 = vmatprep.subr.bf16.mxu0 0
    %5318 = vmatpush1.bf16.msra.mxu0 0
    %5319 = vmatprep.subr.bf16.mxu0 0
    %5320 = vmatpush1.bf16.msra.mxu0 0
    %5321 = vmatprep.subr.bf16.mxu0 0
    %5322 = vmatpush1.bf16.msra.mxu0 0
    %5323 = vmatprep.subr.bf16.mxu0 0
    %5324 = vmatpush1.bf16.msra.mxu0 0
    %5325 = vmatprep.subr.bf16.mxu0 0
    %5326 = vmatpush1.bf16.msra.mxu0 0
    %5327 = vmatprep.subr.bf16.mxu0 0
    %5328 = vmatpush1.bf16.msra.mxu0 0
    %5329 = vmatprep.subr.bf16.mxu0 0
    %5330 = vmatpush1.bf16.msra.mxu0 0
    %5331 = vmatprep.subr.bf16.mxu0 0
    %5332 = vmatpush1.bf16.msra.mxu0 0
    %5333 = vmatprep.subr.bf16.mxu0 0
    %5334 = vmatpush1.bf16.msra.mxu0 0
    %5335 = vmatprep.subr.bf16.mxu0 0
    %5336 = vmatpush1.bf16.msra.mxu0 0
    %5337 = vmatprep.mubr.bf16.mxu0 0
    %5338 = vmatmul.mubr.bf16.gmra.mrb[0].mxu0 %v4832
    %v5339 = vpop.f32.mrb[0].mxu0
    %v5340 = vadd.f32 0.0, %v5339
    %v5341 = vpop.f32.mrb[0].mxu0
    %v5342 = vpop.f32.mrb[0].mxu0
    %v5343 = vadd.f32 0.0, %v5342
    %v5344 = vpop.f32.mrb[0].mxu0
    %5345 = vmatprep.mubr.bf16.mxu0 0
    %5346 = vmatmul.mubr.bf16.gmra.mrb[0].mxu0 %v4835
    %v5347 = vpop.f32.mrb[0].mxu0
    %v5348 = vadd.f32 0.0, %v5347
    %v5349 = vpop.f32.mrb[0].mxu0
    %v5350 = vpop.f32.mrb[0].mxu0
    %v5351 = vadd.f32 0.0, %v5350
    %v5352 = vpop.f32.mrb[0].mxu0
    %5353 = vdwg.mxu0
    %s5354 = scalar_lea.vmem %s61, 96
    %v5355 = vld [vmem:[%s5354] sm:$0xff]
    %v5356 = vld [vmem:[%s5354 + $0x8] sm:$0xff]
    %v5357 = vld [vmem:[%s5354 + $0x10] sm:$0xff]
    %v5358 = vld [vmem:[%s5354 + $0x18] sm:$0xff]
    %v5359 = vpack.c.bf16 %v5356, %v5355
    %v5360 = vpack.c.bf16 %v5358, %v5357
    %5361 = vmatprep.subr.bf16.mxu0 0
    %5362 = vmatpush1.bf16.msra.mxu0 %v5359
    %5363 = vmatprep.subr.bf16.mxu0 0
    %5364 = vmatpush1.bf16.msra.mxu0 %v5360
    %5365 = vmatprep.subr.bf16.mxu0 0
    %5366 = vmatpush1.bf16.msra.mxu0 0
    %5367 = vmatprep.subr.bf16.mxu0 0
    %5368 = vmatpush1.bf16.msra.mxu0 0
    %5369 = vmatprep.subr.bf16.mxu0 0
    %5370 = vmatpush1.bf16.msra.mxu0 0
    %5371 = vmatprep.subr.bf16.mxu0 0
    %5372 = vmatpush1.bf16.msra.mxu0 0
    %5373 = vmatprep.subr.bf16.mxu0 0
    %5374 = vmatpush1.bf16.msra.mxu0 0
    %5375 = vmatprep.subr.bf16.mxu0 0
    %5376 = vmatpush1.bf16.msra.mxu0 0
    %5377 = vmatprep.subr.bf16.mxu0 0
    %5378 = vmatpush1.bf16.msra.mxu0 0
    %5379 = vmatprep.subr.bf16.mxu0 0
    %5380 = vmatpush1.bf16.msra.mxu0 0
    %5381 = vmatprep.subr.bf16.mxu0 0
    %5382 = vmatpush1.bf16.msra.mxu0 0
    %5383 = vmatprep.subr.bf16.mxu0 0
    %5384 = vmatpush1.bf16.msra.mxu0 0
    %5385 = vmatprep.subr.bf16.mxu0 0
    %5386 = vmatpush1.bf16.msra.mxu0 0
    %5387 = vmatprep.subr.bf16.mxu0 0
    %5388 = vmatpush1.bf16.msra.mxu0 0
    %5389 = vmatprep.subr.bf16.mxu0 0
    %5390 = vmatpush1.bf16.msra.mxu0 0
    %5391 = vmatprep.subr.bf16.mxu0 0
    %5392 = vmatpush1.bf16.msra.mxu0 0
    %5393 = vmatprep.mubr.bf16.mxu0 0
    %5394 = vmatmul.mubr.bf16.gmra.mrb[0].mxu0 %v4832
    %v5395 = vpop.f32.mrb[0].mxu0
    %v5396 = vadd.f32 0.0, %v5395
    %v5397 = vpop.f32.mrb[0].mxu0
    %v5398 = vpop.f32.mrb[0].mxu0
    %v5399 = vadd.f32 0.0, %v5398
    %v5400 = vpop.f32.mrb[0].mxu0
    %5401 = vmatprep.mubr.bf16.mxu0 0
    %5402 = vmatmul.mubr.bf16.gmra.mrb[0].mxu0 %v4835
    %v5403 = vpop.f32.mrb[0].mxu0
    %v5404 = vadd.f32 0.0, %v5403
    %v5405 = vpop.f32.mrb[0].mxu0
    %v5406 = vpop.f32.mrb[0].mxu0
    %v5407 = vadd.f32 0.0, %v5406
    %v5408 = vpop.f32.mrb[0].mxu0
    %5409 = vdwg.mxu0
    %v5410 = vmul.f32 %v5284, 0.25
    %v5411 = vmul.f32 %v5287, 0.25
    %v5412 = vmul.f32 %v5292, 0.25
    %v5413 = vmul.f32 %v5295, 0.25
    %v5414 = vpack.c.bf16 %v5411, %v5410
    %v5415 = vpack.c.bf16 %v5413, %v5412
    %v5416 = vpack.c.bf16 %v5343, %v5340
    %v5417 = vpack.c.bf16 %v5351, %v5348
    %v5419 = vsel %vm467, %v5414, 0
    %v5422 = vsel %vm467, %v5416, 0
    %5424 = vmatprep.subr.bf16.mxu0 0
    %5425 = vmatpush1.bf16.xpose.msra.mxu0 %v5422
    %5426 = vmatprep.subr.bf16.mxu0 0
    %5427 = vmatpush1.bf16.xpose.msra.mxu0 0
    %5428 = vmatprep.subr.bf16.mxu0 0
    %5429 = vmatpush1.bf16.xpose.msra.mxu0 0
    %5430 = vmatprep.subr.bf16.mxu0 0
    %5431 = vmatpush1.bf16.xpose.msra.mxu0 0
    %5432 = vmatprep.subr.bf16.mxu0 0
    %5433 = vmatpush1.bf16.xpose.msra.mxu0 0
    %5434 = vmatprep.subr.bf16.mxu0 0
    %5435 = vmatpush1.bf16.xpose.msra.mxu0 0
    %5436 = vmatprep.subr.bf16.mxu0 0
    %5437 = vmatpush1.bf16.xpose.msra.mxu0 0
    %5438 = vmatprep.subr.bf16.mxu0 0
    %5439 = vmatpush1.bf16.xpose.msra.mxu0 0
    %5440 = vmatprep.subr.bf16.mxu0 0
    %5441 = vmatpush1.bf16.xpose.msra.mxu0 0
    %5442 = vmatprep.subr.bf16.mxu0 0
    %5443 = vmatpush1.bf16.xpose.msra.mxu0 0
    %5444 = vmatprep.subr.bf16.mxu0 0
    %5445 = vmatpush1.bf16.xpose.msra.mxu0 0
    %5446 = vmatprep.subr.bf16.mxu0 0
    %5447 = vmatpush1.bf16.xpose.msra.mxu0 0
    %5448 = vmatprep.subr.bf16.mxu0 0
    %5449 = vmatpush1.bf16.xpose.msra.mxu0 0
    %5450 = vmatprep.subr.bf16.mxu0 0
    %5451 = vmatpush1.bf16.xpose.msra.mxu0 0
    %5452 = vmatprep.subr.bf16.mxu0 0
    %5453 = vmatpush1.bf16.xpose.msra.mxu0 0
    %5454 = vmatprep.subr.bf16.mxu0 0
    %5455 = vmatpush1.bf16.xpose.msra.mxu0 0
    %5456 = vmatprep.mubr.bf16.mxu0 0
    %5457 = vmatmul.mubr.bf16.gmra.mrb[0].mxu0 %v5419
    %v5458 = vpop.f32.mrb[0].mxu0
    %v5459 = vadd.f32 %v3457, %v5458
    %v5460 = vpop.f32.mrb[0].mxu0
    %v5461 = vpop.f32.mrb[0].mxu0
    %v5462 = vadd.f32 %v3458, %v5461
    %v5463 = vpop.f32.mrb[0].mxu0
    %5464 = vdwg.mxu0
    %v5466 = vsel %vm467, %v5415, 0
    %v5469 = vsel %vm467, %v5417, 0
    %5471 = vmatprep.subr.bf16.mxu0 0
    %5472 = vmatpush1.bf16.xpose.msra.mxu0 %v5469
    %5473 = vmatprep.subr.bf16.mxu0 0
    %5474 = vmatpush1.bf16.xpose.msra.mxu0 0
    %5475 = vmatprep.subr.bf16.mxu0 0
    %5476 = vmatpush1.bf16.xpose.msra.mxu0 0
    %5477 = vmatprep.subr.bf16.mxu0 0
    %5478 = vmatpush1.bf16.xpose.msra.mxu0 0
    %5479 = vmatprep.subr.bf16.mxu0 0
    %5480 = vmatpush1.bf16.xpose.msra.mxu0 0
    %5481 = vmatprep.subr.bf16.mxu0 0
    %5482 = vmatpush1.bf16.xpose.msra.mxu0 0
    %5483 = vmatprep.subr.bf16.mxu0 0
    %5484 = vmatpush1.bf16.xpose.msra.mxu0 0
    %5485 = vmatprep.subr.bf16.mxu0 0
    %5486 = vmatpush1.bf16.xpose.msra.mxu0 0
    %5487 = vmatprep.subr.bf16.mxu0 0
    %5488 = vmatpush1.bf16.xpose.msra.mxu0 0
    %5489 = vmatprep.subr.bf16.mxu0 0
    %5490 = vmatpush1.bf16.xpose.msra.mxu0 0
    %5491 = vmatprep.subr.bf16.mxu0 0
    %5492 = vmatpush1.bf16.xpose.msra.mxu0 0
    %5493 = vmatprep.subr.bf16.mxu0 0
    %5494 = vmatpush1.bf16.xpose.msra.mxu0 0
    %5495 = vmatprep.subr.bf16.mxu0 0
    %5496 = vmatpush1.bf16.xpose.msra.mxu0 0
    %5497 = vmatprep.subr.bf16.mxu0 0
    %5498 = vmatpush1.bf16.xpose.msra.mxu0 0
    %5499 = vmatprep.subr.bf16.mxu0 0
    %5500 = vmatpush1.bf16.xpose.msra.mxu0 0
    %5501 = vmatprep.subr.bf16.mxu0 0
    %5502 = vmatpush1.bf16.xpose.msra.mxu0 0
    %5503 = vmatprep.mubr.bf16.mxu0 0
    %5504 = vmatmul.mubr.bf16.gmra.mrb[0].mxu0 %v5466
    %v5505 = vpop.f32.mrb[0].mxu0
    %v5506 = vadd.f32 %v3457, %v5505
    %v5507 = vpop.f32.mrb[0].mxu0
    %v5508 = vpop.f32.mrb[0].mxu0
    %v5509 = vadd.f32 %v3458, %v5508
    %v5510 = vpop.f32.mrb[0].mxu0
    %5511 = vdwg.mxu0
    %v5512 = vsel %vm467, %v5459, -inf
    %5513 = vmax.xlane.f32.xlu0 %v5512
    %v5514 = vpop.xlane.xlu0 %5513
    %v5515 = vsel %vm467, %v5462, -inf
    %5516 = vmax.xlane.f32.xlu0 %v5515
    %v5517 = vpop.xlane.xlu0 %5516
    %v5518 = vsel %vm467, %v5506, -inf
    %5519 = vmax.xlane.f32.xlu0 %v5518
    %v5520 = vpop.xlane.xlu0 %5519
    %v5521 = vsel %vm467, %v5509, -inf
    %5522 = vmax.xlane.f32.xlu0 %v5521
    %v5523 = vpop.xlane.xlu0 %5522
    %v5524 = vsub.f32 %v5459, %v5514
    %v5525 = vsub.f32 %v5462, %v5517
    %v5526 = vsub.f32 %v5506, %v5520
    %v5527 = vsub.f32 %v5509, %v5523
    %v5528 = vmul.f32 %v5524, 1.442695
    %v5529 = vpow.pop %v5528
    %v5530 = vmul.f32 %v5525, 1.442695
    %v5531 = vpow.pop %v5530
    %v5532 = vmul.f32 %v5526, 1.442695
    %v5533 = vpow.pop %v5532
    %v5534 = vmul.f32 %v5527, 1.442695
    %v5535 = vpow.pop %v5534
    %v5536 = vsel %vm467, %v5529, 0.0
    %5537 = vadd.xlane.f32.xlu0 %v5536
    %v5538 = vpop.xlane.xlu0 %5537
    %v5539 = vsel %vm467, %v5531, 0.0
    %5540 = vadd.xlane.f32.xlu0 %v5539
    %v5541 = vpop.xlane.xlu0 %5540
    %v5542 = vsel %vm467, %v5533, 0.0
    %5543 = vadd.xlane.f32.xlu0 %v5542
    %v5544 = vpop.xlane.xlu0 %5543
    %v5545 = vsel %vm467, %v5535, 0.0
    %5546 = vadd.xlane.f32.xlu0 %v5545
    %v5547 = vpop.xlane.xlu0 %5546
    %v5548 = vrcp.pop %v5538
    %v5549 = vrcp.pop %v5541
    %v5550 = vrcp.pop %v5544
    %v5551 = vrcp.pop %v5547
    %v5552 = vmul.f32 %v5529, %v5548
    %v5553 = vmul.f32 %v5531, %v5549
    %v5554 = vmul.f32 %v5533, %v5550
    %v5555 = vmul.f32 %v5535, %v5551
    %v5556 = vpack.c.bf16 %v5553, %v5552
    %v5557 = vpack.c.bf16 %v5555, %v5554
    %v5558 = vpack.c.bf16 %v5399, %v5396
    %v5559 = vpack.c.bf16 %v5407, %v5404
    %v5561 = vsel %vm467, %v5556, 0
    %5563 = vmatprep.subr.bf16.mxu0 0
    %5564 = vmatpush1.bf16.msra.mxu0 %v5558
    %5565 = vmatprep.subr.bf16.mxu0 0
    %5566 = vmatpush1.bf16.msra.mxu0 0
    %5567 = vmatprep.subr.bf16.mxu0 0
    %5568 = vmatpush1.bf16.msra.mxu0 0
    %5569 = vmatprep.subr.bf16.mxu0 0
    %5570 = vmatpush1.bf16.msra.mxu0 0
    %5571 = vmatprep.subr.bf16.mxu0 0
    %5572 = vmatpush1.bf16.msra.mxu0 0
    %5573 = vmatprep.subr.bf16.mxu0 0
    %5574 = vmatpush1.bf16.msra.mxu0 0
    %5575 = vmatprep.subr.bf16.mxu0 0
    %5576 = vmatpush1.bf16.msra.mxu0 0
    %5577 = vmatprep.subr.bf16.mxu0 0
    %5578 = vmatpush1.bf16.msra.mxu0 0
    %5579 = vmatprep.subr.bf16.mxu0 0
    %5580 = vmatpush1.bf16.msra.mxu0 0
    %5581 = vmatprep.subr.bf16.mxu0 0
    %5582 = vmatpush1.bf16.msra.mxu0 0
    %5583 = vmatprep.subr.bf16.mxu0 0
    %5584 = vmatpush1.bf16.msra.mxu0 0
    %5585 = vmatprep.subr.bf16.mxu0 0
    %5586 = vmatpush1.bf16.msra.mxu0 0
    %5587 = vmatprep.subr.bf16.mxu0 0
    %5588 = vmatpush1.bf16.msra.mxu0 0
    %5589 = vmatprep.subr.bf16.mxu0 0
    %5590 = vmatpush1.bf16.msra.mxu0 0
    %5591 = vmatprep.subr.bf16.mxu0 0
    %5592 = vmatpush1.bf16.msra.mxu0 0
    %5593 = vmatprep.subr.bf16.mxu0 0
    %5594 = vmatpush1.bf16.msra.mxu0 0
    %5595 = vmatprep.mubr.bf16.mxu0 0
    %5596 = vmatmul.mubr.bf16.gmra.mrb[0].mxu0 %v5561
    %v5597 = vpop.f32.mrb[0].mxu0
    %v5598 = vadd.f32 0.0, %v5597
    %v5599 = vpop.f32.mrb[0].mxu0
    %v5600 = vpop.f32.mrb[0].mxu0
    %v5601 = vadd.f32 0.0, %v5600
    %v5602 = vpop.f32.mrb[0].mxu0
    %5603 = vdwg.mxu0
    %v5605 = vsel %vm467, %v5557, 0
    %5607 = vmatprep.subr.bf16.mxu0 0
    %5608 = vmatpush1.bf16.msra.mxu0 %v5559
    %5609 = vmatprep.subr.bf16.mxu0 0
    %5610 = vmatpush1.bf16.msra.mxu0 0
    %5611 = vmatprep.subr.bf16.mxu0 0
    %5612 = vmatpush1.bf16.msra.mxu0 0
    %5613 = vmatprep.subr.bf16.mxu0 0
    %5614 = vmatpush1.bf16.msra.mxu0 0
    %5615 = vmatprep.subr.bf16.mxu0 0
    %5616 = vmatpush1.bf16.msra.mxu0 0
    %5617 = vmatprep.subr.bf16.mxu0 0
    %5618 = vmatpush1.bf16.msra.mxu0 0
    %5619 = vmatprep.subr.bf16.mxu0 0
    %5620 = vmatpush1.bf16.msra.mxu0 0
    %5621 = vmatprep.subr.bf16.mxu0 0
    %5622 = vmatpush1.bf16.msra.mxu0 0
    %5623 = vmatprep.subr.bf16.mxu0 0
    %5624 = vmatpush1.bf16.msra.mxu0 0
    %5625 = vmatprep.subr.bf16.mxu0 0
    %5626 = vmatpush1.bf16.msra.mxu0 0
    %5627 = vmatprep.subr.bf16.mxu0 0
    %5628 = vmatpush1.bf16.msra.mxu0 0
    %5629 = vmatprep.subr.bf16.mxu0 0
    %5630 = vmatpush1.bf16.msra.mxu0 0
    %5631 = vmatprep.subr.bf16.mxu0 0
    %5632 = vmatpush1.bf16.msra.mxu0 0
    %5633 = vmatprep.subr.bf16.mxu0 0
    %5634 = vmatpush1.bf16.msra.mxu0 0
    %5635 = vmatprep.subr.bf16.mxu0 0
    %5636 = vmatpush1.bf16.msra.mxu0 0
    %5637 = vmatprep.subr.bf16.mxu0 0
    %5638 = vmatpush1.bf16.msra.mxu0 0
    %5639 = vmatprep.mubr.bf16.mxu0 0
    %5640 = vmatmul.mubr.bf16.gmra.mrb[0].mxu0 %v5605
    %v5641 = vpop.f32.mrb[0].mxu0
    %v5642 = vadd.f32 0.0, %v5641
    %v5643 = vpop.f32.mrb[0].mxu0
    %v5644 = vpop.f32.mrb[0].mxu0
    %v5645 = vadd.f32 0.0, %v5644
    %v5646 = vpop.f32.mrb[0].mxu0
    %5647 = vdwg.mxu0
    %v5648 = vpack.c.bf16 %v5601, %v5598
    %v5649 = vpack.c.bf16 %v5645, %v5642
    %s5650 = scalar_lea.vmem %s63, 48
    %v5651 = vld [vmem:[%s5650] sm:$0xff]
    %v5652 = vld [vmem:[%s5650 + $0x8] sm:$0xff]
    %v5653 = vpack.c.bf16 %v5652, %v5651
    %v5655 = vsel %vm467, %v5648, 0
    %v5658 = vsel %vm467, %v5649, 0
    %5660 = vmatprep.subr.bf16.mxu0 0
    %5661 = vmatpush1.bf16.msra.mxu0 %v5653
    %5662 = vmatprep.subr.bf16.mxu0 0
    %5663 = vmatpush1.bf16.msra.mxu0 0
    %5664 = vmatprep.subr.bf16.mxu0 0
    %5665 = vmatpush1.bf16.msra.mxu0 0
    %5666 = vmatprep.subr.bf16.mxu0 0
    %5667 = vmatpush1.bf16.msra.mxu0 0
    %5668 = vmatprep.subr.bf16.mxu0 0
    %5669 = vmatpush1.bf16.msra.mxu0 0
    %5670 = vmatprep.subr.bf16.mxu0 0
    %5671 = vmatpush1.bf16.msra.mxu0 0
    %5672 = vmatprep.subr.bf16.mxu0 0
    %5673 = vmatpush1.bf16.msra.mxu0 0
    %5674 = vmatprep.subr.bf16.mxu0 0
    %5675 = vmatpush1.bf16.msra.mxu0 0
    %5676 = vmatprep.subr.bf16.mxu0 0
    %5677 = vmatpush1.bf16.msra.mxu0 0
    %5678 = vmatprep.subr.bf16.mxu0 0
    %5679 = vmatpush1.bf16.msra.mxu0 0
    %5680 = vmatprep.subr.bf16.mxu0 0
    %5681 = vmatpush1.bf16.msra.mxu0 0
    %5682 = vmatprep.subr.bf16.mxu0 0
    %5683 = vmatpush1.bf16.msra.mxu0 0
    %5684 = vmatprep.subr.bf16.mxu0 0
    %5685 = vmatpush1.bf16.msra.mxu0 0
    %5686 = vmatprep.subr.bf16.mxu0 0
    %5687 = vmatpush1.bf16.msra.mxu0 0
    %5688 = vmatprep.subr.bf16.mxu0 0
    %5689 = vmatpush1.bf16.msra.mxu0 0
    %5690 = vmatprep.subr.bf16.mxu0 0
    %5691 = vmatpush1.bf16.msra.mxu0 0
    %5692 = vmatprep.mubr.bf16.mxu0 0
    %5693 = vmatmul.mubr.bf16.gmra.mrb[0].mxu0 %v5655
    %v5694 = vpop.f32.mrb[0].mxu0
    %v5695 = vadd.f32 0.0, %v5694
    %v5696 = vpop.f32.mrb[0].mxu0
    %v5697 = vpop.f32.mrb[0].mxu0
    %v5698 = vadd.f32 0.0, %v5697
    %v5699 = vpop.f32.mrb[0].mxu0
    %5700 = vmatprep.mubr.bf16.mxu0 0
    %5701 = vmatmul.mubr.bf16.gmra.mrb[0].mxu0 %v5658
    %v5702 = vpop.f32.mrb[0].mxu0
    %v5703 = vadd.f32 0.0, %v5702
    %v5704 = vpop.f32.mrb[0].mxu0
    %v5705 = vpop.f32.mrb[0].mxu0
    %v5706 = vadd.f32 0.0, %v5705
    %v5707 = vpop.f32.mrb[0].mxu0
    %5708 = vdwg.mxu0
    %v5710 = vsel %vm467, %v5236, 0
    %v5713 = vsel %vm467, %v5237, 0
    %5715 = vmatprep.subr.bf16.mxu0 0
    %5716 = vmatpush1.bf16.msra.mxu0 %v5241
    %5717 = vmatprep.subr.bf16.mxu0 0
    %5718 = vmatpush1.bf16.msra.mxu0 0
    %5719 = vmatprep.subr.bf16.mxu0 0
    %5720 = vmatpush1.bf16.msra.mxu0 0
    %5721 = vmatprep.subr.bf16.mxu0 0
    %5722 = vmatpush1.bf16.msra.mxu0 0
    %5723 = vmatprep.subr.bf16.mxu0 0
    %5724 = vmatpush1.bf16.msra.mxu0 0
    %5725 = vmatprep.subr.bf16.mxu0 0
    %5726 = vmatpush1.bf16.msra.mxu0 0
    %5727 = vmatprep.subr.bf16.mxu0 0
    %5728 = vmatpush1.bf16.msra.mxu0 0
    %5729 = vmatprep.subr.bf16.mxu0 0
    %5730 = vmatpush1.bf16.msra.mxu0 0
    %5731 = vmatprep.subr.bf16.mxu0 0
    %5732 = vmatpush1.bf16.msra.mxu0 0
    %5733 = vmatprep.subr.bf16.mxu0 0
    %5734 = vmatpush1.bf16.msra.mxu0 0
    %5735 = vmatprep.subr.bf16.mxu0 0
    %5736 = vmatpush1.bf16.msra.mxu0 0
    %5737 = vmatprep.subr.bf16.mxu0 0
    %5738 = vmatpush1.bf16.msra.mxu0 0
    %5739 = vmatprep.subr.bf16.mxu0 0
    %5740 = vmatpush1.bf16.msra.mxu0 0
    %5741 = vmatprep.subr.bf16.mxu0 0
    %5742 = vmatpush1.bf16.msra.mxu0 0
    %5743 = vmatprep.subr.bf16.mxu0 0
    %5744 = vmatpush1.bf16.msra.mxu0 0
    %5745 = vmatprep.subr.bf16.mxu0 0
    %5746 = vmatpush1.bf16.msra.mxu0 0
    %5747 = vmatprep.mubr.bf16.mxu0 0
    %5748 = vmatmul.mubr.bf16.gmra.mrb[0].mxu0 %v5710
    %v5749 = vpop.f32.mrb[0].mxu0
    %v5750 = vadd.f32 %v5695, %v5749
    %v5751 = vpop.f32.mrb[0].mxu0
    %v5752 = vpop.f32.mrb[0].mxu0
    %v5753 = vadd.f32 %v5698, %v5752
    %v5754 = vpop.f32.mrb[0].mxu0
    %5755 = vmatprep.mubr.bf16.mxu0 0
    %5756 = vmatmul.mubr.bf16.gmra.mrb[0].mxu0 %v5713
    %v5757 = vpop.f32.mrb[0].mxu0
    %v5758 = vadd.f32 %v5703, %v5757
    %v5759 = vpop.f32.mrb[0].mxu0
    %v5760 = vpop.f32.mrb[0].mxu0
    %v5761 = vadd.f32 %v5706, %v5760
    %v5762 = vpop.f32.mrb[0].mxu0
    %5763 = vdwg.mxu0
    %v5764 = vadd.f32 %v4742, %v5750
    %v5765 = vadd.f32 %v4743, %v5753
    %v5766 = vadd.f32 %v4744, %v5758
    %v5767 = vadd.f32 %v4745, %v5761
    %s5768 = scalar_lea.vmem %s65, 1
    %v5769 = vld [vmem:[%s5768] sm:$0x1]
    %v5771 = vlaneseq
    %v5772 = vshrl.u32 %v5771, 7
    %v5773 = vsub.s32 0, %v5772
    %v5774 = vrot.slane %v5769, %v5773
    %v5776 = vadd.f32 %v5764, %v5774
    %v5777 = vadd.f32 %v5765, %v5774
    %v5778 = vadd.f32 %v5766, %v5774
    %v5779 = vadd.f32 %v5767, %v5774
    %s5780 = scalar_lea.vmem %s67, 1
    %v5781 = vld [vmem:[%s5780] sm:$0x1]
    %s5782 = scalar_lea.vmem %s69, 1
    %v5783 = vld [vmem:[%s5782] sm:$0x1]
    %v5784 = vsel %vm266, %v5776, 0.0
    %5785 = vadd.xlane.f32.xlu0 %v5784
    %v5786 = vpop.xlane.xlu0 %5785
    %v5787 = vsel %vm266, %v5777, 0.0
    %5788 = vadd.xlane.f32.xlu0 %v5787
    %v5789 = vpop.xlane.xlu0 %5788
    %v5790 = vsel %vm266, %v5778, 0.0
    %5791 = vadd.xlane.f32.xlu0 %v5790
    %v5792 = vpop.xlane.xlu0 %5791
    %v5793 = vsel %vm266, %v5779, 0.0
    %5794 = vadd.xlane.f32.xlu0 %v5793
    %v5795 = vpop.xlane.xlu0 %5794
    %v5796 = vmul.f32 %v5786, %v273
    %v5797 = vmul.f32 %v5789, %v273
    %v5798 = vmul.f32 %v5792, %v273
    %v5799 = vmul.f32 %v5795, %v273
    %v5800 = vsub.f32 %v5776, %v5796
    %v5801 = vsub.f32 %v5777, %v5797
    %v5802 = vsub.f32 %v5778, %v5798
    %v5803 = vsub.f32 %v5779, %v5799
    %v5804 = vmul.f32 %v5800, %v5800
    %v5805 = vmul.f32 %v5801, %v5801
    %v5806 = vmul.f32 %v5802, %v5802
    %v5807 = vmul.f32 %v5803, %v5803
    %v5808 = vsel %vm266, %v5804, 0.0
    %5809 = vadd.xlane.f32.xlu0 %v5808
    %v5810 = vpop.xlane.xlu0 %5809
    %v5811 = vsel %vm266, %v5805, 0.0
    %5812 = vadd.xlane.f32.xlu0 %v5811
    %v5813 = vpop.xlane.xlu0 %5812
    %v5814 = vsel %vm266, %v5806, 0.0
    %5815 = vadd.xlane.f32.xlu0 %v5814
    %v5816 = vpop.xlane.xlu0 %5815
    %v5817 = vsel %vm266, %v5807, 0.0
    %5818 = vadd.xlane.f32.xlu0 %v5817
    %v5819 = vpop.xlane.xlu0 %5818
    %v5820 = vmul.f32 %v5810, %v273
    %v5821 = vmul.f32 %v5813, %v273
    %v5822 = vmul.f32 %v5816, %v273
    %v5823 = vmul.f32 %v5819, %v273
    %v5824 = vadd.f32 %v5820, 1e-05
    %v5825 = vadd.f32 %v5821, 1e-05
    %v5826 = vadd.f32 %v5822, 1e-05
    %v5827 = vadd.f32 %v5823, 1e-05
    %v5828 = vrsqrt.pop %v5824
    %v5829 = vrsqrt.pop %v5825
    %v5830 = vrsqrt.pop %v5826
    %v5831 = vrsqrt.pop %v5827
    %v5832 = vmul.f32 %v5800, %v5828
    %v5833 = vmul.f32 %v5801, %v5829
    %v5834 = vmul.f32 %v5802, %v5830
    %v5835 = vmul.f32 %v5803, %v5831
    %v5837 = vlaneseq
    %v5838 = vshrl.u32 %v5837, 7
    %v5839 = vsub.s32 0, %v5838
    %v5840 = vrot.slane %v5781, %v5839
    %v5842 = vmul.f32 %v5832, %v5840
    %v5843 = vmul.f32 %v5833, %v5840
    %v5844 = vmul.f32 %v5834, %v5840
    %v5845 = vmul.f32 %v5835, %v5840
    %v5847 = vlaneseq
    %v5848 = vshrl.u32 %v5847, 7
    %v5849 = vsub.s32 0, %v5848
    %v5850 = vrot.slane %v5783, %v5849
    %v5852 = vadd.f32 %v5842, %v5850
    %v5853 = vadd.f32 %v5843, %v5850
    %v5854 = vadd.f32 %v5844, %v5850
    %v5855 = vadd.f32 %v5845, %v5850
    %s5856 = scalar_lea.vmem %s71, 32
    %v5857 = vld [vmem:[%s5856] sm:$0xff]
    %v5858 = vld [vmem:[%s5856 + $0x8] sm:$0xff]
    %v5859 = vld [vmem:[%s5856 + $0x10] sm:$0xff]
    %v5860 = vld [vmem:[%s5856 + $0x18] sm:$0xff]
    %v5861 = vpack.c.bf16 %v5853, %v5852
    %v5862 = vpack.c.bf16 %v5855, %v5854
    %v5863 = vpack.c.bf16 %v5858, %v5857
    %v5864 = vpack.c.bf16 %v5860, %v5859
    %s5865 = scalar_lea.vmem %s73, 1
    %v5866 = vld [vmem:[%s5865] sm:$0x1]
    %v5868 = vlaneseq
    %v5869 = vshrl.u32 %v5868, 7
    %v5870 = vsub.s32 0, %v5869
    %v5871 = vrot.slane %v5866, %v5870
    %v5874 = vsel %vm266, %v5861, 0
    %v5877 = vsel %vm266, %v5862, 0
    %5879 = vmatprep.subr.bf16.mxu0 0
    %5880 = vmatpush1.bf16.msra.mxu0 %v5863
    %5881 = vmatprep.subr.bf16.mxu0 0
    %5882 = vmatpush1.bf16.msra.mxu0 %v5864
    %5883 = vmatprep.subr.bf16.mxu0 0
    %5884 = vmatpush1.bf16.msra.mxu0 0
    %5885 = vmatprep.subr.bf16.mxu0 0
    %5886 = vmatpush1.bf16.msra.mxu0 0
    %5887 = vmatprep.subr.bf16.mxu0 0
    %5888 = vmatpush1.bf16.msra.mxu0 0
    %5889 = vmatprep.subr.bf16.mxu0 0
    %5890 = vmatpush1.bf16.msra.mxu0 0
    %5891 = vmatprep.subr.bf16.mxu0 0
    %5892 = vmatpush1.bf16.msra.mxu0 0
    %5893 = vmatprep.subr.bf16.mxu0 0
    %5894 = vmatpush1.bf16.msra.mxu0 0
    %5895 = vmatprep.subr.bf16.mxu0 0
    %5896 = vmatpush1.bf16.msra.mxu0 0
    %5897 = vmatprep.subr.bf16.mxu0 0
    %5898 = vmatpush1.bf16.msra.mxu0 0
    %5899 = vmatprep.subr.bf16.mxu0 0
    %5900 = vmatpush1.bf16.msra.mxu0 0
    %5901 = vmatprep.subr.bf16.mxu0 0
    %5902 = vmatpush1.bf16.msra.mxu0 0
    %5903 = vmatprep.subr.bf16.mxu0 0
    %5904 = vmatpush1.bf16.msra.mxu0 0
    %5905 = vmatprep.subr.bf16.mxu0 0
    %5906 = vmatpush1.bf16.msra.mxu0 0
    %5907 = vmatprep.subr.bf16.mxu0 0
    %5908 = vmatpush1.bf16.msra.mxu0 0
    %5909 = vmatprep.subr.bf16.mxu0 0
    %5910 = vmatpush1.bf16.msra.mxu0 0
    %5911 = vmatprep.mubr.bf16.mxu0 0
    %5912 = vmatmul.mubr.bf16.gmra.mrb[0].mxu0 %v5874
    %v5913 = vpop.f32.mrb[0].mxu0
    %v5914 = vadd.f32 %v5871, %v5913
    %v5915 = vpop.f32.mrb[0].mxu0
    %v5916 = vpop.f32.mrb[0].mxu0
    %v5917 = vadd.f32 %v5871, %v5916
    %v5918 = vpop.f32.mrb[0].mxu0
    %5919 = vmatprep.mubr.bf16.mxu0 0
    %5920 = vmatmul.mubr.bf16.gmra.mrb[0].mxu0 %v5877
    %v5921 = vpop.f32.mrb[0].mxu0
    %v5922 = vadd.f32 %v5871, %v5921
    %v5923 = vpop.f32.mrb[0].mxu0
    %v5924 = vpop.f32.mrb[0].mxu0
    %v5925 = vadd.f32 %v5871, %v5924
    %v5926 = vpop.f32.mrb[0].mxu0
    %5927 = vdwg.mxu0
    %v5928 = vmul.f32 %v5914, %v5914
    %v5929 = vmul.f32 %v5917, %v5917
    %v5930 = vmul.f32 %v5922, %v5922
    %v5931 = vmul.f32 %v5925, %v5925
    %v5932 = vmul.f32 %v5914, %v5928
    %v5933 = vmul.f32 %v5917, %v5929
    %v5934 = vmul.f32 %v5922, %v5930
    %v5935 = vmul.f32 %v5925, %v5931
    %v5936 = vmul.f32 %v5932, 0.044715
    %v5937 = vmul.f32 %v5933, 0.044715
    %v5938 = vmul.f32 %v5934, 0.044715
    %v5939 = vmul.f32 %v5935, 0.044715
    %v5940 = vadd.f32 %v5914, %v5936
    %v5941 = vadd.f32 %v5917, %v5937
    %v5942 = vadd.f32 %v5922, %v5938
    %v5943 = vadd.f32 %v5925, %v5939
    %v5944 = vmul.f32 %v5940, 0.7978846
    %v5945 = vmul.f32 %v5941, 0.7978846
    %v5946 = vmul.f32 %v5942, 0.7978846
    %v5947 = vmul.f32 %v5943, 0.7978846
    %v5948 = vtanh.pop %v5944
    %v5949 = vtanh.pop %v5945
    %v5950 = vtanh.pop %v5946
    %v5951 = vtanh.pop %v5947
    %v5952 = vadd.f32 %v5948, 1.0
    %v5953 = vadd.f32 %v5949, 1.0
    %v5954 = vadd.f32 %v5950, 1.0
    %v5955 = vadd.f32 %v5951, 1.0
    %v5956 = vmul.f32 %v5952, 0.5
    %v5957 = vmul.f32 %v5953, 0.5
    %v5958 = vmul.f32 %v5954, 0.5
    %v5959 = vmul.f32 %v5955, 0.5
    %v5960 = vmul.f32 %v5914, %v5956
    %v5961 = vmul.f32 %v5917, %v5957
    %v5962 = vmul.f32 %v5922, %v5958
    %v5963 = vmul.f32 %v5925, %v5959
    %s5964 = scalar_lea.vmem %s75, 64
    %v5965 = vld [vmem:[%s5964] sm:$0xff]
    %v5966 = vld [vmem:[%s5964 + $0x8] sm:$0xff]
    %v5967 = vld [vmem:[%s5964 + $0x10] sm:$0xff]
    %v5968 = vld [vmem:[%s5964 + $0x18] sm:$0xff]
    %v5969 = vld [vmem:[%s5964 + $0x20] sm:$0xff]
    %v5970 = vld [vmem:[%s5964 + $0x28] sm:$0xff]
    %v5971 = vld [vmem:[%s5964 + $0x30] sm:$0xff]
    %v5972 = vld [vmem:[%s5964 + $0x38] sm:$0xff]
    %v5973 = vpack.c.bf16 %v5961, %v5960
    %v5974 = vpack.c.bf16 %v5963, %v5962
    %v5975 = vpack.c.bf16 %v5966, %v5965
    %v5976 = vpack.c.bf16 %v5968, %v5967
    %v5977 = vpack.c.bf16 %v5970, %v5969
    %v5978 = vpack.c.bf16 %v5972, %v5971
    %s5979 = scalar_lea.vmem %s77, 1
    %v5980 = vld [vmem:[%s5979] sm:$0x1]
    %v5982 = vlaneseq
    %v5983 = vshrl.u32 %v5982, 7
    %v5984 = vsub.s32 0, %v5983
    %v5985 = vrot.slane %v5980, %v5984
    %v5988 = vsel %vm216, %v5973, 0
    %v5991 = vsel %vm216, %v5974, 0
    %5993 = vmatprep.subr.bf16.mxu0 0
    %5994 = vmatpush1.bf16.msra.mxu0 %v5975
    %5995 = vmatprep.subr.bf16.mxu0 0
    %5996 = vmatpush1.bf16.msra.mxu0 %v5976
    %5997 = vmatprep.subr.bf16.mxu0 0
    %5998 = vmatpush1.bf16.msra.mxu0 %v5977
    %5999 = vmatprep.subr.bf16.mxu0 0
    %6000 = vmatpush1.bf16.msra.mxu0 %v5978
    %6001 = vmatprep.subr.bf16.mxu0 0
    %6002 = vmatpush1.bf16.msra.mxu0 0
    %6003 = vmatprep.subr.bf16.mxu0 0
    %6004 = vmatpush1.bf16.msra.mxu0 0
    %6005 = vmatprep.subr.bf16.mxu0 0
    %6006 = vmatpush1.bf16.msra.mxu0 0
    %6007 = vmatprep.subr.bf16.mxu0 0
    %6008 = vmatpush1.bf16.msra.mxu0 0
    %6009 = vmatprep.subr.bf16.mxu0 0
    %6010 = vmatpush1.bf16.msra.mxu0 0
    %6011 = vmatprep.subr.bf16.mxu0 0
    %6012 = vmatpush1.bf16.msra.mxu0 0
    %6013 = vmatprep.subr.bf16.mxu0 0
    %6014 = vmatpush1.bf16.msra.mxu0 0
    %6015 = vmatprep.subr.bf16.mxu0 0
    %6016 = vmatpush1.bf16.msra.mxu0 0
    %6017 = vmatprep.subr.bf16.mxu0 0
    %6018 = vmatpush1.bf16.msra.mxu0 0
    %6019 = vmatprep.subr.bf16.mxu0 0
    %6020 = vmatpush1.bf16.msra.mxu0 0
    %6021 = vmatprep.subr.bf16.mxu0 0
    %6022 = vmatpush1.bf16.msra.mxu0 0
    %6023 = vmatprep.subr.bf16.mxu0 0
    %6024 = vmatpush1.bf16.msra.mxu0 0
    %6025 = vmatprep.mubr.bf16.mxu0 0
    %6026 = vmatmul.mubr.bf16.gmra.mrb[0].mxu0 %v5988
    %v6027 = vpop.f32.mrb[0].mxu0
    %v6028 = vadd.f32 %v5985, %v6027
    %v6029 = vpop.f32.mrb[0].mxu0
    %v6030 = vpop.f32.mrb[0].mxu0
    %v6031 = vadd.f32 %v5985, %v6030
    %v6032 = vpop.f32.mrb[0].mxu0
    %6033 = vmatprep.mubr.bf16.mxu0 0
    %6034 = vmatmul.mubr.bf16.gmra.mrb[0].mxu0 %v5991
    %v6035 = vpop.f32.mrb[0].mxu0
    %v6036 = vadd.f32 %v5985, %v6035
    %v6037 = vpop.f32.mrb[0].mxu0
    %v6038 = vpop.f32.mrb[0].mxu0
    %v6039 = vadd.f32 %v5985, %v6038
    %v6040 = vpop.f32.mrb[0].mxu0
    %6041 = vdwg.mxu0
    %v6042 = vadd.f32 %v5776, %v6028
    %v6043 = vadd.f32 %v5777, %v6031
    %v6044 = vadd.f32 %v5778, %v6036
    %v6045 = vadd.f32 %v5779, %v6039
    %v6046 = vld [vmem:[%s79] sm:$0x1]
    %v6047 = vld [vmem:[%s81] sm:$0x1]
    %v6048 = vsel %vm266, %v6042, 0.0
    %6049 = vadd.xlane.f32.xlu0 %v6048
    %v6050 = vpop.xlane.xlu0 %6049
    %v6051 = vsel %vm266, %v6043, 0.0
    %6052 = vadd.xlane.f32.xlu0 %v6051
    %v6053 = vpop.xlane.xlu0 %6052
    %v6054 = vsel %vm266, %v6044, 0.0
    %6055 = vadd.xlane.f32.xlu0 %v6054
    %v6056 = vpop.xlane.xlu0 %6055
    %v6057 = vsel %vm266, %v6045, 0.0
    %6058 = vadd.xlane.f32.xlu0 %v6057
    %v6059 = vpop.xlane.xlu0 %6058
    %v6060 = vmul.f32 %v6050, %v273
    %v6061 = vmul.f32 %v6053, %v273
    %v6062 = vmul.f32 %v6056, %v273
    %v6063 = vmul.f32 %v6059, %v273
    %v6064 = vsub.f32 %v6042, %v6060
    %v6065 = vsub.f32 %v6043, %v6061
    %v6066 = vsub.f32 %v6044, %v6062
    %v6067 = vsub.f32 %v6045, %v6063
    %v6068 = vmul.f32 %v6064, %v6064
    %v6069 = vmul.f32 %v6065, %v6065
    %v6070 = vmul.f32 %v6066, %v6066
    %v6071 = vmul.f32 %v6067, %v6067
    %v6072 = vsel %vm266, %v6068, 0.0
    %6073 = vadd.xlane.f32.xlu0 %v6072
    %v6074 = vpop.xlane.xlu0 %6073
    %v6075 = vsel %vm266, %v6069, 0.0
    %6076 = vadd.xlane.f32.xlu0 %v6075
    %v6077 = vpop.xlane.xlu0 %6076
    %v6078 = vsel %vm266, %v6070, 0.0
    %6079 = vadd.xlane.f32.xlu0 %v6078
    %v6080 = vpop.xlane.xlu0 %6079
    %v6081 = vsel %vm266, %v6071, 0.0
    %6082 = vadd.xlane.f32.xlu0 %v6081
    %v6083 = vpop.xlane.xlu0 %6082
    %v6084 = vmul.f32 %v6074, %v273
    %v6085 = vmul.f32 %v6077, %v273
    %v6086 = vmul.f32 %v6080, %v273
    %v6087 = vmul.f32 %v6083, %v273
    %v6088 = vadd.f32 %v6084, 1e-05
    %v6089 = vadd.f32 %v6085, 1e-05
    %v6090 = vadd.f32 %v6086, 1e-05
    %v6091 = vadd.f32 %v6087, 1e-05
    %v6092 = vrsqrt.pop %v6088
    %v6093 = vrsqrt.pop %v6089
    %v6094 = vrsqrt.pop %v6090
    %v6095 = vrsqrt.pop %v6091
    %v6096 = vmul.f32 %v6064, %v6092
    %v6097 = vmul.f32 %v6065, %v6093
    %v6098 = vmul.f32 %v6066, %v6094
    %v6099 = vmul.f32 %v6067, %v6095
    %v6101 = vlaneseq
    %v6102 = vshrl.u32 %v6101, 7
    %v6103 = vsub.s32 0, %v6102
    %v6104 = vrot.slane %v6046, %v6103
    %v6106 = vmul.f32 %v6096, %v6104
    %v6107 = vmul.f32 %v6097, %v6104
    %v6108 = vmul.f32 %v6098, %v6104
    %v6109 = vmul.f32 %v6099, %v6104
    %v6111 = vlaneseq
    %v6112 = vshrl.u32 %v6111, 7
    %v6113 = vsub.s32 0, %v6112
    %v6114 = vrot.slane %v6047, %v6113
    %v6116 = vadd.f32 %v6106, %v6114
    %v6117 = vadd.f32 %v6107, %v6114
    %v6118 = vadd.f32 %v6108, %v6114
    %v6119 = vadd.f32 %v6109, %v6114
    %v6120 = vld [vmem:[%s83] sm:$0xff]
    %v6121 = vld [vmem:[%s83 + $0x8] sm:$0xff]
    %v6122 = vld [vmem:[%s83 + $0x10] sm:$0xff]
    %v6123 = vld [vmem:[%s83 + $0x18] sm:$0xff]
    %v6124 = vld [vmem:[%s85] sm:$0x1]
    %v6126 = vlaneseq
    %v6127 = vshrl.u32 %v6126, 7
    %v6128 = vsub.s32 0, %v6127
    %v6129 = vrot.slane %v6124, %v6128
    %v6132 = vsel %vm266, %v6116, 0
    %v6135 = vsel %vm266, %v6117, 0
    %v6138 = vsel %vm266, %v6118, 0
    %v6141 = vsel %vm266, %v6119, 0
    %6143 = vmatprep.subr.mxu0 0.0
    %6144 = vmatpush1.msra.mxu0 %v6120
    %6145 = vmatprep.subr.mxu0 0.0
    %6146 = vmatpush1.msra.mxu0 %v6121
    %6147 = vmatprep.subr.mxu0 0.0
    %6148 = vmatpush1.msra.mxu0 %v6122
    %6149 = vmatprep.subr.mxu0 0.0
    %6150 = vmatpush1.msra.mxu0 %v6123
    %6151 = vmatprep.subr.mxu0 0.0
    %6152 = vmatpush1.msra.mxu0 0.0
    %6153 = vmatprep.subr.mxu0 0.0
    %6154 = vmatpush1.msra.mxu0 0.0
    %6155 = vmatprep.subr.mxu0 0.0
    %6156 = vmatpush1.msra.mxu0 0.0
    %6157 = vmatprep.subr.mxu0 0.0
    %6158 = vmatpush1.msra.mxu0 0.0
    %6159 = vmatprep.subr.mxu0 0.0
    %6160 = vmatpush1.msra.mxu0 0.0
    %6161 = vmatprep.subr.mxu0 0.0
    %6162 = vmatpush1.msra.mxu0 0.0
    %6163 = vmatprep.subr.mxu0 0.0
    %6164 = vmatpush1.msra.mxu0 0.0
    %6165 = vmatprep.subr.mxu0 0.0
    %6166 = vmatpush1.msra.mxu0 0.0
    %6167 = vmatprep.subr.mxu0 0.0
    %6168 = vmatpush1.msra.mxu0 0.0
    %6169 = vmatprep.subr.mxu0 0.0
    %6170 = vmatpush1.msra.mxu0 0.0
    %6171 = vmatprep.subr.mxu0 0.0
    %6172 = vmatpush1.msra.mxu0 0.0
    %6173 = vmatprep.subr.mxu0 0.0
    %6174 = vmatpush1.msra.mxu0 0.0
    %6175 = vmatprep.subr.mxu0 0.0
    %6176 = vmatpush1.msra.mxu0 0.0
    %6177 = vmatprep.subr.mxu0 0.0
    %6178 = vmatpush1.msra.mxu0 0.0
    %6179 = vmatprep.subr.mxu0 0.0
    %6180 = vmatpush1.msra.mxu0 0.0
    %6181 = vmatprep.subr.mxu0 0.0
    %6182 = vmatpush1.msra.mxu0 0.0
    %6183 = vmatprep.subr.mxu0 0.0
    %6184 = vmatpush1.msra.mxu0 0.0
    %6185 = vmatprep.subr.mxu0 0.0
    %6186 = vmatpush1.msra.mxu0 0.0
    %6187 = vmatprep.subr.mxu0 0.0
    %6188 = vmatpush1.msra.mxu0 0.0
    %6189 = vmatprep.subr.mxu0 0.0
    %6190 = vmatpush1.msra.mxu0 0.0
    %6191 = vmatprep.subr.mxu0 0.0
    %6192 = vmatpush1.msra.mxu0 0.0
    %6193 = vmatprep.subr.mxu0 0.0
    %6194 = vmatpush1.msra.mxu0 0.0
    %6195 = vmatprep.subr.mxu0 0.0
    %6196 = vmatpush1.msra.mxu0 0.0
    %6197 = vmatprep.subr.mxu0 0.0
    %6198 = vmatpush1.msra.mxu0 0.0
    %6199 = vmatprep.subr.mxu0 0.0
    %6200 = vmatpush1.msra.mxu0 0.0
    %6201 = vmatprep.subr.mxu0 0.0
    %6202 = vmatpush1.msra.mxu0 0.0
    %6203 = vmatprep.subr.mxu0 0.0
    %6204 = vmatpush1.msra.mxu0 0.0
    %6205 = vmatprep.subr.mxu0 0.0
    %6206 = vmatpush1.msra.mxu0 0.0
    %6207 = vmatprep.mubr.f32.mxu0 0.0
    %6208 = vmatmul.mubr.f32.gmra.mrb[0].mxu0 %v6132
    %v6209 = vpop.f32.mrb[0].mxu0
    %v6210 = vadd.f32 %v6129, %v6209
    %v6211 = vpop.f32.mrb[0].mxu0
    %6212 = vmatprep.mubr.f32.mxu0 0.0
    %6213 = vmatmul.mubr.f32.gmra.mrb[0].mxu0 %v6135
    %v6214 = vpop.f32.mrb[0].mxu0
    %v6215 = vadd.f32 %v6129, %v6214
    %v6216 = vpop.f32.mrb[0].mxu0
    %6217 = vmatprep.mubr.f32.mxu0 0.0
    %6218 = vmatmul.mubr.f32.gmra.mrb[0].mxu0 %v6138
    %v6219 = vpop.f32.mrb[0].mxu0
    %v6220 = vadd.f32 %v6129, %v6219
    %v6221 = vpop.f32.mrb[0].mxu0
    %6222 = vmatprep.mubr.f32.mxu0 0.0
    %6223 = vmatmul.mubr.f32.gmra.mrb[0].mxu0 %v6141
    %v6224 = vpop.f32.mrb[0].mxu0
    %v6225 = vadd.f32 %v6129, %v6224
    %v6226 = vpop.f32.mrb[0].mxu0
    %6227 = vdwg.mxu0
    %6228 = vst [vmem:[#allocation2] sm:$0xff] %v6210
    %6229 = vst [vmem:[#allocation2 + $0x8] sm:$0xff] %v6215
    %6230 = vst [vmem:[#allocation2 + $0x10] sm:$0xff] %v6220
    %6231 = vst [vmem:[#allocation2 + $0x18] sm:$0xff] %v6225
    %6232 = vmax.xlane.f32.xlu0 %v6210
    %v6233 = vpop.xlane.xlu0 %6232
    %6234 = vmax.xlane.f32.xlu0 %v6215
    %v6235 = vpop.xlane.xlu0 %6234
    %6236 = vmax.xlane.f32.xlu0 %v6220
    %v6237 = vpop.xlane.xlu0 %6236
    %6238 = vmax.xlane.f32.xlu0 %v6225
    %v6239 = vpop.xlane.xlu0 %6238
    %v6240 = vsub.f32 %v6210, %v6233
    %v6241 = vsub.f32 %v6215, %v6235
    %v6242 = vsub.f32 %v6220, %v6237
    %v6243 = vsub.f32 %v6225, %v6239
    %v6244 = vmul.f32 %v6240, 1.442695
    %v6245 = vpow.pop %v6244
    %v6246 = vmul.f32 %v6241, 1.442695
    %v6247 = vpow.pop %v6246
    %v6248 = vmul.f32 %v6242, 1.442695
    %v6249 = vpow.pop %v6248
    %v6250 = vmul.f32 %v6243, 1.442695
    %v6251 = vpow.pop %v6250
    %6252 = vadd.xlane.f32.xlu0 %v6245
    %v6253 = vpop.xlane.xlu0 %6252
    %6254 = vadd.xlane.f32.xlu0 %v6247
    %v6255 = vpop.xlane.xlu0 %6254
    %6256 = vadd.xlane.f32.xlu0 %v6249
    %v6257 = vpop.xlane.xlu0 %6256
    %6258 = vadd.xlane.f32.xlu0 %v6251
    %v6259 = vpop.xlane.xlu0 %6258
    %v6260 = vlog2.pop %v6253
    %v6261 = vmul.f32 %v6260, 0.6931472
    %v6262 = vlog2.pop %v6255
    %v6263 = vmul.f32 %v6262, 0.6931472
    %v6264 = vlog2.pop %v6257
    %v6265 = vmul.f32 %v6264, 0.6931472
    %v6266 = vlog2.pop %v6259
    %v6267 = vmul.f32 %v6266, 0.6931472
    %v6268 = vsub.f32 %v6240, %v6261
    %v6269 = vsub.f32 %v6241, %v6263
    %v6270 = vsub.f32 %v6242, %v6265
    %v6271 = vsub.f32 %v6243, %v6267
    %v6272 = vld [vmem:[%s5] sm:$0xff]
    %v6273 = vld [vmem:[%s5 + $0x8] sm:$0xff]
    %v6274 = vld [vmem:[%s5 + $0x10] sm:$0xff]
    %v6275 = vld [vmem:[%s5 + $0x18] sm:$0xff]
    %6276 = vset.pattern.permute.xlu0 0
    %6277 = vperm.xlu0 %6276, %v6272
    %v6278 = vpop.permute.xlu0 %6277
    %6279 = vset.pattern.permute.xlu0 0
    %6280 = vperm.xlu0 %6279, %v6273
    %v6281 = vpop.permute.xlu0 %6280
    %6282 = vset.pattern.permute.xlu0 0
    %6283 = vperm.xlu0 %6282, %v6274
    %v6284 = vpop.permute.xlu0 %6283
    %6285 = vset.pattern.permute.xlu0 0
    %6286 = vperm.xlu0 %6285, %v6275
    %v6287 = vpop.permute.xlu0 %6286
    %vm6288 = vcmp.eq.s32.totalorder %v2848, %v6278
    %vm6289 = vcmp.eq.s32.totalorder %v2848, %v6281
    %vm6290 = vcmp.eq.s32.totalorder %v2848, %v6284
    %vm6291 = vcmp.eq.s32.totalorder %v2848, %v6287
    %v6292 = vsel %vm6288, 1, 0
    %v6293 = vsel %vm6289, 1, 0
    %v6294 = vsel %vm6290, 1, 0
    %v6295 = vsel %vm6291, 1, 0
    %v6296 = vcvt.s32.f32 %v6292
    %v6297 = vcvt.s32.f32 %v6293
    %v6298 = vcvt.s32.f32 %v6294
    %v6299 = vcvt.s32.f32 %v6295
    %v6300 = vmul.f32 %v6296, %v6268
    %v6301 = vmul.f32 %v6297, %v6269
    %v6302 = vmul.f32 %v6298, %v6270
    %v6303 = vmul.f32 %v6299, %v6271
    %6304 = vadd.xlane.f32.xlu0 %v6300
    %v6305 = vpop.xlane.xlu0 %6304
    %6306 = vadd.xlane.f32.xlu0 %v6301
    %v6307 = vpop.xlane.xlu0 %6306
    %6308 = vadd.xlane.f32.xlu0 %v6302
    %v6309 = vpop.xlane.xlu0 %6308
    %6310 = vadd.xlane.f32.xlu0 %v6303
    %v6311 = vpop.xlane.xlu0 %6310
    %v6312 = vsub.f32 0.0, %v6305
    %v6313 = vsub.f32 0.0, %v6307
    %v6314 = vsub.f32 0.0, %v6309
    %v6315 = vsub.f32 0.0, %v6311
    %v6316 = vadd.f32 %v6312, %v6313
    %v6317 = vrot.slane %v6316, 4
    %v6318 = vadd.f32 %v6316, %v6317
    %v6319 = vrot.slane %v6318, 2
    %v6320 = vadd.f32 %v6318, %v6319
    %v6321 = vrot.slane %v6320, 1
    %v6322 = vadd.f32 %v6320, %v6321
    %v6323 = vadd.f32 %v6314, %v6315
    %v6324 = vrot.slane %v6323, 4
    %v6325 = vadd.f32 %v6323, %v6324
    %v6326 = vrot.slane %v6325, 2
    %v6327 = vadd.f32 %v6325, %v6326
    %v6328 = vrot.slane %v6327, 1
    %v6329 = vadd.f32 %v6327, %v6328
    %v6330 = vadd.f32 %v6322, %v6329
    %v6331 = vrcp.pop 16.0
    %v6332 = vmul.f32 %v6330, %v6331
    %v6333 = vsel %vm3271, %v3266, %v6332
    %vm6334 = vcmask 8192
    %6335 = vst.msk [vmem:[%s93] sm:$0x1] %vm6334, %v6333
    // Predicated region
    $region174: #{brain_to_text_forward.1} parent=1 // pred_check
      _
    $region175: #{brain_to_text_forward.1} parent=1 // pred_check_branch
      %6337 = sbr.rel (0) target = $region177
    $region176: #{brain_to_text_forward.1} parent=1 // pred_region
      %s6339 = ssub.s32 512, 512
      %6340 = vsyncadd [#allocation3], %s6339
      %s6341 = sshll.u32 [#allocation2], 4
      %s6342 = int_to_ptr.vmem [resolvable:$true] %s6341
      %6347 = dma.vmem_to_hbm [thread:$0]  %s6342, 512, %s87, [#allocation3], 128, 128, 8
    $region177: #{brain_to_text_forward.1} parent=1 // pred_fallthru
      _
    // Predicated region
    $region178: #{brain_to_text_forward.1} parent=1 // pred_check
      _
    $region179: #{brain_to_text_forward.1} parent=1 // pred_check_branch
      %6349 = sbr.rel (0) target = $region181
    $region180: #{brain_to_text_forward.1} parent=1 // pred_region
      %s6351 = ssub.s32 256, 256
      %6352 = vsyncadd [#allocation5], %s6351
      %s6353 = sshll.u32 [#allocation4], 4
      %s6354 = int_to_ptr.vmem [resolvable:$true] %s6353
      %6359 = dma.vmem_to_hbm [thread:$0]  %s6354, 256, %s89, [#allocation5], 128, 128, 8
    $region181: #{brain_to_text_forward.1} parent=1 // pred_fallthru
      _
    // Predicated region
    $region182: #{brain_to_text_forward.1} parent=1 // pred_check
      _
    $region183: #{brain_to_text_forward.1} parent=1 // pred_check_branch
      %6361 = sbr.rel (0) target = $region185
    $region184: #{brain_to_text_forward.1} parent=1 // pred_region
      _
    $region185: #{brain_to_text_forward.1} parent=1 // pred_fallthru
      _
    // Predicated region
    $region186: #{brain_to_text_forward.1} parent=1 // pred_check
      _
    $region187: #{brain_to_text_forward.1} parent=1 // pred_check_branch
      %6363 = sbr.rel (0) target = $region189
    $region188: #{brain_to_text_forward.1} parent=1 // pred_region
      _
    $region189: #{brain_to_text_forward.1} parent=1 // pred_fallthru
      _
    // Predicated region
    $region190: #{brain_to_text_forward.1} parent=1 // pred_check
      _
    $region191: #{brain_to_text_forward.1} parent=1 // pred_check_branch
      %6365 = sbr.rel (0) target = $region193
    $region192: #{brain_to_text_forward.1} parent=1 // pred_region
      %6366 = dma.done [#allocation3], 512
    $region193: #{brain_to_text_forward.1} parent=1 // pred_fallthru
      _
    // Predicated region
    $region194: #{brain_to_text_forward.1} parent=1 // pred_check
      _
    $region195: #{brain_to_text_forward.1} parent=1 // pred_check_branch
      %6368 = sbr.rel (0) target = $region197
    $region196: #{brain_to_text_forward.1} parent=1 // pred_region
      %6369 = dma.done [#allocation5], 256
    $region197: #{brain_to_text_forward.1} parent=1 // pred_fallthru
      _
    // Predicated region
    $region198: #{brain_to_text_forward.1} parent=1 // pred_check
      _
    $region199: #{brain_to_text_forward.1} parent=1 // pred_check_branch
      %6371 = sbr.rel (0) target = $region201
    $region200: #{brain_to_text_forward.1} parent=1 // pred_region
      _
    $region201: #{brain_to_text_forward.1} parent=1 // pred_fallthru
      _
    // Predicated region
    $region202: #{brain_to_text_forward.1} parent=1 // pred_check
      _
    $region203: #{brain_to_text_forward.1} parent=1 // pred_check_branch
      %6373 = sbr.rel (0) target = $region205
    $region204: #{brain_to_text_forward.1} parent=1 // pred_region
      _
    $region205: #{brain_to_text_forward.1} parent=1 // pred_fallthru
      _
    %6374 = vsyncpa [#allocation3], 1
    %6375 = vsyncpa [#allocation5], 1

</llo_original>
